<compile_context>
chip_gen: v6e
topology: v6e:2x2x1
jax: 0.10.0
libtpu: 0.0.40
codegen_flags: <defaults>
</compile_context>

<pallas_src>
import functools

import jax
import jax.numpy as jnp
from jax.experimental import pallas as pl
from jax.experimental.pallas import tpu as pltpu


# Internal padded sizes (lane-dense layout).
CP = 128            # padded channel width  -> last (lane) axis always 128
NCP = 128           # padded num_classes    -> lane-dense output store
KH = KW = 3
NTAP = KH * KW


# ----------------------------------------------------------------------------
# Fused kernel: backbone + pool + head for one batch tile per grid step.
# ----------------------------------------------------------------------------
def _fused_kernel(x_ref,                         # VMEM (BT, H+2, W+2, CP) f32, pre-padded
                  meta_ref,                      # VMEM (BT, CP) f32, metadata in lanes [FD, FD+3)
                  ws_ref, bs_ref,                # stem  (NTAP, CP, CP) bf16 / (1, CP) f32
                  w1_ref, b1_ref,                # 1x1   (CP, CP)       bf16 / (1, CP) f32
                  w2_ref, b2_ref,                # 3x3   (NTAP, CP, CP) bf16 / (1, CP) f32
                  w3_ref, b3_ref,                # 1x1   (CP, CP)       bf16 / (1, CP) f32
                  wf_ref, bf_ref,                # head  (CP, NCP) bf16 / (1, NCP) f32
                  o_ref,                         # VMEM (BT, NCP) f32
                  pad_ref, idn_ref,              # VMEM scratch
                  *, H, W, BT):
    S = BT * H * W

    # One-time zero of the mid-conv halo scratch.  The (H, W) interior is
    # fully overwritten (all 128 lanes) every step; the halo ring is never
    # written again, so it stays zero.  Requires sequential ("arbitrary")
    # grid semantics.
    # TODO(synk): for true v7x 2-TensorCore batch sharding (CORE_PARALLEL),
    # zero the halo ring per step (or per core) instead of once at step 0.
    @pl.when(pl.program_id(0) == 0)
    def _():
        pad_ref[...] = jnp.zeros_like(pad_ref)

    def conv3x3(src_ref, w_ref, bias_ref):
        """Same-padded 3x3 conv as 9 accumulated per-tap MXU matmuls.

        No im2col staging buffer: each tap is one (S,128)@(128,128) bf16
        matmul accumulated into an f32 value.
        """
        acc = None
        for dy in range(KH):                       # static unrolled taps
            for dx in range(KW):
                tap = dy * KW + dx
                slab = src_ref[:, dy:dy + H, dx:dx + W, :].reshape(S, CP)
                contrib = jnp.dot(slab.astype(jnp.bfloat16), w_ref[tap],
                                  preferred_element_type=jnp.float32)
                acc = contrib if acc is None else acc + contrib
        return acc + bias_ref[...]

    # ---------------- stem: 3x3 conv (reads the pre-padded input) + ReLU ----
    idn_ref[...] = jnp.maximum(conv3x3(x_ref, ws_ref, bs_ref), 0.0)   # (S, CP)

    # ---------------- bottleneck: 1x1 -> 3x3 -> 1x1 (+ skip) ----------------
    y = jnp.maximum(
        jnp.dot(idn_ref[...].astype(jnp.bfloat16), w1_ref[...],
                preferred_element_type=jnp.float32) + b1_ref[...], 0.0)
    pad_ref[:, 1:1 + H, 1:1 + W, :] = y.reshape(BT, H, W, CP)   # halo stays 0
    y = jnp.maximum(conv3x3(pad_ref, w2_ref, b2_ref), 0.0)
    y = jnp.dot(y.astype(jnp.bfloat16), w3_ref[...],
                preferred_element_type=jnp.float32) + b3_ref[...]
    y = jnp.maximum(y + idn_ref[...], 0.0)                      # residual, ReLU

    # ---------------- global average pool -> (BT, CP) hidden state ----------
    pooled = jnp.sum(y.reshape(BT, H * W, CP), axis=1) * (1.0 / (H * W))

    # ---------------- concat(hidden, age, sex, view) -------------------------
    # Metadata already sits in lanes [feat_dim, feat_dim+3) of meta_ref and the
    # pooled hidden state is exactly zero there (all padded weight columns are
    # zero), so the concat is a plain add.
    combined = pooled + meta_ref[...]

    # ---------------- head: one batched lane-dense matmul --------------------
    o_ref[...] = (jnp.dot(combined.astype(jnp.bfloat16), wf_ref[...],
                          preferred_element_type=jnp.float32)
                  + bf_ref[...]).astype(o_ref.dtype)


# ----------------------------------------------------------------------------
# Parameters (packed into kernel-ready, channel-padded layouts at init time).
# ----------------------------------------------------------------------------
def init_params(key, in_ch, feat_dim, mid, num_classes):
    assert feat_dim + 3 <= CP and num_classes <= NCP
    ks = jax.random.split(key, 6)

    def he(k, shape, fan_in):
        return jax.random.normal(k, shape, jnp.float32) * (2.0 / fan_in) ** 0.5

    def pack_conv3x3(w):                   # (3,3,cin,cout) -> (NTAP, CP, CP) bf16
        cin, cout = w.shape[2], w.shape[3]
        wp = jnp.zeros((KH, KW, CP, CP), jnp.float32).at[:, :, :cin, :cout].set(w)
        return wp.reshape(NTAP, CP, CP).astype(jnp.bfloat16)

    def pack_conv1x1(w):                   # (cin, cout) -> (CP, CP) bf16
        cin, cout = w.shape
        return (jnp.zeros((CP, CP), jnp.float32)
                .at[:cin, :cout].set(w).astype(jnp.bfloat16))

    def pack_bias(bvec):                   # (cout,) -> (1, CP) f32
        return jnp.zeros((1, CP), jnp.float32).at[0, :bvec.shape[0]].set(bvec)

    stem_w = he(ks[0], (KH, KW, in_ch, feat_dim), KH * KW * in_ch)
    b1_w = he(ks[1], (feat_dim, mid), feat_dim)            # 1x1 reduce
    b2_w = he(ks[2], (KH, KW, mid, mid), KH * KW * mid)    # 3x3
    b3_w = he(ks[3], (mid, feat_dim), mid)                 # 1x1 expand

    # classifier: nn.Linear(feat_dim + 3, num_classes) (PyTorch (out,in) layout).
    # The hidden rows go to [0, feat_dim) and the metadata rows (age, sex, view)
    # to [feat_dim, feat_dim+3) of the packed lane-dense weight.
    bound = 1.0 / (feat_dim + 3) ** 0.5
    w_fc = jax.random.uniform(ks[4], (num_classes, feat_dim + 3), jnp.float32,
                              -bound, bound)
    b_fc = jax.random.uniform(ks[5], (num_classes,), jnp.float32, -bound, bound)

    fc_w = (jnp.zeros((CP, NCP), jnp.float32)
            .at[:feat_dim, :num_classes].set(w_fc[:, :feat_dim].T)
            .at[feat_dim:feat_dim + 3, :num_classes].set(w_fc[:, feat_dim:].T)
            .astype(jnp.bfloat16))
    fc_b = jnp.zeros((1, NCP), jnp.float32).at[0, :num_classes].set(b_fc)

    return {
        "stem_w": pack_conv3x3(stem_w),
        "stem_b": pack_bias(jnp.zeros((feat_dim,), jnp.float32)),
        "b1_w": pack_conv1x1(b1_w),
        "b1_b": pack_bias(jnp.zeros((mid,), jnp.float32)),
        "b2_w": pack_conv3x3(b2_w),
        "b2_b": pack_bias(jnp.zeros((mid,), jnp.float32)),
        "b3_w": pack_conv1x1(b3_w),
        "b3_b": pack_bias(jnp.zeros((feat_dim,), jnp.float32)),
        "fc_w": fc_w,
        "fc_b": fc_b,
    }


# ----------------------------------------------------------------------------
# Forward wrapper: single fused pallas_call over the batch.
# ----------------------------------------------------------------------------
def forward(params, image_nchw, metadata, *, num_classes, feat_dim):
    # layout: PyTorch NCHW interface -> NHWC (channels on the lane axis).
    x = jnp.transpose(image_nchw, (0, 2, 3, 1)).astype(jnp.float32)
    B, H, W, Cin = x.shape
    assert Cin <= CP

    # Pre-pad halo + channels in the wrapper: the stem conv reads this block
    # directly — no in-kernel stem staging and no lane-masked stores.
    xp = jnp.pad(x, ((0, 0), (1, 1), (1, 1), (0, CP - Cin)))

    # Metadata placed into lanes [feat_dim, feat_dim+3): concat-by-addition.
    meta = jnp.zeros((B, CP), jnp.float32).at[:, feat_dim:feat_dim + 3].set(
        metadata.astype(jnp.float32))

    # Batch tile: flatten BT images' spatial dims into the matmul M dimension.
    BT = B if B <= 8 else 8
    assert B % BT == 0, "batch must be a multiple of the batch tile"

    const2 = lambda i: (0, 0)
    const3 = lambda i: (0, 0, 0)
    # TODO(synk): pl.Buffered(1) on the constant-index weight specs would drop
    # their pointless double buffers (minor VMEM saving only).
    out = pl.pallas_call(
        functools.partial(_fused_kernel, H=H, W=W, BT=BT),
        out_shape=jax.ShapeDtypeStruct((B, NCP), jnp.float32),
        grid=(B // BT,),
        in_specs=[
            pl.BlockSpec((BT, H + 2, W + 2, CP), lambda i: (i, 0, 0, 0)),   # image
            pl.BlockSpec((BT, CP), lambda i: (i, 0)),                       # metadata
            pl.BlockSpec((NTAP, CP, CP), const3), pl.BlockSpec((1, CP), const2),
            pl.BlockSpec((CP, CP), const2),       pl.BlockSpec((1, CP), const2),
            pl.BlockSpec((NTAP, CP, CP), const3), pl.BlockSpec((1, CP), const2),
            pl.BlockSpec((CP, CP), const2),       pl.BlockSpec((1, CP), const2),
            pl.BlockSpec((CP, NCP), const2),      pl.BlockSpec((1, NCP), const2),
        ],
        out_specs=pl.BlockSpec((BT, NCP), lambda i: (i, 0)),
        scratch_shapes=[
            pltpu.VMEM((BT, H + 2, W + 2, CP), jnp.float32),   # padded activation
            pltpu.VMEM((BT * H * W, CP), jnp.float32),         # residual identity
        ],
        compiler_params=pltpu.CompilerParams(
            dimension_semantics=("arbitrary",)),   # sequential: safe one-time scratch init
    )(xp, meta,
      params["stem_w"], params["stem_b"],
      params["b1_w"], params["b1_b"],
      params["b2_w"], params["b2_b"],
      params["b3_w"], params["b3_b"],
      params["fc_w"], params["fc_b"])

    return out[:, :num_classes]


if __name__ == "__main__":
    B, in_ch, Himg, Wimg = 2, 3, 16, 16
    feat_dim = 32          # small analog of resnet50's 2048-d hidden state
    mid = 16
    num_classes = 15       # len(label_names)

    key = jax.random.PRNGKey(0)
    k_img, k_meta, k_par = jax.random.split(key, 3)
    image = jax.random.normal(k_img, (B, in_ch, Himg, Wimg), jnp.float32)
    metadata = jax.random.normal(k_meta, (B, 3), jnp.float32)

    params = init_params(k_par, in_ch, feat_dim, mid, num_classes)

    fwd = jax.jit(functools.partial(forward, num_classes=num_classes,
                                    feat_dim=feat_dim))
    logits = jax.block_until_ready(fwd(params, image, metadata))
    assert logits.shape == (B, num_classes), logits.shape
    assert jnp.all(jnp.isfinite(logits))
    print("KERNEL_OK")
</pallas_src>

<mosaic_0001>
module attributes {stable_mosaic.version = 11 : i64} {
  func.func @_fused_kernel(%arg0: i32, %arg1: memref<2x18x18x128xf32, #tpu.memory_space<vmem>>, %arg2: memref<2x128xf32, #tpu.memory_space<vmem>>, %arg3: memref<9x128x128xbf16, #tpu.memory_space<vmem>>, %arg4: memref<1x128xf32, #tpu.memory_space<vmem>>, %arg5: memref<128x128xbf16, #tpu.memory_space<vmem>>, %arg6: memref<1x128xf32, #tpu.memory_space<vmem>>, %arg7: memref<9x128x128xbf16, #tpu.memory_space<vmem>>, %arg8: memref<1x128xf32, #tpu.memory_space<vmem>>, %arg9: memref<128x128xbf16, #tpu.memory_space<vmem>>, %arg10: memref<1x128xf32, #tpu.memory_space<vmem>>, %arg11: memref<128x128xbf16, #tpu.memory_space<vmem>>, %arg12: memref<1x128xf32, #tpu.memory_space<vmem>>, %arg13: memref<2x128xf32, #tpu.memory_space<vmem>>, %arg14: memref<2x18x18x128xf32, #tpu.memory_space<vmem>>, %arg15: memref<512x128xf32, #tpu.memory_space<vmem>>) attributes {dimension_semantics = [#tpu.dimension_semantics<arbitrary>], iteration_bounds = array<i64: 1>, scalar_prefetch = 0 : i64, scratch_operands = 2 : i64, tpu.core_type = #tpu.core_type<tc>, window_params = [{transform_indices = @transform_0, window_bounds = array<i64: 2, 18, 18, 128>}, {transform_indices = @transform_1, window_bounds = array<i64: 2, 128>}, {pipeline_mode = #tpu.pipeline_mode<synchronous>, transform_indices = @transform_2, window_bounds = array<i64: 9, 128, 128>}, {pipeline_mode = #tpu.pipeline_mode<synchronous>, transform_indices = @transform_3, window_bounds = array<i64: 1, 128>}, {pipeline_mode = #tpu.pipeline_mode<synchronous>, transform_indices = @transform_4, window_bounds = array<i64: 128, 128>}, {pipeline_mode = #tpu.pipeline_mode<synchronous>, transform_indices = @transform_5, window_bounds = array<i64: 1, 128>}, {pipeline_mode = #tpu.pipeline_mode<synchronous>, transform_indices = @transform_6, window_bounds = array<i64: 9, 128, 128>}, {pipeline_mode = #tpu.pipeline_mode<synchronous>, transform_indices = @transform_7, window_bounds = array<i64: 1, 128>}, {pipeline_mode = #tpu.pipeline_mode<synchronous>, transform_indices = @transform_8, window_bounds = array<i64: 128, 128>}, {pipeline_mode = #tpu.pipeline_mode<synchronous>, transform_indices = @transform_9, window_bounds = array<i64: 1, 128>}, {pipeline_mode = #tpu.pipeline_mode<synchronous>, transform_indices = @transform_10, window_bounds = array<i64: 128, 128>}, {pipeline_mode = #tpu.pipeline_mode<synchronous>, transform_indices = @transform_11, window_bounds = array<i64: 1, 128>}, {transform_indices = @transform_12, window_bounds = array<i64: 2, 128>}]} {
    %c0_i32 = arith.constant 0 : i32
    %0 = arith.cmpi eq, %arg0, %c0_i32 : i32
    %1 = arith.extui %0 : i1 to i32
    %c0_i32_0 = arith.constant 0 : i32
    %2 = arith.cmpi ne, %1, %c0_i32_0 : i32
    scf.if %2 {
      %cst_174 = arith.constant 0.000000e+00 : f32
      %172 = vector.broadcast %cst_174 : f32 to vector<2x18x18x128xf32>
      %c0_175 = arith.constant 0 : index
      %c0_176 = arith.constant 0 : index
      %c0_177 = arith.constant 0 : index
      %c0_178 = arith.constant 0 : index
      %173 = vector.load %arg14[%c0_175, %c0_176, %c0_177, %c0_178] : memref<2x18x18x128xf32, #tpu.memory_space<vmem>>, vector<2x18x18x128xf32>
      tpu.vector_store %arg14[%c0_175, %c0_176, %c0_177, %c0_178], %172 {strides = array<i32>} : memref<2x18x18x128xf32, #tpu.memory_space<vmem>>, vector<2x18x18x128xf32>,
    } else {
    }
    %c0 = arith.constant 0 : index
    %c0_1 = arith.constant 0 : index
    %c0_2 = arith.constant 0 : index
    %c0_3 = arith.constant 0 : index
    %3 = vector.load %arg1[%c0, %c0_1, %c0_2, %c0_3] : memref<2x18x18x128xf32, #tpu.memory_space<vmem>>, vector<2x16x16x128xf32>
    %4 = vector.shape_cast %3 : vector<2x16x16x128xf32> to vector<512x128xf32>
    %5 = arith.truncf %4 : vector<512x128xf32> to vector<512x128xbf16>
    %c0_4 = arith.constant 0 : index
    %c0_5 = arith.constant 0 : index
    %c0_6 = arith.constant 0 : index
    %6 = vector.load %arg3[%c0_4, %c0_5, %c0_6] : memref<9x128x128xbf16, #tpu.memory_space<vmem>>, vector<1x128x128xbf16>
    %7 = vector.shape_cast %6 : vector<1x128x128xbf16> to vector<128x128xbf16>
    %cst = arith.constant dense<0.000000e+00> : vector<512x128xf32>
    %8 = tpu.matmul %5, %7, %cst {dimension_numbers = #tpu.dot_dimension_numbers<[1], [0], [0], [1], [0, 0, 1, 1], [], []>} : vector<512x128xbf16>, vector<128x128xbf16>, vector<512x128xf32> -> vector<512x128xf32>
    %c0_7 = arith.constant 0 : index
    %c0_8 = arith.constant 0 : index
    %c1 = arith.constant 1 : index
    %c0_9 = arith.constant 0 : index
    %9 = vector.load %arg1[%c0_7, %c0_8, %c1, %c0_9] : memref<2x18x18x128xf32, #tpu.memory_space<vmem>>, vector<2x16x16x128xf32>
    %10 = vector.shape_cast %9 : vector<2x16x16x128xf32> to vector<512x128xf32>
    %11 = arith.truncf %10 : vector<512x128xf32> to vector<512x128xbf16>
    %c1_10 = arith.constant 1 : index
    %c0_11 = arith.constant 0 : index
    %c0_12 = arith.constant 0 : index
    %12 = vector.load %arg3[%c1_10, %c0_11, %c0_12] : memref<9x128x128xbf16, #tpu.memory_space<vmem>>, vector<1x128x128xbf16>
    %13 = vector.shape_cast %12 : vector<1x128x128xbf16> to vector<128x128xbf16>
    %cst_13 = arith.constant dense<0.000000e+00> : vector<512x128xf32>
    %14 = tpu.matmul %11, %13, %cst_13 {dimension_numbers = #tpu.dot_dimension_numbers<[1], [0], [0], [1], [0, 0, 1, 1], [], []>} : vector<512x128xbf16>, vector<128x128xbf16>, vector<512x128xf32> -> vector<512x128xf32>
    %15 = arith.addf %8, %14 : vector<512x128xf32>
    %c0_14 = arith.constant 0 : index
    %c0_15 = arith.constant 0 : index
    %c2 = arith.constant 2 : index
    %c0_16 = arith.constant 0 : index
    %16 = vector.load %arg1[%c0_14, %c0_15, %c2, %c0_16] : memref<2x18x18x128xf32, #tpu.memory_space<vmem>>, vector<2x16x16x128xf32>
    %17 = vector.shape_cast %16 : vector<2x16x16x128xf32> to vector<512x128xf32>
    %18 = arith.truncf %17 : vector<512x128xf32> to vector<512x128xbf16>
    %c2_17 = arith.constant 2 : index
    %c0_18 = arith.constant 0 : index
    %c0_19 = arith.constant 0 : index
    %19 = vector.load %arg3[%c2_17, %c0_18, %c0_19] : memref<9x128x128xbf16, #tpu.memory_space<vmem>>, vector<1x128x128xbf16>
    %20 = vector.shape_cast %19 : vector<1x128x128xbf16> to vector<128x128xbf16>
    %cst_20 = arith.constant dense<0.000000e+00> : vector<512x128xf32>
    %21 = tpu.matmul %18, %20, %cst_20 {dimension_numbers = #tpu.dot_dimension_numbers<[1], [0], [0], [1], [0, 0, 1, 1], [], []>} : vector<512x128xbf16>, vector<128x128xbf16>, vector<512x128xf32> -> vector<512x128xf32>
    %22 = arith.addf %15, %21 : vector<512x128xf32>
    %c0_21 = arith.constant 0 : index
    %c1_22 = arith.constant 1 : index
    %c0_23 = arith.constant 0 : index
    %c0_24 = arith.constant 0 : index
    %23 = vector.load %arg1[%c0_21, %c1_22, %c0_23, %c0_24] : memref<2x18x18x128xf32, #tpu.memory_space<vmem>>, vector<2x16x16x128xf32>
    %24 = vector.shape_cast %23 : vector<2x16x16x128xf32> to vector<512x128xf32>
    %25 = arith.truncf %24 : vector<512x128xf32> to vector<512x128xbf16>
    %c3 = arith.constant 3 : index
    %c0_25 = arith.constant 0 : index
    %c0_26 = arith.constant 0 : index
    %26 = vector.load %arg3[%c3, %c0_25, %c0_26] : memref<9x128x128xbf16, #tpu.memory_space<vmem>>, vector<1x128x128xbf16>
    %27 = vector.shape_cast %26 : vector<1x128x128xbf16> to vector<128x128xbf16>
    %cst_27 = arith.constant dense<0.000000e+00> : vector<512x128xf32>
    %28 = tpu.matmul %25, %27, %cst_27 {dimension_numbers = #tpu.dot_dimension_numbers<[1], [0], [0], [1], [0, 0, 1, 1], [], []>} : vector<512x128xbf16>, vector<128x128xbf16>, vector<512x128xf32> -> vector<512x128xf32>
    %29 = arith.addf %22, %28 : vector<512x128xf32>
    %c0_28 = arith.constant 0 : index
    %c1_29 = arith.constant 1 : index
    %c1_30 = arith.constant 1 : index
    %c0_31 = arith.constant 0 : index
    %30 = vector.load %arg1[%c0_28, %c1_29, %c1_30, %c0_31] : memref<2x18x18x128xf32, #tpu.memory_space<vmem>>, vector<2x16x16x128xf32>
    %31 = vector.shape_cast %30 : vector<2x16x16x128xf32> to vector<512x128xf32>
    %32 = arith.truncf %31 : vector<512x128xf32> to vector<512x128xbf16>
    %c4 = arith.constant 4 : index
    %c0_32 = arith.constant 0 : index
    %c0_33 = arith.constant 0 : index
    %33 = vector.load %arg3[%c4, %c0_32, %c0_33] : memref<9x128x128xbf16, #tpu.memory_space<vmem>>, vector<1x128x128xbf16>
    %34 = vector.shape_cast %33 : vector<1x128x128xbf16> to vector<128x128xbf16>
    %cst_34 = arith.constant dense<0.000000e+00> : vector<512x128xf32>
    %35 = tpu.matmul %32, %34, %cst_34 {dimension_numbers = #tpu.dot_dimension_numbers<[1], [0], [0], [1], [0, 0, 1, 1], [], []>} : vector<512x128xbf16>, vector<128x128xbf16>, vector<512x128xf32> -> vector<512x128xf32>
    %36 = arith.addf %29, %35 : vector<512x128xf32>
    %c0_35 = arith.constant 0 : index
    %c1_36 = arith.constant 1 : index
    %c2_37 = arith.constant 2 : index
    %c0_38 = arith.constant 0 : index
    %37 = vector.load %arg1[%c0_35, %c1_36, %c2_37, %c0_38] : memref<2x18x18x128xf32, #tpu.memory_space<vmem>>, vector<2x16x16x128xf32>
    %38 = vector.shape_cast %37 : vector<2x16x16x128xf32> to vector<512x128xf32>
    %39 = arith.truncf %38 : vector<512x128xf32> to vector<512x128xbf16>
    %c5 = arith.constant 5 : index
    %c0_39 = arith.constant 0 : index
    %c0_40 = arith.constant 0 : index
    %40 = vector.load %arg3[%c5, %c0_39, %c0_40] : memref<9x128x128xbf16, #tpu.memory_space<vmem>>, vector<1x128x128xbf16>
    %41 = vector.shape_cast %40 : vector<1x128x128xbf16> to vector<128x128xbf16>
    %cst_41 = arith.constant dense<0.000000e+00> : vector<512x128xf32>
    %42 = tpu.matmul %39, %41, %cst_41 {dimension_numbers = #tpu.dot_dimension_numbers<[1], [0], [0], [1], [0, 0, 1, 1], [], []>} : vector<512x128xbf16>, vector<128x128xbf16>, vector<512x128xf32> -> vector<512x128xf32>
    %43 = arith.addf %36, %42 : vector<512x128xf32>
    %c0_42 = arith.constant 0 : index
    %c2_43 = arith.constant 2 : index
    %c0_44 = arith.constant 0 : index
    %c0_45 = arith.constant 0 : index
    %44 = vector.load %arg1[%c0_42, %c2_43, %c0_44, %c0_45] : memref<2x18x18x128xf32, #tpu.memory_space<vmem>>, vector<2x16x16x128xf32>
    %45 = vector.shape_cast %44 : vector<2x16x16x128xf32> to vector<512x128xf32>
    %46 = arith.truncf %45 : vector<512x128xf32> to vector<512x128xbf16>
    %c6 = arith.constant 6 : index
    %c0_46 = arith.constant 0 : index
    %c0_47 = arith.constant 0 : index
    %47 = vector.load %arg3[%c6, %c0_46, %c0_47] : memref<9x128x128xbf16, #tpu.memory_space<vmem>>, vector<1x128x128xbf16>
    %48 = vector.shape_cast %47 : vector<1x128x128xbf16> to vector<128x128xbf16>
    %cst_48 = arith.constant dense<0.000000e+00> : vector<512x128xf32>
    %49 = tpu.matmul %46, %48, %cst_48 {dimension_numbers = #tpu.dot_dimension_numbers<[1], [0], [0], [1], [0, 0, 1, 1], [], []>} : vector<512x128xbf16>, vector<128x128xbf16>, vector<512x128xf32> -> vector<512x128xf32>
    %50 = arith.addf %43, %49 : vector<512x128xf32>
    %c0_49 = arith.constant 0 : index
    %c2_50 = arith.constant 2 : index
    %c1_51 = arith.constant 1 : index
    %c0_52 = arith.constant 0 : index
    %51 = vector.load %arg1[%c0_49, %c2_50, %c1_51, %c0_52] : memref<2x18x18x128xf32, #tpu.memory_space<vmem>>, vector<2x16x16x128xf32>
    %52 = vector.shape_cast %51 : vector<2x16x16x128xf32> to vector<512x128xf32>
    %53 = arith.truncf %52 : vector<512x128xf32> to vector<512x128xbf16>
    %c7 = arith.constant 7 : index
    %c0_53 = arith.constant 0 : index
    %c0_54 = arith.constant 0 : index
    %54 = vector.load %arg3[%c7, %c0_53, %c0_54] : memref<9x128x128xbf16, #tpu.memory_space<vmem>>, vector<1x128x128xbf16>
    %55 = vector.shape_cast %54 : vector<1x128x128xbf16> to vector<128x128xbf16>
    %cst_55 = arith.constant dense<0.000000e+00> : vector<512x128xf32>
    %56 = tpu.matmul %53, %55, %cst_55 {dimension_numbers = #tpu.dot_dimension_numbers<[1], [0], [0], [1], [0, 0, 1, 1], [], []>} : vector<512x128xbf16>, vector<128x128xbf16>, vector<512x128xf32> -> vector<512x128xf32>
    %57 = arith.addf %50, %56 : vector<512x128xf32>
    %c0_56 = arith.constant 0 : index
    %c2_57 = arith.constant 2 : index
    %c2_58 = arith.constant 2 : index
    %c0_59 = arith.constant 0 : index
    %58 = vector.load %arg1[%c0_56, %c2_57, %c2_58, %c0_59] : memref<2x18x18x128xf32, #tpu.memory_space<vmem>>, vector<2x16x16x128xf32>
    %59 = vector.shape_cast %58 : vector<2x16x16x128xf32> to vector<512x128xf32>
    %60 = arith.truncf %59 : vector<512x128xf32> to vector<512x128xbf16>
    %c8 = arith.constant 8 : index
    %c0_60 = arith.constant 0 : index
    %c0_61 = arith.constant 0 : index
    %61 = vector.load %arg3[%c8, %c0_60, %c0_61] : memref<9x128x128xbf16, #tpu.memory_space<vmem>>, vector<1x128x128xbf16>
    %62 = vector.shape_cast %61 : vector<1x128x128xbf16> to vector<128x128xbf16>
    %cst_62 = arith.constant dense<0.000000e+00> : vector<512x128xf32>
    %63 = tpu.matmul %60, %62, %cst_62 {dimension_numbers = #tpu.dot_dimension_numbers<[1], [0], [0], [1], [0, 0, 1, 1], [], []>} : vector<512x128xbf16>, vector<128x128xbf16>, vector<512x128xf32> -> vector<512x128xf32>
    %64 = arith.addf %57, %63 : vector<512x128xf32>
    %c0_63 = arith.constant 0 : index
    %c0_64 = arith.constant 0 : index
    %65 = vector.load %arg4[%c0_63, %c0_64] : memref<1x128xf32, #tpu.memory_space<vmem>>, vector<1x128xf32>
    %66 = vector.broadcast %65 : vector<1x128xf32> to vector<512x128xf32>
    %67 = arith.addf %64, %66 : vector<512x128xf32>
    %cst_65 = arith.constant 0.000000e+00 : f32
    %68 = vector.broadcast %cst_65 : f32 to vector<512x128xf32>
    %69 = arith.maximumf %67, %68 : vector<512x128xf32>
    %c0_66 = arith.constant 0 : index
    %c0_67 = arith.constant 0 : index
    %70 = vector.load %arg15[%c0_66, %c0_67] : memref<512x128xf32, #tpu.memory_space<vmem>>, vector<512x128xf32>
    tpu.vector_store %arg15[%c0_66, %c0_67], %69 {strides = array<i32>} : memref<512x128xf32, #tpu.memory_space<vmem>>, vector<512x128xf32>,
    %c0_68 = arith.constant 0 : index
    %c0_69 = arith.constant 0 : index
    %71 = vector.load %arg15[%c0_68, %c0_69] : memref<512x128xf32, #tpu.memory_space<vmem>>, vector<512x128xf32>
    %72 = arith.truncf %71 : vector<512x128xf32> to vector<512x128xbf16>
    %c0_70 = arith.constant 0 : index
    %c0_71 = arith.constant 0 : index
    %73 = vector.load %arg5[%c0_70, %c0_71] : memref<128x128xbf16, #tpu.memory_space<vmem>>, vector<128x128xbf16>
    %cst_72 = arith.constant dense<0.000000e+00> : vector<512x128xf32>
    %74 = tpu.matmul %72, %73, %cst_72 {dimension_numbers = #tpu.dot_dimension_numbers<[1], [0], [0], [1], [0, 0, 1, 1], [], []>} : vector<512x128xbf16>, vector<128x128xbf16>, vector<512x128xf32> -> vector<512x128xf32>
    %c0_73 = arith.constant 0 : index
    %c0_74 = arith.constant 0 : index
    %75 = vector.load %arg6[%c0_73, %c0_74] : memref<1x128xf32, #tpu.memory_space<vmem>>, vector<1x128xf32>
    %76 = vector.broadcast %75 : vector<1x128xf32> to vector<512x128xf32>
    %77 = arith.addf %74, %76 : vector<512x128xf32>
    %cst_75 = arith.constant 0.000000e+00 : f32
    %78 = vector.broadcast %cst_75 : f32 to vector<512x128xf32>
    %79 = arith.maximumf %77, %78 : vector<512x128xf32>
    %80 = vector.shape_cast %79 : vector<512x128xf32> to vector<2x16x16x128xf32>
    %c0_76 = arith.constant 0 : index
    %c1_77 = arith.constant 1 : index
    %c1_78 = arith.constant 1 : index
    %c0_79 = arith.constant 0 : index
    %81 = vector.load %arg14[%c0_76, %c1_77, %c1_78, %c0_79] : memref<2x18x18x128xf32, #tpu.memory_space<vmem>>, vector<2x16x16x128xf32>
    tpu.vector_store %arg14[%c0_76, %c1_77, %c1_78, %c0_79], %80 {strides = array<i32>} : memref<2x18x18x128xf32, #tpu.memory_space<vmem>>, vector<2x16x16x128xf32>,
    %c0_80 = arith.constant 0 : index
    %c0_81 = arith.constant 0 : index
    %c0_82 = arith.constant 0 : index
    %c0_83 = arith.constant 0 : index
    %82 = vector.load %arg14[%c0_80, %c0_81, %c0_82, %c0_83] : memref<2x18x18x128xf32, #tpu.memory_space<vmem>>, vector<2x16x16x128xf32>
    %83 = vector.shape_cast %82 : vector<2x16x16x128xf32> to vector<512x128xf32>
    %84 = arith.truncf %83 : vector<512x128xf32> to vector<512x128xbf16>
    %c0_84 = arith.constant 0 : index
    %c0_85 = arith.constant 0 : index
    %c0_86 = arith.constant 0 : index
    %85 = vector.load %arg7[%c0_84, %c0_85, %c0_86] : memref<9x128x128xbf16, #tpu.memory_space<vmem>>, vector<1x128x128xbf16>
    %86 = vector.shape_cast %85 : vector<1x128x128xbf16> to vector<128x128xbf16>
    %cst_87 = arith.constant dense<0.000000e+00> : vector<512x128xf32>
    %87 = tpu.matmul %84, %86, %cst_87 {dimension_numbers = #tpu.dot_dimension_numbers<[1], [0], [0], [1], [0, 0, 1, 1], [], []>} : vector<512x128xbf16>, vector<128x128xbf16>, vector<512x128xf32> -> vector<512x128xf32>
    %c0_88 = arith.constant 0 : index
    %c0_89 = arith.constant 0 : index
    %c1_90 = arith.constant 1 : index
    %c0_91 = arith.constant 0 : index
    %88 = vector.load %arg14[%c0_88, %c0_89, %c1_90, %c0_91] : memref<2x18x18x128xf32, #tpu.memory_space<vmem>>, vector<2x16x16x128xf32>
    %89 = vector.shape_cast %88 : vector<2x16x16x128xf32> to vector<512x128xf32>
    %90 = arith.truncf %89 : vector<512x128xf32> to vector<512x128xbf16>
    %c1_92 = arith.constant 1 : index
    %c0_93 = arith.constant 0 : index
    %c0_94 = arith.constant 0 : index
    %91 = vector.load %arg7[%c1_92, %c0_93, %c0_94] : memref<9x128x128xbf16, #tpu.memory_space<vmem>>, vector<1x128x128xbf16>
    %92 = vector.shape_cast %91 : vector<1x128x128xbf16> to vector<128x128xbf16>
    %cst_95 = arith.constant dense<0.000000e+00> : vector<512x128xf32>
    %93 = tpu.matmul %90, %92, %cst_95 {dimension_numbers = #tpu.dot_dimension_numbers<[1], [0], [0], [1], [0, 0, 1, 1], [], []>} : vector<512x128xbf16>, vector<128x128xbf16>, vector<512x128xf32> -> vector<512x128xf32>
    %94 = arith.addf %87, %93 : vector<512x128xf32>
    %c0_96 = arith.constant 0 : index
    %c0_97 = arith.constant 0 : index
    %c2_98 = arith.constant 2 : index
    %c0_99 = arith.constant 0 : index
    %95 = vector.load %arg14[%c0_96, %c0_97, %c2_98, %c0_99] : memref<2x18x18x128xf32, #tpu.memory_space<vmem>>, vector<2x16x16x128xf32>
    %96 = vector.shape_cast %95 : vector<2x16x16x128xf32> to vector<512x128xf32>
    %97 = arith.truncf %96 : vector<512x128xf32> to vector<512x128xbf16>
    %c2_100 = arith.constant 2 : index
    %c0_101 = arith.constant 0 : index
    %c0_102 = arith.constant 0 : index
    %98 = vector.load %arg7[%c2_100, %c0_101, %c0_102] : memref<9x128x128xbf16, #tpu.memory_space<vmem>>, vector<1x128x128xbf16>
    %99 = vector.shape_cast %98 : vector<1x128x128xbf16> to vector<128x128xbf16>
    %cst_103 = arith.constant dense<0.000000e+00> : vector<512x128xf32>
    %100 = tpu.matmul %97, %99, %cst_103 {dimension_numbers = #tpu.dot_dimension_numbers<[1], [0], [0], [1], [0, 0, 1, 1], [], []>} : vector<512x128xbf16>, vector<128x128xbf16>, vector<512x128xf32> -> vector<512x128xf32>
    %101 = arith.addf %94, %100 : vector<512x128xf32>
    %c0_104 = arith.constant 0 : index
    %c1_105 = arith.constant 1 : index
    %c0_106 = arith.constant 0 : index
    %c0_107 = arith.constant 0 : index
    %102 = vector.load %arg14[%c0_104, %c1_105, %c0_106, %c0_107] : memref<2x18x18x128xf32, #tpu.memory_space<vmem>>, vector<2x16x16x128xf32>
    %103 = vector.shape_cast %102 : vector<2x16x16x128xf32> to vector<512x128xf32>
    %104 = arith.truncf %103 : vector<512x128xf32> to vector<512x128xbf16>
    %c3_108 = arith.constant 3 : index
    %c0_109 = arith.constant 0 : index
    %c0_110 = arith.constant 0 : index
    %105 = vector.load %arg7[%c3_108, %c0_109, %c0_110] : memref<9x128x128xbf16, #tpu.memory_space<vmem>>, vector<1x128x128xbf16>
    %106 = vector.shape_cast %105 : vector<1x128x128xbf16> to vector<128x128xbf16>
    %cst_111 = arith.constant dense<0.000000e+00> : vector<512x128xf32>
    %107 = tpu.matmul %104, %106, %cst_111 {dimension_numbers = #tpu.dot_dimension_numbers<[1], [0], [0], [1], [0, 0, 1, 1], [], []>} : vector<512x128xbf16>, vector<128x128xbf16>, vector<512x128xf32> -> vector<512x128xf32>
    %108 = arith.addf %101, %107 : vector<512x128xf32>
    %c0_112 = arith.constant 0 : index
    %c1_113 = arith.constant 1 : index
    %c1_114 = arith.constant 1 : index
    %c0_115 = arith.constant 0 : index
    %109 = vector.load %arg14[%c0_112, %c1_113, %c1_114, %c0_115] : memref<2x18x18x128xf32, #tpu.memory_space<vmem>>, vector<2x16x16x128xf32>
    %110 = vector.shape_cast %109 : vector<2x16x16x128xf32> to vector<512x128xf32>
    %111 = arith.truncf %110 : vector<512x128xf32> to vector<512x128xbf16>
    %c4_116 = arith.constant 4 : index
    %c0_117 = arith.constant 0 : index
    %c0_118 = arith.constant 0 : index
    %112 = vector.load %arg7[%c4_116, %c0_117, %c0_118] : memref<9x128x128xbf16, #tpu.memory_space<vmem>>, vector<1x128x128xbf16>
    %113 = vector.shape_cast %112 : vector<1x128x128xbf16> to vector<128x128xbf16>
    %cst_119 = arith.constant dense<0.000000e+00> : vector<512x128xf32>
    %114 = tpu.matmul %111, %113, %cst_119 {dimension_numbers = #tpu.dot_dimension_numbers<[1], [0], [0], [1], [0, 0, 1, 1], [], []>} : vector<512x128xbf16>, vector<128x128xbf16>, vector<512x128xf32> -> vector<512x128xf32>
    %115 = arith.addf %108, %114 : vector<512x128xf32>
    %c0_120 = arith.constant 0 : index
    %c1_121 = arith.constant 1 : index
    %c2_122 = arith.constant 2 : index
    %c0_123 = arith.constant 0 : index
    %116 = vector.load %arg14[%c0_120, %c1_121, %c2_122, %c0_123] : memref<2x18x18x128xf32, #tpu.memory_space<vmem>>, vector<2x16x16x128xf32>
    %117 = vector.shape_cast %116 : vector<2x16x16x128xf32> to vector<512x128xf32>
    %118 = arith.truncf %117 : vector<512x128xf32> to vector<512x128xbf16>
    %c5_124 = arith.constant 5 : index
    %c0_125 = arith.constant 0 : index
    %c0_126 = arith.constant 0 : index
    %119 = vector.load %arg7[%c5_124, %c0_125, %c0_126] : memref<9x128x128xbf16, #tpu.memory_space<vmem>>, vector<1x128x128xbf16>
    %120 = vector.shape_cast %119 : vector<1x128x128xbf16> to vector<128x128xbf16>
    %cst_127 = arith.constant dense<0.000000e+00> : vector<512x128xf32>
    %121 = tpu.matmul %118, %120, %cst_127 {dimension_numbers = #tpu.dot_dimension_numbers<[1], [0], [0], [1], [0, 0, 1, 1], [], []>} : vector<512x128xbf16>, vector<128x128xbf16>, vector<512x128xf32> -> vector<512x128xf32>
    %122 = arith.addf %115, %121 : vector<512x128xf32>
    %c0_128 = arith.constant 0 : index
    %c2_129 = arith.constant 2 : index
    %c0_130 = arith.constant 0 : index
    %c0_131 = arith.constant 0 : index
    %123 = vector.load %arg14[%c0_128, %c2_129, %c0_130, %c0_131] : memref<2x18x18x128xf32, #tpu.memory_space<vmem>>, vector<2x16x16x128xf32>
    %124 = vector.shape_cast %123 : vector<2x16x16x128xf32> to vector<512x128xf32>
    %125 = arith.truncf %124 : vector<512x128xf32> to vector<512x128xbf16>
    %c6_132 = arith.constant 6 : index
    %c0_133 = arith.constant 0 : index
    %c0_134 = arith.constant 0 : index
    %126 = vector.load %arg7[%c6_132, %c0_133, %c0_134] : memref<9x128x128xbf16, #tpu.memory_space<vmem>>, vector<1x128x128xbf16>
    %127 = vector.shape_cast %126 : vector<1x128x128xbf16> to vector<128x128xbf16>
    %cst_135 = arith.constant dense<0.000000e+00> : vector<512x128xf32>
    %128 = tpu.matmul %125, %127, %cst_135 {dimension_numbers = #tpu.dot_dimension_numbers<[1], [0], [0], [1], [0, 0, 1, 1], [], []>} : vector<512x128xbf16>, vector<128x128xbf16>, vector<512x128xf32> -> vector<512x128xf32>
    %129 = arith.addf %122, %128 : vector<512x128xf32>
    %c0_136 = arith.constant 0 : index
    %c2_137 = arith.constant 2 : index
    %c1_138 = arith.constant 1 : index
    %c0_139 = arith.constant 0 : index
    %130 = vector.load %arg14[%c0_136, %c2_137, %c1_138, %c0_139] : memref<2x18x18x128xf32, #tpu.memory_space<vmem>>, vector<2x16x16x128xf32>
    %131 = vector.shape_cast %130 : vector<2x16x16x128xf32> to vector<512x128xf32>
    %132 = arith.truncf %131 : vector<512x128xf32> to vector<512x128xbf16>
    %c7_140 = arith.constant 7 : index
    %c0_141 = arith.constant 0 : index
    %c0_142 = arith.constant 0 : index
    %133 = vector.load %arg7[%c7_140, %c0_141, %c0_142] : memref<9x128x128xbf16, #tpu.memory_space<vmem>>, vector<1x128x128xbf16>
    %134 = vector.shape_cast %133 : vector<1x128x128xbf16> to vector<128x128xbf16>
    %cst_143 = arith.constant dense<0.000000e+00> : vector<512x128xf32>
    %135 = tpu.matmul %132, %134, %cst_143 {dimension_numbers = #tpu.dot_dimension_numbers<[1], [0], [0], [1], [0, 0, 1, 1], [], []>} : vector<512x128xbf16>, vector<128x128xbf16>, vector<512x128xf32> -> vector<512x128xf32>
    %136 = arith.addf %129, %135 : vector<512x128xf32>
    %c0_144 = arith.constant 0 : index
    %c2_145 = arith.constant 2 : index
    %c2_146 = arith.constant 2 : index
    %c0_147 = arith.constant 0 : index
    %137 = vector.load %arg14[%c0_144, %c2_145, %c2_146, %c0_147] : memref<2x18x18x128xf32, #tpu.memory_space<vmem>>, vector<2x16x16x128xf32>
    %138 = vector.shape_cast %137 : vector<2x16x16x128xf32> to vector<512x128xf32>
    %139 = arith.truncf %138 : vector<512x128xf32> to vector<512x128xbf16>
    %c8_148 = arith.constant 8 : index
    %c0_149 = arith.constant 0 : index
    %c0_150 = arith.constant 0 : index
    %140 = vector.load %arg7[%c8_148, %c0_149, %c0_150] : memref<9x128x128xbf16, #tpu.memory_space<vmem>>, vector<1x128x128xbf16>
    %141 = vector.shape_cast %140 : vector<1x128x128xbf16> to vector<128x128xbf16>
    %cst_151 = arith.constant dense<0.000000e+00> : vector<512x128xf32>
    %142 = tpu.matmul %139, %141, %cst_151 {dimension_numbers = #tpu.dot_dimension_numbers<[1], [0], [0], [1], [0, 0, 1, 1], [], []>} : vector<512x128xbf16>, vector<128x128xbf16>, vector<512x128xf32> -> vector<512x128xf32>
    %143 = arith.addf %136, %142 : vector<512x128xf32>
    %c0_152 = arith.constant 0 : index
    %c0_153 = arith.constant 0 : index
    %144 = vector.load %arg8[%c0_152, %c0_153] : memref<1x128xf32, #tpu.memory_space<vmem>>, vector<1x128xf32>
    %145 = vector.broadcast %144 : vector<1x128xf32> to vector<512x128xf32>
    %146 = arith.addf %143, %145 : vector<512x128xf32>
    %cst_154 = arith.constant 0.000000e+00 : f32
    %147 = vector.broadcast %cst_154 : f32 to vector<512x128xf32>
    %148 = arith.maximumf %146, %147 : vector<512x128xf32>
    %149 = arith.truncf %148 : vector<512x128xf32> to vector<512x128xbf16>
    %c0_155 = arith.constant 0 : index
    %c0_156 = arith.constant 0 : index
    %150 = vector.load %arg9[%c0_155, %c0_156] : memref<128x128xbf16, #tpu.memory_space<vmem>>, vector<128x128xbf16>
    %cst_157 = arith.constant dense<0.000000e+00> : vector<512x128xf32>
    %151 = tpu.matmul %149, %150, %cst_157 {dimension_numbers = #tpu.dot_dimension_numbers<[1], [0], [0], [1], [0, 0, 1, 1], [], []>} : vector<512x128xbf16>, vector<128x128xbf16>, vector<512x128xf32> -> vector<512x128xf32>
    %c0_158 = arith.constant 0 : index
    %c0_159 = arith.constant 0 : index
    %152 = vector.load %arg10[%c0_158, %c0_159] : memref<1x128xf32, #tpu.memory_space<vmem>>, vector<1x128xf32>
    %153 = vector.broadcast %152 : vector<1x128xf32> to vector<512x128xf32>
    %154 = arith.addf %151, %153 : vector<512x128xf32>
    %c0_160 = arith.constant 0 : index
    %c0_161 = arith.constant 0 : index
    %155 = vector.load %arg15[%c0_160, %c0_161] : memref<512x128xf32, #tpu.memory_space<vmem>>, vector<512x128xf32>
    %156 = arith.addf %154, %155 : vector<512x128xf32>
    %cst_162 = arith.constant 0.000000e+00 : f32
    %157 = vector.broadcast %cst_162 : f32 to vector<512x128xf32>
    %158 = arith.maximumf %156, %157 : vector<512x128xf32>
    %159 = vector.shape_cast %158 : vector<512x128xf32> to vector<2x256x128xf32>
    %cst_163 = arith.constant dense<0.000000e+00> : vector<2x128xf32>
    %160 = vector.multi_reduction <add>, %159, %cst_163 [1] : vector<2x256x128xf32> to vector<2x128xf32>
    %cst_164 = arith.constant 3.906250e-03 : f32
    %161 = vector.broadcast %cst_164 : f32 to vector<2x128xf32>
    %162 = arith.mulf %160, %161 : vector<2x128xf32>
    %c0_165 = arith.constant 0 : index
    %c0_166 = arith.constant 0 : index
    %163 = vector.load %arg2[%c0_165, %c0_166] : memref<2x128xf32, #tpu.memory_space<vmem>>, vector<2x128xf32>
    %164 = arith.addf %162, %163 : vector<2x128xf32>
    %165 = arith.truncf %164 : vector<2x128xf32> to vector<2x128xbf16>
    %c0_167 = arith.constant 0 : index
    %c0_168 = arith.constant 0 : index
    %166 = vector.load %arg11[%c0_167, %c0_168] : memref<128x128xbf16, #tpu.memory_space<vmem>>, vector<128x128xbf16>
    %cst_169 = arith.constant dense<0.000000e+00> : vector<2x128xf32>
    %167 = tpu.matmul %165, %166, %cst_169 {dimension_numbers = #tpu.dot_dimension_numbers<[1], [0], [0], [1], [0, 0, 1, 1], [], []>} : vector<2x128xbf16>, vector<128x128xbf16>, vector<2x128xf32> -> vector<2x128xf32>
    %c0_170 = arith.constant 0 : index
    %c0_171 = arith.constant 0 : index
    %168 = vector.load %arg12[%c0_170, %c0_171] : memref<1x128xf32, #tpu.memory_space<vmem>>, vector<1x128xf32>
    %169 = vector.broadcast %168 : vector<1x128xf32> to vector<2x128xf32>
    %170 = arith.addf %167, %169 : vector<2x128xf32>
    %c0_172 = arith.constant 0 : index
    %c0_173 = arith.constant 0 : index
    %171 = vector.load %arg13[%c0_172, %c0_173] : memref<2x128xf32, #tpu.memory_space<vmem>>, vector<2x128xf32>
    tpu.vector_store %arg13[%c0_172, %c0_173], %170 {strides = array<i32>} : memref<2x128xf32, #tpu.memory_space<vmem>>, vector<2x128xf32>,
    return
  }
  func.func @transform_0(%arg0: i32) -> (i32, i32, i32, i32) {
    %c0_i32 = arith.constant 0 : i32
    %c0_i32_0 = arith.constant 0 : i32
    %c0_i32_1 = arith.constant 0 : i32
    %c0_i32_2 = arith.constant 0 : i32
    return %arg0, %c0_i32, %c0_i32_0, %c0_i32_1 : i32, i32, i32, i32
  }
  func.func @transform_1(%arg0: i32) -> (i32, i32) {
    %c0_i32 = arith.constant 0 : i32
    %c0_i32_0 = arith.constant 0 : i32
    return %arg0, %c0_i32 : i32, i32
  }
  func.func @transform_2(%arg0: i32) -> (i32, i32, i32) {
    %c0_i32 = arith.constant 0 : i32
    %c0_i32_0 = arith.constant 0 : i32
    %c0_i32_1 = arith.constant 0 : i32
    %c0_i32_2 = arith.constant 0 : i32
    return %c0_i32, %c0_i32_0, %c0_i32_1 : i32, i32, i32
  }
  func.func @transform_3(%arg0: i32) -> (i32, i32) {
    %c0_i32 = arith.constant 0 : i32
    %c0_i32_0 = arith.constant 0 : i32
    %c0_i32_1 = arith.constant 0 : i32
    return %c0_i32, %c0_i32_0 : i32, i32
  }
  func.func @transform_4(%arg0: i32) -> (i32, i32) {
    %c0_i32 = arith.constant 0 : i32
    %c0_i32_0 = arith.constant 0 : i32
    %c0_i32_1 = arith.constant 0 : i32
    return %c0_i32, %c0_i32_0 : i32, i32
  }
  func.func @transform_5(%arg0: i32) -> (i32, i32) {
    %c0_i32 = arith.constant 0 : i32
    %c0_i32_0 = arith.constant 0 : i32
    %c0_i32_1 = arith.constant 0 : i32
    return %c0_i32, %c0_i32_0 : i32, i32
  }
  func.func @transform_6(%arg0: i32) -> (i32, i32, i32) {
    %c0_i32 = arith.constant 0 : i32
    %c0_i32_0 = arith.constant 0 : i32
    %c0_i32_1 = arith.constant 0 : i32
    %c0_i32_2 = arith.constant 0 : i32
    return %c0_i32, %c0_i32_0, %c0_i32_1 : i32, i32, i32
  }
  func.func @transform_7(%arg0: i32) -> (i32, i32) {
    %c0_i32 = arith.constant 0 : i32
    %c0_i32_0 = arith.constant 0 : i32
    %c0_i32_1 = arith.constant 0 : i32
    return %c0_i32, %c0_i32_0 : i32, i32
  }
  func.func @transform_8(%arg0: i32) -> (i32, i32) {
    %c0_i32 = arith.constant 0 : i32
    %c0_i32_0 = arith.constant 0 : i32
    %c0_i32_1 = arith.constant 0 : i32
    return %c0_i32, %c0_i32_0 : i32, i32
  }
  func.func @transform_9(%arg0: i32) -> (i32, i32) {
    %c0_i32 = arith.constant 0 : i32
    %c0_i32_0 = arith.constant 0 : i32
    %c0_i32_1 = arith.constant 0 : i32
    return %c0_i32, %c0_i32_0 : i32, i32
  }
  func.func @transform_10(%arg0: i32) -> (i32, i32) {
    %c0_i32 = arith.constant 0 : i32
    %c0_i32_0 = arith.constant 0 : i32
    %c0_i32_1 = arith.constant 0 : i32
    return %c0_i32, %c0_i32_0 : i32, i32
  }
  func.func @transform_11(%arg0: i32) -> (i32, i32) {
    %c0_i32 = arith.constant 0 : i32
    %c0_i32_0 = arith.constant 0 : i32
    %c0_i32_1 = arith.constant 0 : i32
    return %c0_i32, %c0_i32_0 : i32, i32
  }
  func.func @transform_12(%arg0: i32) -> (i32, i32) {
    %c0_i32 = arith.constant 0 : i32
    %c0_i32_0 = arith.constant 0 : i32
    return %arg0, %c0_i32 : i32, i32
  }
}

</mosaic_0001>

<llo_original>
// kernel: forward.1
$region0: #{forward.1}
  #allocation0 [shape = 'u32[]', space=smem, size = 0x4, offset = 0x4, fixed_abs, tag = 'smem constant byte address 0x4 - core index']
  #allocation1 [shape = 'u32[144,128]{1,0:T(1,128)}', space=vmem, size = 0x12000, scoped, tag = 'internal scratch']
  #allocation2 [shape = 'f32[2,18,18,128]{3,2,1,0:T(8,128)}', space=vmem, size = 0x6c000, scoped, tag = 'scratch operand']
  #allocation3 [shape = 'f32[512,128]{1,0:T(8,128)}', space=vmem, size = 0x40000, scoped, tag = 'scratch operand']
  %s0 = inlined_call_operand.vmem [shape: f32[2,18,18,128], index: 0, kind: input, shape index: {}]
  %s1 = inlined_call_operand.vmem [shape: f32[2,128], index: 1, kind: input, shape index: {}]
  %s2 = inlined_call_operand.vmem [shape: bf16[9,128,128], index: 2, kind: input, shape index: {}]
  %s3 = inlined_call_operand.vmem [shape: f32[1,128], index: 3, kind: input, shape index: {}]
  %s4 = inlined_call_operand.vmem [shape: bf16[128,128], index: 4, kind: input, shape index: {}]
  %s5 = inlined_call_operand.vmem [shape: f32[1,128], index: 5, kind: input, shape index: {}]
  %s6 = inlined_call_operand.vmem [shape: bf16[9,128,128], index: 6, kind: input, shape index: {}]
  %s7 = inlined_call_operand.vmem [shape: f32[1,128], index: 7, kind: input, shape index: {}]
  %s8 = inlined_call_operand.vmem [shape: bf16[128,128], index: 8, kind: input, shape index: {}]
  %s9 = inlined_call_operand.vmem [shape: f32[1,128], index: 9, kind: input, shape index: {}]
  %s10 = inlined_call_operand.vmem [shape: bf16[128,128], index: 10, kind: input, shape index: {}]
  %s11 = inlined_call_operand.vmem [shape: f32[1,128], index: 11, kind: input, shape index: {}]
  %s12 = inlined_call_operand.hbm [shape: f32[2,128], index: 12, kind: output, shape index: {}]
  %s13 = sld [smem:[#allocation0]]
  $region62: #{forward.1} parent=0
    _
  %s15 = ssub.s32 1, %s13
  %s16 = scalar_select 0, %s15, %s13
  $region1: #{forward.1} parent=0
    #allocation4 [shape = 'u8[1024]{0}', space=vmem, size = 0x400, scoped, tag = 'output window, operand 0, single buffered']
    #allocation5 [shape = 's32[1]{0}', space=sflag, size = 0x4, scoped, tag = 'scoped memory for forward.1']
    %17 = vsyncpa [#allocation5], 0
    // Predicated region
    $region2: #{forward.1} parent=1 // pred_check
      _
    $region3: #{forward.1} parent=1 // pred_check_branch
      %19 = sbr.rel (0) target = $region5
    $region4: #{forward.1} parent=1 // pred_region
      _
    $region5: #{forward.1} parent=1 // pred_fallthru
      _
    // Predicated region
    $region6: #{forward.1} parent=1 // pred_check
      _
    $region7: #{forward.1} parent=1 // pred_check_branch
      %21 = sbr.rel (0) target = $region9
    $region8: #{forward.1} parent=1 // pred_region
      _
    $region9: #{forward.1} parent=1 // pred_fallthru
      _
    // Predicated region
    $region10: #{forward.1} parent=1 // pred_check
      _
    $region11: #{forward.1} parent=1 // pred_check_branch
      %23 = sbr.rel (0) target = $region13
    $region12: #{forward.1} parent=1 // pred_region
      _
    $region13: #{forward.1} parent=1 // pred_fallthru
      _
    // Predicated region
    $region14: #{forward.1} parent=1 // pred_check
      _
    $region15: #{forward.1} parent=1 // pred_check_branch
      %25 = sbr.rel (0) target = $region17
    $region16: #{forward.1} parent=1 // pred_region
      _
    $region17: #{forward.1} parent=1 // pred_fallthru
      _
    // Predicated region
    $region18: #{forward.1} parent=1 // pred_check
      _
    $region19: #{forward.1} parent=1 // pred_check_branch
      %27 = sbr.rel (0) target = $region21
    $region20: #{forward.1} parent=1 // pred_region
      _
    $region21: #{forward.1} parent=1 // pred_fallthru
      _
    // Predicated region
    $region22: #{forward.1} parent=1 // pred_check
      _
    $region23: #{forward.1} parent=1 // pred_check_branch
      %29 = sbr.rel (0) target = $region25
    $region24: #{forward.1} parent=1 // pred_region
      _
    $region25: #{forward.1} parent=1 // pred_fallthru
      _
    // Predicated region
    $region26: #{forward.1} parent=1 // pred_check
      _
    $region27: #{forward.1} parent=1 // pred_check_branch
      %31 = sbr.rel (0) target = $region29
    $region28: #{forward.1} parent=1 // pred_region
      _
    $region29: #{forward.1} parent=1 // pred_fallthru
      _
    // Predicated region
    $region30: #{forward.1} parent=1 // pred_check
      _
    $region31: #{forward.1} parent=1 // pred_check_branch
      %33 = sbr.rel (0) target = $region33
    $region32: #{forward.1} parent=1 // pred_region
      _
    $region33: #{forward.1} parent=1 // pred_fallthru
      _
    // Predicated region
    $region34: #{forward.1} parent=1 // pred_check
      _
    $region35: #{forward.1} parent=1 // pred_check_branch
      %35 = sbr.rel (0) target = $region37
    $region36: #{forward.1} parent=1 // pred_region
      _
    $region37: #{forward.1} parent=1 // pred_fallthru
      _
    // Predicated region
    $region38: #{forward.1} parent=1 // pred_check
      _
    $region39: #{forward.1} parent=1 // pred_check_branch
      %37 = sbr.rel (0) target = $region41
    $region40: #{forward.1} parent=1 // pred_region
      _
    $region41: #{forward.1} parent=1 // pred_fallthru
      _
    // Predicated region
    $region42: #{forward.1} parent=1 // pred_check
      _
    $region43: #{forward.1} parent=1 // pred_check_branch
      %39 = sbr.rel (0) target = $region45
    $region44: #{forward.1} parent=1 // pred_region
      _
    $region45: #{forward.1} parent=1 // pred_fallthru
      _
    // Predicated region
    $region46: #{forward.1} parent=1 // pred_check
      _
    $region47: #{forward.1} parent=1 // pred_check_branch
      %41 = sbr.rel (0) target = $region49
    $region48: #{forward.1} parent=1 // pred_region
      _
    $region49: #{forward.1} parent=1 // pred_fallthru
      _
    %p43 = scmp.eq.s32.totalorder 0, 0
    // Predicated region
    $region50: #{forward.1} parent=1 // pred_check
      %p44 = pneg %p43
    $region51: #{forward.1} parent=1 // pred_check_branch
      %46 = sbr.rel (%p44) target = $region53
    $region52: #{forward.1} parent=1 // pred_region
      %47 = vst [vmem:[#allocation2] sm:$0xff] 0.0
      %48 = vst [vmem:[#allocation2 + $0x8] sm:$0xff] 0.0
      %49 = vst [vmem:[#allocation2 + $0x10] sm:$0x3] 0.0
      %50 = vst [vmem:[#allocation2 + $0x18] sm:$0xff] 0.0
      %51 = vst [vmem:[#allocation2 + $0x20] sm:$0xff] 0.0
      %52 = vst [vmem:[#allocation2 + $0x28] sm:$0x3] 0.0
      %53 = vst [vmem:[#allocation2 + $0x30] sm:$0xff] 0.0
      %54 = vst [vmem:[#allocation2 + $0x38] sm:$0xff] 0.0
      %55 = vst [vmem:[#allocation2 + $0x40] sm:$0x3] 0.0
      %56 = vst [vmem:[#allocation2 + $0x48] sm:$0xff] 0.0
      %57 = vst [vmem:[#allocation2 + $0x50] sm:$0xff] 0.0
      %58 = vst [vmem:[#allocation2 + $0x58] sm:$0x3] 0.0
      %59 = vst [vmem:[#allocation2 + $0x60] sm:$0xff] 0.0
      %60 = vst [vmem:[#allocation2 + $0x68] sm:$0xff] 0.0
      %61 = vst [vmem:[#allocation2 + $0x70] sm:$0x3] 0.0
      %62 = vst [vmem:[#allocation2 + $0x78] sm:$0xff] 0.0
      %63 = vst [vmem:[#allocation2 + $0x80] sm:$0xff] 0.0
      %64 = vst [vmem:[#allocation2 + $0x88] sm:$0x3] 0.0
      %65 = vst [vmem:[#allocation2 + $0x90] sm:$0xff] 0.0
      %66 = vst [vmem:[#allocation2 + $0x98] sm:$0xff] 0.0
      %67 = vst [vmem:[#allocation2 + $0xa0] sm:$0x3] 0.0
      %68 = vst [vmem:[#allocation2 + $0xa8] sm:$0xff] 0.0
      %69 = vst [vmem:[#allocation2 + $0xb0] sm:$0xff] 0.0
      %70 = vst [vmem:[#allocation2 + $0xb8] sm:$0x3] 0.0
      %71 = vst [vmem:[#allocation2 + $0xc0] sm:$0xff] 0.0
      %72 = vst [vmem:[#allocation2 + $0xc8] sm:$0xff] 0.0
      %73 = vst [vmem:[#allocation2 + $0xd0] sm:$0x3] 0.0
      %74 = vst [vmem:[#allocation2 + $0xd8] sm:$0xff] 0.0
      %75 = vst [vmem:[#allocation2 + $0xe0] sm:$0xff] 0.0
      %76 = vst [vmem:[#allocation2 + $0xe8] sm:$0x3] 0.0
      %77 = vst [vmem:[#allocation2 + $0xf0] sm:$0xff] 0.0
      %78 = vst [vmem:[#allocation2 + $0xf8] sm:$0xff] 0.0
      %79 = vst [vmem:[#allocation2 + $0x100] sm:$0x3] 0.0
      %80 = vst [vmem:[#allocation2 + $0x108] sm:$0xff] 0.0
      %81 = vst [vmem:[#allocation2 + $0x110] sm:$0xff] 0.0
      %82 = vst [vmem:[#allocation2 + $0x118] sm:$0x3] 0.0
      %83 = vst [vmem:[#allocation2 + $0x120] sm:$0xff] 0.0
      %84 = vst [vmem:[#allocation2 + $0x128] sm:$0xff] 0.0
      %85 = vst [vmem:[#allocation2 + $0x130] sm:$0x3] 0.0
      %86 = vst [vmem:[#allocation2 + $0x138] sm:$0xff] 0.0
      %87 = vst [vmem:[#allocation2 + $0x140] sm:$0xff] 0.0
      %88 = vst [vmem:[#allocation2 + $0x148] sm:$0x3] 0.0
      %89 = vst [vmem:[#allocation2 + $0x150] sm:$0xff] 0.0
      %90 = vst [vmem:[#allocation2 + $0x158] sm:$0xff] 0.0
      %91 = vst [vmem:[#allocation2 + $0x160] sm:$0x3] 0.0
      %92 = vst [vmem:[#allocation2 + $0x168] sm:$0xff] 0.0
      %93 = vst [vmem:[#allocation2 + $0x170] sm:$0xff] 0.0
      %94 = vst [vmem:[#allocation2 + $0x178] sm:$0x3] 0.0
      %95 = vst [vmem:[#allocation2 + $0x180] sm:$0xff] 0.0
      %96 = vst [vmem:[#allocation2 + $0x188] sm:$0xff] 0.0
      %97 = vst [vmem:[#allocation2 + $0x190] sm:$0x3] 0.0
      %98 = vst [vmem:[#allocation2 + $0x198] sm:$0xff] 0.0
      %99 = vst [vmem:[#allocation2 + $0x1a0] sm:$0xff] 0.0
      %100 = vst [vmem:[#allocation2 + $0x1a8] sm:$0x3] 0.0
      %101 = vst [vmem:[#allocation2 + $0x1b0] sm:$0xff] 0.0
      %102 = vst [vmem:[#allocation2 + $0x1b8] sm:$0xff] 0.0
      %103 = vst [vmem:[#allocation2 + $0x1c0] sm:$0x3] 0.0
      %104 = vst [vmem:[#allocation2 + $0x1c8] sm:$0xff] 0.0
      %105 = vst [vmem:[#allocation2 + $0x1d0] sm:$0xff] 0.0
      %106 = vst [vmem:[#allocation2 + $0x1d8] sm:$0x3] 0.0
      %107 = vst [vmem:[#allocation2 + $0x1e0] sm:$0xff] 0.0
      %108 = vst [vmem:[#allocation2 + $0x1e8] sm:$0xff] 0.0
      %109 = vst [vmem:[#allocation2 + $0x1f0] sm:$0x3] 0.0
      %110 = vst [vmem:[#allocation2 + $0x1f8] sm:$0xff] 0.0
      %111 = vst [vmem:[#allocation2 + $0x200] sm:$0xff] 0.0
      %112 = vst [vmem:[#allocation2 + $0x208] sm:$0x3] 0.0
      %113 = vst [vmem:[#allocation2 + $0x210] sm:$0xff] 0.0
      %114 = vst [vmem:[#allocation2 + $0x218] sm:$0xff] 0.0
      %115 = vst [vmem:[#allocation2 + $0x220] sm:$0x3] 0.0
      %116 = vst [vmem:[#allocation2 + $0x228] sm:$0xff] 0.0
      %117 = vst [vmem:[#allocation2 + $0x230] sm:$0xff] 0.0
      %118 = vst [vmem:[#allocation2 + $0x238] sm:$0x3] 0.0
      %119 = vst [vmem:[#allocation2 + $0x240] sm:$0xff] 0.0
      %120 = vst [vmem:[#allocation2 + $0x248] sm:$0xff] 0.0
      %121 = vst [vmem:[#allocation2 + $0x250] sm:$0x3] 0.0
      %122 = vst [vmem:[#allocation2 + $0x258] sm:$0xff] 0.0
      %123 = vst [vmem:[#allocation2 + $0x260] sm:$0xff] 0.0
      %124 = vst [vmem:[#allocation2 + $0x268] sm:$0x3] 0.0
      %125 = vst [vmem:[#allocation2 + $0x270] sm:$0xff] 0.0
      %126 = vst [vmem:[#allocation2 + $0x278] sm:$0xff] 0.0
      %127 = vst [vmem:[#allocation2 + $0x280] sm:$0x3] 0.0
      %128 = vst [vmem:[#allocation2 + $0x288] sm:$0xff] 0.0
      %129 = vst [vmem:[#allocation2 + $0x290] sm:$0xff] 0.0
      %130 = vst [vmem:[#allocation2 + $0x298] sm:$0x3] 0.0
      %131 = vst [vmem:[#allocation2 + $0x2a0] sm:$0xff] 0.0
      %132 = vst [vmem:[#allocation2 + $0x2a8] sm:$0xff] 0.0
      %133 = vst [vmem:[#allocation2 + $0x2b0] sm:$0x3] 0.0
      %134 = vst [vmem:[#allocation2 + $0x2b8] sm:$0xff] 0.0
      %135 = vst [vmem:[#allocation2 + $0x2c0] sm:$0xff] 0.0
      %136 = vst [vmem:[#allocation2 + $0x2c8] sm:$0x3] 0.0
      %137 = vst [vmem:[#allocation2 + $0x2d0] sm:$0xff] 0.0
      %138 = vst [vmem:[#allocation2 + $0x2d8] sm:$0xff] 0.0
      %139 = vst [vmem:[#allocation2 + $0x2e0] sm:$0x3] 0.0
      %140 = vst [vmem:[#allocation2 + $0x2e8] sm:$0xff] 0.0
      %141 = vst [vmem:[#allocation2 + $0x2f0] sm:$0xff] 0.0
      %142 = vst [vmem:[#allocation2 + $0x2f8] sm:$0x3] 0.0
      %143 = vst [vmem:[#allocation2 + $0x300] sm:$0xff] 0.0
      %144 = vst [vmem:[#allocation2 + $0x308] sm:$0xff] 0.0
      %145 = vst [vmem:[#allocation2 + $0x310] sm:$0x3] 0.0
      %146 = vst [vmem:[#allocation2 + $0x318] sm:$0xff] 0.0
      %147 = vst [vmem:[#allocation2 + $0x320] sm:$0xff] 0.0
      %148 = vst [vmem:[#allocation2 + $0x328] sm:$0x3] 0.0
      %149 = vst [vmem:[#allocation2 + $0x330] sm:$0xff] 0.0
      %150 = vst [vmem:[#allocation2 + $0x338] sm:$0xff] 0.0
      %151 = vst [vmem:[#allocation2 + $0x340] sm:$0x3] 0.0
      %152 = vst [vmem:[#allocation2 + $0x348] sm:$0xff] 0.0
      %153 = vst [vmem:[#allocation2 + $0x350] sm:$0xff] 0.0
      %154 = vst [vmem:[#allocation2 + $0x358] sm:$0x3] 0.0
    $region53: #{forward.1} parent=1 // pred_fallthru
      _
    %v155 = vld [vmem:[%s0] sm:$0xff]
    %v156 = vld [vmem:[%s0 + $0x8] sm:$0xff]
    %v157 = vld [vmem:[%s0 + $0x18] sm:$0xff]
    %v158 = vld [vmem:[%s0 + $0x20] sm:$0xff]
    %v159 = vld [vmem:[%s0 + $0x30] sm:$0xff]
    %v160 = vld [vmem:[%s0 + $0x38] sm:$0xff]
    %v161 = vld [vmem:[%s0 + $0x48] sm:$0xff]
    %v162 = vld [vmem:[%s0 + $0x50] sm:$0xff]
    %v163 = vld [vmem:[%s0 + $0x60] sm:$0xff]
    %v164 = vld [vmem:[%s0 + $0x68] sm:$0xff]
    %v165 = vld [vmem:[%s0 + $0x78] sm:$0xff]
    %v166 = vld [vmem:[%s0 + $0x80] sm:$0xff]
    %v167 = vld [vmem:[%s0 + $0x90] sm:$0xff]
    %v168 = vld [vmem:[%s0 + $0x98] sm:$0xff]
    %v169 = vld [vmem:[%s0 + $0xa8] sm:$0xff]
    %v170 = vld [vmem:[%s0 + $0xb0] sm:$0xff]
    %v171 = vld [vmem:[%s0 + $0xc0] sm:$0xff]
    %v172 = vld [vmem:[%s0 + $0xc8] sm:$0xff]
    %v173 = vld [vmem:[%s0 + $0xd8] sm:$0xff]
    %v174 = vld [vmem:[%s0 + $0xe0] sm:$0xff]
    %v175 = vld [vmem:[%s0 + $0xf0] sm:$0xff]
    %v176 = vld [vmem:[%s0 + $0xf8] sm:$0xff]
    %v177 = vld [vmem:[%s0 + $0x108] sm:$0xff]
    %v178 = vld [vmem:[%s0 + $0x110] sm:$0xff]
    %v179 = vld [vmem:[%s0 + $0x120] sm:$0xff]
    %v180 = vld [vmem:[%s0 + $0x128] sm:$0xff]
    %v181 = vld [vmem:[%s0 + $0x138] sm:$0xff]
    %v182 = vld [vmem:[%s0 + $0x140] sm:$0xff]
    %v183 = vld [vmem:[%s0 + $0x150] sm:$0xff]
    %v184 = vld [vmem:[%s0 + $0x158] sm:$0xff]
    %v185 = vld [vmem:[%s0 + $0x168] sm:$0xff]
    %v186 = vld [vmem:[%s0 + $0x170] sm:$0xff]
    %v187 = vld [vmem:[%s0 + $0x1b0] sm:$0xff]
    %v188 = vld [vmem:[%s0 + $0x1b8] sm:$0xff]
    %v189 = vld [vmem:[%s0 + $0x1c8] sm:$0xff]
    %v190 = vld [vmem:[%s0 + $0x1d0] sm:$0xff]
    %v191 = vld [vmem:[%s0 + $0x1e0] sm:$0xff]
    %v192 = vld [vmem:[%s0 + $0x1e8] sm:$0xff]
    %v193 = vld [vmem:[%s0 + $0x1f8] sm:$0xff]
    %v194 = vld [vmem:[%s0 + $0x200] sm:$0xff]
    %v195 = vld [vmem:[%s0 + $0x210] sm:$0xff]
    %v196 = vld [vmem:[%s0 + $0x218] sm:$0xff]
    %v197 = vld [vmem:[%s0 + $0x228] sm:$0xff]
    %v198 = vld [vmem:[%s0 + $0x230] sm:$0xff]
    %v199 = vld [vmem:[%s0 + $0x240] sm:$0xff]
    %v200 = vld [vmem:[%s0 + $0x248] sm:$0xff]
    %v201 = vld [vmem:[%s0 + $0x258] sm:$0xff]
    %v202 = vld [vmem:[%s0 + $0x260] sm:$0xff]
    %v203 = vld [vmem:[%s0 + $0x270] sm:$0xff]
    %v204 = vld [vmem:[%s0 + $0x278] sm:$0xff]
    %v205 = vld [vmem:[%s0 + $0x288] sm:$0xff]
    %v206 = vld [vmem:[%s0 + $0x290] sm:$0xff]
    %v207 = vld [vmem:[%s0 + $0x2a0] sm:$0xff]
    %v208 = vld [vmem:[%s0 + $0x2a8] sm:$0xff]
    %v209 = vld [vmem:[%s0 + $0x2b8] sm:$0xff]
    %v210 = vld [vmem:[%s0 + $0x2c0] sm:$0xff]
    %v211 = vld [vmem:[%s0 + $0x2d0] sm:$0xff]
    %v212 = vld [vmem:[%s0 + $0x2d8] sm:$0xff]
    %v213 = vld [vmem:[%s0 + $0x2e8] sm:$0xff]
    %v214 = vld [vmem:[%s0 + $0x2f0] sm:$0xff]
    %v215 = vld [vmem:[%s0 + $0x300] sm:$0xff]
    %v216 = vld [vmem:[%s0 + $0x308] sm:$0xff]
    %v217 = vld [vmem:[%s0 + $0x318] sm:$0xff]
    %v218 = vld [vmem:[%s0 + $0x320] sm:$0xff]
    %v219 = vpack.c.bf16 %v156, %v155
    %v220 = vpack.c.bf16 %v158, %v157
    %v221 = vpack.c.bf16 %v160, %v159
    %v222 = vpack.c.bf16 %v162, %v161
    %v223 = vpack.c.bf16 %v164, %v163
    %v224 = vpack.c.bf16 %v166, %v165
    %v225 = vpack.c.bf16 %v168, %v167
    %v226 = vpack.c.bf16 %v170, %v169
    %v227 = vpack.c.bf16 %v172, %v171
    %v228 = vpack.c.bf16 %v174, %v173
    %v229 = vpack.c.bf16 %v176, %v175
    %v230 = vpack.c.bf16 %v178, %v177
    %v231 = vpack.c.bf16 %v180, %v179
    %v232 = vpack.c.bf16 %v182, %v181
    %v233 = vpack.c.bf16 %v184, %v183
    %v234 = vpack.c.bf16 %v186, %v185
    %v235 = vpack.c.bf16 %v188, %v187
    %v236 = vpack.c.bf16 %v190, %v189
    %v237 = vpack.c.bf16 %v192, %v191
    %v238 = vpack.c.bf16 %v194, %v193
    %v239 = vpack.c.bf16 %v196, %v195
    %v240 = vpack.c.bf16 %v198, %v197
    %v241 = vpack.c.bf16 %v200, %v199
    %v242 = vpack.c.bf16 %v202, %v201
    %v243 = vpack.c.bf16 %v204, %v203
    %v244 = vpack.c.bf16 %v206, %v205
    %v245 = vpack.c.bf16 %v208, %v207
    %v246 = vpack.c.bf16 %v210, %v209
    %v247 = vpack.c.bf16 %v212, %v211
    %v248 = vpack.c.bf16 %v214, %v213
    %v249 = vpack.c.bf16 %v216, %v215
    %v250 = vpack.c.bf16 %v218, %v217
    %v251 = vld [vmem:[%s2] sm:$0xf]
    %v252 = vld [vmem:[%s2 + $0x4] sm:$0xf]
    %v253 = vld [vmem:[%s2 + $0x8] sm:$0xf]
    %v254 = vld [vmem:[%s2 + $0xc] sm:$0xf]
    %v255 = vld [vmem:[%s2 + $0x10] sm:$0xf]
    %v256 = vld [vmem:[%s2 + $0x14] sm:$0xf]
    %v257 = vld [vmem:[%s2 + $0x18] sm:$0xf]
    %v258 = vld [vmem:[%s2 + $0x1c] sm:$0xf]
    %v259 = vld [vmem:[%s2 + $0x20] sm:$0xf]
    %v260 = vld [vmem:[%s2 + $0x24] sm:$0xf]
    %v261 = vld [vmem:[%s2 + $0x28] sm:$0xf]
    %v262 = vld [vmem:[%s2 + $0x2c] sm:$0xf]
    %v263 = vld [vmem:[%s2 + $0x30] sm:$0xf]
    %v264 = vld [vmem:[%s2 + $0x34] sm:$0xf]
    %v265 = vld [vmem:[%s2 + $0x38] sm:$0xf]
    %v266 = vld [vmem:[%s2 + $0x3c] sm:$0xf]
    %v267 = vld [vmem:[%s0 + $0x1] sm:$0xff]
    %v268 = vld [vmem:[%s0 + $0x9] sm:$0xff]
    %v269 = vld [vmem:[%s0 + $0x19] sm:$0xff]
    %v270 = vld [vmem:[%s0 + $0x21] sm:$0xff]
    %v271 = vld [vmem:[%s0 + $0x31] sm:$0xff]
    %v272 = vld [vmem:[%s0 + $0x39] sm:$0xff]
    %v273 = vld [vmem:[%s0 + $0x49] sm:$0xff]
    %v274 = vld [vmem:[%s0 + $0x51] sm:$0xff]
    %v275 = vld [vmem:[%s0 + $0x61] sm:$0xff]
    %v276 = vld [vmem:[%s0 + $0x69] sm:$0xff]
    %v277 = vld [vmem:[%s0 + $0x79] sm:$0xff]
    %v278 = vld [vmem:[%s0 + $0x81] sm:$0xff]
    %v279 = vld [vmem:[%s0 + $0x91] sm:$0xff]
    %v280 = vld [vmem:[%s0 + $0x99] sm:$0xff]
    %v281 = vld [vmem:[%s0 + $0xa9] sm:$0xff]
    %v282 = vld [vmem:[%s0 + $0xb1] sm:$0xff]
    %v283 = vld [vmem:[%s0 + $0xc1] sm:$0xff]
    %v284 = vld [vmem:[%s0 + $0xc9] sm:$0xff]
    %v285 = vld [vmem:[%s0 + $0xd9] sm:$0xff]
    %v286 = vld [vmem:[%s0 + $0xe1] sm:$0xff]
    %v287 = vld [vmem:[%s0 + $0xf1] sm:$0xff]
    %v288 = vld [vmem:[%s0 + $0xf9] sm:$0xff]
    %v289 = vld [vmem:[%s0 + $0x109] sm:$0xff]
    %v290 = vld [vmem:[%s0 + $0x111] sm:$0xff]
    %v291 = vld [vmem:[%s0 + $0x121] sm:$0xff]
    %v292 = vld [vmem:[%s0 + $0x129] sm:$0xff]
    %v293 = vld [vmem:[%s0 + $0x139] sm:$0xff]
    %v294 = vld [vmem:[%s0 + $0x141] sm:$0xff]
    %v295 = vld [vmem:[%s0 + $0x151] sm:$0xff]
    %v296 = vld [vmem:[%s0 + $0x159] sm:$0xff]
    %v297 = vld [vmem:[%s0 + $0x169] sm:$0xff]
    %v298 = vld [vmem:[%s0 + $0x171] sm:$0xff]
    %v299 = vld [vmem:[%s0 + $0x1b1] sm:$0xff]
    %v300 = vld [vmem:[%s0 + $0x1b9] sm:$0xff]
    %v301 = vld [vmem:[%s0 + $0x1c9] sm:$0xff]
    %v302 = vld [vmem:[%s0 + $0x1d1] sm:$0xff]
    %v303 = vld [vmem:[%s0 + $0x1e1] sm:$0xff]
    %v304 = vld [vmem:[%s0 + $0x1e9] sm:$0xff]
    %v305 = vld [vmem:[%s0 + $0x1f9] sm:$0xff]
    %v306 = vld [vmem:[%s0 + $0x201] sm:$0xff]
    %v307 = vld [vmem:[%s0 + $0x211] sm:$0xff]
    %v308 = vld [vmem:[%s0 + $0x219] sm:$0xff]
    %v309 = vld [vmem:[%s0 + $0x229] sm:$0xff]
    %v310 = vld [vmem:[%s0 + $0x231] sm:$0xff]
    %v311 = vld [vmem:[%s0 + $0x241] sm:$0xff]
    %v312 = vld [vmem:[%s0 + $0x249] sm:$0xff]
    %v313 = vld [vmem:[%s0 + $0x259] sm:$0xff]
    %v314 = vld [vmem:[%s0 + $0x261] sm:$0xff]
    %v315 = vld [vmem:[%s0 + $0x271] sm:$0xff]
    %v316 = vld [vmem:[%s0 + $0x279] sm:$0xff]
    %v317 = vld [vmem:[%s0 + $0x289] sm:$0xff]
    %v318 = vld [vmem:[%s0 + $0x291] sm:$0xff]
    %v319 = vld [vmem:[%s0 + $0x2a1] sm:$0xff]
    %v320 = vld [vmem:[%s0 + $0x2a9] sm:$0xff]
    %v321 = vld [vmem:[%s0 + $0x2b9] sm:$0xff]
    %v322 = vld [vmem:[%s0 + $0x2c1] sm:$0xff]
    %v323 = vld [vmem:[%s0 + $0x2d1] sm:$0xff]
    %v324 = vld [vmem:[%s0 + $0x2d9] sm:$0xff]
    %v325 = vld [vmem:[%s0 + $0x2e9] sm:$0xff]
    %v326 = vld [vmem:[%s0 + $0x2f1] sm:$0xff]
    %v327 = vld [vmem:[%s0 + $0x301] sm:$0xff]
    %v328 = vld [vmem:[%s0 + $0x309] sm:$0xff]
    %v329 = vld [vmem:[%s0 + $0x319] sm:$0xff]
    %v330 = vld [vmem:[%s0 + $0x321] sm:$0xff]
    %v331 = vpack.c.bf16 %v268, %v267
    %v332 = vpack.c.bf16 %v270, %v269
    %v333 = vpack.c.bf16 %v272, %v271
    %v334 = vpack.c.bf16 %v274, %v273
    %v335 = vpack.c.bf16 %v276, %v275
    %v336 = vpack.c.bf16 %v278, %v277
    %v337 = vpack.c.bf16 %v280, %v279
    %v338 = vpack.c.bf16 %v282, %v281
    %v339 = vpack.c.bf16 %v284, %v283
    %v340 = vpack.c.bf16 %v286, %v285
    %v341 = vpack.c.bf16 %v288, %v287
    %v342 = vpack.c.bf16 %v290, %v289
    %v343 = vpack.c.bf16 %v292, %v291
    %v344 = vpack.c.bf16 %v294, %v293
    %v345 = vpack.c.bf16 %v296, %v295
    %v346 = vpack.c.bf16 %v298, %v297
    %v347 = vpack.c.bf16 %v300, %v299
    %v348 = vpack.c.bf16 %v302, %v301
    %v349 = vpack.c.bf16 %v304, %v303
    %v350 = vpack.c.bf16 %v306, %v305
    %v351 = vpack.c.bf16 %v308, %v307
    %v352 = vpack.c.bf16 %v310, %v309
    %v353 = vpack.c.bf16 %v312, %v311
    %v354 = vpack.c.bf16 %v314, %v313
    %v355 = vpack.c.bf16 %v316, %v315
    %v356 = vpack.c.bf16 %v318, %v317
    %v357 = vpack.c.bf16 %v320, %v319
    %v358 = vpack.c.bf16 %v322, %v321
    %v359 = vpack.c.bf16 %v324, %v323
    %v360 = vpack.c.bf16 %v326, %v325
    %v361 = vpack.c.bf16 %v328, %v327
    %v362 = vpack.c.bf16 %v330, %v329
    %s363 = scalar_lea.vmem %s2, 64
    %v364 = vld [vmem:[%s363] sm:$0xf]
    %v365 = vld [vmem:[%s363 + $0x4] sm:$0xf]
    %v366 = vld [vmem:[%s363 + $0x8] sm:$0xf]
    %v367 = vld [vmem:[%s363 + $0xc] sm:$0xf]
    %v368 = vld [vmem:[%s363 + $0x10] sm:$0xf]
    %v369 = vld [vmem:[%s363 + $0x14] sm:$0xf]
    %v370 = vld [vmem:[%s363 + $0x18] sm:$0xf]
    %v371 = vld [vmem:[%s363 + $0x1c] sm:$0xf]
    %v372 = vld [vmem:[%s363 + $0x20] sm:$0xf]
    %v373 = vld [vmem:[%s363 + $0x24] sm:$0xf]
    %v374 = vld [vmem:[%s363 + $0x28] sm:$0xf]
    %v375 = vld [vmem:[%s363 + $0x2c] sm:$0xf]
    %v376 = vld [vmem:[%s363 + $0x30] sm:$0xf]
    %v377 = vld [vmem:[%s363 + $0x34] sm:$0xf]
    %v378 = vld [vmem:[%s363 + $0x38] sm:$0xf]
    %v379 = vld [vmem:[%s363 + $0x3c] sm:$0xf]
    %v396 = vunpack.c.l.b16 %v364
    %v397 = vunpack.c.l.b16 %v365
    %v398 = vunpack.c.l.b16 %v366
    %v399 = vunpack.c.l.b16 %v367
    %v400 = vunpack.c.l.b16 %v368
    %v401 = vunpack.c.l.b16 %v369
    %v402 = vunpack.c.l.b16 %v370
    %v403 = vunpack.c.l.b16 %v371
    %v404 = vunpack.c.l.b16 %v372
    %v405 = vunpack.c.l.b16 %v373
    %v406 = vunpack.c.l.b16 %v374
    %v407 = vunpack.c.l.b16 %v375
    %v408 = vunpack.c.l.b16 %v376
    %v409 = vunpack.c.l.b16 %v377
    %v410 = vunpack.c.l.b16 %v378
    %v411 = vunpack.c.l.b16 %v379
    %v412 = vpack.c.b16 %v397, %v396
    %v413 = vpack.c.b16 %v399, %v398
    %v414 = vpack.c.b16 %v401, %v400
    %v415 = vpack.c.b16 %v403, %v402
    %v416 = vpack.c.b16 %v405, %v404
    %v417 = vpack.c.b16 %v407, %v406
    %v418 = vpack.c.b16 %v409, %v408
    %v419 = vpack.c.b16 %v411, %v410
    %428 = vmatprep.subr.bf16.mxu0 0
    %429 = vmatpush1.bf16.msra.mxu0 %v419
    %430 = vmatprep.subr.bf16.mxu0 0
    %431 = vmatpush1.bf16.msra.mxu0 %v418
    %432 = vmatprep.subr.bf16.mxu0 0
    %433 = vmatpush1.bf16.msra.mxu0 %v417
    %434 = vmatprep.subr.bf16.mxu0 0
    %435 = vmatpush1.bf16.msra.mxu0 %v416
    %436 = vmatprep.subr.bf16.mxu0 0
    %437 = vmatpush1.bf16.msra.mxu0 %v415
    %438 = vmatprep.subr.bf16.mxu0 0
    %439 = vmatpush1.bf16.msra.mxu0 %v414
    %440 = vmatprep.subr.bf16.mxu0 0
    %441 = vmatpush1.bf16.msra.mxu0 %v413
    %442 = vmatprep.subr.bf16.mxu0 0
    %443 = vmatpush1.bf16.msra.mxu0 %v412
    %444 = vmatprep.subr.bf16.mxu0 0
    %445 = vmatpush2.bf16.msra.mxu0 0
    %446 = vmatprep.subr.bf16.mxu0 0
    %447 = vmatpush2.bf16.msra.mxu0 0
    %448 = vmatprep.subr.bf16.mxu0 0
    %449 = vmatpush2.bf16.msra.mxu0 0
    %450 = vmatprep.subr.bf16.mxu0 0
    %451 = vmatpush2.bf16.msra.mxu0 0
    %452 = vmatprep.subr.bf16.mxu0 0
    %453 = vmatpush2.bf16.msra.mxu0 0
    %454 = vmatprep.subr.bf16.mxu0 0
    %455 = vmatpush2.bf16.msra.mxu0 0
    %456 = vmatprep.subr.bf16.mxu0 0
    %457 = vmatpush2.bf16.msra.mxu0 0
    %458 = vmatprep.subr.bf16.mxu0 0
    %459 = vmatpush2.bf16.msra.mxu0 0
    %460 = vmatprep.mubr.bf16.mxu0 0
    %461 = vmatmul.mubr.bf16.gmra.mxu0 %v331
    %v462 = vpop.f32.mrf.mxu0
    %v463 = vadd.f32 0.0, %v462
    %v464 = vpop.f32.mrf.mxu0
    %v465 = vpop.f32.mrf.mxu0
    %v466 = vadd.f32 0.0, %v465
    %v467 = vpop.f32.mrf.mxu0
    %468 = vmatprep.mubr.bf16.mxu0 0
    %469 = vmatmul.mubr.bf16.gmra.mxu0 %v332
    %v470 = vpop.f32.mrf.mxu0
    %v471 = vadd.f32 0.0, %v470
    %v472 = vpop.f32.mrf.mxu0
    %v473 = vpop.f32.mrf.mxu0
    %v474 = vadd.f32 0.0, %v473
    %v475 = vpop.f32.mrf.mxu0
    %476 = vmatprep.mubr.bf16.mxu0 0
    %477 = vmatmul.mubr.bf16.gmra.mxu0 %v333
    %v478 = vpop.f32.mrf.mxu0
    %v479 = vadd.f32 0.0, %v478
    %v480 = vpop.f32.mrf.mxu0
    %v481 = vpop.f32.mrf.mxu0
    %v482 = vadd.f32 0.0, %v481
    %v483 = vpop.f32.mrf.mxu0
    %484 = vmatprep.mubr.bf16.mxu0 0
    %485 = vmatmul.mubr.bf16.gmra.mxu0 %v334
    %v486 = vpop.f32.mrf.mxu0
    %v487 = vadd.f32 0.0, %v486
    %v488 = vpop.f32.mrf.mxu0
    %v489 = vpop.f32.mrf.mxu0
    %v490 = vadd.f32 0.0, %v489
    %v491 = vpop.f32.mrf.mxu0
    %492 = vmatprep.mubr.bf16.mxu0 0
    %493 = vmatmul.mubr.bf16.gmra.mxu0 %v335
    %v494 = vpop.f32.mrf.mxu0
    %v495 = vadd.f32 0.0, %v494
    %v496 = vpop.f32.mrf.mxu0
    %v497 = vpop.f32.mrf.mxu0
    %v498 = vadd.f32 0.0, %v497
    %v499 = vpop.f32.mrf.mxu0
    %500 = vmatprep.mubr.bf16.mxu0 0
    %501 = vmatmul.mubr.bf16.gmra.mxu0 %v336
    %v502 = vpop.f32.mrf.mxu0
    %v503 = vadd.f32 0.0, %v502
    %v504 = vpop.f32.mrf.mxu0
    %v505 = vpop.f32.mrf.mxu0
    %v506 = vadd.f32 0.0, %v505
    %v507 = vpop.f32.mrf.mxu0
    %508 = vmatprep.mubr.bf16.mxu0 0
    %509 = vmatmul.mubr.bf16.gmra.mxu0 %v337
    %v510 = vpop.f32.mrf.mxu0
    %v511 = vadd.f32 0.0, %v510
    %v512 = vpop.f32.mrf.mxu0
    %v513 = vpop.f32.mrf.mxu0
    %v514 = vadd.f32 0.0, %v513
    %v515 = vpop.f32.mrf.mxu0
    %516 = vmatprep.mubr.bf16.mxu0 0
    %517 = vmatmul.mubr.bf16.gmra.mxu0 %v338
    %v518 = vpop.f32.mrf.mxu0
    %v519 = vadd.f32 0.0, %v518
    %v520 = vpop.f32.mrf.mxu0
    %v521 = vpop.f32.mrf.mxu0
    %v522 = vadd.f32 0.0, %v521
    %v523 = vpop.f32.mrf.mxu0
    %524 = vmatprep.mubr.bf16.mxu0 0
    %525 = vmatmul.mubr.bf16.gmra.mxu0 %v339
    %v526 = vpop.f32.mrf.mxu0
    %v527 = vadd.f32 0.0, %v526
    %v528 = vpop.f32.mrf.mxu0
    %v529 = vpop.f32.mrf.mxu0
    %v530 = vadd.f32 0.0, %v529
    %v531 = vpop.f32.mrf.mxu0
    %532 = vmatprep.mubr.bf16.mxu0 0
    %533 = vmatmul.mubr.bf16.gmra.mxu0 %v340
    %v534 = vpop.f32.mrf.mxu0
    %v535 = vadd.f32 0.0, %v534
    %v536 = vpop.f32.mrf.mxu0
    %v537 = vpop.f32.mrf.mxu0
    %v538 = vadd.f32 0.0, %v537
    %v539 = vpop.f32.mrf.mxu0
    %540 = vmatprep.mubr.bf16.mxu0 0
    %541 = vmatmul.mubr.bf16.gmra.mxu0 %v341
    %v542 = vpop.f32.mrf.mxu0
    %v543 = vadd.f32 0.0, %v542
    %v544 = vpop.f32.mrf.mxu0
    %v545 = vpop.f32.mrf.mxu0
    %v546 = vadd.f32 0.0, %v545
    %v547 = vpop.f32.mrf.mxu0
    %548 = vmatprep.mubr.bf16.mxu0 0
    %549 = vmatmul.mubr.bf16.gmra.mxu0 %v342
    %v550 = vpop.f32.mrf.mxu0
    %v551 = vadd.f32 0.0, %v550
    %v552 = vpop.f32.mrf.mxu0
    %v553 = vpop.f32.mrf.mxu0
    %v554 = vadd.f32 0.0, %v553
    %v555 = vpop.f32.mrf.mxu0
    %556 = vmatprep.mubr.bf16.mxu0 0
    %557 = vmatmul.mubr.bf16.gmra.mxu0 %v343
    %v558 = vpop.f32.mrf.mxu0
    %v559 = vadd.f32 0.0, %v558
    %v560 = vpop.f32.mrf.mxu0
    %v561 = vpop.f32.mrf.mxu0
    %v562 = vadd.f32 0.0, %v561
    %v563 = vpop.f32.mrf.mxu0
    %564 = vmatprep.mubr.bf16.mxu0 0
    %565 = vmatmul.mubr.bf16.gmra.mxu0 %v344
    %v566 = vpop.f32.mrf.mxu0
    %v567 = vadd.f32 0.0, %v566
    %v568 = vpop.f32.mrf.mxu0
    %v569 = vpop.f32.mrf.mxu0
    %v570 = vadd.f32 0.0, %v569
    %v571 = vpop.f32.mrf.mxu0
    %572 = vmatprep.mubr.bf16.mxu0 0
    %573 = vmatmul.mubr.bf16.gmra.mxu0 %v345
    %v574 = vpop.f32.mrf.mxu0
    %v575 = vadd.f32 0.0, %v574
    %v576 = vpop.f32.mrf.mxu0
    %v577 = vpop.f32.mrf.mxu0
    %v578 = vadd.f32 0.0, %v577
    %v579 = vpop.f32.mrf.mxu0
    %580 = vmatprep.mubr.bf16.mxu0 0
    %581 = vmatmul.mubr.bf16.gmra.mxu0 %v346
    %v582 = vpop.f32.mrf.mxu0
    %v583 = vadd.f32 0.0, %v582
    %v584 = vpop.f32.mrf.mxu0
    %v585 = vpop.f32.mrf.mxu0
    %v586 = vadd.f32 0.0, %v585
    %v587 = vpop.f32.mrf.mxu0
    %588 = vmatprep.mubr.bf16.mxu0 0
    %589 = vmatmul.mubr.bf16.gmra.mxu0 %v347
    %v590 = vpop.f32.mrf.mxu0
    %v591 = vadd.f32 0.0, %v590
    %v592 = vpop.f32.mrf.mxu0
    %v593 = vpop.f32.mrf.mxu0
    %v594 = vadd.f32 0.0, %v593
    %v595 = vpop.f32.mrf.mxu0
    %596 = vmatprep.mubr.bf16.mxu0 0
    %597 = vmatmul.mubr.bf16.gmra.mxu0 %v348
    %v598 = vpop.f32.mrf.mxu0
    %v599 = vadd.f32 0.0, %v598
    %v600 = vpop.f32.mrf.mxu0
    %v601 = vpop.f32.mrf.mxu0
    %v602 = vadd.f32 0.0, %v601
    %v603 = vpop.f32.mrf.mxu0
    %604 = vmatprep.mubr.bf16.mxu0 0
    %605 = vmatmul.mubr.bf16.gmra.mxu0 %v349
    %v606 = vpop.f32.mrf.mxu0
    %v607 = vadd.f32 0.0, %v606
    %v608 = vpop.f32.mrf.mxu0
    %v609 = vpop.f32.mrf.mxu0
    %v610 = vadd.f32 0.0, %v609
    %v611 = vpop.f32.mrf.mxu0
    %612 = vmatprep.mubr.bf16.mxu0 0
    %613 = vmatmul.mubr.bf16.gmra.mxu0 %v350
    %v614 = vpop.f32.mrf.mxu0
    %v615 = vadd.f32 0.0, %v614
    %v616 = vpop.f32.mrf.mxu0
    %v617 = vpop.f32.mrf.mxu0
    %v618 = vadd.f32 0.0, %v617
    %v619 = vpop.f32.mrf.mxu0
    %620 = vmatprep.mubr.bf16.mxu0 0
    %621 = vmatmul.mubr.bf16.gmra.mxu0 %v351
    %v622 = vpop.f32.mrf.mxu0
    %v623 = vadd.f32 0.0, %v622
    %v624 = vpop.f32.mrf.mxu0
    %v625 = vpop.f32.mrf.mxu0
    %v626 = vadd.f32 0.0, %v625
    %v627 = vpop.f32.mrf.mxu0
    %628 = vmatprep.mubr.bf16.mxu0 0
    %629 = vmatmul.mubr.bf16.gmra.mxu0 %v352
    %v630 = vpop.f32.mrf.mxu0
    %v631 = vadd.f32 0.0, %v630
    %v632 = vpop.f32.mrf.mxu0
    %v633 = vpop.f32.mrf.mxu0
    %v634 = vadd.f32 0.0, %v633
    %v635 = vpop.f32.mrf.mxu0
    %636 = vmatprep.mubr.bf16.mxu0 0
    %637 = vmatmul.mubr.bf16.gmra.mxu0 %v353
    %v638 = vpop.f32.mrf.mxu0
    %v639 = vadd.f32 0.0, %v638
    %v640 = vpop.f32.mrf.mxu0
    %v641 = vpop.f32.mrf.mxu0
    %v642 = vadd.f32 0.0, %v641
    %v643 = vpop.f32.mrf.mxu0
    %644 = vmatprep.mubr.bf16.mxu0 0
    %645 = vmatmul.mubr.bf16.gmra.mxu0 %v354
    %v646 = vpop.f32.mrf.mxu0
    %v647 = vadd.f32 0.0, %v646
    %v648 = vpop.f32.mrf.mxu0
    %v649 = vpop.f32.mrf.mxu0
    %v650 = vadd.f32 0.0, %v649
    %v651 = vpop.f32.mrf.mxu0
    %652 = vmatprep.mubr.bf16.mxu0 0
    %653 = vmatmul.mubr.bf16.gmra.mxu0 %v355
    %v654 = vpop.f32.mrf.mxu0
    %v655 = vadd.f32 0.0, %v654
    %v656 = vpop.f32.mrf.mxu0
    %v657 = vpop.f32.mrf.mxu0
    %v658 = vadd.f32 0.0, %v657
    %v659 = vpop.f32.mrf.mxu0
    %660 = vmatprep.mubr.bf16.mxu0 0
    %661 = vmatmul.mubr.bf16.gmra.mxu0 %v356
    %v662 = vpop.f32.mrf.mxu0
    %v663 = vadd.f32 0.0, %v662
    %v664 = vpop.f32.mrf.mxu0
    %v665 = vpop.f32.mrf.mxu0
    %v666 = vadd.f32 0.0, %v665
    %v667 = vpop.f32.mrf.mxu0
    %668 = vmatprep.mubr.bf16.mxu0 0
    %669 = vmatmul.mubr.bf16.gmra.mxu0 %v357
    %v670 = vpop.f32.mrf.mxu0
    %v671 = vadd.f32 0.0, %v670
    %v672 = vpop.f32.mrf.mxu0
    %v673 = vpop.f32.mrf.mxu0
    %v674 = vadd.f32 0.0, %v673
    %v675 = vpop.f32.mrf.mxu0
    %676 = vmatprep.mubr.bf16.mxu0 0
    %677 = vmatmul.mubr.bf16.gmra.mxu0 %v358
    %v678 = vpop.f32.mrf.mxu0
    %v679 = vadd.f32 0.0, %v678
    %v680 = vpop.f32.mrf.mxu0
    %v681 = vpop.f32.mrf.mxu0
    %v682 = vadd.f32 0.0, %v681
    %v683 = vpop.f32.mrf.mxu0
    %684 = vmatprep.mubr.bf16.mxu0 0
    %685 = vmatmul.mubr.bf16.gmra.mxu0 %v359
    %v686 = vpop.f32.mrf.mxu0
    %v687 = vadd.f32 0.0, %v686
    %v688 = vpop.f32.mrf.mxu0
    %v689 = vpop.f32.mrf.mxu0
    %v690 = vadd.f32 0.0, %v689
    %v691 = vpop.f32.mrf.mxu0
    %692 = vmatprep.mubr.bf16.mxu0 0
    %693 = vmatmul.mubr.bf16.gmra.mxu0 %v360
    %v694 = vpop.f32.mrf.mxu0
    %v695 = vadd.f32 0.0, %v694
    %v696 = vpop.f32.mrf.mxu0
    %v697 = vpop.f32.mrf.mxu0
    %v698 = vadd.f32 0.0, %v697
    %v699 = vpop.f32.mrf.mxu0
    %700 = vmatprep.mubr.bf16.mxu0 0
    %701 = vmatmul.mubr.bf16.gmra.mxu0 %v361
    %v702 = vpop.f32.mrf.mxu0
    %v703 = vadd.f32 0.0, %v702
    %v704 = vpop.f32.mrf.mxu0
    %v705 = vpop.f32.mrf.mxu0
    %v706 = vadd.f32 0.0, %v705
    %v707 = vpop.f32.mrf.mxu0
    %708 = vmatprep.mubr.bf16.mxu0 0
    %709 = vmatmul.mubr.bf16.gmra.mxu0 %v362
    %v710 = vpop.f32.mrf.mxu0
    %v711 = vadd.f32 0.0, %v710
    %v712 = vpop.f32.mrf.mxu0
    %v713 = vpop.f32.mrf.mxu0
    %v714 = vadd.f32 0.0, %v713
    %v715 = vpop.f32.mrf.mxu0
    %716 = vdwg.mxu0
    %v733 = vunpack.c.l.b16 %v251
    %v734 = vunpack.c.l.b16 %v252
    %v735 = vunpack.c.l.b16 %v253
    %v736 = vunpack.c.l.b16 %v254
    %v737 = vunpack.c.l.b16 %v255
    %v738 = vunpack.c.l.b16 %v256
    %v739 = vunpack.c.l.b16 %v257
    %v740 = vunpack.c.l.b16 %v258
    %v741 = vunpack.c.l.b16 %v259
    %v742 = vunpack.c.l.b16 %v260
    %v743 = vunpack.c.l.b16 %v261
    %v744 = vunpack.c.l.b16 %v262
    %v745 = vunpack.c.l.b16 %v263
    %v746 = vunpack.c.l.b16 %v264
    %v747 = vunpack.c.l.b16 %v265
    %v748 = vunpack.c.l.b16 %v266
    %v749 = vpack.c.b16 %v734, %v733
    %v750 = vpack.c.b16 %v736, %v735
    %v751 = vpack.c.b16 %v738, %v737
    %v752 = vpack.c.b16 %v740, %v739
    %v753 = vpack.c.b16 %v742, %v741
    %v754 = vpack.c.b16 %v744, %v743
    %v755 = vpack.c.b16 %v746, %v745
    %v756 = vpack.c.b16 %v748, %v747
    %765 = vmatprep.subr.bf16.mxu0 0
    %766 = vmatpush1.bf16.msra.mxu0 %v756
    %767 = vmatprep.subr.bf16.mxu0 0
    %768 = vmatpush1.bf16.msra.mxu0 %v755
    %769 = vmatprep.subr.bf16.mxu0 0
    %770 = vmatpush1.bf16.msra.mxu0 %v754
    %771 = vmatprep.subr.bf16.mxu0 0
    %772 = vmatpush1.bf16.msra.mxu0 %v753
    %773 = vmatprep.subr.bf16.mxu0 0
    %774 = vmatpush1.bf16.msra.mxu0 %v752
    %775 = vmatprep.subr.bf16.mxu0 0
    %776 = vmatpush1.bf16.msra.mxu0 %v751
    %777 = vmatprep.subr.bf16.mxu0 0
    %778 = vmatpush1.bf16.msra.mxu0 %v750
    %779 = vmatprep.subr.bf16.mxu0 0
    %780 = vmatpush1.bf16.msra.mxu0 %v749
    %781 = vmatprep.subr.bf16.mxu0 0
    %782 = vmatpush2.bf16.msra.mxu0 0
    %783 = vmatprep.subr.bf16.mxu0 0
    %784 = vmatpush2.bf16.msra.mxu0 0
    %785 = vmatprep.subr.bf16.mxu0 0
    %786 = vmatpush2.bf16.msra.mxu0 0
    %787 = vmatprep.subr.bf16.mxu0 0
    %788 = vmatpush2.bf16.msra.mxu0 0
    %789 = vmatprep.subr.bf16.mxu0 0
    %790 = vmatpush2.bf16.msra.mxu0 0
    %791 = vmatprep.subr.bf16.mxu0 0
    %792 = vmatpush2.bf16.msra.mxu0 0
    %793 = vmatprep.subr.bf16.mxu0 0
    %794 = vmatpush2.bf16.msra.mxu0 0
    %795 = vmatprep.subr.bf16.mxu0 0
    %796 = vmatpush2.bf16.msra.mxu0 0
    %797 = vmatprep.mubr.bf16.mxu0 0
    %798 = vmatmul.mubr.bf16.gmra.mxu0 %v219
    %v799 = vpop.f32.mrf.mxu0
    %v800 = vadd.f32 %v463, %v799
    %v801 = vpop.f32.mrf.mxu0
    %v802 = vpop.f32.mrf.mxu0
    %v803 = vadd.f32 %v466, %v802
    %v804 = vpop.f32.mrf.mxu0
    %805 = vmatprep.mubr.bf16.mxu0 0
    %806 = vmatmul.mubr.bf16.gmra.mxu0 %v220
    %v807 = vpop.f32.mrf.mxu0
    %v808 = vadd.f32 %v471, %v807
    %v809 = vpop.f32.mrf.mxu0
    %v810 = vpop.f32.mrf.mxu0
    %v811 = vadd.f32 %v474, %v810
    %v812 = vpop.f32.mrf.mxu0
    %813 = vmatprep.mubr.bf16.mxu0 0
    %814 = vmatmul.mubr.bf16.gmra.mxu0 %v221
    %v815 = vpop.f32.mrf.mxu0
    %v816 = vadd.f32 %v479, %v815
    %v817 = vpop.f32.mrf.mxu0
    %v818 = vpop.f32.mrf.mxu0
    %v819 = vadd.f32 %v482, %v818
    %v820 = vpop.f32.mrf.mxu0
    %821 = vmatprep.mubr.bf16.mxu0 0
    %822 = vmatmul.mubr.bf16.gmra.mxu0 %v222
    %v823 = vpop.f32.mrf.mxu0
    %v824 = vadd.f32 %v487, %v823
    %v825 = vpop.f32.mrf.mxu0
    %v826 = vpop.f32.mrf.mxu0
    %v827 = vadd.f32 %v490, %v826
    %v828 = vpop.f32.mrf.mxu0
    %829 = vmatprep.mubr.bf16.mxu0 0
    %830 = vmatmul.mubr.bf16.gmra.mxu0 %v223
    %v831 = vpop.f32.mrf.mxu0
    %v832 = vadd.f32 %v495, %v831
    %v833 = vpop.f32.mrf.mxu0
    %v834 = vpop.f32.mrf.mxu0
    %v835 = vadd.f32 %v498, %v834
    %v836 = vpop.f32.mrf.mxu0
    %837 = vmatprep.mubr.bf16.mxu0 0
    %838 = vmatmul.mubr.bf16.gmra.mxu0 %v224
    %v839 = vpop.f32.mrf.mxu0
    %v840 = vadd.f32 %v503, %v839
    %v841 = vpop.f32.mrf.mxu0
    %v842 = vpop.f32.mrf.mxu0
    %v843 = vadd.f32 %v506, %v842
    %v844 = vpop.f32.mrf.mxu0
    %845 = vmatprep.mubr.bf16.mxu0 0
    %846 = vmatmul.mubr.bf16.gmra.mxu0 %v225
    %v847 = vpop.f32.mrf.mxu0
    %v848 = vadd.f32 %v511, %v847
    %v849 = vpop.f32.mrf.mxu0
    %v850 = vpop.f32.mrf.mxu0
    %v851 = vadd.f32 %v514, %v850
    %v852 = vpop.f32.mrf.mxu0
    %853 = vmatprep.mubr.bf16.mxu0 0
    %854 = vmatmul.mubr.bf16.gmra.mxu0 %v226
    %v855 = vpop.f32.mrf.mxu0
    %v856 = vadd.f32 %v519, %v855
    %v857 = vpop.f32.mrf.mxu0
    %v858 = vpop.f32.mrf.mxu0
    %v859 = vadd.f32 %v522, %v858
    %v860 = vpop.f32.mrf.mxu0
    %861 = vmatprep.mubr.bf16.mxu0 0
    %862 = vmatmul.mubr.bf16.gmra.mxu0 %v227
    %v863 = vpop.f32.mrf.mxu0
    %v864 = vadd.f32 %v527, %v863
    %v865 = vpop.f32.mrf.mxu0
    %v866 = vpop.f32.mrf.mxu0
    %v867 = vadd.f32 %v530, %v866
    %v868 = vpop.f32.mrf.mxu0
    %869 = vmatprep.mubr.bf16.mxu0 0
    %870 = vmatmul.mubr.bf16.gmra.mxu0 %v228
    %v871 = vpop.f32.mrf.mxu0
    %v872 = vadd.f32 %v535, %v871
    %v873 = vpop.f32.mrf.mxu0
    %v874 = vpop.f32.mrf.mxu0
    %v875 = vadd.f32 %v538, %v874
    %v876 = vpop.f32.mrf.mxu0
    %877 = vmatprep.mubr.bf16.mxu0 0
    %878 = vmatmul.mubr.bf16.gmra.mxu0 %v229
    %v879 = vpop.f32.mrf.mxu0
    %v880 = vadd.f32 %v543, %v879
    %v881 = vpop.f32.mrf.mxu0
    %v882 = vpop.f32.mrf.mxu0
    %v883 = vadd.f32 %v546, %v882
    %v884 = vpop.f32.mrf.mxu0
    %885 = vmatprep.mubr.bf16.mxu0 0
    %886 = vmatmul.mubr.bf16.gmra.mxu0 %v230
    %v887 = vpop.f32.mrf.mxu0
    %v888 = vadd.f32 %v551, %v887
    %v889 = vpop.f32.mrf.mxu0
    %v890 = vpop.f32.mrf.mxu0
    %v891 = vadd.f32 %v554, %v890
    %v892 = vpop.f32.mrf.mxu0
    %893 = vmatprep.mubr.bf16.mxu0 0
    %894 = vmatmul.mubr.bf16.gmra.mxu0 %v231
    %v895 = vpop.f32.mrf.mxu0
    %v896 = vadd.f32 %v559, %v895
    %v897 = vpop.f32.mrf.mxu0
    %v898 = vpop.f32.mrf.mxu0
    %v899 = vadd.f32 %v562, %v898
    %v900 = vpop.f32.mrf.mxu0
    %901 = vmatprep.mubr.bf16.mxu0 0
    %902 = vmatmul.mubr.bf16.gmra.mxu0 %v232
    %v903 = vpop.f32.mrf.mxu0
    %v904 = vadd.f32 %v567, %v903
    %v905 = vpop.f32.mrf.mxu0
    %v906 = vpop.f32.mrf.mxu0
    %v907 = vadd.f32 %v570, %v906
    %v908 = vpop.f32.mrf.mxu0
    %909 = vmatprep.mubr.bf16.mxu0 0
    %910 = vmatmul.mubr.bf16.gmra.mxu0 %v233
    %v911 = vpop.f32.mrf.mxu0
    %v912 = vadd.f32 %v575, %v911
    %v913 = vpop.f32.mrf.mxu0
    %v914 = vpop.f32.mrf.mxu0
    %v915 = vadd.f32 %v578, %v914
    %v916 = vpop.f32.mrf.mxu0
    %917 = vmatprep.mubr.bf16.mxu0 0
    %918 = vmatmul.mubr.bf16.gmra.mxu0 %v234
    %v919 = vpop.f32.mrf.mxu0
    %v920 = vadd.f32 %v583, %v919
    %v921 = vpop.f32.mrf.mxu0
    %v922 = vpop.f32.mrf.mxu0
    %v923 = vadd.f32 %v586, %v922
    %v924 = vpop.f32.mrf.mxu0
    %925 = vmatprep.mubr.bf16.mxu0 0
    %926 = vmatmul.mubr.bf16.gmra.mxu0 %v235
    %v927 = vpop.f32.mrf.mxu0
    %v928 = vadd.f32 %v591, %v927
    %v929 = vpop.f32.mrf.mxu0
    %v930 = vpop.f32.mrf.mxu0
    %v931 = vadd.f32 %v594, %v930
    %v932 = vpop.f32.mrf.mxu0
    %933 = vmatprep.mubr.bf16.mxu0 0
    %934 = vmatmul.mubr.bf16.gmra.mxu0 %v236
    %v935 = vpop.f32.mrf.mxu0
    %v936 = vadd.f32 %v599, %v935
    %v937 = vpop.f32.mrf.mxu0
    %v938 = vpop.f32.mrf.mxu0
    %v939 = vadd.f32 %v602, %v938
    %v940 = vpop.f32.mrf.mxu0
    %941 = vmatprep.mubr.bf16.mxu0 0
    %942 = vmatmul.mubr.bf16.gmra.mxu0 %v237
    %v943 = vpop.f32.mrf.mxu0
    %v944 = vadd.f32 %v607, %v943
    %v945 = vpop.f32.mrf.mxu0
    %v946 = vpop.f32.mrf.mxu0
    %v947 = vadd.f32 %v610, %v946
    %v948 = vpop.f32.mrf.mxu0
    %949 = vmatprep.mubr.bf16.mxu0 0
    %950 = vmatmul.mubr.bf16.gmra.mxu0 %v238
    %v951 = vpop.f32.mrf.mxu0
    %v952 = vadd.f32 %v615, %v951
    %v953 = vpop.f32.mrf.mxu0
    %v954 = vpop.f32.mrf.mxu0
    %v955 = vadd.f32 %v618, %v954
    %v956 = vpop.f32.mrf.mxu0
    %957 = vmatprep.mubr.bf16.mxu0 0
    %958 = vmatmul.mubr.bf16.gmra.mxu0 %v239
    %v959 = vpop.f32.mrf.mxu0
    %v960 = vadd.f32 %v623, %v959
    %v961 = vpop.f32.mrf.mxu0
    %v962 = vpop.f32.mrf.mxu0
    %v963 = vadd.f32 %v626, %v962
    %v964 = vpop.f32.mrf.mxu0
    %965 = vmatprep.mubr.bf16.mxu0 0
    %966 = vmatmul.mubr.bf16.gmra.mxu0 %v240
    %v967 = vpop.f32.mrf.mxu0
    %v968 = vadd.f32 %v631, %v967
    %v969 = vpop.f32.mrf.mxu0
    %v970 = vpop.f32.mrf.mxu0
    %v971 = vadd.f32 %v634, %v970
    %v972 = vpop.f32.mrf.mxu0
    %973 = vmatprep.mubr.bf16.mxu0 0
    %974 = vmatmul.mubr.bf16.gmra.mxu0 %v241
    %v975 = vpop.f32.mrf.mxu0
    %v976 = vadd.f32 %v639, %v975
    %v977 = vpop.f32.mrf.mxu0
    %v978 = vpop.f32.mrf.mxu0
    %v979 = vadd.f32 %v642, %v978
    %v980 = vpop.f32.mrf.mxu0
    %981 = vmatprep.mubr.bf16.mxu0 0
    %982 = vmatmul.mubr.bf16.gmra.mxu0 %v242
    %v983 = vpop.f32.mrf.mxu0
    %v984 = vadd.f32 %v647, %v983
    %v985 = vpop.f32.mrf.mxu0
    %v986 = vpop.f32.mrf.mxu0
    %v987 = vadd.f32 %v650, %v986
    %v988 = vpop.f32.mrf.mxu0
    %989 = vmatprep.mubr.bf16.mxu0 0
    %990 = vmatmul.mubr.bf16.gmra.mxu0 %v243
    %v991 = vpop.f32.mrf.mxu0
    %v992 = vadd.f32 %v655, %v991
    %v993 = vpop.f32.mrf.mxu0
    %v994 = vpop.f32.mrf.mxu0
    %v995 = vadd.f32 %v658, %v994
    %v996 = vpop.f32.mrf.mxu0
    %997 = vmatprep.mubr.bf16.mxu0 0
    %998 = vmatmul.mubr.bf16.gmra.mxu0 %v244
    %v999 = vpop.f32.mrf.mxu0
    %v1000 = vadd.f32 %v663, %v999
    %v1001 = vpop.f32.mrf.mxu0
    %v1002 = vpop.f32.mrf.mxu0
    %v1003 = vadd.f32 %v666, %v1002
    %v1004 = vpop.f32.mrf.mxu0
    %1005 = vmatprep.mubr.bf16.mxu0 0
    %1006 = vmatmul.mubr.bf16.gmra.mxu0 %v245
    %v1007 = vpop.f32.mrf.mxu0
    %v1008 = vadd.f32 %v671, %v1007
    %v1009 = vpop.f32.mrf.mxu0
    %v1010 = vpop.f32.mrf.mxu0
    %v1011 = vadd.f32 %v674, %v1010
    %v1012 = vpop.f32.mrf.mxu0
    %1013 = vmatprep.mubr.bf16.mxu0 0
    %1014 = vmatmul.mubr.bf16.gmra.mxu0 %v246
    %v1015 = vpop.f32.mrf.mxu0
    %v1016 = vadd.f32 %v679, %v1015
    %v1017 = vpop.f32.mrf.mxu0
    %v1018 = vpop.f32.mrf.mxu0
    %v1019 = vadd.f32 %v682, %v1018
    %v1020 = vpop.f32.mrf.mxu0
    %1021 = vmatprep.mubr.bf16.mxu0 0
    %1022 = vmatmul.mubr.bf16.gmra.mxu0 %v247
    %v1023 = vpop.f32.mrf.mxu0
    %v1024 = vadd.f32 %v687, %v1023
    %v1025 = vpop.f32.mrf.mxu0
    %v1026 = vpop.f32.mrf.mxu0
    %v1027 = vadd.f32 %v690, %v1026
    %v1028 = vpop.f32.mrf.mxu0
    %1029 = vmatprep.mubr.bf16.mxu0 0
    %1030 = vmatmul.mubr.bf16.gmra.mxu0 %v248
    %v1031 = vpop.f32.mrf.mxu0
    %v1032 = vadd.f32 %v695, %v1031
    %v1033 = vpop.f32.mrf.mxu0
    %v1034 = vpop.f32.mrf.mxu0
    %v1035 = vadd.f32 %v698, %v1034
    %v1036 = vpop.f32.mrf.mxu0
    %1037 = vmatprep.mubr.bf16.mxu0 0
    %1038 = vmatmul.mubr.bf16.gmra.mxu0 %v249
    %v1039 = vpop.f32.mrf.mxu0
    %v1040 = vadd.f32 %v703, %v1039
    %v1041 = vpop.f32.mrf.mxu0
    %v1042 = vpop.f32.mrf.mxu0
    %v1043 = vadd.f32 %v706, %v1042
    %v1044 = vpop.f32.mrf.mxu0
    %1045 = vmatprep.mubr.bf16.mxu0 0
    %1046 = vmatmul.mubr.bf16.gmra.mxu0 %v250
    %v1047 = vpop.f32.mrf.mxu0
    %v1048 = vadd.f32 %v711, %v1047
    %v1049 = vpop.f32.mrf.mxu0
    %v1050 = vpop.f32.mrf.mxu0
    %v1051 = vadd.f32 %v714, %v1050
    %v1052 = vpop.f32.mrf.mxu0
    %1053 = vdwg.mxu0
    %v1054 = vld [vmem:[%s0 + $0x2] sm:$0xff]
    %v1055 = vld [vmem:[%s0 + $0xa] sm:$0xff]
    %v1056 = vld [vmem:[%s0 + $0x1a] sm:$0xff]
    %v1057 = vld [vmem:[%s0 + $0x22] sm:$0xff]
    %v1058 = vld [vmem:[%s0 + $0x32] sm:$0xff]
    %v1059 = vld [vmem:[%s0 + $0x3a] sm:$0xff]
    %v1060 = vld [vmem:[%s0 + $0x4a] sm:$0xff]
    %v1061 = vld [vmem:[%s0 + $0x52] sm:$0xff]
    %v1062 = vld [vmem:[%s0 + $0x62] sm:$0xff]
    %v1063 = vld [vmem:[%s0 + $0x6a] sm:$0xff]
    %v1064 = vld [vmem:[%s0 + $0x7a] sm:$0xff]
    %v1065 = vld [vmem:[%s0 + $0x82] sm:$0xff]
    %v1066 = vld [vmem:[%s0 + $0x92] sm:$0xff]
    %v1067 = vld [vmem:[%s0 + $0x9a] sm:$0xff]
    %v1068 = vld [vmem:[%s0 + $0xaa] sm:$0xff]
    %v1069 = vld [vmem:[%s0 + $0xb2] sm:$0xff]
    %v1070 = vld [vmem:[%s0 + $0xc2] sm:$0xff]
    %v1071 = vld [vmem:[%s0 + $0xca] sm:$0xff]
    %v1072 = vld [vmem:[%s0 + $0xda] sm:$0xff]
    %v1073 = vld [vmem:[%s0 + $0xe2] sm:$0xff]
    %v1074 = vld [vmem:[%s0 + $0xf2] sm:$0xff]
    %v1075 = vld [vmem:[%s0 + $0xfa] sm:$0xff]
    %v1076 = vld [vmem:[%s0 + $0x10a] sm:$0xff]
    %v1077 = vld [vmem:[%s0 + $0x112] sm:$0xff]
    %v1078 = vld [vmem:[%s0 + $0x122] sm:$0xff]
    %v1079 = vld [vmem:[%s0 + $0x12a] sm:$0xff]
    %v1080 = vld [vmem:[%s0 + $0x13a] sm:$0xff]
    %v1081 = vld [vmem:[%s0 + $0x142] sm:$0xff]
    %v1082 = vld [vmem:[%s0 + $0x152] sm:$0xff]
    %v1083 = vld [vmem:[%s0 + $0x15a] sm:$0xff]
    %v1084 = vld [vmem:[%s0 + $0x16a] sm:$0xff]
    %v1085 = vld [vmem:[%s0 + $0x172] sm:$0xff]
    %v1086 = vld [vmem:[%s0 + $0x1b2] sm:$0xff]
    %v1087 = vld [vmem:[%s0 + $0x1ba] sm:$0xff]
    %v1088 = vld [vmem:[%s0 + $0x1ca] sm:$0xff]
    %v1089 = vld [vmem:[%s0 + $0x1d2] sm:$0xff]
    %v1090 = vld [vmem:[%s0 + $0x1e2] sm:$0xff]
    %v1091 = vld [vmem:[%s0 + $0x1ea] sm:$0xff]
    %v1092 = vld [vmem:[%s0 + $0x1fa] sm:$0xff]
    %v1093 = vld [vmem:[%s0 + $0x202] sm:$0xff]
    %v1094 = vld [vmem:[%s0 + $0x212] sm:$0xff]
    %v1095 = vld [vmem:[%s0 + $0x21a] sm:$0xff]
    %v1096 = vld [vmem:[%s0 + $0x22a] sm:$0xff]
    %v1097 = vld [vmem:[%s0 + $0x232] sm:$0xff]
    %v1098 = vld [vmem:[%s0 + $0x242] sm:$0xff]
    %v1099 = vld [vmem:[%s0 + $0x24a] sm:$0xff]
    %v1100 = vld [vmem:[%s0 + $0x25a] sm:$0xff]
    %v1101 = vld [vmem:[%s0 + $0x262] sm:$0xff]
    %v1102 = vld [vmem:[%s0 + $0x272] sm:$0xff]
    %v1103 = vld [vmem:[%s0 + $0x27a] sm:$0xff]
    %v1104 = vld [vmem:[%s0 + $0x28a] sm:$0xff]
    %v1105 = vld [vmem:[%s0 + $0x292] sm:$0xff]
    %v1106 = vld [vmem:[%s0 + $0x2a2] sm:$0xff]
    %v1107 = vld [vmem:[%s0 + $0x2aa] sm:$0xff]
    %v1108 = vld [vmem:[%s0 + $0x2ba] sm:$0xff]
    %v1109 = vld [vmem:[%s0 + $0x2c2] sm:$0xff]
    %v1110 = vld [vmem:[%s0 + $0x2d2] sm:$0xff]
    %v1111 = vld [vmem:[%s0 + $0x2da] sm:$0xff]
    %v1112 = vld [vmem:[%s0 + $0x2ea] sm:$0xff]
    %v1113 = vld [vmem:[%s0 + $0x2f2] sm:$0xff]
    %v1114 = vld [vmem:[%s0 + $0x302] sm:$0xff]
    %v1115 = vld [vmem:[%s0 + $0x30a] sm:$0xff]
    %v1116 = vld [vmem:[%s0 + $0x31a] sm:$0xff]
    %v1117 = vld [vmem:[%s0 + $0x322] sm:$0xff]
    %v1118 = vpack.c.bf16 %v1055, %v1054
    %v1119 = vpack.c.bf16 %v1057, %v1056
    %v1120 = vpack.c.bf16 %v1059, %v1058
    %v1121 = vpack.c.bf16 %v1061, %v1060
    %v1122 = vpack.c.bf16 %v1063, %v1062
    %v1123 = vpack.c.bf16 %v1065, %v1064
    %v1124 = vpack.c.bf16 %v1067, %v1066
    %v1125 = vpack.c.bf16 %v1069, %v1068
    %v1126 = vpack.c.bf16 %v1071, %v1070
    %v1127 = vpack.c.bf16 %v1073, %v1072
    %v1128 = vpack.c.bf16 %v1075, %v1074
    %v1129 = vpack.c.bf16 %v1077, %v1076
    %v1130 = vpack.c.bf16 %v1079, %v1078
    %v1131 = vpack.c.bf16 %v1081, %v1080
    %v1132 = vpack.c.bf16 %v1083, %v1082
    %v1133 = vpack.c.bf16 %v1085, %v1084
    %v1134 = vpack.c.bf16 %v1087, %v1086
    %v1135 = vpack.c.bf16 %v1089, %v1088
    %v1136 = vpack.c.bf16 %v1091, %v1090
    %v1137 = vpack.c.bf16 %v1093, %v1092
    %v1138 = vpack.c.bf16 %v1095, %v1094
    %v1139 = vpack.c.bf16 %v1097, %v1096
    %v1140 = vpack.c.bf16 %v1099, %v1098
    %v1141 = vpack.c.bf16 %v1101, %v1100
    %v1142 = vpack.c.bf16 %v1103, %v1102
    %v1143 = vpack.c.bf16 %v1105, %v1104
    %v1144 = vpack.c.bf16 %v1107, %v1106
    %v1145 = vpack.c.bf16 %v1109, %v1108
    %v1146 = vpack.c.bf16 %v1111, %v1110
    %v1147 = vpack.c.bf16 %v1113, %v1112
    %v1148 = vpack.c.bf16 %v1115, %v1114
    %v1149 = vpack.c.bf16 %v1117, %v1116
    %s1150 = scalar_lea.vmem %s2, 128
    %v1151 = vld [vmem:[%s1150] sm:$0xf]
    %v1152 = vld [vmem:[%s1150 + $0x4] sm:$0xf]
    %v1153 = vld [vmem:[%s1150 + $0x8] sm:$0xf]
    %v1154 = vld [vmem:[%s1150 + $0xc] sm:$0xf]
    %v1155 = vld [vmem:[%s1150 + $0x10] sm:$0xf]
    %v1156 = vld [vmem:[%s1150 + $0x14] sm:$0xf]
    %v1157 = vld [vmem:[%s1150 + $0x18] sm:$0xf]
    %v1158 = vld [vmem:[%s1150 + $0x1c] sm:$0xf]
    %v1159 = vld [vmem:[%s1150 + $0x20] sm:$0xf]
    %v1160 = vld [vmem:[%s1150 + $0x24] sm:$0xf]
    %v1161 = vld [vmem:[%s1150 + $0x28] sm:$0xf]
    %v1162 = vld [vmem:[%s1150 + $0x2c] sm:$0xf]
    %v1163 = vld [vmem:[%s1150 + $0x30] sm:$0xf]
    %v1164 = vld [vmem:[%s1150 + $0x34] sm:$0xf]
    %v1165 = vld [vmem:[%s1150 + $0x38] sm:$0xf]
    %v1166 = vld [vmem:[%s1150 + $0x3c] sm:$0xf]
    %v1183 = vunpack.c.l.b16 %v1151
    %v1184 = vunpack.c.l.b16 %v1152
    %v1185 = vunpack.c.l.b16 %v1153
    %v1186 = vunpack.c.l.b16 %v1154
    %v1187 = vunpack.c.l.b16 %v1155
    %v1188 = vunpack.c.l.b16 %v1156
    %v1189 = vunpack.c.l.b16 %v1157
    %v1190 = vunpack.c.l.b16 %v1158
    %v1191 = vunpack.c.l.b16 %v1159
    %v1192 = vunpack.c.l.b16 %v1160
    %v1193 = vunpack.c.l.b16 %v1161
    %v1194 = vunpack.c.l.b16 %v1162
    %v1195 = vunpack.c.l.b16 %v1163
    %v1196 = vunpack.c.l.b16 %v1164
    %v1197 = vunpack.c.l.b16 %v1165
    %v1198 = vunpack.c.l.b16 %v1166
    %v1199 = vpack.c.b16 %v1184, %v1183
    %v1200 = vpack.c.b16 %v1186, %v1185
    %v1201 = vpack.c.b16 %v1188, %v1187
    %v1202 = vpack.c.b16 %v1190, %v1189
    %v1203 = vpack.c.b16 %v1192, %v1191
    %v1204 = vpack.c.b16 %v1194, %v1193
    %v1205 = vpack.c.b16 %v1196, %v1195
    %v1206 = vpack.c.b16 %v1198, %v1197
    %1215 = vmatprep.subr.bf16.mxu0 0
    %1216 = vmatpush1.bf16.msra.mxu0 %v1206
    %1217 = vmatprep.subr.bf16.mxu0 0
    %1218 = vmatpush1.bf16.msra.mxu0 %v1205
    %1219 = vmatprep.subr.bf16.mxu0 0
    %1220 = vmatpush1.bf16.msra.mxu0 %v1204
    %1221 = vmatprep.subr.bf16.mxu0 0
    %1222 = vmatpush1.bf16.msra.mxu0 %v1203
    %1223 = vmatprep.subr.bf16.mxu0 0
    %1224 = vmatpush1.bf16.msra.mxu0 %v1202
    %1225 = vmatprep.subr.bf16.mxu0 0
    %1226 = vmatpush1.bf16.msra.mxu0 %v1201
    %1227 = vmatprep.subr.bf16.mxu0 0
    %1228 = vmatpush1.bf16.msra.mxu0 %v1200
    %1229 = vmatprep.subr.bf16.mxu0 0
    %1230 = vmatpush1.bf16.msra.mxu0 %v1199
    %1231 = vmatprep.subr.bf16.mxu0 0
    %1232 = vmatpush2.bf16.msra.mxu0 0
    %1233 = vmatprep.subr.bf16.mxu0 0
    %1234 = vmatpush2.bf16.msra.mxu0 0
    %1235 = vmatprep.subr.bf16.mxu0 0
    %1236 = vmatpush2.bf16.msra.mxu0 0
    %1237 = vmatprep.subr.bf16.mxu0 0
    %1238 = vmatpush2.bf16.msra.mxu0 0
    %1239 = vmatprep.subr.bf16.mxu0 0
    %1240 = vmatpush2.bf16.msra.mxu0 0
    %1241 = vmatprep.subr.bf16.mxu0 0
    %1242 = vmatpush2.bf16.msra.mxu0 0
    %1243 = vmatprep.subr.bf16.mxu0 0
    %1244 = vmatpush2.bf16.msra.mxu0 0
    %1245 = vmatprep.subr.bf16.mxu0 0
    %1246 = vmatpush2.bf16.msra.mxu0 0
    %1247 = vmatprep.mubr.bf16.mxu0 0
    %1248 = vmatmul.mubr.bf16.gmra.mxu0 %v1118
    %v1249 = vpop.f32.mrf.mxu0
    %v1250 = vadd.f32 0.0, %v1249
    %v1251 = vpop.f32.mrf.mxu0
    %v1252 = vpop.f32.mrf.mxu0
    %v1253 = vadd.f32 0.0, %v1252
    %v1254 = vpop.f32.mrf.mxu0
    %1255 = vmatprep.mubr.bf16.mxu0 0
    %1256 = vmatmul.mubr.bf16.gmra.mxu0 %v1119
    %v1257 = vpop.f32.mrf.mxu0
    %v1258 = vadd.f32 0.0, %v1257
    %v1259 = vpop.f32.mrf.mxu0
    %v1260 = vpop.f32.mrf.mxu0
    %v1261 = vadd.f32 0.0, %v1260
    %v1262 = vpop.f32.mrf.mxu0
    %1263 = vmatprep.mubr.bf16.mxu0 0
    %1264 = vmatmul.mubr.bf16.gmra.mxu0 %v1120
    %v1265 = vpop.f32.mrf.mxu0
    %v1266 = vadd.f32 0.0, %v1265
    %v1267 = vpop.f32.mrf.mxu0
    %v1268 = vpop.f32.mrf.mxu0
    %v1269 = vadd.f32 0.0, %v1268
    %v1270 = vpop.f32.mrf.mxu0
    %1271 = vmatprep.mubr.bf16.mxu0 0
    %1272 = vmatmul.mubr.bf16.gmra.mxu0 %v1121
    %v1273 = vpop.f32.mrf.mxu0
    %v1274 = vadd.f32 0.0, %v1273
    %v1275 = vpop.f32.mrf.mxu0
    %v1276 = vpop.f32.mrf.mxu0
    %v1277 = vadd.f32 0.0, %v1276
    %v1278 = vpop.f32.mrf.mxu0
    %1279 = vmatprep.mubr.bf16.mxu0 0
    %1280 = vmatmul.mubr.bf16.gmra.mxu0 %v1122
    %v1281 = vpop.f32.mrf.mxu0
    %v1282 = vadd.f32 0.0, %v1281
    %v1283 = vpop.f32.mrf.mxu0
    %v1284 = vpop.f32.mrf.mxu0
    %v1285 = vadd.f32 0.0, %v1284
    %v1286 = vpop.f32.mrf.mxu0
    %1287 = vmatprep.mubr.bf16.mxu0 0
    %1288 = vmatmul.mubr.bf16.gmra.mxu0 %v1123
    %v1289 = vpop.f32.mrf.mxu0
    %v1290 = vadd.f32 0.0, %v1289
    %v1291 = vpop.f32.mrf.mxu0
    %v1292 = vpop.f32.mrf.mxu0
    %v1293 = vadd.f32 0.0, %v1292
    %v1294 = vpop.f32.mrf.mxu0
    %1295 = vmatprep.mubr.bf16.mxu0 0
    %1296 = vmatmul.mubr.bf16.gmra.mxu0 %v1124
    %v1297 = vpop.f32.mrf.mxu0
    %v1298 = vadd.f32 0.0, %v1297
    %v1299 = vpop.f32.mrf.mxu0
    %v1300 = vpop.f32.mrf.mxu0
    %v1301 = vadd.f32 0.0, %v1300
    %v1302 = vpop.f32.mrf.mxu0
    %1303 = vmatprep.mubr.bf16.mxu0 0
    %1304 = vmatmul.mubr.bf16.gmra.mxu0 %v1125
    %v1305 = vpop.f32.mrf.mxu0
    %v1306 = vadd.f32 0.0, %v1305
    %v1307 = vpop.f32.mrf.mxu0
    %v1308 = vpop.f32.mrf.mxu0
    %v1309 = vadd.f32 0.0, %v1308
    %v1310 = vpop.f32.mrf.mxu0
    %1311 = vmatprep.mubr.bf16.mxu0 0
    %1312 = vmatmul.mubr.bf16.gmra.mxu0 %v1126
    %v1313 = vpop.f32.mrf.mxu0
    %v1314 = vadd.f32 0.0, %v1313
    %v1315 = vpop.f32.mrf.mxu0
    %v1316 = vpop.f32.mrf.mxu0
    %v1317 = vadd.f32 0.0, %v1316
    %v1318 = vpop.f32.mrf.mxu0
    %1319 = vmatprep.mubr.bf16.mxu0 0
    %1320 = vmatmul.mubr.bf16.gmra.mxu0 %v1127
    %v1321 = vpop.f32.mrf.mxu0
    %v1322 = vadd.f32 0.0, %v1321
    %v1323 = vpop.f32.mrf.mxu0
    %v1324 = vpop.f32.mrf.mxu0
    %v1325 = vadd.f32 0.0, %v1324
    %v1326 = vpop.f32.mrf.mxu0
    %1327 = vmatprep.mubr.bf16.mxu0 0
    %1328 = vmatmul.mubr.bf16.gmra.mxu0 %v1128
    %v1329 = vpop.f32.mrf.mxu0
    %v1330 = vadd.f32 0.0, %v1329
    %v1331 = vpop.f32.mrf.mxu0
    %v1332 = vpop.f32.mrf.mxu0
    %v1333 = vadd.f32 0.0, %v1332
    %v1334 = vpop.f32.mrf.mxu0
    %1335 = vmatprep.mubr.bf16.mxu0 0
    %1336 = vmatmul.mubr.bf16.gmra.mxu0 %v1129
    %v1337 = vpop.f32.mrf.mxu0
    %v1338 = vadd.f32 0.0, %v1337
    %v1339 = vpop.f32.mrf.mxu0
    %v1340 = vpop.f32.mrf.mxu0
    %v1341 = vadd.f32 0.0, %v1340
    %v1342 = vpop.f32.mrf.mxu0
    %1343 = vmatprep.mubr.bf16.mxu0 0
    %1344 = vmatmul.mubr.bf16.gmra.mxu0 %v1130
    %v1345 = vpop.f32.mrf.mxu0
    %v1346 = vadd.f32 0.0, %v1345
    %v1347 = vpop.f32.mrf.mxu0
    %v1348 = vpop.f32.mrf.mxu0
    %v1349 = vadd.f32 0.0, %v1348
    %v1350 = vpop.f32.mrf.mxu0
    %1351 = vmatprep.mubr.bf16.mxu0 0
    %1352 = vmatmul.mubr.bf16.gmra.mxu0 %v1131
    %v1353 = vpop.f32.mrf.mxu0
    %v1354 = vadd.f32 0.0, %v1353
    %v1355 = vpop.f32.mrf.mxu0
    %v1356 = vpop.f32.mrf.mxu0
    %v1357 = vadd.f32 0.0, %v1356
    %v1358 = vpop.f32.mrf.mxu0
    %1359 = vmatprep.mubr.bf16.mxu0 0
    %1360 = vmatmul.mubr.bf16.gmra.mxu0 %v1132
    %v1361 = vpop.f32.mrf.mxu0
    %v1362 = vadd.f32 0.0, %v1361
    %v1363 = vpop.f32.mrf.mxu0
    %v1364 = vpop.f32.mrf.mxu0
    %v1365 = vadd.f32 0.0, %v1364
    %v1366 = vpop.f32.mrf.mxu0
    %1367 = vmatprep.mubr.bf16.mxu0 0
    %1368 = vmatmul.mubr.bf16.gmra.mxu0 %v1133
    %v1369 = vpop.f32.mrf.mxu0
    %v1370 = vadd.f32 0.0, %v1369
    %v1371 = vpop.f32.mrf.mxu0
    %v1372 = vpop.f32.mrf.mxu0
    %v1373 = vadd.f32 0.0, %v1372
    %v1374 = vpop.f32.mrf.mxu0
    %1375 = vmatprep.mubr.bf16.mxu0 0
    %1376 = vmatmul.mubr.bf16.gmra.mxu0 %v1134
    %v1377 = vpop.f32.mrf.mxu0
    %v1378 = vadd.f32 0.0, %v1377
    %v1379 = vpop.f32.mrf.mxu0
    %v1380 = vpop.f32.mrf.mxu0
    %v1381 = vadd.f32 0.0, %v1380
    %v1382 = vpop.f32.mrf.mxu0
    %1383 = vmatprep.mubr.bf16.mxu0 0
    %1384 = vmatmul.mubr.bf16.gmra.mxu0 %v1135
    %v1385 = vpop.f32.mrf.mxu0
    %v1386 = vadd.f32 0.0, %v1385
    %v1387 = vpop.f32.mrf.mxu0
    %v1388 = vpop.f32.mrf.mxu0
    %v1389 = vadd.f32 0.0, %v1388
    %v1390 = vpop.f32.mrf.mxu0
    %1391 = vmatprep.mubr.bf16.mxu0 0
    %1392 = vmatmul.mubr.bf16.gmra.mxu0 %v1136
    %v1393 = vpop.f32.mrf.mxu0
    %v1394 = vadd.f32 0.0, %v1393
    %v1395 = vpop.f32.mrf.mxu0
    %v1396 = vpop.f32.mrf.mxu0
    %v1397 = vadd.f32 0.0, %v1396
    %v1398 = vpop.f32.mrf.mxu0
    %1399 = vmatprep.mubr.bf16.mxu0 0
    %1400 = vmatmul.mubr.bf16.gmra.mxu0 %v1137
    %v1401 = vpop.f32.mrf.mxu0
    %v1402 = vadd.f32 0.0, %v1401
    %v1403 = vpop.f32.mrf.mxu0
    %v1404 = vpop.f32.mrf.mxu0
    %v1405 = vadd.f32 0.0, %v1404
    %v1406 = vpop.f32.mrf.mxu0
    %1407 = vmatprep.mubr.bf16.mxu0 0
    %1408 = vmatmul.mubr.bf16.gmra.mxu0 %v1138
    %v1409 = vpop.f32.mrf.mxu0
    %v1410 = vadd.f32 0.0, %v1409
    %v1411 = vpop.f32.mrf.mxu0
    %v1412 = vpop.f32.mrf.mxu0
    %v1413 = vadd.f32 0.0, %v1412
    %v1414 = vpop.f32.mrf.mxu0
    %1415 = vmatprep.mubr.bf16.mxu0 0
    %1416 = vmatmul.mubr.bf16.gmra.mxu0 %v1139
    %v1417 = vpop.f32.mrf.mxu0
    %v1418 = vadd.f32 0.0, %v1417
    %v1419 = vpop.f32.mrf.mxu0
    %v1420 = vpop.f32.mrf.mxu0
    %v1421 = vadd.f32 0.0, %v1420
    %v1422 = vpop.f32.mrf.mxu0
    %1423 = vmatprep.mubr.bf16.mxu0 0
    %1424 = vmatmul.mubr.bf16.gmra.mxu0 %v1140
    %v1425 = vpop.f32.mrf.mxu0
    %v1426 = vadd.f32 0.0, %v1425
    %v1427 = vpop.f32.mrf.mxu0
    %v1428 = vpop.f32.mrf.mxu0
    %v1429 = vadd.f32 0.0, %v1428
    %v1430 = vpop.f32.mrf.mxu0
    %1431 = vmatprep.mubr.bf16.mxu0 0
    %1432 = vmatmul.mubr.bf16.gmra.mxu0 %v1141
    %v1433 = vpop.f32.mrf.mxu0
    %v1434 = vadd.f32 0.0, %v1433
    %v1435 = vpop.f32.mrf.mxu0
    %v1436 = vpop.f32.mrf.mxu0
    %v1437 = vadd.f32 0.0, %v1436
    %v1438 = vpop.f32.mrf.mxu0
    %1439 = vmatprep.mubr.bf16.mxu0 0
    %1440 = vmatmul.mubr.bf16.gmra.mxu0 %v1142
    %v1441 = vpop.f32.mrf.mxu0
    %v1442 = vadd.f32 0.0, %v1441
    %v1443 = vpop.f32.mrf.mxu0
    %v1444 = vpop.f32.mrf.mxu0
    %v1445 = vadd.f32 0.0, %v1444
    %v1446 = vpop.f32.mrf.mxu0
    %1447 = vmatprep.mubr.bf16.mxu0 0
    %1448 = vmatmul.mubr.bf16.gmra.mxu0 %v1143
    %v1449 = vpop.f32.mrf.mxu0
    %v1450 = vadd.f32 0.0, %v1449
    %v1451 = vpop.f32.mrf.mxu0
    %v1452 = vpop.f32.mrf.mxu0
    %v1453 = vadd.f32 0.0, %v1452
    %v1454 = vpop.f32.mrf.mxu0
    %1455 = vmatprep.mubr.bf16.mxu0 0
    %1456 = vmatmul.mubr.bf16.gmra.mxu0 %v1144
    %v1457 = vpop.f32.mrf.mxu0
    %v1458 = vadd.f32 0.0, %v1457
    %v1459 = vpop.f32.mrf.mxu0
    %v1460 = vpop.f32.mrf.mxu0
    %v1461 = vadd.f32 0.0, %v1460
    %v1462 = vpop.f32.mrf.mxu0
    %1463 = vmatprep.mubr.bf16.mxu0 0
    %1464 = vmatmul.mubr.bf16.gmra.mxu0 %v1145
    %v1465 = vpop.f32.mrf.mxu0
    %v1466 = vadd.f32 0.0, %v1465
    %v1467 = vpop.f32.mrf.mxu0
    %v1468 = vpop.f32.mrf.mxu0
    %v1469 = vadd.f32 0.0, %v1468
    %v1470 = vpop.f32.mrf.mxu0
    %1471 = vmatprep.mubr.bf16.mxu0 0
    %1472 = vmatmul.mubr.bf16.gmra.mxu0 %v1146
    %v1473 = vpop.f32.mrf.mxu0
    %v1474 = vadd.f32 0.0, %v1473
    %v1475 = vpop.f32.mrf.mxu0
    %v1476 = vpop.f32.mrf.mxu0
    %v1477 = vadd.f32 0.0, %v1476
    %v1478 = vpop.f32.mrf.mxu0
    %1479 = vmatprep.mubr.bf16.mxu0 0
    %1480 = vmatmul.mubr.bf16.gmra.mxu0 %v1147
    %v1481 = vpop.f32.mrf.mxu0
    %v1482 = vadd.f32 0.0, %v1481
    %v1483 = vpop.f32.mrf.mxu0
    %v1484 = vpop.f32.mrf.mxu0
    %v1485 = vadd.f32 0.0, %v1484
    %v1486 = vpop.f32.mrf.mxu0
    %1487 = vmatprep.mubr.bf16.mxu0 0
    %1488 = vmatmul.mubr.bf16.gmra.mxu0 %v1148
    %v1489 = vpop.f32.mrf.mxu0
    %v1490 = vadd.f32 0.0, %v1489
    %v1491 = vpop.f32.mrf.mxu0
    %v1492 = vpop.f32.mrf.mxu0
    %v1493 = vadd.f32 0.0, %v1492
    %v1494 = vpop.f32.mrf.mxu0
    %1495 = vmatprep.mubr.bf16.mxu0 0
    %1496 = vmatmul.mubr.bf16.gmra.mxu0 %v1149
    %v1497 = vpop.f32.mrf.mxu0
    %v1498 = vadd.f32 0.0, %v1497
    %v1499 = vpop.f32.mrf.mxu0
    %v1500 = vpop.f32.mrf.mxu0
    %v1501 = vadd.f32 0.0, %v1500
    %v1502 = vpop.f32.mrf.mxu0
    %1503 = vdwg.mxu0
    %v1504 = vadd.f32 %v800, %v1250
    %v1505 = vadd.f32 %v803, %v1253
    %v1506 = vadd.f32 %v808, %v1258
    %v1507 = vadd.f32 %v811, %v1261
    %v1508 = vadd.f32 %v816, %v1266
    %v1509 = vadd.f32 %v819, %v1269
    %v1510 = vadd.f32 %v824, %v1274
    %v1511 = vadd.f32 %v827, %v1277
    %v1512 = vadd.f32 %v832, %v1282
    %v1513 = vadd.f32 %v835, %v1285
    %v1514 = vadd.f32 %v840, %v1290
    %v1515 = vadd.f32 %v843, %v1293
    %v1516 = vadd.f32 %v848, %v1298
    %v1517 = vadd.f32 %v851, %v1301
    %v1518 = vadd.f32 %v856, %v1306
    %v1519 = vadd.f32 %v859, %v1309
    %v1520 = vadd.f32 %v864, %v1314
    %v1521 = vadd.f32 %v867, %v1317
    %v1522 = vadd.f32 %v872, %v1322
    %v1523 = vadd.f32 %v875, %v1325
    %v1524 = vadd.f32 %v880, %v1330
    %v1525 = vadd.f32 %v883, %v1333
    %v1526 = vadd.f32 %v888, %v1338
    %v1527 = vadd.f32 %v891, %v1341
    %v1528 = vadd.f32 %v896, %v1346
    %v1529 = vadd.f32 %v899, %v1349
    %v1530 = vadd.f32 %v904, %v1354
    %v1531 = vadd.f32 %v907, %v1357
    %v1532 = vadd.f32 %v912, %v1362
    %v1533 = vadd.f32 %v915, %v1365
    %v1534 = vadd.f32 %v920, %v1370
    %v1535 = vadd.f32 %v923, %v1373
    %v1536 = vadd.f32 %v928, %v1378
    %v1537 = vadd.f32 %v931, %v1381
    %v1538 = vadd.f32 %v936, %v1386
    %v1539 = vadd.f32 %v939, %v1389
    %v1540 = vadd.f32 %v944, %v1394
    %v1541 = vadd.f32 %v947, %v1397
    %v1542 = vadd.f32 %v952, %v1402
    %v1543 = vadd.f32 %v955, %v1405
    %v1544 = vadd.f32 %v960, %v1410
    %v1545 = vadd.f32 %v963, %v1413
    %v1546 = vadd.f32 %v968, %v1418
    %v1547 = vadd.f32 %v971, %v1421
    %v1548 = vadd.f32 %v976, %v1426
    %v1549 = vadd.f32 %v979, %v1429
    %v1550 = vadd.f32 %v984, %v1434
    %v1551 = vadd.f32 %v987, %v1437
    %v1552 = vadd.f32 %v992, %v1442
    %v1553 = vadd.f32 %v995, %v1445
    %v1554 = vadd.f32 %v1000, %v1450
    %v1555 = vadd.f32 %v1003, %v1453
    %v1556 = vadd.f32 %v1008, %v1458
    %v1557 = vadd.f32 %v1011, %v1461
    %v1558 = vadd.f32 %v1016, %v1466
    %v1559 = vadd.f32 %v1019, %v1469
    %v1560 = vadd.f32 %v1024, %v1474
    %v1561 = vadd.f32 %v1027, %v1477
    %v1562 = vadd.f32 %v1032, %v1482
    %v1563 = vadd.f32 %v1035, %v1485
    %v1564 = vadd.f32 %v1040, %v1490
    %v1565 = vadd.f32 %v1043, %v1493
    %v1566 = vadd.f32 %v1048, %v1498
    %v1567 = vadd.f32 %v1051, %v1501
    %s1568 = scalar_lea.vmem %s0, 24
    %v1569 = vld [vmem:[%s1568] sm:$0xff]
    %v1570 = vld [vmem:[%s1568 + $0x8] sm:$0xff]
    %v1571 = vld [vmem:[%s1568 + $0x18] sm:$0xff]
    %v1572 = vld [vmem:[%s1568 + $0x20] sm:$0xff]
    %v1573 = vld [vmem:[%s1568 + $0x30] sm:$0xff]
    %v1574 = vld [vmem:[%s1568 + $0x38] sm:$0xff]
    %v1575 = vld [vmem:[%s1568 + $0x48] sm:$0xff]
    %v1576 = vld [vmem:[%s1568 + $0x50] sm:$0xff]
    %v1577 = vld [vmem:[%s1568 + $0x60] sm:$0xff]
    %v1578 = vld [vmem:[%s1568 + $0x68] sm:$0xff]
    %v1579 = vld [vmem:[%s1568 + $0x78] sm:$0xff]
    %v1580 = vld [vmem:[%s1568 + $0x80] sm:$0xff]
    %v1581 = vld [vmem:[%s1568 + $0x90] sm:$0xff]
    %v1582 = vld [vmem:[%s1568 + $0x98] sm:$0xff]
    %v1583 = vld [vmem:[%s1568 + $0xa8] sm:$0xff]
    %v1584 = vld [vmem:[%s1568 + $0xb0] sm:$0xff]
    %v1585 = vld [vmem:[%s1568 + $0xc0] sm:$0xff]
    %v1586 = vld [vmem:[%s1568 + $0xc8] sm:$0xff]
    %v1587 = vld [vmem:[%s1568 + $0xd8] sm:$0xff]
    %v1588 = vld [vmem:[%s1568 + $0xe0] sm:$0xff]
    %v1589 = vld [vmem:[%s1568 + $0xf0] sm:$0xff]
    %v1590 = vld [vmem:[%s1568 + $0xf8] sm:$0xff]
    %v1591 = vld [vmem:[%s1568 + $0x108] sm:$0xff]
    %v1592 = vld [vmem:[%s1568 + $0x110] sm:$0xff]
    %v1593 = vld [vmem:[%s1568 + $0x120] sm:$0xff]
    %v1594 = vld [vmem:[%s1568 + $0x128] sm:$0xff]
    %v1595 = vld [vmem:[%s1568 + $0x138] sm:$0xff]
    %v1596 = vld [vmem:[%s1568 + $0x140] sm:$0xff]
    %v1597 = vld [vmem:[%s1568 + $0x150] sm:$0xff]
    %v1598 = vld [vmem:[%s1568 + $0x158] sm:$0xff]
    %v1599 = vld [vmem:[%s1568 + $0x168] sm:$0xff]
    %v1600 = vld [vmem:[%s1568 + $0x170] sm:$0xff]
    %v1601 = vld [vmem:[%s1568 + $0x1b0] sm:$0xff]
    %v1602 = vld [vmem:[%s1568 + $0x1b8] sm:$0xff]
    %v1603 = vld [vmem:[%s1568 + $0x1c8] sm:$0xff]
    %v1604 = vld [vmem:[%s1568 + $0x1d0] sm:$0xff]
    %v1605 = vld [vmem:[%s1568 + $0x1e0] sm:$0xff]
    %v1606 = vld [vmem:[%s1568 + $0x1e8] sm:$0xff]
    %v1607 = vld [vmem:[%s1568 + $0x1f8] sm:$0xff]
    %v1608 = vld [vmem:[%s1568 + $0x200] sm:$0xff]
    %v1609 = vld [vmem:[%s1568 + $0x210] sm:$0xff]
    %v1610 = vld [vmem:[%s1568 + $0x218] sm:$0xff]
    %v1611 = vld [vmem:[%s1568 + $0x228] sm:$0xff]
    %v1612 = vld [vmem:[%s1568 + $0x230] sm:$0xff]
    %v1613 = vld [vmem:[%s1568 + $0x240] sm:$0xff]
    %v1614 = vld [vmem:[%s1568 + $0x248] sm:$0xff]
    %v1615 = vld [vmem:[%s1568 + $0x258] sm:$0xff]
    %v1616 = vld [vmem:[%s1568 + $0x260] sm:$0xff]
    %v1617 = vld [vmem:[%s1568 + $0x270] sm:$0xff]
    %v1618 = vld [vmem:[%s1568 + $0x278] sm:$0xff]
    %v1619 = vld [vmem:[%s1568 + $0x288] sm:$0xff]
    %v1620 = vld [vmem:[%s1568 + $0x290] sm:$0xff]
    %v1621 = vld [vmem:[%s1568 + $0x2a0] sm:$0xff]
    %v1622 = vld [vmem:[%s1568 + $0x2a8] sm:$0xff]
    %v1623 = vld [vmem:[%s1568 + $0x2b8] sm:$0xff]
    %v1624 = vld [vmem:[%s1568 + $0x2c0] sm:$0xff]
    %v1625 = vld [vmem:[%s1568 + $0x2d0] sm:$0xff]
    %v1626 = vld [vmem:[%s1568 + $0x2d8] sm:$0xff]
    %v1627 = vld [vmem:[%s1568 + $0x2e8] sm:$0xff]
    %v1628 = vld [vmem:[%s1568 + $0x2f0] sm:$0xff]
    %v1629 = vld [vmem:[%s1568 + $0x300] sm:$0xff]
    %v1630 = vld [vmem:[%s1568 + $0x308] sm:$0xff]
    %v1631 = vld [vmem:[%s1568 + $0x318] sm:$0xff]
    %v1632 = vld [vmem:[%s1568 + $0x320] sm:$0xff]
    %v1633 = vpack.c.bf16 %v1570, %v1569
    %v1634 = vpack.c.bf16 %v1572, %v1571
    %v1635 = vpack.c.bf16 %v1574, %v1573
    %v1636 = vpack.c.bf16 %v1576, %v1575
    %v1637 = vpack.c.bf16 %v1578, %v1577
    %v1638 = vpack.c.bf16 %v1580, %v1579
    %v1639 = vpack.c.bf16 %v1582, %v1581
    %v1640 = vpack.c.bf16 %v1584, %v1583
    %v1641 = vpack.c.bf16 %v1586, %v1585
    %v1642 = vpack.c.bf16 %v1588, %v1587
    %v1643 = vpack.c.bf16 %v1590, %v1589
    %v1644 = vpack.c.bf16 %v1592, %v1591
    %v1645 = vpack.c.bf16 %v1594, %v1593
    %v1646 = vpack.c.bf16 %v1596, %v1595
    %v1647 = vpack.c.bf16 %v1598, %v1597
    %v1648 = vpack.c.bf16 %v1600, %v1599
    %v1649 = vpack.c.bf16 %v1602, %v1601
    %v1650 = vpack.c.bf16 %v1604, %v1603
    %v1651 = vpack.c.bf16 %v1606, %v1605
    %v1652 = vpack.c.bf16 %v1608, %v1607
    %v1653 = vpack.c.bf16 %v1610, %v1609
    %v1654 = vpack.c.bf16 %v1612, %v1611
    %v1655 = vpack.c.bf16 %v1614, %v1613
    %v1656 = vpack.c.bf16 %v1616, %v1615
    %v1657 = vpack.c.bf16 %v1618, %v1617
    %v1658 = vpack.c.bf16 %v1620, %v1619
    %v1659 = vpack.c.bf16 %v1622, %v1621
    %v1660 = vpack.c.bf16 %v1624, %v1623
    %v1661 = vpack.c.bf16 %v1626, %v1625
    %v1662 = vpack.c.bf16 %v1628, %v1627
    %v1663 = vpack.c.bf16 %v1630, %v1629
    %v1664 = vpack.c.bf16 %v1632, %v1631
    %s1665 = scalar_lea.vmem %s2, 192
    %v1666 = vld [vmem:[%s1665] sm:$0xf]
    %v1667 = vld [vmem:[%s1665 + $0x4] sm:$0xf]
    %v1668 = vld [vmem:[%s1665 + $0x8] sm:$0xf]
    %v1669 = vld [vmem:[%s1665 + $0xc] sm:$0xf]
    %v1670 = vld [vmem:[%s1665 + $0x10] sm:$0xf]
    %v1671 = vld [vmem:[%s1665 + $0x14] sm:$0xf]
    %v1672 = vld [vmem:[%s1665 + $0x18] sm:$0xf]
    %v1673 = vld [vmem:[%s1665 + $0x1c] sm:$0xf]
    %v1674 = vld [vmem:[%s1665 + $0x20] sm:$0xf]
    %v1675 = vld [vmem:[%s1665 + $0x24] sm:$0xf]
    %v1676 = vld [vmem:[%s1665 + $0x28] sm:$0xf]
    %v1677 = vld [vmem:[%s1665 + $0x2c] sm:$0xf]
    %v1678 = vld [vmem:[%s1665 + $0x30] sm:$0xf]
    %v1679 = vld [vmem:[%s1665 + $0x34] sm:$0xf]
    %v1680 = vld [vmem:[%s1665 + $0x38] sm:$0xf]
    %v1681 = vld [vmem:[%s1665 + $0x3c] sm:$0xf]
    %v1698 = vunpack.c.l.b16 %v1666
    %v1699 = vunpack.c.l.b16 %v1667
    %v1700 = vunpack.c.l.b16 %v1668
    %v1701 = vunpack.c.l.b16 %v1669
    %v1702 = vunpack.c.l.b16 %v1670
    %v1703 = vunpack.c.l.b16 %v1671
    %v1704 = vunpack.c.l.b16 %v1672
    %v1705 = vunpack.c.l.b16 %v1673
    %v1706 = vunpack.c.l.b16 %v1674
    %v1707 = vunpack.c.l.b16 %v1675
    %v1708 = vunpack.c.l.b16 %v1676
    %v1709 = vunpack.c.l.b16 %v1677
    %v1710 = vunpack.c.l.b16 %v1678
    %v1711 = vunpack.c.l.b16 %v1679
    %v1712 = vunpack.c.l.b16 %v1680
    %v1713 = vunpack.c.l.b16 %v1681
    %v1714 = vpack.c.b16 %v1699, %v1698
    %v1715 = vpack.c.b16 %v1701, %v1700
    %v1716 = vpack.c.b16 %v1703, %v1702
    %v1717 = vpack.c.b16 %v1705, %v1704
    %v1718 = vpack.c.b16 %v1707, %v1706
    %v1719 = vpack.c.b16 %v1709, %v1708
    %v1720 = vpack.c.b16 %v1711, %v1710
    %v1721 = vpack.c.b16 %v1713, %v1712
    %1730 = vmatprep.subr.bf16.mxu0 0
    %1731 = vmatpush1.bf16.msra.mxu0 %v1721
    %1732 = vmatprep.subr.bf16.mxu0 0
    %1733 = vmatpush1.bf16.msra.mxu0 %v1720
    %1734 = vmatprep.subr.bf16.mxu0 0
    %1735 = vmatpush1.bf16.msra.mxu0 %v1719
    %1736 = vmatprep.subr.bf16.mxu0 0
    %1737 = vmatpush1.bf16.msra.mxu0 %v1718
    %1738 = vmatprep.subr.bf16.mxu0 0
    %1739 = vmatpush1.bf16.msra.mxu0 %v1717
    %1740 = vmatprep.subr.bf16.mxu0 0
    %1741 = vmatpush1.bf16.msra.mxu0 %v1716
    %1742 = vmatprep.subr.bf16.mxu0 0
    %1743 = vmatpush1.bf16.msra.mxu0 %v1715
    %1744 = vmatprep.subr.bf16.mxu0 0
    %1745 = vmatpush1.bf16.msra.mxu0 %v1714
    %1746 = vmatprep.subr.bf16.mxu0 0
    %1747 = vmatpush2.bf16.msra.mxu0 0
    %1748 = vmatprep.subr.bf16.mxu0 0
    %1749 = vmatpush2.bf16.msra.mxu0 0
    %1750 = vmatprep.subr.bf16.mxu0 0
    %1751 = vmatpush2.bf16.msra.mxu0 0
    %1752 = vmatprep.subr.bf16.mxu0 0
    %1753 = vmatpush2.bf16.msra.mxu0 0
    %1754 = vmatprep.subr.bf16.mxu0 0
    %1755 = vmatpush2.bf16.msra.mxu0 0
    %1756 = vmatprep.subr.bf16.mxu0 0
    %1757 = vmatpush2.bf16.msra.mxu0 0
    %1758 = vmatprep.subr.bf16.mxu0 0
    %1759 = vmatpush2.bf16.msra.mxu0 0
    %1760 = vmatprep.subr.bf16.mxu0 0
    %1761 = vmatpush2.bf16.msra.mxu0 0
    %1762 = vmatprep.mubr.bf16.mxu0 0
    %1763 = vmatmul.mubr.bf16.gmra.mxu0 %v1633
    %v1764 = vpop.f32.mrf.mxu0
    %v1765 = vadd.f32 0.0, %v1764
    %v1766 = vpop.f32.mrf.mxu0
    %v1767 = vpop.f32.mrf.mxu0
    %v1768 = vadd.f32 0.0, %v1767
    %v1769 = vpop.f32.mrf.mxu0
    %1770 = vmatprep.mubr.bf16.mxu0 0
    %1771 = vmatmul.mubr.bf16.gmra.mxu0 %v1634
    %v1772 = vpop.f32.mrf.mxu0
    %v1773 = vadd.f32 0.0, %v1772
    %v1774 = vpop.f32.mrf.mxu0
    %v1775 = vpop.f32.mrf.mxu0
    %v1776 = vadd.f32 0.0, %v1775
    %v1777 = vpop.f32.mrf.mxu0
    %1778 = vmatprep.mubr.bf16.mxu0 0
    %1779 = vmatmul.mubr.bf16.gmra.mxu0 %v1635
    %v1780 = vpop.f32.mrf.mxu0
    %v1781 = vadd.f32 0.0, %v1780
    %v1782 = vpop.f32.mrf.mxu0
    %v1783 = vpop.f32.mrf.mxu0
    %v1784 = vadd.f32 0.0, %v1783
    %v1785 = vpop.f32.mrf.mxu0
    %1786 = vmatprep.mubr.bf16.mxu0 0
    %1787 = vmatmul.mubr.bf16.gmra.mxu0 %v1636
    %v1788 = vpop.f32.mrf.mxu0
    %v1789 = vadd.f32 0.0, %v1788
    %v1790 = vpop.f32.mrf.mxu0
    %v1791 = vpop.f32.mrf.mxu0
    %v1792 = vadd.f32 0.0, %v1791
    %v1793 = vpop.f32.mrf.mxu0
    %1794 = vmatprep.mubr.bf16.mxu0 0
    %1795 = vmatmul.mubr.bf16.gmra.mxu0 %v1637
    %v1796 = vpop.f32.mrf.mxu0
    %v1797 = vadd.f32 0.0, %v1796
    %v1798 = vpop.f32.mrf.mxu0
    %v1799 = vpop.f32.mrf.mxu0
    %v1800 = vadd.f32 0.0, %v1799
    %v1801 = vpop.f32.mrf.mxu0
    %1802 = vmatprep.mubr.bf16.mxu0 0
    %1803 = vmatmul.mubr.bf16.gmra.mxu0 %v1638
    %v1804 = vpop.f32.mrf.mxu0
    %v1805 = vadd.f32 0.0, %v1804
    %v1806 = vpop.f32.mrf.mxu0
    %v1807 = vpop.f32.mrf.mxu0
    %v1808 = vadd.f32 0.0, %v1807
    %v1809 = vpop.f32.mrf.mxu0
    %1810 = vmatprep.mubr.bf16.mxu0 0
    %1811 = vmatmul.mubr.bf16.gmra.mxu0 %v1639
    %v1812 = vpop.f32.mrf.mxu0
    %v1813 = vadd.f32 0.0, %v1812
    %v1814 = vpop.f32.mrf.mxu0
    %v1815 = vpop.f32.mrf.mxu0
    %v1816 = vadd.f32 0.0, %v1815
    %v1817 = vpop.f32.mrf.mxu0
    %1818 = vmatprep.mubr.bf16.mxu0 0
    %1819 = vmatmul.mubr.bf16.gmra.mxu0 %v1640
    %v1820 = vpop.f32.mrf.mxu0
    %v1821 = vadd.f32 0.0, %v1820
    %v1822 = vpop.f32.mrf.mxu0
    %v1823 = vpop.f32.mrf.mxu0
    %v1824 = vadd.f32 0.0, %v1823
    %v1825 = vpop.f32.mrf.mxu0
    %1826 = vmatprep.mubr.bf16.mxu0 0
    %1827 = vmatmul.mubr.bf16.gmra.mxu0 %v1641
    %v1828 = vpop.f32.mrf.mxu0
    %v1829 = vadd.f32 0.0, %v1828
    %v1830 = vpop.f32.mrf.mxu0
    %v1831 = vpop.f32.mrf.mxu0
    %v1832 = vadd.f32 0.0, %v1831
    %v1833 = vpop.f32.mrf.mxu0
    %1834 = vmatprep.mubr.bf16.mxu0 0
    %1835 = vmatmul.mubr.bf16.gmra.mxu0 %v1642
    %v1836 = vpop.f32.mrf.mxu0
    %v1837 = vadd.f32 0.0, %v1836
    %v1838 = vpop.f32.mrf.mxu0
    %v1839 = vpop.f32.mrf.mxu0
    %v1840 = vadd.f32 0.0, %v1839
    %v1841 = vpop.f32.mrf.mxu0
    %1842 = vmatprep.mubr.bf16.mxu0 0
    %1843 = vmatmul.mubr.bf16.gmra.mxu0 %v1643
    %v1844 = vpop.f32.mrf.mxu0
    %v1845 = vadd.f32 0.0, %v1844
    %v1846 = vpop.f32.mrf.mxu0
    %v1847 = vpop.f32.mrf.mxu0
    %v1848 = vadd.f32 0.0, %v1847
    %v1849 = vpop.f32.mrf.mxu0
    %1850 = vmatprep.mubr.bf16.mxu0 0
    %1851 = vmatmul.mubr.bf16.gmra.mxu0 %v1644
    %v1852 = vpop.f32.mrf.mxu0
    %v1853 = vadd.f32 0.0, %v1852
    %v1854 = vpop.f32.mrf.mxu0
    %v1855 = vpop.f32.mrf.mxu0
    %v1856 = vadd.f32 0.0, %v1855
    %v1857 = vpop.f32.mrf.mxu0
    %1858 = vmatprep.mubr.bf16.mxu0 0
    %1859 = vmatmul.mubr.bf16.gmra.mxu0 %v1645
    %v1860 = vpop.f32.mrf.mxu0
    %v1861 = vadd.f32 0.0, %v1860
    %v1862 = vpop.f32.mrf.mxu0
    %v1863 = vpop.f32.mrf.mxu0
    %v1864 = vadd.f32 0.0, %v1863
    %v1865 = vpop.f32.mrf.mxu0
    %1866 = vmatprep.mubr.bf16.mxu0 0
    %1867 = vmatmul.mubr.bf16.gmra.mxu0 %v1646
    %v1868 = vpop.f32.mrf.mxu0
    %v1869 = vadd.f32 0.0, %v1868
    %v1870 = vpop.f32.mrf.mxu0
    %v1871 = vpop.f32.mrf.mxu0
    %v1872 = vadd.f32 0.0, %v1871
    %v1873 = vpop.f32.mrf.mxu0
    %1874 = vmatprep.mubr.bf16.mxu0 0
    %1875 = vmatmul.mubr.bf16.gmra.mxu0 %v1647
    %v1876 = vpop.f32.mrf.mxu0
    %v1877 = vadd.f32 0.0, %v1876
    %v1878 = vpop.f32.mrf.mxu0
    %v1879 = vpop.f32.mrf.mxu0
    %v1880 = vadd.f32 0.0, %v1879
    %v1881 = vpop.f32.mrf.mxu0
    %1882 = vmatprep.mubr.bf16.mxu0 0
    %1883 = vmatmul.mubr.bf16.gmra.mxu0 %v1648
    %v1884 = vpop.f32.mrf.mxu0
    %v1885 = vadd.f32 0.0, %v1884
    %v1886 = vpop.f32.mrf.mxu0
    %v1887 = vpop.f32.mrf.mxu0
    %v1888 = vadd.f32 0.0, %v1887
    %v1889 = vpop.f32.mrf.mxu0
    %1890 = vmatprep.mubr.bf16.mxu0 0
    %1891 = vmatmul.mubr.bf16.gmra.mxu0 %v1649
    %v1892 = vpop.f32.mrf.mxu0
    %v1893 = vadd.f32 0.0, %v1892
    %v1894 = vpop.f32.mrf.mxu0
    %v1895 = vpop.f32.mrf.mxu0
    %v1896 = vadd.f32 0.0, %v1895
    %v1897 = vpop.f32.mrf.mxu0
    %1898 = vmatprep.mubr.bf16.mxu0 0
    %1899 = vmatmul.mubr.bf16.gmra.mxu0 %v1650
    %v1900 = vpop.f32.mrf.mxu0
    %v1901 = vadd.f32 0.0, %v1900
    %v1902 = vpop.f32.mrf.mxu0
    %v1903 = vpop.f32.mrf.mxu0
    %v1904 = vadd.f32 0.0, %v1903
    %v1905 = vpop.f32.mrf.mxu0
    %1906 = vmatprep.mubr.bf16.mxu0 0
    %1907 = vmatmul.mubr.bf16.gmra.mxu0 %v1651
    %v1908 = vpop.f32.mrf.mxu0
    %v1909 = vadd.f32 0.0, %v1908
    %v1910 = vpop.f32.mrf.mxu0
    %v1911 = vpop.f32.mrf.mxu0
    %v1912 = vadd.f32 0.0, %v1911
    %v1913 = vpop.f32.mrf.mxu0
    %1914 = vmatprep.mubr.bf16.mxu0 0
    %1915 = vmatmul.mubr.bf16.gmra.mxu0 %v1652
    %v1916 = vpop.f32.mrf.mxu0
    %v1917 = vadd.f32 0.0, %v1916
    %v1918 = vpop.f32.mrf.mxu0
    %v1919 = vpop.f32.mrf.mxu0
    %v1920 = vadd.f32 0.0, %v1919
    %v1921 = vpop.f32.mrf.mxu0
    %1922 = vmatprep.mubr.bf16.mxu0 0
    %1923 = vmatmul.mubr.bf16.gmra.mxu0 %v1653
    %v1924 = vpop.f32.mrf.mxu0
    %v1925 = vadd.f32 0.0, %v1924
    %v1926 = vpop.f32.mrf.mxu0
    %v1927 = vpop.f32.mrf.mxu0
    %v1928 = vadd.f32 0.0, %v1927
    %v1929 = vpop.f32.mrf.mxu0
    %1930 = vmatprep.mubr.bf16.mxu0 0
    %1931 = vmatmul.mubr.bf16.gmra.mxu0 %v1654
    %v1932 = vpop.f32.mrf.mxu0
    %v1933 = vadd.f32 0.0, %v1932
    %v1934 = vpop.f32.mrf.mxu0
    %v1935 = vpop.f32.mrf.mxu0
    %v1936 = vadd.f32 0.0, %v1935
    %v1937 = vpop.f32.mrf.mxu0
    %1938 = vmatprep.mubr.bf16.mxu0 0
    %1939 = vmatmul.mubr.bf16.gmra.mxu0 %v1655
    %v1940 = vpop.f32.mrf.mxu0
    %v1941 = vadd.f32 0.0, %v1940
    %v1942 = vpop.f32.mrf.mxu0
    %v1943 = vpop.f32.mrf.mxu0
    %v1944 = vadd.f32 0.0, %v1943
    %v1945 = vpop.f32.mrf.mxu0
    %1946 = vmatprep.mubr.bf16.mxu0 0
    %1947 = vmatmul.mubr.bf16.gmra.mxu0 %v1656
    %v1948 = vpop.f32.mrf.mxu0
    %v1949 = vadd.f32 0.0, %v1948
    %v1950 = vpop.f32.mrf.mxu0
    %v1951 = vpop.f32.mrf.mxu0
    %v1952 = vadd.f32 0.0, %v1951
    %v1953 = vpop.f32.mrf.mxu0
    %1954 = vmatprep.mubr.bf16.mxu0 0
    %1955 = vmatmul.mubr.bf16.gmra.mxu0 %v1657
    %v1956 = vpop.f32.mrf.mxu0
    %v1957 = vadd.f32 0.0, %v1956
    %v1958 = vpop.f32.mrf.mxu0
    %v1959 = vpop.f32.mrf.mxu0
    %v1960 = vadd.f32 0.0, %v1959
    %v1961 = vpop.f32.mrf.mxu0
    %1962 = vmatprep.mubr.bf16.mxu0 0
    %1963 = vmatmul.mubr.bf16.gmra.mxu0 %v1658
    %v1964 = vpop.f32.mrf.mxu0
    %v1965 = vadd.f32 0.0, %v1964
    %v1966 = vpop.f32.mrf.mxu0
    %v1967 = vpop.f32.mrf.mxu0
    %v1968 = vadd.f32 0.0, %v1967
    %v1969 = vpop.f32.mrf.mxu0
    %1970 = vmatprep.mubr.bf16.mxu0 0
    %1971 = vmatmul.mubr.bf16.gmra.mxu0 %v1659
    %v1972 = vpop.f32.mrf.mxu0
    %v1973 = vadd.f32 0.0, %v1972
    %v1974 = vpop.f32.mrf.mxu0
    %v1975 = vpop.f32.mrf.mxu0
    %v1976 = vadd.f32 0.0, %v1975
    %v1977 = vpop.f32.mrf.mxu0
    %1978 = vmatprep.mubr.bf16.mxu0 0
    %1979 = vmatmul.mubr.bf16.gmra.mxu0 %v1660
    %v1980 = vpop.f32.mrf.mxu0
    %v1981 = vadd.f32 0.0, %v1980
    %v1982 = vpop.f32.mrf.mxu0
    %v1983 = vpop.f32.mrf.mxu0
    %v1984 = vadd.f32 0.0, %v1983
    %v1985 = vpop.f32.mrf.mxu0
    %1986 = vmatprep.mubr.bf16.mxu0 0
    %1987 = vmatmul.mubr.bf16.gmra.mxu0 %v1661
    %v1988 = vpop.f32.mrf.mxu0
    %v1989 = vadd.f32 0.0, %v1988
    %v1990 = vpop.f32.mrf.mxu0
    %v1991 = vpop.f32.mrf.mxu0
    %v1992 = vadd.f32 0.0, %v1991
    %v1993 = vpop.f32.mrf.mxu0
    %1994 = vmatprep.mubr.bf16.mxu0 0
    %1995 = vmatmul.mubr.bf16.gmra.mxu0 %v1662
    %v1996 = vpop.f32.mrf.mxu0
    %v1997 = vadd.f32 0.0, %v1996
    %v1998 = vpop.f32.mrf.mxu0
    %v1999 = vpop.f32.mrf.mxu0
    %v2000 = vadd.f32 0.0, %v1999
    %v2001 = vpop.f32.mrf.mxu0
    %2002 = vmatprep.mubr.bf16.mxu0 0
    %2003 = vmatmul.mubr.bf16.gmra.mxu0 %v1663
    %v2004 = vpop.f32.mrf.mxu0
    %v2005 = vadd.f32 0.0, %v2004
    %v2006 = vpop.f32.mrf.mxu0
    %v2007 = vpop.f32.mrf.mxu0
    %v2008 = vadd.f32 0.0, %v2007
    %v2009 = vpop.f32.mrf.mxu0
    %2010 = vmatprep.mubr.bf16.mxu0 0
    %2011 = vmatmul.mubr.bf16.gmra.mxu0 %v1664
    %v2012 = vpop.f32.mrf.mxu0
    %v2013 = vadd.f32 0.0, %v2012
    %v2014 = vpop.f32.mrf.mxu0
    %v2015 = vpop.f32.mrf.mxu0
    %v2016 = vadd.f32 0.0, %v2015
    %v2017 = vpop.f32.mrf.mxu0
    %2018 = vdwg.mxu0
    %v2019 = vadd.f32 %v1504, %v1765
    %v2020 = vadd.f32 %v1505, %v1768
    %v2021 = vadd.f32 %v1506, %v1773
    %v2022 = vadd.f32 %v1507, %v1776
    %v2023 = vadd.f32 %v1508, %v1781
    %v2024 = vadd.f32 %v1509, %v1784
    %v2025 = vadd.f32 %v1510, %v1789
    %v2026 = vadd.f32 %v1511, %v1792
    %v2027 = vadd.f32 %v1512, %v1797
    %v2028 = vadd.f32 %v1513, %v1800
    %v2029 = vadd.f32 %v1514, %v1805
    %v2030 = vadd.f32 %v1515, %v1808
    %v2031 = vadd.f32 %v1516, %v1813
    %v2032 = vadd.f32 %v1517, %v1816
    %v2033 = vadd.f32 %v1518, %v1821
    %v2034 = vadd.f32 %v1519, %v1824
    %v2035 = vadd.f32 %v1520, %v1829
    %v2036 = vadd.f32 %v1521, %v1832
    %v2037 = vadd.f32 %v1522, %v1837
    %v2038 = vadd.f32 %v1523, %v1840
    %v2039 = vadd.f32 %v1524, %v1845
    %v2040 = vadd.f32 %v1525, %v1848
    %v2041 = vadd.f32 %v1526, %v1853
    %v2042 = vadd.f32 %v1527, %v1856
    %v2043 = vadd.f32 %v1528, %v1861
    %v2044 = vadd.f32 %v1529, %v1864
    %v2045 = vadd.f32 %v1530, %v1869
    %v2046 = vadd.f32 %v1531, %v1872
    %v2047 = vadd.f32 %v1532, %v1877
    %v2048 = vadd.f32 %v1533, %v1880
    %v2049 = vadd.f32 %v1534, %v1885
    %v2050 = vadd.f32 %v1535, %v1888
    %v2051 = vadd.f32 %v1536, %v1893
    %v2052 = vadd.f32 %v1537, %v1896
    %v2053 = vadd.f32 %v1538, %v1901
    %v2054 = vadd.f32 %v1539, %v1904
    %v2055 = vadd.f32 %v1540, %v1909
    %v2056 = vadd.f32 %v1541, %v1912
    %v2057 = vadd.f32 %v1542, %v1917
    %v2058 = vadd.f32 %v1543, %v1920
    %v2059 = vadd.f32 %v1544, %v1925
    %v2060 = vadd.f32 %v1545, %v1928
    %v2061 = vadd.f32 %v1546, %v1933
    %v2062 = vadd.f32 %v1547, %v1936
    %v2063 = vadd.f32 %v1548, %v1941
    %v2064 = vadd.f32 %v1549, %v1944
    %v2065 = vadd.f32 %v1550, %v1949
    %v2066 = vadd.f32 %v1551, %v1952
    %v2067 = vadd.f32 %v1552, %v1957
    %v2068 = vadd.f32 %v1553, %v1960
    %v2069 = vadd.f32 %v1554, %v1965
    %v2070 = vadd.f32 %v1555, %v1968
    %v2071 = vadd.f32 %v1556, %v1973
    %v2072 = vadd.f32 %v1557, %v1976
    %v2073 = vadd.f32 %v1558, %v1981
    %v2074 = vadd.f32 %v1559, %v1984
    %v2075 = vadd.f32 %v1560, %v1989
    %v2076 = vadd.f32 %v1561, %v1992
    %v2077 = vadd.f32 %v1562, %v1997
    %v2078 = vadd.f32 %v1563, %v2000
    %v2079 = vadd.f32 %v1564, %v2005
    %v2080 = vadd.f32 %v1565, %v2008
    %v2081 = vadd.f32 %v1566, %v2013
    %v2082 = vadd.f32 %v1567, %v2016
    %v2083 = vld [vmem:[%s1568 + $0x1] sm:$0xff]
    %v2084 = vld [vmem:[%s1568 + $0x9] sm:$0xff]
    %v2085 = vld [vmem:[%s1568 + $0x19] sm:$0xff]
    %v2086 = vld [vmem:[%s1568 + $0x21] sm:$0xff]
    %v2087 = vld [vmem:[%s1568 + $0x31] sm:$0xff]
    %v2088 = vld [vmem:[%s1568 + $0x39] sm:$0xff]
    %v2089 = vld [vmem:[%s1568 + $0x49] sm:$0xff]
    %v2090 = vld [vmem:[%s1568 + $0x51] sm:$0xff]
    %v2091 = vld [vmem:[%s1568 + $0x61] sm:$0xff]
    %v2092 = vld [vmem:[%s1568 + $0x69] sm:$0xff]
    %v2093 = vld [vmem:[%s1568 + $0x79] sm:$0xff]
    %v2094 = vld [vmem:[%s1568 + $0x81] sm:$0xff]
    %v2095 = vld [vmem:[%s1568 + $0x91] sm:$0xff]
    %v2096 = vld [vmem:[%s1568 + $0x99] sm:$0xff]
    %v2097 = vld [vmem:[%s1568 + $0xa9] sm:$0xff]
    %v2098 = vld [vmem:[%s1568 + $0xb1] sm:$0xff]
    %v2099 = vld [vmem:[%s1568 + $0xc1] sm:$0xff]
    %v2100 = vld [vmem:[%s1568 + $0xc9] sm:$0xff]
    %v2101 = vld [vmem:[%s1568 + $0xd9] sm:$0xff]
    %v2102 = vld [vmem:[%s1568 + $0xe1] sm:$0xff]
    %v2103 = vld [vmem:[%s1568 + $0xf1] sm:$0xff]
    %v2104 = vld [vmem:[%s1568 + $0xf9] sm:$0xff]
    %v2105 = vld [vmem:[%s1568 + $0x109] sm:$0xff]
    %v2106 = vld [vmem:[%s1568 + $0x111] sm:$0xff]
    %v2107 = vld [vmem:[%s1568 + $0x121] sm:$0xff]
    %v2108 = vld [vmem:[%s1568 + $0x129] sm:$0xff]
    %v2109 = vld [vmem:[%s1568 + $0x139] sm:$0xff]
    %v2110 = vld [vmem:[%s1568 + $0x141] sm:$0xff]
    %v2111 = vld [vmem:[%s1568 + $0x151] sm:$0xff]
    %v2112 = vld [vmem:[%s1568 + $0x159] sm:$0xff]
    %v2113 = vld [vmem:[%s1568 + $0x169] sm:$0xff]
    %v2114 = vld [vmem:[%s1568 + $0x171] sm:$0xff]
    %v2115 = vld [vmem:[%s1568 + $0x1b1] sm:$0xff]
    %v2116 = vld [vmem:[%s1568 + $0x1b9] sm:$0xff]
    %v2117 = vld [vmem:[%s1568 + $0x1c9] sm:$0xff]
    %v2118 = vld [vmem:[%s1568 + $0x1d1] sm:$0xff]
    %v2119 = vld [vmem:[%s1568 + $0x1e1] sm:$0xff]
    %v2120 = vld [vmem:[%s1568 + $0x1e9] sm:$0xff]
    %v2121 = vld [vmem:[%s1568 + $0x1f9] sm:$0xff]
    %v2122 = vld [vmem:[%s1568 + $0x201] sm:$0xff]
    %v2123 = vld [vmem:[%s1568 + $0x211] sm:$0xff]
    %v2124 = vld [vmem:[%s1568 + $0x219] sm:$0xff]
    %v2125 = vld [vmem:[%s1568 + $0x229] sm:$0xff]
    %v2126 = vld [vmem:[%s1568 + $0x231] sm:$0xff]
    %v2127 = vld [vmem:[%s1568 + $0x241] sm:$0xff]
    %v2128 = vld [vmem:[%s1568 + $0x249] sm:$0xff]
    %v2129 = vld [vmem:[%s1568 + $0x259] sm:$0xff]
    %v2130 = vld [vmem:[%s1568 + $0x261] sm:$0xff]
    %v2131 = vld [vmem:[%s1568 + $0x271] sm:$0xff]
    %v2132 = vld [vmem:[%s1568 + $0x279] sm:$0xff]
    %v2133 = vld [vmem:[%s1568 + $0x289] sm:$0xff]
    %v2134 = vld [vmem:[%s1568 + $0x291] sm:$0xff]
    %v2135 = vld [vmem:[%s1568 + $0x2a1] sm:$0xff]
    %v2136 = vld [vmem:[%s1568 + $0x2a9] sm:$0xff]
    %v2137 = vld [vmem:[%s1568 + $0x2b9] sm:$0xff]
    %v2138 = vld [vmem:[%s1568 + $0x2c1] sm:$0xff]
    %v2139 = vld [vmem:[%s1568 + $0x2d1] sm:$0xff]
    %v2140 = vld [vmem:[%s1568 + $0x2d9] sm:$0xff]
    %v2141 = vld [vmem:[%s1568 + $0x2e9] sm:$0xff]
    %v2142 = vld [vmem:[%s1568 + $0x2f1] sm:$0xff]
    %v2143 = vld [vmem:[%s1568 + $0x301] sm:$0xff]
    %v2144 = vld [vmem:[%s1568 + $0x309] sm:$0xff]
    %v2145 = vld [vmem:[%s1568 + $0x319] sm:$0xff]
    %v2146 = vld [vmem:[%s1568 + $0x321] sm:$0xff]
    %v2147 = vpack.c.bf16 %v2084, %v2083
    %v2148 = vpack.c.bf16 %v2086, %v2085
    %v2149 = vpack.c.bf16 %v2088, %v2087
    %v2150 = vpack.c.bf16 %v2090, %v2089
    %v2151 = vpack.c.bf16 %v2092, %v2091
    %v2152 = vpack.c.bf16 %v2094, %v2093
    %v2153 = vpack.c.bf16 %v2096, %v2095
    %v2154 = vpack.c.bf16 %v2098, %v2097
    %v2155 = vpack.c.bf16 %v2100, %v2099
    %v2156 = vpack.c.bf16 %v2102, %v2101
    %v2157 = vpack.c.bf16 %v2104, %v2103
    %v2158 = vpack.c.bf16 %v2106, %v2105
    %v2159 = vpack.c.bf16 %v2108, %v2107
    %v2160 = vpack.c.bf16 %v2110, %v2109
    %v2161 = vpack.c.bf16 %v2112, %v2111
    %v2162 = vpack.c.bf16 %v2114, %v2113
    %v2163 = vpack.c.bf16 %v2116, %v2115
    %v2164 = vpack.c.bf16 %v2118, %v2117
    %v2165 = vpack.c.bf16 %v2120, %v2119
    %v2166 = vpack.c.bf16 %v2122, %v2121
    %v2167 = vpack.c.bf16 %v2124, %v2123
    %v2168 = vpack.c.bf16 %v2126, %v2125
    %v2169 = vpack.c.bf16 %v2128, %v2127
    %v2170 = vpack.c.bf16 %v2130, %v2129
    %v2171 = vpack.c.bf16 %v2132, %v2131
    %v2172 = vpack.c.bf16 %v2134, %v2133
    %v2173 = vpack.c.bf16 %v2136, %v2135
    %v2174 = vpack.c.bf16 %v2138, %v2137
    %v2175 = vpack.c.bf16 %v2140, %v2139
    %v2176 = vpack.c.bf16 %v2142, %v2141
    %v2177 = vpack.c.bf16 %v2144, %v2143
    %v2178 = vpack.c.bf16 %v2146, %v2145
    %s2179 = scalar_lea.vmem %s2, 256
    %v2180 = vld [vmem:[%s2179] sm:$0xf]
    %v2181 = vld [vmem:[%s2179 + $0x4] sm:$0xf]
    %v2182 = vld [vmem:[%s2179 + $0x8] sm:$0xf]
    %v2183 = vld [vmem:[%s2179 + $0xc] sm:$0xf]
    %v2184 = vld [vmem:[%s2179 + $0x10] sm:$0xf]
    %v2185 = vld [vmem:[%s2179 + $0x14] sm:$0xf]
    %v2186 = vld [vmem:[%s2179 + $0x18] sm:$0xf]
    %v2187 = vld [vmem:[%s2179 + $0x1c] sm:$0xf]
    %v2188 = vld [vmem:[%s2179 + $0x20] sm:$0xf]
    %v2189 = vld [vmem:[%s2179 + $0x24] sm:$0xf]
    %v2190 = vld [vmem:[%s2179 + $0x28] sm:$0xf]
    %v2191 = vld [vmem:[%s2179 + $0x2c] sm:$0xf]
    %v2192 = vld [vmem:[%s2179 + $0x30] sm:$0xf]
    %v2193 = vld [vmem:[%s2179 + $0x34] sm:$0xf]
    %v2194 = vld [vmem:[%s2179 + $0x38] sm:$0xf]
    %v2195 = vld [vmem:[%s2179 + $0x3c] sm:$0xf]
    %v2212 = vunpack.c.l.b16 %v2180
    %v2213 = vunpack.c.l.b16 %v2181
    %v2214 = vunpack.c.l.b16 %v2182
    %v2215 = vunpack.c.l.b16 %v2183
    %v2216 = vunpack.c.l.b16 %v2184
    %v2217 = vunpack.c.l.b16 %v2185
    %v2218 = vunpack.c.l.b16 %v2186
    %v2219 = vunpack.c.l.b16 %v2187
    %v2220 = vunpack.c.l.b16 %v2188
    %v2221 = vunpack.c.l.b16 %v2189
    %v2222 = vunpack.c.l.b16 %v2190
    %v2223 = vunpack.c.l.b16 %v2191
    %v2224 = vunpack.c.l.b16 %v2192
    %v2225 = vunpack.c.l.b16 %v2193
    %v2226 = vunpack.c.l.b16 %v2194
    %v2227 = vunpack.c.l.b16 %v2195
    %v2228 = vpack.c.b16 %v2213, %v2212
    %v2229 = vpack.c.b16 %v2215, %v2214
    %v2230 = vpack.c.b16 %v2217, %v2216
    %v2231 = vpack.c.b16 %v2219, %v2218
    %v2232 = vpack.c.b16 %v2221, %v2220
    %v2233 = vpack.c.b16 %v2223, %v2222
    %v2234 = vpack.c.b16 %v2225, %v2224
    %v2235 = vpack.c.b16 %v2227, %v2226
    %2244 = vmatprep.subr.bf16.mxu0 0
    %2245 = vmatpush1.bf16.msra.mxu0 %v2235
    %2246 = vmatprep.subr.bf16.mxu0 0
    %2247 = vmatpush1.bf16.msra.mxu0 %v2234
    %2248 = vmatprep.subr.bf16.mxu0 0
    %2249 = vmatpush1.bf16.msra.mxu0 %v2233
    %2250 = vmatprep.subr.bf16.mxu0 0
    %2251 = vmatpush1.bf16.msra.mxu0 %v2232
    %2252 = vmatprep.subr.bf16.mxu0 0
    %2253 = vmatpush1.bf16.msra.mxu0 %v2231
    %2254 = vmatprep.subr.bf16.mxu0 0
    %2255 = vmatpush1.bf16.msra.mxu0 %v2230
    %2256 = vmatprep.subr.bf16.mxu0 0
    %2257 = vmatpush1.bf16.msra.mxu0 %v2229
    %2258 = vmatprep.subr.bf16.mxu0 0
    %2259 = vmatpush1.bf16.msra.mxu0 %v2228
    %2260 = vmatprep.subr.bf16.mxu0 0
    %2261 = vmatpush2.bf16.msra.mxu0 0
    %2262 = vmatprep.subr.bf16.mxu0 0
    %2263 = vmatpush2.bf16.msra.mxu0 0
    %2264 = vmatprep.subr.bf16.mxu0 0
    %2265 = vmatpush2.bf16.msra.mxu0 0
    %2266 = vmatprep.subr.bf16.mxu0 0
    %2267 = vmatpush2.bf16.msra.mxu0 0
    %2268 = vmatprep.subr.bf16.mxu0 0
    %2269 = vmatpush2.bf16.msra.mxu0 0
    %2270 = vmatprep.subr.bf16.mxu0 0
    %2271 = vmatpush2.bf16.msra.mxu0 0
    %2272 = vmatprep.subr.bf16.mxu0 0
    %2273 = vmatpush2.bf16.msra.mxu0 0
    %2274 = vmatprep.subr.bf16.mxu0 0
    %2275 = vmatpush2.bf16.msra.mxu0 0
    %2276 = vmatprep.mubr.bf16.mxu0 0
    %2277 = vmatmul.mubr.bf16.gmra.mxu0 %v2147
    %v2278 = vpop.f32.mrf.mxu0
    %v2279 = vadd.f32 0.0, %v2278
    %v2280 = vpop.f32.mrf.mxu0
    %v2281 = vpop.f32.mrf.mxu0
    %v2282 = vadd.f32 0.0, %v2281
    %v2283 = vpop.f32.mrf.mxu0
    %2284 = vmatprep.mubr.bf16.mxu0 0
    %2285 = vmatmul.mubr.bf16.gmra.mxu0 %v2148
    %v2286 = vpop.f32.mrf.mxu0
    %v2287 = vadd.f32 0.0, %v2286
    %v2288 = vpop.f32.mrf.mxu0
    %v2289 = vpop.f32.mrf.mxu0
    %v2290 = vadd.f32 0.0, %v2289
    %v2291 = vpop.f32.mrf.mxu0
    %2292 = vmatprep.mubr.bf16.mxu0 0
    %2293 = vmatmul.mubr.bf16.gmra.mxu0 %v2149
    %v2294 = vpop.f32.mrf.mxu0
    %v2295 = vadd.f32 0.0, %v2294
    %v2296 = vpop.f32.mrf.mxu0
    %v2297 = vpop.f32.mrf.mxu0
    %v2298 = vadd.f32 0.0, %v2297
    %v2299 = vpop.f32.mrf.mxu0
    %2300 = vmatprep.mubr.bf16.mxu0 0
    %2301 = vmatmul.mubr.bf16.gmra.mxu0 %v2150
    %v2302 = vpop.f32.mrf.mxu0
    %v2303 = vadd.f32 0.0, %v2302
    %v2304 = vpop.f32.mrf.mxu0
    %v2305 = vpop.f32.mrf.mxu0
    %v2306 = vadd.f32 0.0, %v2305
    %v2307 = vpop.f32.mrf.mxu0
    %2308 = vmatprep.mubr.bf16.mxu0 0
    %2309 = vmatmul.mubr.bf16.gmra.mxu0 %v2151
    %v2310 = vpop.f32.mrf.mxu0
    %v2311 = vadd.f32 0.0, %v2310
    %v2312 = vpop.f32.mrf.mxu0
    %v2313 = vpop.f32.mrf.mxu0
    %v2314 = vadd.f32 0.0, %v2313
    %v2315 = vpop.f32.mrf.mxu0
    %2316 = vmatprep.mubr.bf16.mxu0 0
    %2317 = vmatmul.mubr.bf16.gmra.mxu0 %v2152
    %v2318 = vpop.f32.mrf.mxu0
    %v2319 = vadd.f32 0.0, %v2318
    %v2320 = vpop.f32.mrf.mxu0
    %v2321 = vpop.f32.mrf.mxu0
    %v2322 = vadd.f32 0.0, %v2321
    %v2323 = vpop.f32.mrf.mxu0
    %2324 = vmatprep.mubr.bf16.mxu0 0
    %2325 = vmatmul.mubr.bf16.gmra.mxu0 %v2153
    %v2326 = vpop.f32.mrf.mxu0
    %v2327 = vadd.f32 0.0, %v2326
    %v2328 = vpop.f32.mrf.mxu0
    %v2329 = vpop.f32.mrf.mxu0
    %v2330 = vadd.f32 0.0, %v2329
    %v2331 = vpop.f32.mrf.mxu0
    %2332 = vmatprep.mubr.bf16.mxu0 0
    %2333 = vmatmul.mubr.bf16.gmra.mxu0 %v2154
    %v2334 = vpop.f32.mrf.mxu0
    %v2335 = vadd.f32 0.0, %v2334
    %v2336 = vpop.f32.mrf.mxu0
    %v2337 = vpop.f32.mrf.mxu0
    %v2338 = vadd.f32 0.0, %v2337
    %v2339 = vpop.f32.mrf.mxu0
    %2340 = vmatprep.mubr.bf16.mxu0 0
    %2341 = vmatmul.mubr.bf16.gmra.mxu0 %v2155
    %v2342 = vpop.f32.mrf.mxu0
    %v2343 = vadd.f32 0.0, %v2342
    %v2344 = vpop.f32.mrf.mxu0
    %v2345 = vpop.f32.mrf.mxu0
    %v2346 = vadd.f32 0.0, %v2345
    %v2347 = vpop.f32.mrf.mxu0
    %2348 = vmatprep.mubr.bf16.mxu0 0
    %2349 = vmatmul.mubr.bf16.gmra.mxu0 %v2156
    %v2350 = vpop.f32.mrf.mxu0
    %v2351 = vadd.f32 0.0, %v2350
    %v2352 = vpop.f32.mrf.mxu0
    %v2353 = vpop.f32.mrf.mxu0
    %v2354 = vadd.f32 0.0, %v2353
    %v2355 = vpop.f32.mrf.mxu0
    %2356 = vmatprep.mubr.bf16.mxu0 0
    %2357 = vmatmul.mubr.bf16.gmra.mxu0 %v2157
    %v2358 = vpop.f32.mrf.mxu0
    %v2359 = vadd.f32 0.0, %v2358
    %v2360 = vpop.f32.mrf.mxu0
    %v2361 = vpop.f32.mrf.mxu0
    %v2362 = vadd.f32 0.0, %v2361
    %v2363 = vpop.f32.mrf.mxu0
    %2364 = vmatprep.mubr.bf16.mxu0 0
    %2365 = vmatmul.mubr.bf16.gmra.mxu0 %v2158
    %v2366 = vpop.f32.mrf.mxu0
    %v2367 = vadd.f32 0.0, %v2366
    %v2368 = vpop.f32.mrf.mxu0
    %v2369 = vpop.f32.mrf.mxu0
    %v2370 = vadd.f32 0.0, %v2369
    %v2371 = vpop.f32.mrf.mxu0
    %2372 = vmatprep.mubr.bf16.mxu0 0
    %2373 = vmatmul.mubr.bf16.gmra.mxu0 %v2159
    %v2374 = vpop.f32.mrf.mxu0
    %v2375 = vadd.f32 0.0, %v2374
    %v2376 = vpop.f32.mrf.mxu0
    %v2377 = vpop.f32.mrf.mxu0
    %v2378 = vadd.f32 0.0, %v2377
    %v2379 = vpop.f32.mrf.mxu0
    %2380 = vmatprep.mubr.bf16.mxu0 0
    %2381 = vmatmul.mubr.bf16.gmra.mxu0 %v2160
    %v2382 = vpop.f32.mrf.mxu0
    %v2383 = vadd.f32 0.0, %v2382
    %v2384 = vpop.f32.mrf.mxu0
    %v2385 = vpop.f32.mrf.mxu0
    %v2386 = vadd.f32 0.0, %v2385
    %v2387 = vpop.f32.mrf.mxu0
    %2388 = vmatprep.mubr.bf16.mxu0 0
    %2389 = vmatmul.mubr.bf16.gmra.mxu0 %v2161
    %v2390 = vpop.f32.mrf.mxu0
    %v2391 = vadd.f32 0.0, %v2390
    %v2392 = vpop.f32.mrf.mxu0
    %v2393 = vpop.f32.mrf.mxu0
    %v2394 = vadd.f32 0.0, %v2393
    %v2395 = vpop.f32.mrf.mxu0
    %2396 = vmatprep.mubr.bf16.mxu0 0
    %2397 = vmatmul.mubr.bf16.gmra.mxu0 %v2162
    %v2398 = vpop.f32.mrf.mxu0
    %v2399 = vadd.f32 0.0, %v2398
    %v2400 = vpop.f32.mrf.mxu0
    %v2401 = vpop.f32.mrf.mxu0
    %v2402 = vadd.f32 0.0, %v2401
    %v2403 = vpop.f32.mrf.mxu0
    %2404 = vmatprep.mubr.bf16.mxu0 0
    %2405 = vmatmul.mubr.bf16.gmra.mxu0 %v2163
    %v2406 = vpop.f32.mrf.mxu0
    %v2407 = vadd.f32 0.0, %v2406
    %v2408 = vpop.f32.mrf.mxu0
    %v2409 = vpop.f32.mrf.mxu0
    %v2410 = vadd.f32 0.0, %v2409
    %v2411 = vpop.f32.mrf.mxu0
    %2412 = vmatprep.mubr.bf16.mxu0 0
    %2413 = vmatmul.mubr.bf16.gmra.mxu0 %v2164
    %v2414 = vpop.f32.mrf.mxu0
    %v2415 = vadd.f32 0.0, %v2414
    %v2416 = vpop.f32.mrf.mxu0
    %v2417 = vpop.f32.mrf.mxu0
    %v2418 = vadd.f32 0.0, %v2417
    %v2419 = vpop.f32.mrf.mxu0
    %2420 = vmatprep.mubr.bf16.mxu0 0
    %2421 = vmatmul.mubr.bf16.gmra.mxu0 %v2165
    %v2422 = vpop.f32.mrf.mxu0
    %v2423 = vadd.f32 0.0, %v2422
    %v2424 = vpop.f32.mrf.mxu0
    %v2425 = vpop.f32.mrf.mxu0
    %v2426 = vadd.f32 0.0, %v2425
    %v2427 = vpop.f32.mrf.mxu0
    %2428 = vmatprep.mubr.bf16.mxu0 0
    %2429 = vmatmul.mubr.bf16.gmra.mxu0 %v2166
    %v2430 = vpop.f32.mrf.mxu0
    %v2431 = vadd.f32 0.0, %v2430
    %v2432 = vpop.f32.mrf.mxu0
    %v2433 = vpop.f32.mrf.mxu0
    %v2434 = vadd.f32 0.0, %v2433
    %v2435 = vpop.f32.mrf.mxu0
    %2436 = vmatprep.mubr.bf16.mxu0 0
    %2437 = vmatmul.mubr.bf16.gmra.mxu0 %v2167
    %v2438 = vpop.f32.mrf.mxu0
    %v2439 = vadd.f32 0.0, %v2438
    %v2440 = vpop.f32.mrf.mxu0
    %v2441 = vpop.f32.mrf.mxu0
    %v2442 = vadd.f32 0.0, %v2441
    %v2443 = vpop.f32.mrf.mxu0
    %2444 = vmatprep.mubr.bf16.mxu0 0
    %2445 = vmatmul.mubr.bf16.gmra.mxu0 %v2168
    %v2446 = vpop.f32.mrf.mxu0
    %v2447 = vadd.f32 0.0, %v2446
    %v2448 = vpop.f32.mrf.mxu0
    %v2449 = vpop.f32.mrf.mxu0
    %v2450 = vadd.f32 0.0, %v2449
    %v2451 = vpop.f32.mrf.mxu0
    %2452 = vmatprep.mubr.bf16.mxu0 0
    %2453 = vmatmul.mubr.bf16.gmra.mxu0 %v2169
    %v2454 = vpop.f32.mrf.mxu0
    %v2455 = vadd.f32 0.0, %v2454
    %v2456 = vpop.f32.mrf.mxu0
    %v2457 = vpop.f32.mrf.mxu0
    %v2458 = vadd.f32 0.0, %v2457
    %v2459 = vpop.f32.mrf.mxu0
    %2460 = vmatprep.mubr.bf16.mxu0 0
    %2461 = vmatmul.mubr.bf16.gmra.mxu0 %v2170
    %v2462 = vpop.f32.mrf.mxu0
    %v2463 = vadd.f32 0.0, %v2462
    %v2464 = vpop.f32.mrf.mxu0
    %v2465 = vpop.f32.mrf.mxu0
    %v2466 = vadd.f32 0.0, %v2465
    %v2467 = vpop.f32.mrf.mxu0
    %2468 = vmatprep.mubr.bf16.mxu0 0
    %2469 = vmatmul.mubr.bf16.gmra.mxu0 %v2171
    %v2470 = vpop.f32.mrf.mxu0
    %v2471 = vadd.f32 0.0, %v2470
    %v2472 = vpop.f32.mrf.mxu0
    %v2473 = vpop.f32.mrf.mxu0
    %v2474 = vadd.f32 0.0, %v2473
    %v2475 = vpop.f32.mrf.mxu0
    %2476 = vmatprep.mubr.bf16.mxu0 0
    %2477 = vmatmul.mubr.bf16.gmra.mxu0 %v2172
    %v2478 = vpop.f32.mrf.mxu0
    %v2479 = vadd.f32 0.0, %v2478
    %v2480 = vpop.f32.mrf.mxu0
    %v2481 = vpop.f32.mrf.mxu0
    %v2482 = vadd.f32 0.0, %v2481
    %v2483 = vpop.f32.mrf.mxu0
    %2484 = vmatprep.mubr.bf16.mxu0 0
    %2485 = vmatmul.mubr.bf16.gmra.mxu0 %v2173
    %v2486 = vpop.f32.mrf.mxu0
    %v2487 = vadd.f32 0.0, %v2486
    %v2488 = vpop.f32.mrf.mxu0
    %v2489 = vpop.f32.mrf.mxu0
    %v2490 = vadd.f32 0.0, %v2489
    %v2491 = vpop.f32.mrf.mxu0
    %2492 = vmatprep.mubr.bf16.mxu0 0
    %2493 = vmatmul.mubr.bf16.gmra.mxu0 %v2174
    %v2494 = vpop.f32.mrf.mxu0
    %v2495 = vadd.f32 0.0, %v2494
    %v2496 = vpop.f32.mrf.mxu0
    %v2497 = vpop.f32.mrf.mxu0
    %v2498 = vadd.f32 0.0, %v2497
    %v2499 = vpop.f32.mrf.mxu0
    %2500 = vmatprep.mubr.bf16.mxu0 0
    %2501 = vmatmul.mubr.bf16.gmra.mxu0 %v2175
    %v2502 = vpop.f32.mrf.mxu0
    %v2503 = vadd.f32 0.0, %v2502
    %v2504 = vpop.f32.mrf.mxu0
    %v2505 = vpop.f32.mrf.mxu0
    %v2506 = vadd.f32 0.0, %v2505
    %v2507 = vpop.f32.mrf.mxu0
    %2508 = vmatprep.mubr.bf16.mxu0 0
    %2509 = vmatmul.mubr.bf16.gmra.mxu0 %v2176
    %v2510 = vpop.f32.mrf.mxu0
    %v2511 = vadd.f32 0.0, %v2510
    %v2512 = vpop.f32.mrf.mxu0
    %v2513 = vpop.f32.mrf.mxu0
    %v2514 = vadd.f32 0.0, %v2513
    %v2515 = vpop.f32.mrf.mxu0
    %2516 = vmatprep.mubr.bf16.mxu0 0
    %2517 = vmatmul.mubr.bf16.gmra.mxu0 %v2177
    %v2518 = vpop.f32.mrf.mxu0
    %v2519 = vadd.f32 0.0, %v2518
    %v2520 = vpop.f32.mrf.mxu0
    %v2521 = vpop.f32.mrf.mxu0
    %v2522 = vadd.f32 0.0, %v2521
    %v2523 = vpop.f32.mrf.mxu0
    %2524 = vmatprep.mubr.bf16.mxu0 0
    %2525 = vmatmul.mubr.bf16.gmra.mxu0 %v2178
    %v2526 = vpop.f32.mrf.mxu0
    %v2527 = vadd.f32 0.0, %v2526
    %v2528 = vpop.f32.mrf.mxu0
    %v2529 = vpop.f32.mrf.mxu0
    %v2530 = vadd.f32 0.0, %v2529
    %v2531 = vpop.f32.mrf.mxu0
    %2532 = vdwg.mxu0
    %v2533 = vadd.f32 %v2019, %v2279
    %v2534 = vadd.f32 %v2020, %v2282
    %v2535 = vadd.f32 %v2021, %v2287
    %v2536 = vadd.f32 %v2022, %v2290
    %v2537 = vadd.f32 %v2023, %v2295
    %v2538 = vadd.f32 %v2024, %v2298
    %v2539 = vadd.f32 %v2025, %v2303
    %v2540 = vadd.f32 %v2026, %v2306
    %v2541 = vadd.f32 %v2027, %v2311
    %v2542 = vadd.f32 %v2028, %v2314
    %v2543 = vadd.f32 %v2029, %v2319
    %v2544 = vadd.f32 %v2030, %v2322
    %v2545 = vadd.f32 %v2031, %v2327
    %v2546 = vadd.f32 %v2032, %v2330
    %v2547 = vadd.f32 %v2033, %v2335
    %v2548 = vadd.f32 %v2034, %v2338
    %v2549 = vadd.f32 %v2035, %v2343
    %v2550 = vadd.f32 %v2036, %v2346
    %v2551 = vadd.f32 %v2037, %v2351
    %v2552 = vadd.f32 %v2038, %v2354
    %v2553 = vadd.f32 %v2039, %v2359
    %v2554 = vadd.f32 %v2040, %v2362
    %v2555 = vadd.f32 %v2041, %v2367
    %v2556 = vadd.f32 %v2042, %v2370
    %v2557 = vadd.f32 %v2043, %v2375
    %v2558 = vadd.f32 %v2044, %v2378
    %v2559 = vadd.f32 %v2045, %v2383
    %v2560 = vadd.f32 %v2046, %v2386
    %v2561 = vadd.f32 %v2047, %v2391
    %v2562 = vadd.f32 %v2048, %v2394
    %v2563 = vadd.f32 %v2049, %v2399
    %v2564 = vadd.f32 %v2050, %v2402
    %v2565 = vadd.f32 %v2051, %v2407
    %v2566 = vadd.f32 %v2052, %v2410
    %v2567 = vadd.f32 %v2053, %v2415
    %v2568 = vadd.f32 %v2054, %v2418
    %v2569 = vadd.f32 %v2055, %v2423
    %v2570 = vadd.f32 %v2056, %v2426
    %v2571 = vadd.f32 %v2057, %v2431
    %v2572 = vadd.f32 %v2058, %v2434
    %v2573 = vadd.f32 %v2059, %v2439
    %v2574 = vadd.f32 %v2060, %v2442
    %v2575 = vadd.f32 %v2061, %v2447
    %v2576 = vadd.f32 %v2062, %v2450
    %v2577 = vadd.f32 %v2063, %v2455
    %v2578 = vadd.f32 %v2064, %v2458
    %v2579 = vadd.f32 %v2065, %v2463
    %v2580 = vadd.f32 %v2066, %v2466
    %v2581 = vadd.f32 %v2067, %v2471
    %v2582 = vadd.f32 %v2068, %v2474
    %v2583 = vadd.f32 %v2069, %v2479
    %v2584 = vadd.f32 %v2070, %v2482
    %v2585 = vadd.f32 %v2071, %v2487
    %v2586 = vadd.f32 %v2072, %v2490
    %v2587 = vadd.f32 %v2073, %v2495
    %v2588 = vadd.f32 %v2074, %v2498
    %v2589 = vadd.f32 %v2075, %v2503
    %v2590 = vadd.f32 %v2076, %v2506
    %v2591 = vadd.f32 %v2077, %v2511
    %v2592 = vadd.f32 %v2078, %v2514
    %v2593 = vadd.f32 %v2079, %v2519
    %v2594 = vadd.f32 %v2080, %v2522
    %v2595 = vadd.f32 %v2081, %v2527
    %v2596 = vadd.f32 %v2082, %v2530
    %v2597 = vld [vmem:[%s1568 + $0x2] sm:$0xff]
    %v2598 = vld [vmem:[%s1568 + $0xa] sm:$0xff]
    %v2599 = vld [vmem:[%s1568 + $0x1a] sm:$0xff]
    %v2600 = vld [vmem:[%s1568 + $0x22] sm:$0xff]
    %v2601 = vld [vmem:[%s1568 + $0x32] sm:$0xff]
    %v2602 = vld [vmem:[%s1568 + $0x3a] sm:$0xff]
    %v2603 = vld [vmem:[%s1568 + $0x4a] sm:$0xff]
    %v2604 = vld [vmem:[%s1568 + $0x52] sm:$0xff]
    %v2605 = vld [vmem:[%s1568 + $0x62] sm:$0xff]
    %v2606 = vld [vmem:[%s1568 + $0x6a] sm:$0xff]
    %v2607 = vld [vmem:[%s1568 + $0x7a] sm:$0xff]
    %v2608 = vld [vmem:[%s1568 + $0x82] sm:$0xff]
    %v2609 = vld [vmem:[%s1568 + $0x92] sm:$0xff]
    %v2610 = vld [vmem:[%s1568 + $0x9a] sm:$0xff]
    %v2611 = vld [vmem:[%s1568 + $0xaa] sm:$0xff]
    %v2612 = vld [vmem:[%s1568 + $0xb2] sm:$0xff]
    %v2613 = vld [vmem:[%s1568 + $0xc2] sm:$0xff]
    %v2614 = vld [vmem:[%s1568 + $0xca] sm:$0xff]
    %v2615 = vld [vmem:[%s1568 + $0xda] sm:$0xff]
    %v2616 = vld [vmem:[%s1568 + $0xe2] sm:$0xff]
    %v2617 = vld [vmem:[%s1568 + $0xf2] sm:$0xff]
    %v2618 = vld [vmem:[%s1568 + $0xfa] sm:$0xff]
    %v2619 = vld [vmem:[%s1568 + $0x10a] sm:$0xff]
    %v2620 = vld [vmem:[%s1568 + $0x112] sm:$0xff]
    %v2621 = vld [vmem:[%s1568 + $0x122] sm:$0xff]
    %v2622 = vld [vmem:[%s1568 + $0x12a] sm:$0xff]
    %v2623 = vld [vmem:[%s1568 + $0x13a] sm:$0xff]
    %v2624 = vld [vmem:[%s1568 + $0x142] sm:$0xff]
    %v2625 = vld [vmem:[%s1568 + $0x152] sm:$0xff]
    %v2626 = vld [vmem:[%s1568 + $0x15a] sm:$0xff]
    %v2627 = vld [vmem:[%s1568 + $0x16a] sm:$0xff]
    %v2628 = vld [vmem:[%s1568 + $0x172] sm:$0xff]
    %v2629 = vld [vmem:[%s1568 + $0x1b2] sm:$0xff]
    %v2630 = vld [vmem:[%s1568 + $0x1ba] sm:$0xff]
    %v2631 = vld [vmem:[%s1568 + $0x1ca] sm:$0xff]
    %v2632 = vld [vmem:[%s1568 + $0x1d2] sm:$0xff]
    %v2633 = vld [vmem:[%s1568 + $0x1e2] sm:$0xff]
    %v2634 = vld [vmem:[%s1568 + $0x1ea] sm:$0xff]
    %v2635 = vld [vmem:[%s1568 + $0x1fa] sm:$0xff]
    %v2636 = vld [vmem:[%s1568 + $0x202] sm:$0xff]
    %v2637 = vld [vmem:[%s1568 + $0x212] sm:$0xff]
    %v2638 = vld [vmem:[%s1568 + $0x21a] sm:$0xff]
    %v2639 = vld [vmem:[%s1568 + $0x22a] sm:$0xff]
    %v2640 = vld [vmem:[%s1568 + $0x232] sm:$0xff]
    %v2641 = vld [vmem:[%s1568 + $0x242] sm:$0xff]
    %v2642 = vld [vmem:[%s1568 + $0x24a] sm:$0xff]
    %v2643 = vld [vmem:[%s1568 + $0x25a] sm:$0xff]
    %v2644 = vld [vmem:[%s1568 + $0x262] sm:$0xff]
    %v2645 = vld [vmem:[%s1568 + $0x272] sm:$0xff]
    %v2646 = vld [vmem:[%s1568 + $0x27a] sm:$0xff]
    %v2647 = vld [vmem:[%s1568 + $0x28a] sm:$0xff]
    %v2648 = vld [vmem:[%s1568 + $0x292] sm:$0xff]
    %v2649 = vld [vmem:[%s1568 + $0x2a2] sm:$0xff]
    %v2650 = vld [vmem:[%s1568 + $0x2aa] sm:$0xff]
    %v2651 = vld [vmem:[%s1568 + $0x2ba] sm:$0xff]
    %v2652 = vld [vmem:[%s1568 + $0x2c2] sm:$0xff]
    %v2653 = vld [vmem:[%s1568 + $0x2d2] sm:$0xff]
    %v2654 = vld [vmem:[%s1568 + $0x2da] sm:$0xff]
    %v2655 = vld [vmem:[%s1568 + $0x2ea] sm:$0xff]
    %v2656 = vld [vmem:[%s1568 + $0x2f2] sm:$0xff]
    %v2657 = vld [vmem:[%s1568 + $0x302] sm:$0xff]
    %v2658 = vld [vmem:[%s1568 + $0x30a] sm:$0xff]
    %v2659 = vld [vmem:[%s1568 + $0x31a] sm:$0xff]
    %v2660 = vld [vmem:[%s1568 + $0x322] sm:$0xff]
    %v2661 = vpack.c.bf16 %v2598, %v2597
    %v2662 = vpack.c.bf16 %v2600, %v2599
    %v2663 = vpack.c.bf16 %v2602, %v2601
    %v2664 = vpack.c.bf16 %v2604, %v2603
    %v2665 = vpack.c.bf16 %v2606, %v2605
    %v2666 = vpack.c.bf16 %v2608, %v2607
    %v2667 = vpack.c.bf16 %v2610, %v2609
    %v2668 = vpack.c.bf16 %v2612, %v2611
    %v2669 = vpack.c.bf16 %v2614, %v2613
    %v2670 = vpack.c.bf16 %v2616, %v2615
    %v2671 = vpack.c.bf16 %v2618, %v2617
    %v2672 = vpack.c.bf16 %v2620, %v2619
    %v2673 = vpack.c.bf16 %v2622, %v2621
    %v2674 = vpack.c.bf16 %v2624, %v2623
    %v2675 = vpack.c.bf16 %v2626, %v2625
    %v2676 = vpack.c.bf16 %v2628, %v2627
    %v2677 = vpack.c.bf16 %v2630, %v2629
    %v2678 = vpack.c.bf16 %v2632, %v2631
    %v2679 = vpack.c.bf16 %v2634, %v2633
    %v2680 = vpack.c.bf16 %v2636, %v2635
    %v2681 = vpack.c.bf16 %v2638, %v2637
    %v2682 = vpack.c.bf16 %v2640, %v2639
    %v2683 = vpack.c.bf16 %v2642, %v2641
    %v2684 = vpack.c.bf16 %v2644, %v2643
    %v2685 = vpack.c.bf16 %v2646, %v2645
    %v2686 = vpack.c.bf16 %v2648, %v2647
    %v2687 = vpack.c.bf16 %v2650, %v2649
    %v2688 = vpack.c.bf16 %v2652, %v2651
    %v2689 = vpack.c.bf16 %v2654, %v2653
    %v2690 = vpack.c.bf16 %v2656, %v2655
    %v2691 = vpack.c.bf16 %v2658, %v2657
    %v2692 = vpack.c.bf16 %v2660, %v2659
    %s2693 = scalar_lea.vmem %s2, 320
    %v2694 = vld [vmem:[%s2693] sm:$0xf]
    %v2695 = vld [vmem:[%s2693 + $0x4] sm:$0xf]
    %v2696 = vld [vmem:[%s2693 + $0x8] sm:$0xf]
    %v2697 = vld [vmem:[%s2693 + $0xc] sm:$0xf]
    %v2698 = vld [vmem:[%s2693 + $0x10] sm:$0xf]
    %v2699 = vld [vmem:[%s2693 + $0x14] sm:$0xf]
    %v2700 = vld [vmem:[%s2693 + $0x18] sm:$0xf]
    %v2701 = vld [vmem:[%s2693 + $0x1c] sm:$0xf]
    %v2702 = vld [vmem:[%s2693 + $0x20] sm:$0xf]
    %v2703 = vld [vmem:[%s2693 + $0x24] sm:$0xf]
    %v2704 = vld [vmem:[%s2693 + $0x28] sm:$0xf]
    %v2705 = vld [vmem:[%s2693 + $0x2c] sm:$0xf]
    %v2706 = vld [vmem:[%s2693 + $0x30] sm:$0xf]
    %v2707 = vld [vmem:[%s2693 + $0x34] sm:$0xf]
    %v2708 = vld [vmem:[%s2693 + $0x38] sm:$0xf]
    %v2709 = vld [vmem:[%s2693 + $0x3c] sm:$0xf]
    %v2726 = vunpack.c.l.b16 %v2694
    %v2727 = vunpack.c.l.b16 %v2695
    %v2728 = vunpack.c.l.b16 %v2696
    %v2729 = vunpack.c.l.b16 %v2697
    %v2730 = vunpack.c.l.b16 %v2698
    %v2731 = vunpack.c.l.b16 %v2699
    %v2732 = vunpack.c.l.b16 %v2700
    %v2733 = vunpack.c.l.b16 %v2701
    %v2734 = vunpack.c.l.b16 %v2702
    %v2735 = vunpack.c.l.b16 %v2703
    %v2736 = vunpack.c.l.b16 %v2704
    %v2737 = vunpack.c.l.b16 %v2705
    %v2738 = vunpack.c.l.b16 %v2706
    %v2739 = vunpack.c.l.b16 %v2707
    %v2740 = vunpack.c.l.b16 %v2708
    %v2741 = vunpack.c.l.b16 %v2709
    %v2742 = vpack.c.b16 %v2727, %v2726
    %v2743 = vpack.c.b16 %v2729, %v2728
    %v2744 = vpack.c.b16 %v2731, %v2730
    %v2745 = vpack.c.b16 %v2733, %v2732
    %v2746 = vpack.c.b16 %v2735, %v2734
    %v2747 = vpack.c.b16 %v2737, %v2736
    %v2748 = vpack.c.b16 %v2739, %v2738
    %v2749 = vpack.c.b16 %v2741, %v2740
    %2758 = vmatprep.subr.bf16.mxu0 0
    %2759 = vmatpush1.bf16.msra.mxu0 %v2749
    %2760 = vmatprep.subr.bf16.mxu0 0
    %2761 = vmatpush1.bf16.msra.mxu0 %v2748
    %2762 = vmatprep.subr.bf16.mxu0 0
    %2763 = vmatpush1.bf16.msra.mxu0 %v2747
    %2764 = vmatprep.subr.bf16.mxu0 0
    %2765 = vmatpush1.bf16.msra.mxu0 %v2746
    %2766 = vmatprep.subr.bf16.mxu0 0
    %2767 = vmatpush1.bf16.msra.mxu0 %v2745
    %2768 = vmatprep.subr.bf16.mxu0 0
    %2769 = vmatpush1.bf16.msra.mxu0 %v2744
    %2770 = vmatprep.subr.bf16.mxu0 0
    %2771 = vmatpush1.bf16.msra.mxu0 %v2743
    %2772 = vmatprep.subr.bf16.mxu0 0
    %2773 = vmatpush1.bf16.msra.mxu0 %v2742
    %2774 = vmatprep.subr.bf16.mxu0 0
    %2775 = vmatpush2.bf16.msra.mxu0 0
    %2776 = vmatprep.subr.bf16.mxu0 0
    %2777 = vmatpush2.bf16.msra.mxu0 0
    %2778 = vmatprep.subr.bf16.mxu0 0
    %2779 = vmatpush2.bf16.msra.mxu0 0
    %2780 = vmatprep.subr.bf16.mxu0 0
    %2781 = vmatpush2.bf16.msra.mxu0 0
    %2782 = vmatprep.subr.bf16.mxu0 0
    %2783 = vmatpush2.bf16.msra.mxu0 0
    %2784 = vmatprep.subr.bf16.mxu0 0
    %2785 = vmatpush2.bf16.msra.mxu0 0
    %2786 = vmatprep.subr.bf16.mxu0 0
    %2787 = vmatpush2.bf16.msra.mxu0 0
    %2788 = vmatprep.subr.bf16.mxu0 0
    %2789 = vmatpush2.bf16.msra.mxu0 0
    %2790 = vmatprep.mubr.bf16.mxu0 0
    %2791 = vmatmul.mubr.bf16.gmra.mxu0 %v2661
    %v2792 = vpop.f32.mrf.mxu0
    %v2793 = vadd.f32 0.0, %v2792
    %v2794 = vpop.f32.mrf.mxu0
    %v2795 = vpop.f32.mrf.mxu0
    %v2796 = vadd.f32 0.0, %v2795
    %v2797 = vpop.f32.mrf.mxu0
    %2798 = vmatprep.mubr.bf16.mxu0 0
    %2799 = vmatmul.mubr.bf16.gmra.mxu0 %v2662
    %v2800 = vpop.f32.mrf.mxu0
    %v2801 = vadd.f32 0.0, %v2800
    %v2802 = vpop.f32.mrf.mxu0
    %v2803 = vpop.f32.mrf.mxu0
    %v2804 = vadd.f32 0.0, %v2803
    %v2805 = vpop.f32.mrf.mxu0
    %2806 = vmatprep.mubr.bf16.mxu0 0
    %2807 = vmatmul.mubr.bf16.gmra.mxu0 %v2663
    %v2808 = vpop.f32.mrf.mxu0
    %v2809 = vadd.f32 0.0, %v2808
    %v2810 = vpop.f32.mrf.mxu0
    %v2811 = vpop.f32.mrf.mxu0
    %v2812 = vadd.f32 0.0, %v2811
    %v2813 = vpop.f32.mrf.mxu0
    %2814 = vmatprep.mubr.bf16.mxu0 0
    %2815 = vmatmul.mubr.bf16.gmra.mxu0 %v2664
    %v2816 = vpop.f32.mrf.mxu0
    %v2817 = vadd.f32 0.0, %v2816
    %v2818 = vpop.f32.mrf.mxu0
    %v2819 = vpop.f32.mrf.mxu0
    %v2820 = vadd.f32 0.0, %v2819
    %v2821 = vpop.f32.mrf.mxu0
    %2822 = vmatprep.mubr.bf16.mxu0 0
    %2823 = vmatmul.mubr.bf16.gmra.mxu0 %v2665
    %v2824 = vpop.f32.mrf.mxu0
    %v2825 = vadd.f32 0.0, %v2824
    %v2826 = vpop.f32.mrf.mxu0
    %v2827 = vpop.f32.mrf.mxu0
    %v2828 = vadd.f32 0.0, %v2827
    %v2829 = vpop.f32.mrf.mxu0
    %2830 = vmatprep.mubr.bf16.mxu0 0
    %2831 = vmatmul.mubr.bf16.gmra.mxu0 %v2666
    %v2832 = vpop.f32.mrf.mxu0
    %v2833 = vadd.f32 0.0, %v2832
    %v2834 = vpop.f32.mrf.mxu0
    %v2835 = vpop.f32.mrf.mxu0
    %v2836 = vadd.f32 0.0, %v2835
    %v2837 = vpop.f32.mrf.mxu0
    %2838 = vmatprep.mubr.bf16.mxu0 0
    %2839 = vmatmul.mubr.bf16.gmra.mxu0 %v2667
    %v2840 = vpop.f32.mrf.mxu0
    %v2841 = vadd.f32 0.0, %v2840
    %v2842 = vpop.f32.mrf.mxu0
    %v2843 = vpop.f32.mrf.mxu0
    %v2844 = vadd.f32 0.0, %v2843
    %v2845 = vpop.f32.mrf.mxu0
    %2846 = vmatprep.mubr.bf16.mxu0 0
    %2847 = vmatmul.mubr.bf16.gmra.mxu0 %v2668
    %v2848 = vpop.f32.mrf.mxu0
    %v2849 = vadd.f32 0.0, %v2848
    %v2850 = vpop.f32.mrf.mxu0
    %v2851 = vpop.f32.mrf.mxu0
    %v2852 = vadd.f32 0.0, %v2851
    %v2853 = vpop.f32.mrf.mxu0
    %2854 = vmatprep.mubr.bf16.mxu0 0
    %2855 = vmatmul.mubr.bf16.gmra.mxu0 %v2669
    %v2856 = vpop.f32.mrf.mxu0
    %v2857 = vadd.f32 0.0, %v2856
    %v2858 = vpop.f32.mrf.mxu0
    %v2859 = vpop.f32.mrf.mxu0
    %v2860 = vadd.f32 0.0, %v2859
    %v2861 = vpop.f32.mrf.mxu0
    %2862 = vmatprep.mubr.bf16.mxu0 0
    %2863 = vmatmul.mubr.bf16.gmra.mxu0 %v2670
    %v2864 = vpop.f32.mrf.mxu0
    %v2865 = vadd.f32 0.0, %v2864
    %v2866 = vpop.f32.mrf.mxu0
    %v2867 = vpop.f32.mrf.mxu0
    %v2868 = vadd.f32 0.0, %v2867
    %v2869 = vpop.f32.mrf.mxu0
    %2870 = vmatprep.mubr.bf16.mxu0 0
    %2871 = vmatmul.mubr.bf16.gmra.mxu0 %v2671
    %v2872 = vpop.f32.mrf.mxu0
    %v2873 = vadd.f32 0.0, %v2872
    %v2874 = vpop.f32.mrf.mxu0
    %v2875 = vpop.f32.mrf.mxu0
    %v2876 = vadd.f32 0.0, %v2875
    %v2877 = vpop.f32.mrf.mxu0
    %2878 = vmatprep.mubr.bf16.mxu0 0
    %2879 = vmatmul.mubr.bf16.gmra.mxu0 %v2672
    %v2880 = vpop.f32.mrf.mxu0
    %v2881 = vadd.f32 0.0, %v2880
    %v2882 = vpop.f32.mrf.mxu0
    %v2883 = vpop.f32.mrf.mxu0
    %v2884 = vadd.f32 0.0, %v2883
    %v2885 = vpop.f32.mrf.mxu0
    %2886 = vmatprep.mubr.bf16.mxu0 0
    %2887 = vmatmul.mubr.bf16.gmra.mxu0 %v2673
    %v2888 = vpop.f32.mrf.mxu0
    %v2889 = vadd.f32 0.0, %v2888
    %v2890 = vpop.f32.mrf.mxu0
    %v2891 = vpop.f32.mrf.mxu0
    %v2892 = vadd.f32 0.0, %v2891
    %v2893 = vpop.f32.mrf.mxu0
    %2894 = vmatprep.mubr.bf16.mxu0 0
    %2895 = vmatmul.mubr.bf16.gmra.mxu0 %v2674
    %v2896 = vpop.f32.mrf.mxu0
    %v2897 = vadd.f32 0.0, %v2896
    %v2898 = vpop.f32.mrf.mxu0
    %v2899 = vpop.f32.mrf.mxu0
    %v2900 = vadd.f32 0.0, %v2899
    %v2901 = vpop.f32.mrf.mxu0
    %2902 = vmatprep.mubr.bf16.mxu0 0
    %2903 = vmatmul.mubr.bf16.gmra.mxu0 %v2675
    %v2904 = vpop.f32.mrf.mxu0
    %v2905 = vadd.f32 0.0, %v2904
    %v2906 = vpop.f32.mrf.mxu0
    %v2907 = vpop.f32.mrf.mxu0
    %v2908 = vadd.f32 0.0, %v2907
    %v2909 = vpop.f32.mrf.mxu0
    %2910 = vmatprep.mubr.bf16.mxu0 0
    %2911 = vmatmul.mubr.bf16.gmra.mxu0 %v2676
    %v2912 = vpop.f32.mrf.mxu0
    %v2913 = vadd.f32 0.0, %v2912
    %v2914 = vpop.f32.mrf.mxu0
    %v2915 = vpop.f32.mrf.mxu0
    %v2916 = vadd.f32 0.0, %v2915
    %v2917 = vpop.f32.mrf.mxu0
    %2918 = vmatprep.mubr.bf16.mxu0 0
    %2919 = vmatmul.mubr.bf16.gmra.mxu0 %v2677
    %v2920 = vpop.f32.mrf.mxu0
    %v2921 = vadd.f32 0.0, %v2920
    %v2922 = vpop.f32.mrf.mxu0
    %v2923 = vpop.f32.mrf.mxu0
    %v2924 = vadd.f32 0.0, %v2923
    %v2925 = vpop.f32.mrf.mxu0
    %2926 = vmatprep.mubr.bf16.mxu0 0
    %2927 = vmatmul.mubr.bf16.gmra.mxu0 %v2678
    %v2928 = vpop.f32.mrf.mxu0
    %v2929 = vadd.f32 0.0, %v2928
    %v2930 = vpop.f32.mrf.mxu0
    %v2931 = vpop.f32.mrf.mxu0
    %v2932 = vadd.f32 0.0, %v2931
    %v2933 = vpop.f32.mrf.mxu0
    %2934 = vmatprep.mubr.bf16.mxu0 0
    %2935 = vmatmul.mubr.bf16.gmra.mxu0 %v2679
    %v2936 = vpop.f32.mrf.mxu0
    %v2937 = vadd.f32 0.0, %v2936
    %v2938 = vpop.f32.mrf.mxu0
    %v2939 = vpop.f32.mrf.mxu0
    %v2940 = vadd.f32 0.0, %v2939
    %v2941 = vpop.f32.mrf.mxu0
    %2942 = vmatprep.mubr.bf16.mxu0 0
    %2943 = vmatmul.mubr.bf16.gmra.mxu0 %v2680
    %v2944 = vpop.f32.mrf.mxu0
    %v2945 = vadd.f32 0.0, %v2944
    %v2946 = vpop.f32.mrf.mxu0
    %v2947 = vpop.f32.mrf.mxu0
    %v2948 = vadd.f32 0.0, %v2947
    %v2949 = vpop.f32.mrf.mxu0
    %2950 = vmatprep.mubr.bf16.mxu0 0
    %2951 = vmatmul.mubr.bf16.gmra.mxu0 %v2681
    %v2952 = vpop.f32.mrf.mxu0
    %v2953 = vadd.f32 0.0, %v2952
    %v2954 = vpop.f32.mrf.mxu0
    %v2955 = vpop.f32.mrf.mxu0
    %v2956 = vadd.f32 0.0, %v2955
    %v2957 = vpop.f32.mrf.mxu0
    %2958 = vmatprep.mubr.bf16.mxu0 0
    %2959 = vmatmul.mubr.bf16.gmra.mxu0 %v2682
    %v2960 = vpop.f32.mrf.mxu0
    %v2961 = vadd.f32 0.0, %v2960
    %v2962 = vpop.f32.mrf.mxu0
    %v2963 = vpop.f32.mrf.mxu0
    %v2964 = vadd.f32 0.0, %v2963
    %v2965 = vpop.f32.mrf.mxu0
    %2966 = vmatprep.mubr.bf16.mxu0 0
    %2967 = vmatmul.mubr.bf16.gmra.mxu0 %v2683
    %v2968 = vpop.f32.mrf.mxu0
    %v2969 = vadd.f32 0.0, %v2968
    %v2970 = vpop.f32.mrf.mxu0
    %v2971 = vpop.f32.mrf.mxu0
    %v2972 = vadd.f32 0.0, %v2971
    %v2973 = vpop.f32.mrf.mxu0
    %2974 = vmatprep.mubr.bf16.mxu0 0
    %2975 = vmatmul.mubr.bf16.gmra.mxu0 %v2684
    %v2976 = vpop.f32.mrf.mxu0
    %v2977 = vadd.f32 0.0, %v2976
    %v2978 = vpop.f32.mrf.mxu0
    %v2979 = vpop.f32.mrf.mxu0
    %v2980 = vadd.f32 0.0, %v2979
    %v2981 = vpop.f32.mrf.mxu0
    %2982 = vmatprep.mubr.bf16.mxu0 0
    %2983 = vmatmul.mubr.bf16.gmra.mxu0 %v2685
    %v2984 = vpop.f32.mrf.mxu0
    %v2985 = vadd.f32 0.0, %v2984
    %v2986 = vpop.f32.mrf.mxu0
    %v2987 = vpop.f32.mrf.mxu0
    %v2988 = vadd.f32 0.0, %v2987
    %v2989 = vpop.f32.mrf.mxu0
    %2990 = vmatprep.mubr.bf16.mxu0 0
    %2991 = vmatmul.mubr.bf16.gmra.mxu0 %v2686
    %v2992 = vpop.f32.mrf.mxu0
    %v2993 = vadd.f32 0.0, %v2992
    %v2994 = vpop.f32.mrf.mxu0
    %v2995 = vpop.f32.mrf.mxu0
    %v2996 = vadd.f32 0.0, %v2995
    %v2997 = vpop.f32.mrf.mxu0
    %2998 = vmatprep.mubr.bf16.mxu0 0
    %2999 = vmatmul.mubr.bf16.gmra.mxu0 %v2687
    %v3000 = vpop.f32.mrf.mxu0
    %v3001 = vadd.f32 0.0, %v3000
    %v3002 = vpop.f32.mrf.mxu0
    %v3003 = vpop.f32.mrf.mxu0
    %v3004 = vadd.f32 0.0, %v3003
    %v3005 = vpop.f32.mrf.mxu0
    %3006 = vmatprep.mubr.bf16.mxu0 0
    %3007 = vmatmul.mubr.bf16.gmra.mxu0 %v2688
    %v3008 = vpop.f32.mrf.mxu0
    %v3009 = vadd.f32 0.0, %v3008
    %v3010 = vpop.f32.mrf.mxu0
    %v3011 = vpop.f32.mrf.mxu0
    %v3012 = vadd.f32 0.0, %v3011
    %v3013 = vpop.f32.mrf.mxu0
    %3014 = vmatprep.mubr.bf16.mxu0 0
    %3015 = vmatmul.mubr.bf16.gmra.mxu0 %v2689
    %v3016 = vpop.f32.mrf.mxu0
    %v3017 = vadd.f32 0.0, %v3016
    %v3018 = vpop.f32.mrf.mxu0
    %v3019 = vpop.f32.mrf.mxu0
    %v3020 = vadd.f32 0.0, %v3019
    %v3021 = vpop.f32.mrf.mxu0
    %3022 = vmatprep.mubr.bf16.mxu0 0
    %3023 = vmatmul.mubr.bf16.gmra.mxu0 %v2690
    %v3024 = vpop.f32.mrf.mxu0
    %v3025 = vadd.f32 0.0, %v3024
    %v3026 = vpop.f32.mrf.mxu0
    %v3027 = vpop.f32.mrf.mxu0
    %v3028 = vadd.f32 0.0, %v3027
    %v3029 = vpop.f32.mrf.mxu0
    %3030 = vmatprep.mubr.bf16.mxu0 0
    %3031 = vmatmul.mubr.bf16.gmra.mxu0 %v2691
    %v3032 = vpop.f32.mrf.mxu0
    %v3033 = vadd.f32 0.0, %v3032
    %v3034 = vpop.f32.mrf.mxu0
    %v3035 = vpop.f32.mrf.mxu0
    %v3036 = vadd.f32 0.0, %v3035
    %v3037 = vpop.f32.mrf.mxu0
    %3038 = vmatprep.mubr.bf16.mxu0 0
    %3039 = vmatmul.mubr.bf16.gmra.mxu0 %v2692
    %v3040 = vpop.f32.mrf.mxu0
    %v3041 = vadd.f32 0.0, %v3040
    %v3042 = vpop.f32.mrf.mxu0
    %v3043 = vpop.f32.mrf.mxu0
    %v3044 = vadd.f32 0.0, %v3043
    %v3045 = vpop.f32.mrf.mxu0
    %3046 = vdwg.mxu0
    %v3047 = vadd.f32 %v2533, %v2793
    %v3048 = vadd.f32 %v2534, %v2796
    %v3049 = vadd.f32 %v2535, %v2801
    %v3050 = vadd.f32 %v2536, %v2804
    %v3051 = vadd.f32 %v2537, %v2809
    %v3052 = vadd.f32 %v2538, %v2812
    %v3053 = vadd.f32 %v2539, %v2817
    %v3054 = vadd.f32 %v2540, %v2820
    %v3055 = vadd.f32 %v2541, %v2825
    %v3056 = vadd.f32 %v2542, %v2828
    %v3057 = vadd.f32 %v2543, %v2833
    %v3058 = vadd.f32 %v2544, %v2836
    %v3059 = vadd.f32 %v2545, %v2841
    %v3060 = vadd.f32 %v2546, %v2844
    %v3061 = vadd.f32 %v2547, %v2849
    %v3062 = vadd.f32 %v2548, %v2852
    %v3063 = vadd.f32 %v2549, %v2857
    %v3064 = vadd.f32 %v2550, %v2860
    %v3065 = vadd.f32 %v2551, %v2865
    %v3066 = vadd.f32 %v2552, %v2868
    %v3067 = vadd.f32 %v2553, %v2873
    %v3068 = vadd.f32 %v2554, %v2876
    %v3069 = vadd.f32 %v2555, %v2881
    %v3070 = vadd.f32 %v2556, %v2884
    %v3071 = vadd.f32 %v2557, %v2889
    %v3072 = vadd.f32 %v2558, %v2892
    %v3073 = vadd.f32 %v2559, %v2897
    %v3074 = vadd.f32 %v2560, %v2900
    %v3075 = vadd.f32 %v2561, %v2905
    %v3076 = vadd.f32 %v2562, %v2908
    %v3077 = vadd.f32 %v2563, %v2913
    %v3078 = vadd.f32 %v2564, %v2916
    %v3079 = vadd.f32 %v2565, %v2921
    %v3080 = vadd.f32 %v2566, %v2924
    %v3081 = vadd.f32 %v2567, %v2929
    %v3082 = vadd.f32 %v2568, %v2932
    %v3083 = vadd.f32 %v2569, %v2937
    %v3084 = vadd.f32 %v2570, %v2940
    %v3085 = vadd.f32 %v2571, %v2945
    %v3086 = vadd.f32 %v2572, %v2948
    %v3087 = vadd.f32 %v2573, %v2953
    %v3088 = vadd.f32 %v2574, %v2956
    %v3089 = vadd.f32 %v2575, %v2961
    %v3090 = vadd.f32 %v2576, %v2964
    %v3091 = vadd.f32 %v2577, %v2969
    %v3092 = vadd.f32 %v2578, %v2972
    %v3093 = vadd.f32 %v2579, %v2977
    %v3094 = vadd.f32 %v2580, %v2980
    %v3095 = vadd.f32 %v2581, %v2985
    %v3096 = vadd.f32 %v2582, %v2988
    %v3097 = vadd.f32 %v2583, %v2993
    %v3098 = vadd.f32 %v2584, %v2996
    %v3099 = vadd.f32 %v2585, %v3001
    %v3100 = vadd.f32 %v2586, %v3004
    %v3101 = vadd.f32 %v2587, %v3009
    %v3102 = vadd.f32 %v2588, %v3012
    %v3103 = vadd.f32 %v2589, %v3017
    %v3104 = vadd.f32 %v2590, %v3020
    %v3105 = vadd.f32 %v2591, %v3025
    %v3106 = vadd.f32 %v2592, %v3028
    %v3107 = vadd.f32 %v2593, %v3033
    %v3108 = vadd.f32 %v2594, %v3036
    %v3109 = vadd.f32 %v2595, %v3041
    %v3110 = vadd.f32 %v2596, %v3044
    %s3111 = scalar_lea.vmem %s0, 48
    %v3112 = vld [vmem:[%s3111] sm:$0xff]
    %v3113 = vld [vmem:[%s3111 + $0x8] sm:$0xff]
    %v3114 = vld [vmem:[%s3111 + $0x18] sm:$0xff]
    %v3115 = vld [vmem:[%s3111 + $0x20] sm:$0xff]
    %v3116 = vld [vmem:[%s3111 + $0x30] sm:$0xff]
    %v3117 = vld [vmem:[%s3111 + $0x38] sm:$0xff]
    %v3118 = vld [vmem:[%s3111 + $0x48] sm:$0xff]
    %v3119 = vld [vmem:[%s3111 + $0x50] sm:$0xff]
    %v3120 = vld [vmem:[%s3111 + $0x60] sm:$0xff]
    %v3121 = vld [vmem:[%s3111 + $0x68] sm:$0xff]
    %v3122 = vld [vmem:[%s3111 + $0x78] sm:$0xff]
    %v3123 = vld [vmem:[%s3111 + $0x80] sm:$0xff]
    %v3124 = vld [vmem:[%s3111 + $0x90] sm:$0xff]
    %v3125 = vld [vmem:[%s3111 + $0x98] sm:$0xff]
    %v3126 = vld [vmem:[%s3111 + $0xa8] sm:$0xff]
    %v3127 = vld [vmem:[%s3111 + $0xb0] sm:$0xff]
    %v3128 = vld [vmem:[%s3111 + $0xc0] sm:$0xff]
    %v3129 = vld [vmem:[%s3111 + $0xc8] sm:$0xff]
    %v3130 = vld [vmem:[%s3111 + $0xd8] sm:$0xff]
    %v3131 = vld [vmem:[%s3111 + $0xe0] sm:$0xff]
    %v3132 = vld [vmem:[%s3111 + $0xf0] sm:$0xff]
    %v3133 = vld [vmem:[%s3111 + $0xf8] sm:$0xff]
    %v3134 = vld [vmem:[%s3111 + $0x108] sm:$0xff]
    %v3135 = vld [vmem:[%s3111 + $0x110] sm:$0xff]
    %v3136 = vld [vmem:[%s3111 + $0x120] sm:$0xff]
    %v3137 = vld [vmem:[%s3111 + $0x128] sm:$0xff]
    %v3138 = vld [vmem:[%s3111 + $0x138] sm:$0xff]
    %v3139 = vld [vmem:[%s3111 + $0x140] sm:$0xff]
    %v3140 = vld [vmem:[%s3111 + $0x150] sm:$0xff]
    %v3141 = vld [vmem:[%s3111 + $0x158] sm:$0xff]
    %v3142 = vld [vmem:[%s3111 + $0x168] sm:$0xff]
    %v3143 = vld [vmem:[%s3111 + $0x170] sm:$0xff]
    %v3144 = vld [vmem:[%s3111 + $0x1b0] sm:$0xff]
    %v3145 = vld [vmem:[%s3111 + $0x1b8] sm:$0xff]
    %v3146 = vld [vmem:[%s3111 + $0x1c8] sm:$0xff]
    %v3147 = vld [vmem:[%s3111 + $0x1d0] sm:$0xff]
    %v3148 = vld [vmem:[%s3111 + $0x1e0] sm:$0xff]
    %v3149 = vld [vmem:[%s3111 + $0x1e8] sm:$0xff]
    %v3150 = vld [vmem:[%s3111 + $0x1f8] sm:$0xff]
    %v3151 = vld [vmem:[%s3111 + $0x200] sm:$0xff]
    %v3152 = vld [vmem:[%s3111 + $0x210] sm:$0xff]
    %v3153 = vld [vmem:[%s3111 + $0x218] sm:$0xff]
    %v3154 = vld [vmem:[%s3111 + $0x228] sm:$0xff]
    %v3155 = vld [vmem:[%s3111 + $0x230] sm:$0xff]
    %v3156 = vld [vmem:[%s3111 + $0x240] sm:$0xff]
    %v3157 = vld [vmem:[%s3111 + $0x248] sm:$0xff]
    %v3158 = vld [vmem:[%s3111 + $0x258] sm:$0xff]
    %v3159 = vld [vmem:[%s3111 + $0x260] sm:$0xff]
    %v3160 = vld [vmem:[%s3111 + $0x270] sm:$0xff]
    %v3161 = vld [vmem:[%s3111 + $0x278] sm:$0xff]
    %v3162 = vld [vmem:[%s3111 + $0x288] sm:$0xff]
    %v3163 = vld [vmem:[%s3111 + $0x290] sm:$0xff]
    %v3164 = vld [vmem:[%s3111 + $0x2a0] sm:$0xff]
    %v3165 = vld [vmem:[%s3111 + $0x2a8] sm:$0xff]
    %v3166 = vld [vmem:[%s3111 + $0x2b8] sm:$0xff]
    %v3167 = vld [vmem:[%s3111 + $0x2c0] sm:$0xff]
    %v3168 = vld [vmem:[%s3111 + $0x2d0] sm:$0xff]
    %v3169 = vld [vmem:[%s3111 + $0x2d8] sm:$0xff]
    %v3170 = vld [vmem:[%s3111 + $0x2e8] sm:$0xff]
    %v3171 = vld [vmem:[%s3111 + $0x2f0] sm:$0xff]
    %v3172 = vld [vmem:[%s3111 + $0x300] sm:$0xff]
    %v3173 = vld [vmem:[%s3111 + $0x308] sm:$0xff]
    %v3174 = vld [vmem:[%s3111 + $0x318] sm:$0xff]
    %v3175 = vld [vmem:[%s3111 + $0x320] sm:$0xff]
    %v3176 = vpack.c.bf16 %v3113, %v3112
    %v3177 = vpack.c.bf16 %v3115, %v3114
    %v3178 = vpack.c.bf16 %v3117, %v3116
    %v3179 = vpack.c.bf16 %v3119, %v3118
    %v3180 = vpack.c.bf16 %v3121, %v3120
    %v3181 = vpack.c.bf16 %v3123, %v3122
    %v3182 = vpack.c.bf16 %v3125, %v3124
    %v3183 = vpack.c.bf16 %v3127, %v3126
    %v3184 = vpack.c.bf16 %v3129, %v3128
    %v3185 = vpack.c.bf16 %v3131, %v3130
    %v3186 = vpack.c.bf16 %v3133, %v3132
    %v3187 = vpack.c.bf16 %v3135, %v3134
    %v3188 = vpack.c.bf16 %v3137, %v3136
    %v3189 = vpack.c.bf16 %v3139, %v3138
    %v3190 = vpack.c.bf16 %v3141, %v3140
    %v3191 = vpack.c.bf16 %v3143, %v3142
    %v3192 = vpack.c.bf16 %v3145, %v3144
    %v3193 = vpack.c.bf16 %v3147, %v3146
    %v3194 = vpack.c.bf16 %v3149, %v3148
    %v3195 = vpack.c.bf16 %v3151, %v3150
    %v3196 = vpack.c.bf16 %v3153, %v3152
    %v3197 = vpack.c.bf16 %v3155, %v3154
    %v3198 = vpack.c.bf16 %v3157, %v3156
    %v3199 = vpack.c.bf16 %v3159, %v3158
    %v3200 = vpack.c.bf16 %v3161, %v3160
    %v3201 = vpack.c.bf16 %v3163, %v3162
    %v3202 = vpack.c.bf16 %v3165, %v3164
    %v3203 = vpack.c.bf16 %v3167, %v3166
    %v3204 = vpack.c.bf16 %v3169, %v3168
    %v3205 = vpack.c.bf16 %v3171, %v3170
    %v3206 = vpack.c.bf16 %v3173, %v3172
    %v3207 = vpack.c.bf16 %v3175, %v3174
    %s3208 = scalar_lea.vmem %s2, 384
    %v3209 = vld [vmem:[%s3208] sm:$0xf]
    %v3210 = vld [vmem:[%s3208 + $0x4] sm:$0xf]
    %v3211 = vld [vmem:[%s3208 + $0x8] sm:$0xf]
    %v3212 = vld [vmem:[%s3208 + $0xc] sm:$0xf]
    %v3213 = vld [vmem:[%s3208 + $0x10] sm:$0xf]
    %v3214 = vld [vmem:[%s3208 + $0x14] sm:$0xf]
    %v3215 = vld [vmem:[%s3208 + $0x18] sm:$0xf]
    %v3216 = vld [vmem:[%s3208 + $0x1c] sm:$0xf]
    %v3217 = vld [vmem:[%s3208 + $0x20] sm:$0xf]
    %v3218 = vld [vmem:[%s3208 + $0x24] sm:$0xf]
    %v3219 = vld [vmem:[%s3208 + $0x28] sm:$0xf]
    %v3220 = vld [vmem:[%s3208 + $0x2c] sm:$0xf]
    %v3221 = vld [vmem:[%s3208 + $0x30] sm:$0xf]
    %v3222 = vld [vmem:[%s3208 + $0x34] sm:$0xf]
    %v3223 = vld [vmem:[%s3208 + $0x38] sm:$0xf]
    %v3224 = vld [vmem:[%s3208 + $0x3c] sm:$0xf]
    %v3241 = vunpack.c.l.b16 %v3209
    %v3242 = vunpack.c.l.b16 %v3210
    %v3243 = vunpack.c.l.b16 %v3211
    %v3244 = vunpack.c.l.b16 %v3212
    %v3245 = vunpack.c.l.b16 %v3213
    %v3246 = vunpack.c.l.b16 %v3214
    %v3247 = vunpack.c.l.b16 %v3215
    %v3248 = vunpack.c.l.b16 %v3216
    %v3249 = vunpack.c.l.b16 %v3217
    %v3250 = vunpack.c.l.b16 %v3218
    %v3251 = vunpack.c.l.b16 %v3219
    %v3252 = vunpack.c.l.b16 %v3220
    %v3253 = vunpack.c.l.b16 %v3221
    %v3254 = vunpack.c.l.b16 %v3222
    %v3255 = vunpack.c.l.b16 %v3223
    %v3256 = vunpack.c.l.b16 %v3224
    %v3257 = vpack.c.b16 %v3242, %v3241
    %v3258 = vpack.c.b16 %v3244, %v3243
    %v3259 = vpack.c.b16 %v3246, %v3245
    %v3260 = vpack.c.b16 %v3248, %v3247
    %v3261 = vpack.c.b16 %v3250, %v3249
    %v3262 = vpack.c.b16 %v3252, %v3251
    %v3263 = vpack.c.b16 %v3254, %v3253
    %v3264 = vpack.c.b16 %v3256, %v3255
    %3273 = vmatprep.subr.bf16.mxu0 0
    %3274 = vmatpush1.bf16.msra.mxu0 %v3264
    %3275 = vmatprep.subr.bf16.mxu0 0
    %3276 = vmatpush1.bf16.msra.mxu0 %v3263
    %3277 = vmatprep.subr.bf16.mxu0 0
    %3278 = vmatpush1.bf16.msra.mxu0 %v3262
    %3279 = vmatprep.subr.bf16.mxu0 0
    %3280 = vmatpush1.bf16.msra.mxu0 %v3261
    %3281 = vmatprep.subr.bf16.mxu0 0
    %3282 = vmatpush1.bf16.msra.mxu0 %v3260
    %3283 = vmatprep.subr.bf16.mxu0 0
    %3284 = vmatpush1.bf16.msra.mxu0 %v3259
    %3285 = vmatprep.subr.bf16.mxu0 0
    %3286 = vmatpush1.bf16.msra.mxu0 %v3258
    %3287 = vmatprep.subr.bf16.mxu0 0
    %3288 = vmatpush1.bf16.msra.mxu0 %v3257
    %3289 = vmatprep.subr.bf16.mxu0 0
    %3290 = vmatpush2.bf16.msra.mxu0 0
    %3291 = vmatprep.subr.bf16.mxu0 0
    %3292 = vmatpush2.bf16.msra.mxu0 0
    %3293 = vmatprep.subr.bf16.mxu0 0
    %3294 = vmatpush2.bf16.msra.mxu0 0
    %3295 = vmatprep.subr.bf16.mxu0 0
    %3296 = vmatpush2.bf16.msra.mxu0 0
    %3297 = vmatprep.subr.bf16.mxu0 0
    %3298 = vmatpush2.bf16.msra.mxu0 0
    %3299 = vmatprep.subr.bf16.mxu0 0
    %3300 = vmatpush2.bf16.msra.mxu0 0
    %3301 = vmatprep.subr.bf16.mxu0 0
    %3302 = vmatpush2.bf16.msra.mxu0 0
    %3303 = vmatprep.subr.bf16.mxu0 0
    %3304 = vmatpush2.bf16.msra.mxu0 0
    %3305 = vmatprep.mubr.bf16.mxu0 0
    %3306 = vmatmul.mubr.bf16.gmra.mxu0 %v3176
    %v3307 = vpop.f32.mrf.mxu0
    %v3308 = vadd.f32 0.0, %v3307
    %v3309 = vpop.f32.mrf.mxu0
    %v3310 = vpop.f32.mrf.mxu0
    %v3311 = vadd.f32 0.0, %v3310
    %v3312 = vpop.f32.mrf.mxu0
    %3313 = vmatprep.mubr.bf16.mxu0 0
    %3314 = vmatmul.mubr.bf16.gmra.mxu0 %v3177
    %v3315 = vpop.f32.mrf.mxu0
    %v3316 = vadd.f32 0.0, %v3315
    %v3317 = vpop.f32.mrf.mxu0
    %v3318 = vpop.f32.mrf.mxu0
    %v3319 = vadd.f32 0.0, %v3318
    %v3320 = vpop.f32.mrf.mxu0
    %3321 = vmatprep.mubr.bf16.mxu0 0
    %3322 = vmatmul.mubr.bf16.gmra.mxu0 %v3178
    %v3323 = vpop.f32.mrf.mxu0
    %v3324 = vadd.f32 0.0, %v3323
    %v3325 = vpop.f32.mrf.mxu0
    %v3326 = vpop.f32.mrf.mxu0
    %v3327 = vadd.f32 0.0, %v3326
    %v3328 = vpop.f32.mrf.mxu0
    %3329 = vmatprep.mubr.bf16.mxu0 0
    %3330 = vmatmul.mubr.bf16.gmra.mxu0 %v3179
    %v3331 = vpop.f32.mrf.mxu0
    %v3332 = vadd.f32 0.0, %v3331
    %v3333 = vpop.f32.mrf.mxu0
    %v3334 = vpop.f32.mrf.mxu0
    %v3335 = vadd.f32 0.0, %v3334
    %v3336 = vpop.f32.mrf.mxu0
    %3337 = vmatprep.mubr.bf16.mxu0 0
    %3338 = vmatmul.mubr.bf16.gmra.mxu0 %v3180
    %v3339 = vpop.f32.mrf.mxu0
    %v3340 = vadd.f32 0.0, %v3339
    %v3341 = vpop.f32.mrf.mxu0
    %v3342 = vpop.f32.mrf.mxu0
    %v3343 = vadd.f32 0.0, %v3342
    %v3344 = vpop.f32.mrf.mxu0
    %3345 = vmatprep.mubr.bf16.mxu0 0
    %3346 = vmatmul.mubr.bf16.gmra.mxu0 %v3181
    %v3347 = vpop.f32.mrf.mxu0
    %v3348 = vadd.f32 0.0, %v3347
    %v3349 = vpop.f32.mrf.mxu0
    %v3350 = vpop.f32.mrf.mxu0
    %v3351 = vadd.f32 0.0, %v3350
    %v3352 = vpop.f32.mrf.mxu0
    %3353 = vmatprep.mubr.bf16.mxu0 0
    %3354 = vmatmul.mubr.bf16.gmra.mxu0 %v3182
    %v3355 = vpop.f32.mrf.mxu0
    %v3356 = vadd.f32 0.0, %v3355
    %v3357 = vpop.f32.mrf.mxu0
    %v3358 = vpop.f32.mrf.mxu0
    %v3359 = vadd.f32 0.0, %v3358
    %v3360 = vpop.f32.mrf.mxu0
    %3361 = vmatprep.mubr.bf16.mxu0 0
    %3362 = vmatmul.mubr.bf16.gmra.mxu0 %v3183
    %v3363 = vpop.f32.mrf.mxu0
    %v3364 = vadd.f32 0.0, %v3363
    %v3365 = vpop.f32.mrf.mxu0
    %v3366 = vpop.f32.mrf.mxu0
    %v3367 = vadd.f32 0.0, %v3366
    %v3368 = vpop.f32.mrf.mxu0
    %3369 = vmatprep.mubr.bf16.mxu0 0
    %3370 = vmatmul.mubr.bf16.gmra.mxu0 %v3184
    %v3371 = vpop.f32.mrf.mxu0
    %v3372 = vadd.f32 0.0, %v3371
    %v3373 = vpop.f32.mrf.mxu0
    %v3374 = vpop.f32.mrf.mxu0
    %v3375 = vadd.f32 0.0, %v3374
    %v3376 = vpop.f32.mrf.mxu0
    %3377 = vmatprep.mubr.bf16.mxu0 0
    %3378 = vmatmul.mubr.bf16.gmra.mxu0 %v3185
    %v3379 = vpop.f32.mrf.mxu0
    %v3380 = vadd.f32 0.0, %v3379
    %v3381 = vpop.f32.mrf.mxu0
    %v3382 = vpop.f32.mrf.mxu0
    %v3383 = vadd.f32 0.0, %v3382
    %v3384 = vpop.f32.mrf.mxu0
    %3385 = vmatprep.mubr.bf16.mxu0 0
    %3386 = vmatmul.mubr.bf16.gmra.mxu0 %v3186
    %v3387 = vpop.f32.mrf.mxu0
    %v3388 = vadd.f32 0.0, %v3387
    %v3389 = vpop.f32.mrf.mxu0
    %v3390 = vpop.f32.mrf.mxu0
    %v3391 = vadd.f32 0.0, %v3390
    %v3392 = vpop.f32.mrf.mxu0
    %3393 = vmatprep.mubr.bf16.mxu0 0
    %3394 = vmatmul.mubr.bf16.gmra.mxu0 %v3187
    %v3395 = vpop.f32.mrf.mxu0
    %v3396 = vadd.f32 0.0, %v3395
    %v3397 = vpop.f32.mrf.mxu0
    %v3398 = vpop.f32.mrf.mxu0
    %v3399 = vadd.f32 0.0, %v3398
    %v3400 = vpop.f32.mrf.mxu0
    %3401 = vmatprep.mubr.bf16.mxu0 0
    %3402 = vmatmul.mubr.bf16.gmra.mxu0 %v3188
    %v3403 = vpop.f32.mrf.mxu0
    %v3404 = vadd.f32 0.0, %v3403
    %v3405 = vpop.f32.mrf.mxu0
    %v3406 = vpop.f32.mrf.mxu0
    %v3407 = vadd.f32 0.0, %v3406
    %v3408 = vpop.f32.mrf.mxu0
    %3409 = vmatprep.mubr.bf16.mxu0 0
    %3410 = vmatmul.mubr.bf16.gmra.mxu0 %v3189
    %v3411 = vpop.f32.mrf.mxu0
    %v3412 = vadd.f32 0.0, %v3411
    %v3413 = vpop.f32.mrf.mxu0
    %v3414 = vpop.f32.mrf.mxu0
    %v3415 = vadd.f32 0.0, %v3414
    %v3416 = vpop.f32.mrf.mxu0
    %3417 = vmatprep.mubr.bf16.mxu0 0
    %3418 = vmatmul.mubr.bf16.gmra.mxu0 %v3190
    %v3419 = vpop.f32.mrf.mxu0
    %v3420 = vadd.f32 0.0, %v3419
    %v3421 = vpop.f32.mrf.mxu0
    %v3422 = vpop.f32.mrf.mxu0
    %v3423 = vadd.f32 0.0, %v3422
    %v3424 = vpop.f32.mrf.mxu0
    %3425 = vmatprep.mubr.bf16.mxu0 0
    %3426 = vmatmul.mubr.bf16.gmra.mxu0 %v3191
    %v3427 = vpop.f32.mrf.mxu0
    %v3428 = vadd.f32 0.0, %v3427
    %v3429 = vpop.f32.mrf.mxu0
    %v3430 = vpop.f32.mrf.mxu0
    %v3431 = vadd.f32 0.0, %v3430
    %v3432 = vpop.f32.mrf.mxu0
    %3433 = vmatprep.mubr.bf16.mxu0 0
    %3434 = vmatmul.mubr.bf16.gmra.mxu0 %v3192
    %v3435 = vpop.f32.mrf.mxu0
    %v3436 = vadd.f32 0.0, %v3435
    %v3437 = vpop.f32.mrf.mxu0
    %v3438 = vpop.f32.mrf.mxu0
    %v3439 = vadd.f32 0.0, %v3438
    %v3440 = vpop.f32.mrf.mxu0
    %3441 = vmatprep.mubr.bf16.mxu0 0
    %3442 = vmatmul.mubr.bf16.gmra.mxu0 %v3193
    %v3443 = vpop.f32.mrf.mxu0
    %v3444 = vadd.f32 0.0, %v3443
    %v3445 = vpop.f32.mrf.mxu0
    %v3446 = vpop.f32.mrf.mxu0
    %v3447 = vadd.f32 0.0, %v3446
    %v3448 = vpop.f32.mrf.mxu0
    %3449 = vmatprep.mubr.bf16.mxu0 0
    %3450 = vmatmul.mubr.bf16.gmra.mxu0 %v3194
    %v3451 = vpop.f32.mrf.mxu0
    %v3452 = vadd.f32 0.0, %v3451
    %v3453 = vpop.f32.mrf.mxu0
    %v3454 = vpop.f32.mrf.mxu0
    %v3455 = vadd.f32 0.0, %v3454
    %v3456 = vpop.f32.mrf.mxu0
    %3457 = vmatprep.mubr.bf16.mxu0 0
    %3458 = vmatmul.mubr.bf16.gmra.mxu0 %v3195
    %v3459 = vpop.f32.mrf.mxu0
    %v3460 = vadd.f32 0.0, %v3459
    %v3461 = vpop.f32.mrf.mxu0
    %v3462 = vpop.f32.mrf.mxu0
    %v3463 = vadd.f32 0.0, %v3462
    %v3464 = vpop.f32.mrf.mxu0
    %3465 = vmatprep.mubr.bf16.mxu0 0
    %3466 = vmatmul.mubr.bf16.gmra.mxu0 %v3196
    %v3467 = vpop.f32.mrf.mxu0
    %v3468 = vadd.f32 0.0, %v3467
    %v3469 = vpop.f32.mrf.mxu0
    %v3470 = vpop.f32.mrf.mxu0
    %v3471 = vadd.f32 0.0, %v3470
    %v3472 = vpop.f32.mrf.mxu0
    %3473 = vmatprep.mubr.bf16.mxu0 0
    %3474 = vmatmul.mubr.bf16.gmra.mxu0 %v3197
    %v3475 = vpop.f32.mrf.mxu0
    %v3476 = vadd.f32 0.0, %v3475
    %v3477 = vpop.f32.mrf.mxu0
    %v3478 = vpop.f32.mrf.mxu0
    %v3479 = vadd.f32 0.0, %v3478
    %v3480 = vpop.f32.mrf.mxu0
    %3481 = vmatprep.mubr.bf16.mxu0 0
    %3482 = vmatmul.mubr.bf16.gmra.mxu0 %v3198
    %v3483 = vpop.f32.mrf.mxu0
    %v3484 = vadd.f32 0.0, %v3483
    %v3485 = vpop.f32.mrf.mxu0
    %v3486 = vpop.f32.mrf.mxu0
    %v3487 = vadd.f32 0.0, %v3486
    %v3488 = vpop.f32.mrf.mxu0
    %3489 = vmatprep.mubr.bf16.mxu0 0
    %3490 = vmatmul.mubr.bf16.gmra.mxu0 %v3199
    %v3491 = vpop.f32.mrf.mxu0
    %v3492 = vadd.f32 0.0, %v3491
    %v3493 = vpop.f32.mrf.mxu0
    %v3494 = vpop.f32.mrf.mxu0
    %v3495 = vadd.f32 0.0, %v3494
    %v3496 = vpop.f32.mrf.mxu0
    %3497 = vmatprep.mubr.bf16.mxu0 0
    %3498 = vmatmul.mubr.bf16.gmra.mxu0 %v3200
    %v3499 = vpop.f32.mrf.mxu0
    %v3500 = vadd.f32 0.0, %v3499
    %v3501 = vpop.f32.mrf.mxu0
    %v3502 = vpop.f32.mrf.mxu0
    %v3503 = vadd.f32 0.0, %v3502
    %v3504 = vpop.f32.mrf.mxu0
    %3505 = vmatprep.mubr.bf16.mxu0 0
    %3506 = vmatmul.mubr.bf16.gmra.mxu0 %v3201
    %v3507 = vpop.f32.mrf.mxu0
    %v3508 = vadd.f32 0.0, %v3507
    %v3509 = vpop.f32.mrf.mxu0
    %v3510 = vpop.f32.mrf.mxu0
    %v3511 = vadd.f32 0.0, %v3510
    %v3512 = vpop.f32.mrf.mxu0
    %3513 = vmatprep.mubr.bf16.mxu0 0
    %3514 = vmatmul.mubr.bf16.gmra.mxu0 %v3202
    %v3515 = vpop.f32.mrf.mxu0
    %v3516 = vadd.f32 0.0, %v3515
    %v3517 = vpop.f32.mrf.mxu0
    %v3518 = vpop.f32.mrf.mxu0
    %v3519 = vadd.f32 0.0, %v3518
    %v3520 = vpop.f32.mrf.mxu0
    %3521 = vmatprep.mubr.bf16.mxu0 0
    %3522 = vmatmul.mubr.bf16.gmra.mxu0 %v3203
    %v3523 = vpop.f32.mrf.mxu0
    %v3524 = vadd.f32 0.0, %v3523
    %v3525 = vpop.f32.mrf.mxu0
    %v3526 = vpop.f32.mrf.mxu0
    %v3527 = vadd.f32 0.0, %v3526
    %v3528 = vpop.f32.mrf.mxu0
    %3529 = vmatprep.mubr.bf16.mxu0 0
    %3530 = vmatmul.mubr.bf16.gmra.mxu0 %v3204
    %v3531 = vpop.f32.mrf.mxu0
    %v3532 = vadd.f32 0.0, %v3531
    %v3533 = vpop.f32.mrf.mxu0
    %v3534 = vpop.f32.mrf.mxu0
    %v3535 = vadd.f32 0.0, %v3534
    %v3536 = vpop.f32.mrf.mxu0
    %3537 = vmatprep.mubr.bf16.mxu0 0
    %3538 = vmatmul.mubr.bf16.gmra.mxu0 %v3205
    %v3539 = vpop.f32.mrf.mxu0
    %v3540 = vadd.f32 0.0, %v3539
    %v3541 = vpop.f32.mrf.mxu0
    %v3542 = vpop.f32.mrf.mxu0
    %v3543 = vadd.f32 0.0, %v3542
    %v3544 = vpop.f32.mrf.mxu0
    %3545 = vmatprep.mubr.bf16.mxu0 0
    %3546 = vmatmul.mubr.bf16.gmra.mxu0 %v3206
    %v3547 = vpop.f32.mrf.mxu0
    %v3548 = vadd.f32 0.0, %v3547
    %v3549 = vpop.f32.mrf.mxu0
    %v3550 = vpop.f32.mrf.mxu0
    %v3551 = vadd.f32 0.0, %v3550
    %v3552 = vpop.f32.mrf.mxu0
    %3553 = vmatprep.mubr.bf16.mxu0 0
    %3554 = vmatmul.mubr.bf16.gmra.mxu0 %v3207
    %v3555 = vpop.f32.mrf.mxu0
    %v3556 = vadd.f32 0.0, %v3555
    %v3557 = vpop.f32.mrf.mxu0
    %v3558 = vpop.f32.mrf.mxu0
    %v3559 = vadd.f32 0.0, %v3558
    %v3560 = vpop.f32.mrf.mxu0
    %3561 = vdwg.mxu0
    %v3562 = vadd.f32 %v3047, %v3308
    %v3563 = vadd.f32 %v3048, %v3311
    %v3564 = vadd.f32 %v3049, %v3316
    %v3565 = vadd.f32 %v3050, %v3319
    %v3566 = vadd.f32 %v3051, %v3324
    %v3567 = vadd.f32 %v3052, %v3327
    %v3568 = vadd.f32 %v3053, %v3332
    %v3569 = vadd.f32 %v3054, %v3335
    %v3570 = vadd.f32 %v3055, %v3340
    %v3571 = vadd.f32 %v3056, %v3343
    %v3572 = vadd.f32 %v3057, %v3348
    %v3573 = vadd.f32 %v3058, %v3351
    %v3574 = vadd.f32 %v3059, %v3356
    %v3575 = vadd.f32 %v3060, %v3359
    %v3576 = vadd.f32 %v3061, %v3364
    %v3577 = vadd.f32 %v3062, %v3367
    %v3578 = vadd.f32 %v3063, %v3372
    %v3579 = vadd.f32 %v3064, %v3375
    %v3580 = vadd.f32 %v3065, %v3380
    %v3581 = vadd.f32 %v3066, %v3383
    %v3582 = vadd.f32 %v3067, %v3388
    %v3583 = vadd.f32 %v3068, %v3391
    %v3584 = vadd.f32 %v3069, %v3396
    %v3585 = vadd.f32 %v3070, %v3399
    %v3586 = vadd.f32 %v3071, %v3404
    %v3587 = vadd.f32 %v3072, %v3407
    %v3588 = vadd.f32 %v3073, %v3412
    %v3589 = vadd.f32 %v3074, %v3415
    %v3590 = vadd.f32 %v3075, %v3420
    %v3591 = vadd.f32 %v3076, %v3423
    %v3592 = vadd.f32 %v3077, %v3428
    %v3593 = vadd.f32 %v3078, %v3431
    %v3594 = vadd.f32 %v3079, %v3436
    %v3595 = vadd.f32 %v3080, %v3439
    %v3596 = vadd.f32 %v3081, %v3444
    %v3597 = vadd.f32 %v3082, %v3447
    %v3598 = vadd.f32 %v3083, %v3452
    %v3599 = vadd.f32 %v3084, %v3455
    %v3600 = vadd.f32 %v3085, %v3460
    %v3601 = vadd.f32 %v3086, %v3463
    %v3602 = vadd.f32 %v3087, %v3468
    %v3603 = vadd.f32 %v3088, %v3471
    %v3604 = vadd.f32 %v3089, %v3476
    %v3605 = vadd.f32 %v3090, %v3479
    %v3606 = vadd.f32 %v3091, %v3484
    %v3607 = vadd.f32 %v3092, %v3487
    %v3608 = vadd.f32 %v3093, %v3492
    %v3609 = vadd.f32 %v3094, %v3495
    %v3610 = vadd.f32 %v3095, %v3500
    %v3611 = vadd.f32 %v3096, %v3503
    %v3612 = vadd.f32 %v3097, %v3508
    %v3613 = vadd.f32 %v3098, %v3511
    %v3614 = vadd.f32 %v3099, %v3516
    %v3615 = vadd.f32 %v3100, %v3519
    %v3616 = vadd.f32 %v3101, %v3524
    %v3617 = vadd.f32 %v3102, %v3527
    %v3618 = vadd.f32 %v3103, %v3532
    %v3619 = vadd.f32 %v3104, %v3535
    %v3620 = vadd.f32 %v3105, %v3540
    %v3621 = vadd.f32 %v3106, %v3543
    %v3622 = vadd.f32 %v3107, %v3548
    %v3623 = vadd.f32 %v3108, %v3551
    %v3624 = vadd.f32 %v3109, %v3556
    %v3625 = vadd.f32 %v3110, %v3559
    %v3626 = vld [vmem:[%s3111 + $0x1] sm:$0xff]
    %v3627 = vld [vmem:[%s3111 + $0x9] sm:$0xff]
    %v3628 = vld [vmem:[%s3111 + $0x19] sm:$0xff]
    %v3629 = vld [vmem:[%s3111 + $0x21] sm:$0xff]
    %v3630 = vld [vmem:[%s3111 + $0x31] sm:$0xff]
    %v3631 = vld [vmem:[%s3111 + $0x39] sm:$0xff]
    %v3632 = vld [vmem:[%s3111 + $0x49] sm:$0xff]
    %v3633 = vld [vmem:[%s3111 + $0x51] sm:$0xff]
    %v3634 = vld [vmem:[%s3111 + $0x61] sm:$0xff]
    %v3635 = vld [vmem:[%s3111 + $0x69] sm:$0xff]
    %v3636 = vld [vmem:[%s3111 + $0x79] sm:$0xff]
    %v3637 = vld [vmem:[%s3111 + $0x81] sm:$0xff]
    %v3638 = vld [vmem:[%s3111 + $0x91] sm:$0xff]
    %v3639 = vld [vmem:[%s3111 + $0x99] sm:$0xff]
    %v3640 = vld [vmem:[%s3111 + $0xa9] sm:$0xff]
    %v3641 = vld [vmem:[%s3111 + $0xb1] sm:$0xff]
    %v3642 = vld [vmem:[%s3111 + $0xc1] sm:$0xff]
    %v3643 = vld [vmem:[%s3111 + $0xc9] sm:$0xff]
    %v3644 = vld [vmem:[%s3111 + $0xd9] sm:$0xff]
    %v3645 = vld [vmem:[%s3111 + $0xe1] sm:$0xff]
    %v3646 = vld [vmem:[%s3111 + $0xf1] sm:$0xff]
    %v3647 = vld [vmem:[%s3111 + $0xf9] sm:$0xff]
    %v3648 = vld [vmem:[%s3111 + $0x109] sm:$0xff]
    %v3649 = vld [vmem:[%s3111 + $0x111] sm:$0xff]
    %v3650 = vld [vmem:[%s3111 + $0x121] sm:$0xff]
    %v3651 = vld [vmem:[%s3111 + $0x129] sm:$0xff]
    %v3652 = vld [vmem:[%s3111 + $0x139] sm:$0xff]
    %v3653 = vld [vmem:[%s3111 + $0x141] sm:$0xff]
    %v3654 = vld [vmem:[%s3111 + $0x151] sm:$0xff]
    %v3655 = vld [vmem:[%s3111 + $0x159] sm:$0xff]
    %v3656 = vld [vmem:[%s3111 + $0x169] sm:$0xff]
    %v3657 = vld [vmem:[%s3111 + $0x171] sm:$0xff]
    %v3658 = vld [vmem:[%s3111 + $0x1b1] sm:$0xff]
    %v3659 = vld [vmem:[%s3111 + $0x1b9] sm:$0xff]
    %v3660 = vld [vmem:[%s3111 + $0x1c9] sm:$0xff]
    %v3661 = vld [vmem:[%s3111 + $0x1d1] sm:$0xff]
    %v3662 = vld [vmem:[%s3111 + $0x1e1] sm:$0xff]
    %v3663 = vld [vmem:[%s3111 + $0x1e9] sm:$0xff]
    %v3664 = vld [vmem:[%s3111 + $0x1f9] sm:$0xff]
    %v3665 = vld [vmem:[%s3111 + $0x201] sm:$0xff]
    %v3666 = vld [vmem:[%s3111 + $0x211] sm:$0xff]
    %v3667 = vld [vmem:[%s3111 + $0x219] sm:$0xff]
    %v3668 = vld [vmem:[%s3111 + $0x229] sm:$0xff]
    %v3669 = vld [vmem:[%s3111 + $0x231] sm:$0xff]
    %v3670 = vld [vmem:[%s3111 + $0x241] sm:$0xff]
    %v3671 = vld [vmem:[%s3111 + $0x249] sm:$0xff]
    %v3672 = vld [vmem:[%s3111 + $0x259] sm:$0xff]
    %v3673 = vld [vmem:[%s3111 + $0x261] sm:$0xff]
    %v3674 = vld [vmem:[%s3111 + $0x271] sm:$0xff]
    %v3675 = vld [vmem:[%s3111 + $0x279] sm:$0xff]
    %v3676 = vld [vmem:[%s3111 + $0x289] sm:$0xff]
    %v3677 = vld [vmem:[%s3111 + $0x291] sm:$0xff]
    %v3678 = vld [vmem:[%s3111 + $0x2a1] sm:$0xff]
    %v3679 = vld [vmem:[%s3111 + $0x2a9] sm:$0xff]
    %v3680 = vld [vmem:[%s3111 + $0x2b9] sm:$0xff]
    %v3681 = vld [vmem:[%s3111 + $0x2c1] sm:$0xff]
    %v3682 = vld [vmem:[%s3111 + $0x2d1] sm:$0xff]
    %v3683 = vld [vmem:[%s3111 + $0x2d9] sm:$0xff]
    %v3684 = vld [vmem:[%s3111 + $0x2e9] sm:$0xff]
    %v3685 = vld [vmem:[%s3111 + $0x2f1] sm:$0xff]
    %v3686 = vld [vmem:[%s3111 + $0x301] sm:$0xff]
    %v3687 = vld [vmem:[%s3111 + $0x309] sm:$0xff]
    %v3688 = vld [vmem:[%s3111 + $0x319] sm:$0xff]
    %v3689 = vld [vmem:[%s3111 + $0x321] sm:$0xff]
    %v3690 = vpack.c.bf16 %v3627, %v3626
    %v3691 = vpack.c.bf16 %v3629, %v3628
    %v3692 = vpack.c.bf16 %v3631, %v3630
    %v3693 = vpack.c.bf16 %v3633, %v3632
    %v3694 = vpack.c.bf16 %v3635, %v3634
    %v3695 = vpack.c.bf16 %v3637, %v3636
    %v3696 = vpack.c.bf16 %v3639, %v3638
    %v3697 = vpack.c.bf16 %v3641, %v3640
    %v3698 = vpack.c.bf16 %v3643, %v3642
    %v3699 = vpack.c.bf16 %v3645, %v3644
    %v3700 = vpack.c.bf16 %v3647, %v3646
    %v3701 = vpack.c.bf16 %v3649, %v3648
    %v3702 = vpack.c.bf16 %v3651, %v3650
    %v3703 = vpack.c.bf16 %v3653, %v3652
    %v3704 = vpack.c.bf16 %v3655, %v3654
    %v3705 = vpack.c.bf16 %v3657, %v3656
    %v3706 = vpack.c.bf16 %v3659, %v3658
    %v3707 = vpack.c.bf16 %v3661, %v3660
    %v3708 = vpack.c.bf16 %v3663, %v3662
    %v3709 = vpack.c.bf16 %v3665, %v3664
    %v3710 = vpack.c.bf16 %v3667, %v3666
    %v3711 = vpack.c.bf16 %v3669, %v3668
    %v3712 = vpack.c.bf16 %v3671, %v3670
    %v3713 = vpack.c.bf16 %v3673, %v3672
    %v3714 = vpack.c.bf16 %v3675, %v3674
    %v3715 = vpack.c.bf16 %v3677, %v3676
    %v3716 = vpack.c.bf16 %v3679, %v3678
    %v3717 = vpack.c.bf16 %v3681, %v3680
    %v3718 = vpack.c.bf16 %v3683, %v3682
    %v3719 = vpack.c.bf16 %v3685, %v3684
    %v3720 = vpack.c.bf16 %v3687, %v3686
    %v3721 = vpack.c.bf16 %v3689, %v3688
    %s3722 = scalar_lea.vmem %s2, 448
    %v3723 = vld [vmem:[%s3722] sm:$0xf]
    %v3724 = vld [vmem:[%s3722 + $0x4] sm:$0xf]
    %v3725 = vld [vmem:[%s3722 + $0x8] sm:$0xf]
    %v3726 = vld [vmem:[%s3722 + $0xc] sm:$0xf]
    %v3727 = vld [vmem:[%s3722 + $0x10] sm:$0xf]
    %v3728 = vld [vmem:[%s3722 + $0x14] sm:$0xf]
    %v3729 = vld [vmem:[%s3722 + $0x18] sm:$0xf]
    %v3730 = vld [vmem:[%s3722 + $0x1c] sm:$0xf]
    %v3731 = vld [vmem:[%s3722 + $0x20] sm:$0xf]
    %v3732 = vld [vmem:[%s3722 + $0x24] sm:$0xf]
    %v3733 = vld [vmem:[%s3722 + $0x28] sm:$0xf]
    %v3734 = vld [vmem:[%s3722 + $0x2c] sm:$0xf]
    %v3735 = vld [vmem:[%s3722 + $0x30] sm:$0xf]
    %v3736 = vld [vmem:[%s3722 + $0x34] sm:$0xf]
    %v3737 = vld [vmem:[%s3722 + $0x38] sm:$0xf]
    %v3738 = vld [vmem:[%s3722 + $0x3c] sm:$0xf]
    %v3755 = vunpack.c.l.b16 %v3723
    %v3756 = vunpack.c.l.b16 %v3724
    %v3757 = vunpack.c.l.b16 %v3725
    %v3758 = vunpack.c.l.b16 %v3726
    %v3759 = vunpack.c.l.b16 %v3727
    %v3760 = vunpack.c.l.b16 %v3728
    %v3761 = vunpack.c.l.b16 %v3729
    %v3762 = vunpack.c.l.b16 %v3730
    %v3763 = vunpack.c.l.b16 %v3731
    %v3764 = vunpack.c.l.b16 %v3732
    %v3765 = vunpack.c.l.b16 %v3733
    %v3766 = vunpack.c.l.b16 %v3734
    %v3767 = vunpack.c.l.b16 %v3735
    %v3768 = vunpack.c.l.b16 %v3736
    %v3769 = vunpack.c.l.b16 %v3737
    %v3770 = vunpack.c.l.b16 %v3738
    %v3771 = vpack.c.b16 %v3756, %v3755
    %v3772 = vpack.c.b16 %v3758, %v3757
    %v3773 = vpack.c.b16 %v3760, %v3759
    %v3774 = vpack.c.b16 %v3762, %v3761
    %v3775 = vpack.c.b16 %v3764, %v3763
    %v3776 = vpack.c.b16 %v3766, %v3765
    %v3777 = vpack.c.b16 %v3768, %v3767
    %v3778 = vpack.c.b16 %v3770, %v3769
    %3787 = vmatprep.subr.bf16.mxu0 0
    %3788 = vmatpush1.bf16.msra.mxu0 %v3778
    %3789 = vmatprep.subr.bf16.mxu0 0
    %3790 = vmatpush1.bf16.msra.mxu0 %v3777
    %3791 = vmatprep.subr.bf16.mxu0 0
    %3792 = vmatpush1.bf16.msra.mxu0 %v3776
    %3793 = vmatprep.subr.bf16.mxu0 0
    %3794 = vmatpush1.bf16.msra.mxu0 %v3775
    %3795 = vmatprep.subr.bf16.mxu0 0
    %3796 = vmatpush1.bf16.msra.mxu0 %v3774
    %3797 = vmatprep.subr.bf16.mxu0 0
    %3798 = vmatpush1.bf16.msra.mxu0 %v3773
    %3799 = vmatprep.subr.bf16.mxu0 0
    %3800 = vmatpush1.bf16.msra.mxu0 %v3772
    %3801 = vmatprep.subr.bf16.mxu0 0
    %3802 = vmatpush1.bf16.msra.mxu0 %v3771
    %3803 = vmatprep.subr.bf16.mxu0 0
    %3804 = vmatpush2.bf16.msra.mxu0 0
    %3805 = vmatprep.subr.bf16.mxu0 0
    %3806 = vmatpush2.bf16.msra.mxu0 0
    %3807 = vmatprep.subr.bf16.mxu0 0
    %3808 = vmatpush2.bf16.msra.mxu0 0
    %3809 = vmatprep.subr.bf16.mxu0 0
    %3810 = vmatpush2.bf16.msra.mxu0 0
    %3811 = vmatprep.subr.bf16.mxu0 0
    %3812 = vmatpush2.bf16.msra.mxu0 0
    %3813 = vmatprep.subr.bf16.mxu0 0
    %3814 = vmatpush2.bf16.msra.mxu0 0
    %3815 = vmatprep.subr.bf16.mxu0 0
    %3816 = vmatpush2.bf16.msra.mxu0 0
    %3817 = vmatprep.subr.bf16.mxu0 0
    %3818 = vmatpush2.bf16.msra.mxu0 0
    %3819 = vmatprep.mubr.bf16.mxu0 0
    %3820 = vmatmul.mubr.bf16.gmra.mxu0 %v3690
    %v3821 = vpop.f32.mrf.mxu0
    %v3822 = vadd.f32 0.0, %v3821
    %v3823 = vpop.f32.mrf.mxu0
    %v3824 = vpop.f32.mrf.mxu0
    %v3825 = vadd.f32 0.0, %v3824
    %v3826 = vpop.f32.mrf.mxu0
    %3827 = vmatprep.mubr.bf16.mxu0 0
    %3828 = vmatmul.mubr.bf16.gmra.mxu0 %v3691
    %v3829 = vpop.f32.mrf.mxu0
    %v3830 = vadd.f32 0.0, %v3829
    %v3831 = vpop.f32.mrf.mxu0
    %v3832 = vpop.f32.mrf.mxu0
    %v3833 = vadd.f32 0.0, %v3832
    %v3834 = vpop.f32.mrf.mxu0
    %3835 = vmatprep.mubr.bf16.mxu0 0
    %3836 = vmatmul.mubr.bf16.gmra.mxu0 %v3692
    %v3837 = vpop.f32.mrf.mxu0
    %v3838 = vadd.f32 0.0, %v3837
    %v3839 = vpop.f32.mrf.mxu0
    %v3840 = vpop.f32.mrf.mxu0
    %v3841 = vadd.f32 0.0, %v3840
    %v3842 = vpop.f32.mrf.mxu0
    %3843 = vmatprep.mubr.bf16.mxu0 0
    %3844 = vmatmul.mubr.bf16.gmra.mxu0 %v3693
    %v3845 = vpop.f32.mrf.mxu0
    %v3846 = vadd.f32 0.0, %v3845
    %v3847 = vpop.f32.mrf.mxu0
    %v3848 = vpop.f32.mrf.mxu0
    %v3849 = vadd.f32 0.0, %v3848
    %v3850 = vpop.f32.mrf.mxu0
    %3851 = vmatprep.mubr.bf16.mxu0 0
    %3852 = vmatmul.mubr.bf16.gmra.mxu0 %v3694
    %v3853 = vpop.f32.mrf.mxu0
    %v3854 = vadd.f32 0.0, %v3853
    %v3855 = vpop.f32.mrf.mxu0
    %v3856 = vpop.f32.mrf.mxu0
    %v3857 = vadd.f32 0.0, %v3856
    %v3858 = vpop.f32.mrf.mxu0
    %3859 = vmatprep.mubr.bf16.mxu0 0
    %3860 = vmatmul.mubr.bf16.gmra.mxu0 %v3695
    %v3861 = vpop.f32.mrf.mxu0
    %v3862 = vadd.f32 0.0, %v3861
    %v3863 = vpop.f32.mrf.mxu0
    %v3864 = vpop.f32.mrf.mxu0
    %v3865 = vadd.f32 0.0, %v3864
    %v3866 = vpop.f32.mrf.mxu0
    %3867 = vmatprep.mubr.bf16.mxu0 0
    %3868 = vmatmul.mubr.bf16.gmra.mxu0 %v3696
    %v3869 = vpop.f32.mrf.mxu0
    %v3870 = vadd.f32 0.0, %v3869
    %v3871 = vpop.f32.mrf.mxu0
    %v3872 = vpop.f32.mrf.mxu0
    %v3873 = vadd.f32 0.0, %v3872
    %v3874 = vpop.f32.mrf.mxu0
    %3875 = vmatprep.mubr.bf16.mxu0 0
    %3876 = vmatmul.mubr.bf16.gmra.mxu0 %v3697
    %v3877 = vpop.f32.mrf.mxu0
    %v3878 = vadd.f32 0.0, %v3877
    %v3879 = vpop.f32.mrf.mxu0
    %v3880 = vpop.f32.mrf.mxu0
    %v3881 = vadd.f32 0.0, %v3880
    %v3882 = vpop.f32.mrf.mxu0
    %3883 = vmatprep.mubr.bf16.mxu0 0
    %3884 = vmatmul.mubr.bf16.gmra.mxu0 %v3698
    %v3885 = vpop.f32.mrf.mxu0
    %v3886 = vadd.f32 0.0, %v3885
    %v3887 = vpop.f32.mrf.mxu0
    %v3888 = vpop.f32.mrf.mxu0
    %v3889 = vadd.f32 0.0, %v3888
    %v3890 = vpop.f32.mrf.mxu0
    %3891 = vmatprep.mubr.bf16.mxu0 0
    %3892 = vmatmul.mubr.bf16.gmra.mxu0 %v3699
    %v3893 = vpop.f32.mrf.mxu0
    %v3894 = vadd.f32 0.0, %v3893
    %v3895 = vpop.f32.mrf.mxu0
    %v3896 = vpop.f32.mrf.mxu0
    %v3897 = vadd.f32 0.0, %v3896
    %v3898 = vpop.f32.mrf.mxu0
    %3899 = vmatprep.mubr.bf16.mxu0 0
    %3900 = vmatmul.mubr.bf16.gmra.mxu0 %v3700
    %v3901 = vpop.f32.mrf.mxu0
    %v3902 = vadd.f32 0.0, %v3901
    %v3903 = vpop.f32.mrf.mxu0
    %v3904 = vpop.f32.mrf.mxu0
    %v3905 = vadd.f32 0.0, %v3904
    %v3906 = vpop.f32.mrf.mxu0
    %3907 = vmatprep.mubr.bf16.mxu0 0
    %3908 = vmatmul.mubr.bf16.gmra.mxu0 %v3701
    %v3909 = vpop.f32.mrf.mxu0
    %v3910 = vadd.f32 0.0, %v3909
    %v3911 = vpop.f32.mrf.mxu0
    %v3912 = vpop.f32.mrf.mxu0
    %v3913 = vadd.f32 0.0, %v3912
    %v3914 = vpop.f32.mrf.mxu0
    %3915 = vmatprep.mubr.bf16.mxu0 0
    %3916 = vmatmul.mubr.bf16.gmra.mxu0 %v3702
    %v3917 = vpop.f32.mrf.mxu0
    %v3918 = vadd.f32 0.0, %v3917
    %v3919 = vpop.f32.mrf.mxu0
    %v3920 = vpop.f32.mrf.mxu0
    %v3921 = vadd.f32 0.0, %v3920
    %v3922 = vpop.f32.mrf.mxu0
    %3923 = vmatprep.mubr.bf16.mxu0 0
    %3924 = vmatmul.mubr.bf16.gmra.mxu0 %v3703
    %v3925 = vpop.f32.mrf.mxu0
    %v3926 = vadd.f32 0.0, %v3925
    %v3927 = vpop.f32.mrf.mxu0
    %v3928 = vpop.f32.mrf.mxu0
    %v3929 = vadd.f32 0.0, %v3928
    %v3930 = vpop.f32.mrf.mxu0
    %3931 = vmatprep.mubr.bf16.mxu0 0
    %3932 = vmatmul.mubr.bf16.gmra.mxu0 %v3704
    %v3933 = vpop.f32.mrf.mxu0
    %v3934 = vadd.f32 0.0, %v3933
    %v3935 = vpop.f32.mrf.mxu0
    %v3936 = vpop.f32.mrf.mxu0
    %v3937 = vadd.f32 0.0, %v3936
    %v3938 = vpop.f32.mrf.mxu0
    %3939 = vmatprep.mubr.bf16.mxu0 0
    %3940 = vmatmul.mubr.bf16.gmra.mxu0 %v3705
    %v3941 = vpop.f32.mrf.mxu0
    %v3942 = vadd.f32 0.0, %v3941
    %v3943 = vpop.f32.mrf.mxu0
    %v3944 = vpop.f32.mrf.mxu0
    %v3945 = vadd.f32 0.0, %v3944
    %v3946 = vpop.f32.mrf.mxu0
    %3947 = vmatprep.mubr.bf16.mxu0 0
    %3948 = vmatmul.mubr.bf16.gmra.mxu0 %v3706
    %v3949 = vpop.f32.mrf.mxu0
    %v3950 = vadd.f32 0.0, %v3949
    %v3951 = vpop.f32.mrf.mxu0
    %v3952 = vpop.f32.mrf.mxu0
    %v3953 = vadd.f32 0.0, %v3952
    %v3954 = vpop.f32.mrf.mxu0
    %3955 = vmatprep.mubr.bf16.mxu0 0
    %3956 = vmatmul.mubr.bf16.gmra.mxu0 %v3707
    %v3957 = vpop.f32.mrf.mxu0
    %v3958 = vadd.f32 0.0, %v3957
    %v3959 = vpop.f32.mrf.mxu0
    %v3960 = vpop.f32.mrf.mxu0
    %v3961 = vadd.f32 0.0, %v3960
    %v3962 = vpop.f32.mrf.mxu0
    %3963 = vmatprep.mubr.bf16.mxu0 0
    %3964 = vmatmul.mubr.bf16.gmra.mxu0 %v3708
    %v3965 = vpop.f32.mrf.mxu0
    %v3966 = vadd.f32 0.0, %v3965
    %v3967 = vpop.f32.mrf.mxu0
    %v3968 = vpop.f32.mrf.mxu0
    %v3969 = vadd.f32 0.0, %v3968
    %v3970 = vpop.f32.mrf.mxu0
    %3971 = vmatprep.mubr.bf16.mxu0 0
    %3972 = vmatmul.mubr.bf16.gmra.mxu0 %v3709
    %v3973 = vpop.f32.mrf.mxu0
    %v3974 = vadd.f32 0.0, %v3973
    %v3975 = vpop.f32.mrf.mxu0
    %v3976 = vpop.f32.mrf.mxu0
    %v3977 = vadd.f32 0.0, %v3976
    %v3978 = vpop.f32.mrf.mxu0
    %3979 = vmatprep.mubr.bf16.mxu0 0
    %3980 = vmatmul.mubr.bf16.gmra.mxu0 %v3710
    %v3981 = vpop.f32.mrf.mxu0
    %v3982 = vadd.f32 0.0, %v3981
    %v3983 = vpop.f32.mrf.mxu0
    %v3984 = vpop.f32.mrf.mxu0
    %v3985 = vadd.f32 0.0, %v3984
    %v3986 = vpop.f32.mrf.mxu0
    %3987 = vmatprep.mubr.bf16.mxu0 0
    %3988 = vmatmul.mubr.bf16.gmra.mxu0 %v3711
    %v3989 = vpop.f32.mrf.mxu0
    %v3990 = vadd.f32 0.0, %v3989
    %v3991 = vpop.f32.mrf.mxu0
    %v3992 = vpop.f32.mrf.mxu0
    %v3993 = vadd.f32 0.0, %v3992
    %v3994 = vpop.f32.mrf.mxu0
    %3995 = vmatprep.mubr.bf16.mxu0 0
    %3996 = vmatmul.mubr.bf16.gmra.mxu0 %v3712
    %v3997 = vpop.f32.mrf.mxu0
    %v3998 = vadd.f32 0.0, %v3997
    %v3999 = vpop.f32.mrf.mxu0
    %v4000 = vpop.f32.mrf.mxu0
    %v4001 = vadd.f32 0.0, %v4000
    %v4002 = vpop.f32.mrf.mxu0
    %4003 = vmatprep.mubr.bf16.mxu0 0
    %4004 = vmatmul.mubr.bf16.gmra.mxu0 %v3713
    %v4005 = vpop.f32.mrf.mxu0
    %v4006 = vadd.f32 0.0, %v4005
    %v4007 = vpop.f32.mrf.mxu0
    %v4008 = vpop.f32.mrf.mxu0
    %v4009 = vadd.f32 0.0, %v4008
    %v4010 = vpop.f32.mrf.mxu0
    %4011 = vmatprep.mubr.bf16.mxu0 0
    %4012 = vmatmul.mubr.bf16.gmra.mxu0 %v3714
    %v4013 = vpop.f32.mrf.mxu0
    %v4014 = vadd.f32 0.0, %v4013
    %v4015 = vpop.f32.mrf.mxu0
    %v4016 = vpop.f32.mrf.mxu0
    %v4017 = vadd.f32 0.0, %v4016
    %v4018 = vpop.f32.mrf.mxu0
    %4019 = vmatprep.mubr.bf16.mxu0 0
    %4020 = vmatmul.mubr.bf16.gmra.mxu0 %v3715
    %v4021 = vpop.f32.mrf.mxu0
    %v4022 = vadd.f32 0.0, %v4021
    %v4023 = vpop.f32.mrf.mxu0
    %v4024 = vpop.f32.mrf.mxu0
    %v4025 = vadd.f32 0.0, %v4024
    %v4026 = vpop.f32.mrf.mxu0
    %4027 = vmatprep.mubr.bf16.mxu0 0
    %4028 = vmatmul.mubr.bf16.gmra.mxu0 %v3716
    %v4029 = vpop.f32.mrf.mxu0
    %v4030 = vadd.f32 0.0, %v4029
    %v4031 = vpop.f32.mrf.mxu0
    %v4032 = vpop.f32.mrf.mxu0
    %v4033 = vadd.f32 0.0, %v4032
    %v4034 = vpop.f32.mrf.mxu0
    %4035 = vmatprep.mubr.bf16.mxu0 0
    %4036 = vmatmul.mubr.bf16.gmra.mxu0 %v3717
    %v4037 = vpop.f32.mrf.mxu0
    %v4038 = vadd.f32 0.0, %v4037
    %v4039 = vpop.f32.mrf.mxu0
    %v4040 = vpop.f32.mrf.mxu0
    %v4041 = vadd.f32 0.0, %v4040
    %v4042 = vpop.f32.mrf.mxu0
    %4043 = vmatprep.mubr.bf16.mxu0 0
    %4044 = vmatmul.mubr.bf16.gmra.mxu0 %v3718
    %v4045 = vpop.f32.mrf.mxu0
    %v4046 = vadd.f32 0.0, %v4045
    %v4047 = vpop.f32.mrf.mxu0
    %v4048 = vpop.f32.mrf.mxu0
    %v4049 = vadd.f32 0.0, %v4048
    %v4050 = vpop.f32.mrf.mxu0
    %4051 = vmatprep.mubr.bf16.mxu0 0
    %4052 = vmatmul.mubr.bf16.gmra.mxu0 %v3719
    %v4053 = vpop.f32.mrf.mxu0
    %v4054 = vadd.f32 0.0, %v4053
    %v4055 = vpop.f32.mrf.mxu0
    %v4056 = vpop.f32.mrf.mxu0
    %v4057 = vadd.f32 0.0, %v4056
    %v4058 = vpop.f32.mrf.mxu0
    %4059 = vmatprep.mubr.bf16.mxu0 0
    %4060 = vmatmul.mubr.bf16.gmra.mxu0 %v3720
    %v4061 = vpop.f32.mrf.mxu0
    %v4062 = vadd.f32 0.0, %v4061
    %v4063 = vpop.f32.mrf.mxu0
    %v4064 = vpop.f32.mrf.mxu0
    %v4065 = vadd.f32 0.0, %v4064
    %v4066 = vpop.f32.mrf.mxu0
    %4067 = vmatprep.mubr.bf16.mxu0 0
    %4068 = vmatmul.mubr.bf16.gmra.mxu0 %v3721
    %v4069 = vpop.f32.mrf.mxu0
    %v4070 = vadd.f32 0.0, %v4069
    %v4071 = vpop.f32.mrf.mxu0
    %v4072 = vpop.f32.mrf.mxu0
    %v4073 = vadd.f32 0.0, %v4072
    %v4074 = vpop.f32.mrf.mxu0
    %4075 = vdwg.mxu0
    %v4076 = vadd.f32 %v3562, %v3822
    %v4077 = vadd.f32 %v3563, %v3825
    %v4078 = vadd.f32 %v3564, %v3830
    %v4079 = vadd.f32 %v3565, %v3833
    %v4080 = vadd.f32 %v3566, %v3838
    %v4081 = vadd.f32 %v3567, %v3841
    %v4082 = vadd.f32 %v3568, %v3846
    %v4083 = vadd.f32 %v3569, %v3849
    %v4084 = vadd.f32 %v3570, %v3854
    %v4085 = vadd.f32 %v3571, %v3857
    %v4086 = vadd.f32 %v3572, %v3862
    %v4087 = vadd.f32 %v3573, %v3865
    %v4088 = vadd.f32 %v3574, %v3870
    %v4089 = vadd.f32 %v3575, %v3873
    %v4090 = vadd.f32 %v3576, %v3878
    %v4091 = vadd.f32 %v3577, %v3881
    %v4092 = vadd.f32 %v3578, %v3886
    %v4093 = vadd.f32 %v3579, %v3889
    %v4094 = vadd.f32 %v3580, %v3894
    %v4095 = vadd.f32 %v3581, %v3897
    %v4096 = vadd.f32 %v3582, %v3902
    %v4097 = vadd.f32 %v3583, %v3905
    %v4098 = vadd.f32 %v3584, %v3910
    %v4099 = vadd.f32 %v3585, %v3913
    %v4100 = vadd.f32 %v3586, %v3918
    %v4101 = vadd.f32 %v3587, %v3921
    %v4102 = vadd.f32 %v3588, %v3926
    %v4103 = vadd.f32 %v3589, %v3929
    %v4104 = vadd.f32 %v3590, %v3934
    %v4105 = vadd.f32 %v3591, %v3937
    %v4106 = vadd.f32 %v3592, %v3942
    %v4107 = vadd.f32 %v3593, %v3945
    %v4108 = vadd.f32 %v3594, %v3950
    %v4109 = vadd.f32 %v3595, %v3953
    %v4110 = vadd.f32 %v3596, %v3958
    %v4111 = vadd.f32 %v3597, %v3961
    %v4112 = vadd.f32 %v3598, %v3966
    %v4113 = vadd.f32 %v3599, %v3969
    %v4114 = vadd.f32 %v3600, %v3974
    %v4115 = vadd.f32 %v3601, %v3977
    %v4116 = vadd.f32 %v3602, %v3982
    %v4117 = vadd.f32 %v3603, %v3985
    %v4118 = vadd.f32 %v3604, %v3990
    %v4119 = vadd.f32 %v3605, %v3993
    %v4120 = vadd.f32 %v3606, %v3998
    %v4121 = vadd.f32 %v3607, %v4001
    %v4122 = vadd.f32 %v3608, %v4006
    %v4123 = vadd.f32 %v3609, %v4009
    %v4124 = vadd.f32 %v3610, %v4014
    %v4125 = vadd.f32 %v3611, %v4017
    %v4126 = vadd.f32 %v3612, %v4022
    %v4127 = vadd.f32 %v3613, %v4025
    %v4128 = vadd.f32 %v3614, %v4030
    %v4129 = vadd.f32 %v3615, %v4033
    %v4130 = vadd.f32 %v3616, %v4038
    %v4131 = vadd.f32 %v3617, %v4041
    %v4132 = vadd.f32 %v3618, %v4046
    %v4133 = vadd.f32 %v3619, %v4049
    %v4134 = vadd.f32 %v3620, %v4054
    %v4135 = vadd.f32 %v3621, %v4057
    %v4136 = vadd.f32 %v3622, %v4062
    %v4137 = vadd.f32 %v3623, %v4065
    %v4138 = vadd.f32 %v3624, %v4070
    %v4139 = vadd.f32 %v3625, %v4073
    %v4140 = vld [vmem:[%s3111 + $0x2] sm:$0xff]
    %v4141 = vld [vmem:[%s3111 + $0xa] sm:$0xff]
    %v4142 = vld [vmem:[%s3111 + $0x1a] sm:$0xff]
    %v4143 = vld [vmem:[%s3111 + $0x22] sm:$0xff]
    %v4144 = vld [vmem:[%s3111 + $0x32] sm:$0xff]
    %v4145 = vld [vmem:[%s3111 + $0x3a] sm:$0xff]
    %v4146 = vld [vmem:[%s3111 + $0x4a] sm:$0xff]
    %v4147 = vld [vmem:[%s3111 + $0x52] sm:$0xff]
    %v4148 = vld [vmem:[%s3111 + $0x62] sm:$0xff]
    %v4149 = vld [vmem:[%s3111 + $0x6a] sm:$0xff]
    %v4150 = vld [vmem:[%s3111 + $0x7a] sm:$0xff]
    %v4151 = vld [vmem:[%s3111 + $0x82] sm:$0xff]
    %v4152 = vld [vmem:[%s3111 + $0x92] sm:$0xff]
    %v4153 = vld [vmem:[%s3111 + $0x9a] sm:$0xff]
    %v4154 = vld [vmem:[%s3111 + $0xaa] sm:$0xff]
    %v4155 = vld [vmem:[%s3111 + $0xb2] sm:$0xff]
    %v4156 = vld [vmem:[%s3111 + $0xc2] sm:$0xff]
    %v4157 = vld [vmem:[%s3111 + $0xca] sm:$0xff]
    %v4158 = vld [vmem:[%s3111 + $0xda] sm:$0xff]
    %v4159 = vld [vmem:[%s3111 + $0xe2] sm:$0xff]
    %v4160 = vld [vmem:[%s3111 + $0xf2] sm:$0xff]
    %v4161 = vld [vmem:[%s3111 + $0xfa] sm:$0xff]
    %v4162 = vld [vmem:[%s3111 + $0x10a] sm:$0xff]
    %v4163 = vld [vmem:[%s3111 + $0x112] sm:$0xff]
    %v4164 = vld [vmem:[%s3111 + $0x122] sm:$0xff]
    %v4165 = vld [vmem:[%s3111 + $0x12a] sm:$0xff]
    %v4166 = vld [vmem:[%s3111 + $0x13a] sm:$0xff]
    %v4167 = vld [vmem:[%s3111 + $0x142] sm:$0xff]
    %v4168 = vld [vmem:[%s3111 + $0x152] sm:$0xff]
    %v4169 = vld [vmem:[%s3111 + $0x15a] sm:$0xff]
    %v4170 = vld [vmem:[%s3111 + $0x16a] sm:$0xff]
    %v4171 = vld [vmem:[%s3111 + $0x172] sm:$0xff]
    %v4172 = vld [vmem:[%s3111 + $0x1b2] sm:$0xff]
    %v4173 = vld [vmem:[%s3111 + $0x1ba] sm:$0xff]
    %v4174 = vld [vmem:[%s3111 + $0x1ca] sm:$0xff]
    %v4175 = vld [vmem:[%s3111 + $0x1d2] sm:$0xff]
    %v4176 = vld [vmem:[%s3111 + $0x1e2] sm:$0xff]
    %v4177 = vld [vmem:[%s3111 + $0x1ea] sm:$0xff]
    %v4178 = vld [vmem:[%s3111 + $0x1fa] sm:$0xff]
    %v4179 = vld [vmem:[%s3111 + $0x202] sm:$0xff]
    %v4180 = vld [vmem:[%s3111 + $0x212] sm:$0xff]
    %v4181 = vld [vmem:[%s3111 + $0x21a] sm:$0xff]
    %v4182 = vld [vmem:[%s3111 + $0x22a] sm:$0xff]
    %v4183 = vld [vmem:[%s3111 + $0x232] sm:$0xff]
    %v4184 = vld [vmem:[%s3111 + $0x242] sm:$0xff]
    %v4185 = vld [vmem:[%s3111 + $0x24a] sm:$0xff]
    %v4186 = vld [vmem:[%s3111 + $0x25a] sm:$0xff]
    %v4187 = vld [vmem:[%s3111 + $0x262] sm:$0xff]
    %v4188 = vld [vmem:[%s3111 + $0x272] sm:$0xff]
    %v4189 = vld [vmem:[%s3111 + $0x27a] sm:$0xff]
    %v4190 = vld [vmem:[%s3111 + $0x28a] sm:$0xff]
    %v4191 = vld [vmem:[%s3111 + $0x292] sm:$0xff]
    %v4192 = vld [vmem:[%s3111 + $0x2a2] sm:$0xff]
    %v4193 = vld [vmem:[%s3111 + $0x2aa] sm:$0xff]
    %v4194 = vld [vmem:[%s3111 + $0x2ba] sm:$0xff]
    %v4195 = vld [vmem:[%s3111 + $0x2c2] sm:$0xff]
    %v4196 = vld [vmem:[%s3111 + $0x2d2] sm:$0xff]
    %v4197 = vld [vmem:[%s3111 + $0x2da] sm:$0xff]
    %v4198 = vld [vmem:[%s3111 + $0x2ea] sm:$0xff]
    %v4199 = vld [vmem:[%s3111 + $0x2f2] sm:$0xff]
    %v4200 = vld [vmem:[%s3111 + $0x302] sm:$0xff]
    %v4201 = vld [vmem:[%s3111 + $0x30a] sm:$0xff]
    %v4202 = vld [vmem:[%s3111 + $0x31a] sm:$0xff]
    %v4203 = vld [vmem:[%s3111 + $0x322] sm:$0xff]
    %v4204 = vpack.c.bf16 %v4141, %v4140
    %v4205 = vpack.c.bf16 %v4143, %v4142
    %v4206 = vpack.c.bf16 %v4145, %v4144
    %v4207 = vpack.c.bf16 %v4147, %v4146
    %v4208 = vpack.c.bf16 %v4149, %v4148
    %v4209 = vpack.c.bf16 %v4151, %v4150
    %v4210 = vpack.c.bf16 %v4153, %v4152
    %v4211 = vpack.c.bf16 %v4155, %v4154
    %v4212 = vpack.c.bf16 %v4157, %v4156
    %v4213 = vpack.c.bf16 %v4159, %v4158
    %v4214 = vpack.c.bf16 %v4161, %v4160
    %v4215 = vpack.c.bf16 %v4163, %v4162
    %v4216 = vpack.c.bf16 %v4165, %v4164
    %v4217 = vpack.c.bf16 %v4167, %v4166
    %v4218 = vpack.c.bf16 %v4169, %v4168
    %v4219 = vpack.c.bf16 %v4171, %v4170
    %v4220 = vpack.c.bf16 %v4173, %v4172
    %v4221 = vpack.c.bf16 %v4175, %v4174
    %v4222 = vpack.c.bf16 %v4177, %v4176
    %v4223 = vpack.c.bf16 %v4179, %v4178
    %v4224 = vpack.c.bf16 %v4181, %v4180
    %v4225 = vpack.c.bf16 %v4183, %v4182
    %v4226 = vpack.c.bf16 %v4185, %v4184
    %v4227 = vpack.c.bf16 %v4187, %v4186
    %v4228 = vpack.c.bf16 %v4189, %v4188
    %v4229 = vpack.c.bf16 %v4191, %v4190
    %v4230 = vpack.c.bf16 %v4193, %v4192
    %v4231 = vpack.c.bf16 %v4195, %v4194
    %v4232 = vpack.c.bf16 %v4197, %v4196
    %v4233 = vpack.c.bf16 %v4199, %v4198
    %v4234 = vpack.c.bf16 %v4201, %v4200
    %v4235 = vpack.c.bf16 %v4203, %v4202
    %s4236 = scalar_lea.vmem %s2, 512
    %v4237 = vld [vmem:[%s4236] sm:$0xf]
    %v4238 = vld [vmem:[%s4236 + $0x4] sm:$0xf]
    %v4239 = vld [vmem:[%s4236 + $0x8] sm:$0xf]
    %v4240 = vld [vmem:[%s4236 + $0xc] sm:$0xf]
    %v4241 = vld [vmem:[%s4236 + $0x10] sm:$0xf]
    %v4242 = vld [vmem:[%s4236 + $0x14] sm:$0xf]
    %v4243 = vld [vmem:[%s4236 + $0x18] sm:$0xf]
    %v4244 = vld [vmem:[%s4236 + $0x1c] sm:$0xf]
    %v4245 = vld [vmem:[%s4236 + $0x20] sm:$0xf]
    %v4246 = vld [vmem:[%s4236 + $0x24] sm:$0xf]
    %v4247 = vld [vmem:[%s4236 + $0x28] sm:$0xf]
    %v4248 = vld [vmem:[%s4236 + $0x2c] sm:$0xf]
    %v4249 = vld [vmem:[%s4236 + $0x30] sm:$0xf]
    %v4250 = vld [vmem:[%s4236 + $0x34] sm:$0xf]
    %v4251 = vld [vmem:[%s4236 + $0x38] sm:$0xf]
    %v4252 = vld [vmem:[%s4236 + $0x3c] sm:$0xf]
    %v4269 = vunpack.c.l.b16 %v4237
    %v4270 = vunpack.c.l.b16 %v4238
    %v4271 = vunpack.c.l.b16 %v4239
    %v4272 = vunpack.c.l.b16 %v4240
    %v4273 = vunpack.c.l.b16 %v4241
    %v4274 = vunpack.c.l.b16 %v4242
    %v4275 = vunpack.c.l.b16 %v4243
    %v4276 = vunpack.c.l.b16 %v4244
    %v4277 = vunpack.c.l.b16 %v4245
    %v4278 = vunpack.c.l.b16 %v4246
    %v4279 = vunpack.c.l.b16 %v4247
    %v4280 = vunpack.c.l.b16 %v4248
    %v4281 = vunpack.c.l.b16 %v4249
    %v4282 = vunpack.c.l.b16 %v4250
    %v4283 = vunpack.c.l.b16 %v4251
    %v4284 = vunpack.c.l.b16 %v4252
    %v4285 = vpack.c.b16 %v4270, %v4269
    %v4286 = vpack.c.b16 %v4272, %v4271
    %v4287 = vpack.c.b16 %v4274, %v4273
    %v4288 = vpack.c.b16 %v4276, %v4275
    %v4289 = vpack.c.b16 %v4278, %v4277
    %v4290 = vpack.c.b16 %v4280, %v4279
    %v4291 = vpack.c.b16 %v4282, %v4281
    %v4292 = vpack.c.b16 %v4284, %v4283
    %4301 = vmatprep.subr.bf16.mxu0 0
    %4302 = vmatpush1.bf16.msra.mxu0 %v4292
    %4303 = vmatprep.subr.bf16.mxu0 0
    %4304 = vmatpush1.bf16.msra.mxu0 %v4291
    %4305 = vmatprep.subr.bf16.mxu0 0
    %4306 = vmatpush1.bf16.msra.mxu0 %v4290
    %4307 = vmatprep.subr.bf16.mxu0 0
    %4308 = vmatpush1.bf16.msra.mxu0 %v4289
    %4309 = vmatprep.subr.bf16.mxu0 0
    %4310 = vmatpush1.bf16.msra.mxu0 %v4288
    %4311 = vmatprep.subr.bf16.mxu0 0
    %4312 = vmatpush1.bf16.msra.mxu0 %v4287
    %4313 = vmatprep.subr.bf16.mxu0 0
    %4314 = vmatpush1.bf16.msra.mxu0 %v4286
    %4315 = vmatprep.subr.bf16.mxu0 0
    %4316 = vmatpush1.bf16.msra.mxu0 %v4285
    %4317 = vmatprep.subr.bf16.mxu0 0
    %4318 = vmatpush2.bf16.msra.mxu0 0
    %4319 = vmatprep.subr.bf16.mxu0 0
    %4320 = vmatpush2.bf16.msra.mxu0 0
    %4321 = vmatprep.subr.bf16.mxu0 0
    %4322 = vmatpush2.bf16.msra.mxu0 0
    %4323 = vmatprep.subr.bf16.mxu0 0
    %4324 = vmatpush2.bf16.msra.mxu0 0
    %4325 = vmatprep.subr.bf16.mxu0 0
    %4326 = vmatpush2.bf16.msra.mxu0 0
    %4327 = vmatprep.subr.bf16.mxu0 0
    %4328 = vmatpush2.bf16.msra.mxu0 0
    %4329 = vmatprep.subr.bf16.mxu0 0
    %4330 = vmatpush2.bf16.msra.mxu0 0
    %4331 = vmatprep.subr.bf16.mxu0 0
    %4332 = vmatpush2.bf16.msra.mxu0 0
    %4333 = vmatprep.mubr.bf16.mxu0 0
    %4334 = vmatmul.mubr.bf16.gmra.mxu0 %v4204
    %v4335 = vpop.f32.mrf.mxu0
    %v4336 = vadd.f32 0.0, %v4335
    %v4337 = vpop.f32.mrf.mxu0
    %v4338 = vpop.f32.mrf.mxu0
    %v4339 = vadd.f32 0.0, %v4338
    %v4340 = vpop.f32.mrf.mxu0
    %4341 = vmatprep.mubr.bf16.mxu0 0
    %4342 = vmatmul.mubr.bf16.gmra.mxu0 %v4205
    %v4343 = vpop.f32.mrf.mxu0
    %v4344 = vadd.f32 0.0, %v4343
    %v4345 = vpop.f32.mrf.mxu0
    %v4346 = vpop.f32.mrf.mxu0
    %v4347 = vadd.f32 0.0, %v4346
    %v4348 = vpop.f32.mrf.mxu0
    %4349 = vmatprep.mubr.bf16.mxu0 0
    %4350 = vmatmul.mubr.bf16.gmra.mxu0 %v4206
    %v4351 = vpop.f32.mrf.mxu0
    %v4352 = vadd.f32 0.0, %v4351
    %v4353 = vpop.f32.mrf.mxu0
    %v4354 = vpop.f32.mrf.mxu0
    %v4355 = vadd.f32 0.0, %v4354
    %v4356 = vpop.f32.mrf.mxu0
    %4357 = vmatprep.mubr.bf16.mxu0 0
    %4358 = vmatmul.mubr.bf16.gmra.mxu0 %v4207
    %v4359 = vpop.f32.mrf.mxu0
    %v4360 = vadd.f32 0.0, %v4359
    %v4361 = vpop.f32.mrf.mxu0
    %v4362 = vpop.f32.mrf.mxu0
    %v4363 = vadd.f32 0.0, %v4362
    %v4364 = vpop.f32.mrf.mxu0
    %4365 = vmatprep.mubr.bf16.mxu0 0
    %4366 = vmatmul.mubr.bf16.gmra.mxu0 %v4208
    %v4367 = vpop.f32.mrf.mxu0
    %v4368 = vadd.f32 0.0, %v4367
    %v4369 = vpop.f32.mrf.mxu0
    %v4370 = vpop.f32.mrf.mxu0
    %v4371 = vadd.f32 0.0, %v4370
    %v4372 = vpop.f32.mrf.mxu0
    %4373 = vmatprep.mubr.bf16.mxu0 0
    %4374 = vmatmul.mubr.bf16.gmra.mxu0 %v4209
    %v4375 = vpop.f32.mrf.mxu0
    %v4376 = vadd.f32 0.0, %v4375
    %v4377 = vpop.f32.mrf.mxu0
    %v4378 = vpop.f32.mrf.mxu0
    %v4379 = vadd.f32 0.0, %v4378
    %v4380 = vpop.f32.mrf.mxu0
    %4381 = vmatprep.mubr.bf16.mxu0 0
    %4382 = vmatmul.mubr.bf16.gmra.mxu0 %v4210
    %v4383 = vpop.f32.mrf.mxu0
    %v4384 = vadd.f32 0.0, %v4383
    %v4385 = vpop.f32.mrf.mxu0
    %v4386 = vpop.f32.mrf.mxu0
    %v4387 = vadd.f32 0.0, %v4386
    %v4388 = vpop.f32.mrf.mxu0
    %4389 = vmatprep.mubr.bf16.mxu0 0
    %4390 = vmatmul.mubr.bf16.gmra.mxu0 %v4211
    %v4391 = vpop.f32.mrf.mxu0
    %v4392 = vadd.f32 0.0, %v4391
    %v4393 = vpop.f32.mrf.mxu0
    %v4394 = vpop.f32.mrf.mxu0
    %v4395 = vadd.f32 0.0, %v4394
    %v4396 = vpop.f32.mrf.mxu0
    %4397 = vmatprep.mubr.bf16.mxu0 0
    %4398 = vmatmul.mubr.bf16.gmra.mxu0 %v4212
    %v4399 = vpop.f32.mrf.mxu0
    %v4400 = vadd.f32 0.0, %v4399
    %v4401 = vpop.f32.mrf.mxu0
    %v4402 = vpop.f32.mrf.mxu0
    %v4403 = vadd.f32 0.0, %v4402
    %v4404 = vpop.f32.mrf.mxu0
    %4405 = vmatprep.mubr.bf16.mxu0 0
    %4406 = vmatmul.mubr.bf16.gmra.mxu0 %v4213
    %v4407 = vpop.f32.mrf.mxu0
    %v4408 = vadd.f32 0.0, %v4407
    %v4409 = vpop.f32.mrf.mxu0
    %v4410 = vpop.f32.mrf.mxu0
    %v4411 = vadd.f32 0.0, %v4410
    %v4412 = vpop.f32.mrf.mxu0
    %4413 = vmatprep.mubr.bf16.mxu0 0
    %4414 = vmatmul.mubr.bf16.gmra.mxu0 %v4214
    %v4415 = vpop.f32.mrf.mxu0
    %v4416 = vadd.f32 0.0, %v4415
    %v4417 = vpop.f32.mrf.mxu0
    %v4418 = vpop.f32.mrf.mxu0
    %v4419 = vadd.f32 0.0, %v4418
    %v4420 = vpop.f32.mrf.mxu0
    %4421 = vmatprep.mubr.bf16.mxu0 0
    %4422 = vmatmul.mubr.bf16.gmra.mxu0 %v4215
    %v4423 = vpop.f32.mrf.mxu0
    %v4424 = vadd.f32 0.0, %v4423
    %v4425 = vpop.f32.mrf.mxu0
    %v4426 = vpop.f32.mrf.mxu0
    %v4427 = vadd.f32 0.0, %v4426
    %v4428 = vpop.f32.mrf.mxu0
    %4429 = vmatprep.mubr.bf16.mxu0 0
    %4430 = vmatmul.mubr.bf16.gmra.mxu0 %v4216
    %v4431 = vpop.f32.mrf.mxu0
    %v4432 = vadd.f32 0.0, %v4431
    %v4433 = vpop.f32.mrf.mxu0
    %v4434 = vpop.f32.mrf.mxu0
    %v4435 = vadd.f32 0.0, %v4434
    %v4436 = vpop.f32.mrf.mxu0
    %4437 = vmatprep.mubr.bf16.mxu0 0
    %4438 = vmatmul.mubr.bf16.gmra.mxu0 %v4217
    %v4439 = vpop.f32.mrf.mxu0
    %v4440 = vadd.f32 0.0, %v4439
    %v4441 = vpop.f32.mrf.mxu0
    %v4442 = vpop.f32.mrf.mxu0
    %v4443 = vadd.f32 0.0, %v4442
    %v4444 = vpop.f32.mrf.mxu0
    %4445 = vmatprep.mubr.bf16.mxu0 0
    %4446 = vmatmul.mubr.bf16.gmra.mxu0 %v4218
    %v4447 = vpop.f32.mrf.mxu0
    %v4448 = vadd.f32 0.0, %v4447
    %v4449 = vpop.f32.mrf.mxu0
    %v4450 = vpop.f32.mrf.mxu0
    %v4451 = vadd.f32 0.0, %v4450
    %v4452 = vpop.f32.mrf.mxu0
    %4453 = vmatprep.mubr.bf16.mxu0 0
    %4454 = vmatmul.mubr.bf16.gmra.mxu0 %v4219
    %v4455 = vpop.f32.mrf.mxu0
    %v4456 = vadd.f32 0.0, %v4455
    %v4457 = vpop.f32.mrf.mxu0
    %v4458 = vpop.f32.mrf.mxu0
    %v4459 = vadd.f32 0.0, %v4458
    %v4460 = vpop.f32.mrf.mxu0
    %4461 = vmatprep.mubr.bf16.mxu0 0
    %4462 = vmatmul.mubr.bf16.gmra.mxu0 %v4220
    %v4463 = vpop.f32.mrf.mxu0
    %v4464 = vadd.f32 0.0, %v4463
    %v4465 = vpop.f32.mrf.mxu0
    %v4466 = vpop.f32.mrf.mxu0
    %v4467 = vadd.f32 0.0, %v4466
    %v4468 = vpop.f32.mrf.mxu0
    %4469 = vmatprep.mubr.bf16.mxu0 0
    %4470 = vmatmul.mubr.bf16.gmra.mxu0 %v4221
    %v4471 = vpop.f32.mrf.mxu0
    %v4472 = vadd.f32 0.0, %v4471
    %v4473 = vpop.f32.mrf.mxu0
    %v4474 = vpop.f32.mrf.mxu0
    %v4475 = vadd.f32 0.0, %v4474
    %v4476 = vpop.f32.mrf.mxu0
    %4477 = vmatprep.mubr.bf16.mxu0 0
    %4478 = vmatmul.mubr.bf16.gmra.mxu0 %v4222
    %v4479 = vpop.f32.mrf.mxu0
    %v4480 = vadd.f32 0.0, %v4479
    %v4481 = vpop.f32.mrf.mxu0
    %v4482 = vpop.f32.mrf.mxu0
    %v4483 = vadd.f32 0.0, %v4482
    %v4484 = vpop.f32.mrf.mxu0
    %4485 = vmatprep.mubr.bf16.mxu0 0
    %4486 = vmatmul.mubr.bf16.gmra.mxu0 %v4223
    %v4487 = vpop.f32.mrf.mxu0
    %v4488 = vadd.f32 0.0, %v4487
    %v4489 = vpop.f32.mrf.mxu0
    %v4490 = vpop.f32.mrf.mxu0
    %v4491 = vadd.f32 0.0, %v4490
    %v4492 = vpop.f32.mrf.mxu0
    %4493 = vmatprep.mubr.bf16.mxu0 0
    %4494 = vmatmul.mubr.bf16.gmra.mxu0 %v4224
    %v4495 = vpop.f32.mrf.mxu0
    %v4496 = vadd.f32 0.0, %v4495
    %v4497 = vpop.f32.mrf.mxu0
    %v4498 = vpop.f32.mrf.mxu0
    %v4499 = vadd.f32 0.0, %v4498
    %v4500 = vpop.f32.mrf.mxu0
    %4501 = vmatprep.mubr.bf16.mxu0 0
    %4502 = vmatmul.mubr.bf16.gmra.mxu0 %v4225
    %v4503 = vpop.f32.mrf.mxu0
    %v4504 = vadd.f32 0.0, %v4503
    %v4505 = vpop.f32.mrf.mxu0
    %v4506 = vpop.f32.mrf.mxu0
    %v4507 = vadd.f32 0.0, %v4506
    %v4508 = vpop.f32.mrf.mxu0
    %4509 = vmatprep.mubr.bf16.mxu0 0
    %4510 = vmatmul.mubr.bf16.gmra.mxu0 %v4226
    %v4511 = vpop.f32.mrf.mxu0
    %v4512 = vadd.f32 0.0, %v4511
    %v4513 = vpop.f32.mrf.mxu0
    %v4514 = vpop.f32.mrf.mxu0
    %v4515 = vadd.f32 0.0, %v4514
    %v4516 = vpop.f32.mrf.mxu0
    %4517 = vmatprep.mubr.bf16.mxu0 0
    %4518 = vmatmul.mubr.bf16.gmra.mxu0 %v4227
    %v4519 = vpop.f32.mrf.mxu0
    %v4520 = vadd.f32 0.0, %v4519
    %v4521 = vpop.f32.mrf.mxu0
    %v4522 = vpop.f32.mrf.mxu0
    %v4523 = vadd.f32 0.0, %v4522
    %v4524 = vpop.f32.mrf.mxu0
    %4525 = vmatprep.mubr.bf16.mxu0 0
    %4526 = vmatmul.mubr.bf16.gmra.mxu0 %v4228
    %v4527 = vpop.f32.mrf.mxu0
    %v4528 = vadd.f32 0.0, %v4527
    %v4529 = vpop.f32.mrf.mxu0
    %v4530 = vpop.f32.mrf.mxu0
    %v4531 = vadd.f32 0.0, %v4530
    %v4532 = vpop.f32.mrf.mxu0
    %4533 = vmatprep.mubr.bf16.mxu0 0
    %4534 = vmatmul.mubr.bf16.gmra.mxu0 %v4229
    %v4535 = vpop.f32.mrf.mxu0
    %v4536 = vadd.f32 0.0, %v4535
    %v4537 = vpop.f32.mrf.mxu0
    %v4538 = vpop.f32.mrf.mxu0
    %v4539 = vadd.f32 0.0, %v4538
    %v4540 = vpop.f32.mrf.mxu0
    %4541 = vmatprep.mubr.bf16.mxu0 0
    %4542 = vmatmul.mubr.bf16.gmra.mxu0 %v4230
    %v4543 = vpop.f32.mrf.mxu0
    %v4544 = vadd.f32 0.0, %v4543
    %v4545 = vpop.f32.mrf.mxu0
    %v4546 = vpop.f32.mrf.mxu0
    %v4547 = vadd.f32 0.0, %v4546
    %v4548 = vpop.f32.mrf.mxu0
    %4549 = vmatprep.mubr.bf16.mxu0 0
    %4550 = vmatmul.mubr.bf16.gmra.mxu0 %v4231
    %v4551 = vpop.f32.mrf.mxu0
    %v4552 = vadd.f32 0.0, %v4551
    %v4553 = vpop.f32.mrf.mxu0
    %v4554 = vpop.f32.mrf.mxu0
    %v4555 = vadd.f32 0.0, %v4554
    %v4556 = vpop.f32.mrf.mxu0
    %4557 = vmatprep.mubr.bf16.mxu0 0
    %4558 = vmatmul.mubr.bf16.gmra.mxu0 %v4232
    %v4559 = vpop.f32.mrf.mxu0
    %v4560 = vadd.f32 0.0, %v4559
    %v4561 = vpop.f32.mrf.mxu0
    %v4562 = vpop.f32.mrf.mxu0
    %v4563 = vadd.f32 0.0, %v4562
    %v4564 = vpop.f32.mrf.mxu0
    %4565 = vmatprep.mubr.bf16.mxu0 0
    %4566 = vmatmul.mubr.bf16.gmra.mxu0 %v4233
    %v4567 = vpop.f32.mrf.mxu0
    %v4568 = vadd.f32 0.0, %v4567
    %v4569 = vpop.f32.mrf.mxu0
    %v4570 = vpop.f32.mrf.mxu0
    %v4571 = vadd.f32 0.0, %v4570
    %v4572 = vpop.f32.mrf.mxu0
    %4573 = vmatprep.mubr.bf16.mxu0 0
    %4574 = vmatmul.mubr.bf16.gmra.mxu0 %v4234
    %v4575 = vpop.f32.mrf.mxu0
    %v4576 = vadd.f32 0.0, %v4575
    %v4577 = vpop.f32.mrf.mxu0
    %v4578 = vpop.f32.mrf.mxu0
    %v4579 = vadd.f32 0.0, %v4578
    %v4580 = vpop.f32.mrf.mxu0
    %4581 = vmatprep.mubr.bf16.mxu0 0
    %4582 = vmatmul.mubr.bf16.gmra.mxu0 %v4235
    %v4583 = vpop.f32.mrf.mxu0
    %v4584 = vadd.f32 0.0, %v4583
    %v4585 = vpop.f32.mrf.mxu0
    %v4586 = vpop.f32.mrf.mxu0
    %v4587 = vadd.f32 0.0, %v4586
    %v4588 = vpop.f32.mrf.mxu0
    %4589 = vdwg.mxu0
    %v4590 = vadd.f32 %v4076, %v4336
    %v4591 = vadd.f32 %v4077, %v4339
    %v4592 = vadd.f32 %v4078, %v4344
    %v4593 = vadd.f32 %v4079, %v4347
    %v4594 = vadd.f32 %v4080, %v4352
    %v4595 = vadd.f32 %v4081, %v4355
    %v4596 = vadd.f32 %v4082, %v4360
    %v4597 = vadd.f32 %v4083, %v4363
    %v4598 = vadd.f32 %v4084, %v4368
    %v4599 = vadd.f32 %v4085, %v4371
    %v4600 = vadd.f32 %v4086, %v4376
    %v4601 = vadd.f32 %v4087, %v4379
    %v4602 = vadd.f32 %v4088, %v4384
    %v4603 = vadd.f32 %v4089, %v4387
    %v4604 = vadd.f32 %v4090, %v4392
    %v4605 = vadd.f32 %v4091, %v4395
    %v4606 = vadd.f32 %v4092, %v4400
    %v4607 = vadd.f32 %v4093, %v4403
    %v4608 = vadd.f32 %v4094, %v4408
    %v4609 = vadd.f32 %v4095, %v4411
    %v4610 = vadd.f32 %v4096, %v4416
    %v4611 = vadd.f32 %v4097, %v4419
    %v4612 = vadd.f32 %v4098, %v4424
    %v4613 = vadd.f32 %v4099, %v4427
    %v4614 = vadd.f32 %v4100, %v4432
    %v4615 = vadd.f32 %v4101, %v4435
    %v4616 = vadd.f32 %v4102, %v4440
    %v4617 = vadd.f32 %v4103, %v4443
    %v4618 = vadd.f32 %v4104, %v4448
    %v4619 = vadd.f32 %v4105, %v4451
    %v4620 = vadd.f32 %v4106, %v4456
    %v4621 = vadd.f32 %v4107, %v4459
    %v4622 = vadd.f32 %v4108, %v4464
    %v4623 = vadd.f32 %v4109, %v4467
    %v4624 = vadd.f32 %v4110, %v4472
    %v4625 = vadd.f32 %v4111, %v4475
    %v4626 = vadd.f32 %v4112, %v4480
    %v4627 = vadd.f32 %v4113, %v4483
    %v4628 = vadd.f32 %v4114, %v4488
    %v4629 = vadd.f32 %v4115, %v4491
    %v4630 = vadd.f32 %v4116, %v4496
    %v4631 = vadd.f32 %v4117, %v4499
    %v4632 = vadd.f32 %v4118, %v4504
    %v4633 = vadd.f32 %v4119, %v4507
    %v4634 = vadd.f32 %v4120, %v4512
    %v4635 = vadd.f32 %v4121, %v4515
    %v4636 = vadd.f32 %v4122, %v4520
    %v4637 = vadd.f32 %v4123, %v4523
    %v4638 = vadd.f32 %v4124, %v4528
    %v4639 = vadd.f32 %v4125, %v4531
    %v4640 = vadd.f32 %v4126, %v4536
    %v4641 = vadd.f32 %v4127, %v4539
    %v4642 = vadd.f32 %v4128, %v4544
    %v4643 = vadd.f32 %v4129, %v4547
    %v4644 = vadd.f32 %v4130, %v4552
    %v4645 = vadd.f32 %v4131, %v4555
    %v4646 = vadd.f32 %v4132, %v4560
    %v4647 = vadd.f32 %v4133, %v4563
    %v4648 = vadd.f32 %v4134, %v4568
    %v4649 = vadd.f32 %v4135, %v4571
    %v4650 = vadd.f32 %v4136, %v4576
    %v4651 = vadd.f32 %v4137, %v4579
    %v4652 = vadd.f32 %v4138, %v4584
    %v4653 = vadd.f32 %v4139, %v4587
    %v4654 = vld [vmem:[%s3] sm:$0x1]
    %v4656 = vlaneseq
    %v4657 = vshrl.u32 %v4656, 7
    %v4658 = vsub.s32 0, %v4657
    %v4659 = vrot.slane %v4654, %v4658
    %v4661 = vadd.f32 %v4590, %v4659
    %v4662 = vadd.f32 %v4591, %v4659
    %v4663 = vadd.f32 %v4592, %v4659
    %v4664 = vadd.f32 %v4593, %v4659
    %v4665 = vadd.f32 %v4594, %v4659
    %v4666 = vadd.f32 %v4595, %v4659
    %v4667 = vadd.f32 %v4596, %v4659
    %v4668 = vadd.f32 %v4597, %v4659
    %v4669 = vadd.f32 %v4598, %v4659
    %v4670 = vadd.f32 %v4599, %v4659
    %v4671 = vadd.f32 %v4600, %v4659
    %v4672 = vadd.f32 %v4601, %v4659
    %v4673 = vadd.f32 %v4602, %v4659
    %v4674 = vadd.f32 %v4603, %v4659
    %v4675 = vadd.f32 %v4604, %v4659
    %v4676 = vadd.f32 %v4605, %v4659
    %v4677 = vadd.f32 %v4606, %v4659
    %v4678 = vadd.f32 %v4607, %v4659
    %v4679 = vadd.f32 %v4608, %v4659
    %v4680 = vadd.f32 %v4609, %v4659
    %v4681 = vadd.f32 %v4610, %v4659
    %v4682 = vadd.f32 %v4611, %v4659
    %v4683 = vadd.f32 %v4612, %v4659
    %v4684 = vadd.f32 %v4613, %v4659
    %v4685 = vadd.f32 %v4614, %v4659
    %v4686 = vadd.f32 %v4615, %v4659
    %v4687 = vadd.f32 %v4616, %v4659
    %v4688 = vadd.f32 %v4617, %v4659
    %v4689 = vadd.f32 %v4618, %v4659
    %v4690 = vadd.f32 %v4619, %v4659
    %v4691 = vadd.f32 %v4620, %v4659
    %v4692 = vadd.f32 %v4621, %v4659
    %v4693 = vadd.f32 %v4622, %v4659
    %v4694 = vadd.f32 %v4623, %v4659
    %v4695 = vadd.f32 %v4624, %v4659
    %v4696 = vadd.f32 %v4625, %v4659
    %v4697 = vadd.f32 %v4626, %v4659
    %v4698 = vadd.f32 %v4627, %v4659
    %v4699 = vadd.f32 %v4628, %v4659
    %v4700 = vadd.f32 %v4629, %v4659
    %v4701 = vadd.f32 %v4630, %v4659
    %v4702 = vadd.f32 %v4631, %v4659
    %v4703 = vadd.f32 %v4632, %v4659
    %v4704 = vadd.f32 %v4633, %v4659
    %v4705 = vadd.f32 %v4634, %v4659
    %v4706 = vadd.f32 %v4635, %v4659
    %v4707 = vadd.f32 %v4636, %v4659
    %v4708 = vadd.f32 %v4637, %v4659
    %v4709 = vadd.f32 %v4638, %v4659
    %v4710 = vadd.f32 %v4639, %v4659
    %v4711 = vadd.f32 %v4640, %v4659
    %v4712 = vadd.f32 %v4641, %v4659
    %v4713 = vadd.f32 %v4642, %v4659
    %v4714 = vadd.f32 %v4643, %v4659
    %v4715 = vadd.f32 %v4644, %v4659
    %v4716 = vadd.f32 %v4645, %v4659
    %v4717 = vadd.f32 %v4646, %v4659
    %v4718 = vadd.f32 %v4647, %v4659
    %v4719 = vadd.f32 %v4648, %v4659
    %v4720 = vadd.f32 %v4649, %v4659
    %v4721 = vadd.f32 %v4650, %v4659
    %v4722 = vadd.f32 %v4651, %v4659
    %v4723 = vadd.f32 %v4652, %v4659
    %v4724 = vadd.f32 %v4653, %v4659
    %v4725 = vmax.f32 %v4661, 0.0
    %v4726 = vmax.f32 %v4662, 0.0
    %v4727 = vmax.f32 %v4663, 0.0
    %v4728 = vmax.f32 %v4664, 0.0
    %v4729 = vmax.f32 %v4665, 0.0
    %v4730 = vmax.f32 %v4666, 0.0
    %v4731 = vmax.f32 %v4667, 0.0
    %v4732 = vmax.f32 %v4668, 0.0
    %v4733 = vmax.f32 %v4669, 0.0
    %v4734 = vmax.f32 %v4670, 0.0
    %v4735 = vmax.f32 %v4671, 0.0
    %v4736 = vmax.f32 %v4672, 0.0
    %v4737 = vmax.f32 %v4673, 0.0
    %v4738 = vmax.f32 %v4674, 0.0
    %v4739 = vmax.f32 %v4675, 0.0
    %v4740 = vmax.f32 %v4676, 0.0
    %v4741 = vmax.f32 %v4677, 0.0
    %v4742 = vmax.f32 %v4678, 0.0
    %v4743 = vmax.f32 %v4679, 0.0
    %v4744 = vmax.f32 %v4680, 0.0
    %v4745 = vmax.f32 %v4681, 0.0
    %v4746 = vmax.f32 %v4682, 0.0
    %v4747 = vmax.f32 %v4683, 0.0
    %v4748 = vmax.f32 %v4684, 0.0
    %v4749 = vmax.f32 %v4685, 0.0
    %v4750 = vmax.f32 %v4686, 0.0
    %v4751 = vmax.f32 %v4687, 0.0
    %v4752 = vmax.f32 %v4688, 0.0
    %v4753 = vmax.f32 %v4689, 0.0
    %v4754 = vmax.f32 %v4690, 0.0
    %v4755 = vmax.f32 %v4691, 0.0
    %v4756 = vmax.f32 %v4692, 0.0
    %v4757 = vmax.f32 %v4693, 0.0
    %v4758 = vmax.f32 %v4694, 0.0
    %v4759 = vmax.f32 %v4695, 0.0
    %v4760 = vmax.f32 %v4696, 0.0
    %v4761 = vmax.f32 %v4697, 0.0
    %v4762 = vmax.f32 %v4698, 0.0
    %v4763 = vmax.f32 %v4699, 0.0
    %v4764 = vmax.f32 %v4700, 0.0
    %v4765 = vmax.f32 %v4701, 0.0
    %v4766 = vmax.f32 %v4702, 0.0
    %v4767 = vmax.f32 %v4703, 0.0
    %v4768 = vmax.f32 %v4704, 0.0
    %v4769 = vmax.f32 %v4705, 0.0
    %v4770 = vmax.f32 %v4706, 0.0
    %v4771 = vmax.f32 %v4707, 0.0
    %v4772 = vmax.f32 %v4708, 0.0
    %v4773 = vmax.f32 %v4709, 0.0
    %v4774 = vmax.f32 %v4710, 0.0
    %v4775 = vmax.f32 %v4711, 0.0
    %v4776 = vmax.f32 %v4712, 0.0
    %v4777 = vmax.f32 %v4713, 0.0
    %v4778 = vmax.f32 %v4714, 0.0
    %v4779 = vmax.f32 %v4715, 0.0
    %v4780 = vmax.f32 %v4716, 0.0
    %v4781 = vmax.f32 %v4717, 0.0
    %v4782 = vmax.f32 %v4718, 0.0
    %v4783 = vmax.f32 %v4719, 0.0
    %v4784 = vmax.f32 %v4720, 0.0
    %v4785 = vmax.f32 %v4721, 0.0
    %v4786 = vmax.f32 %v4722, 0.0
    %v4787 = vmax.f32 %v4723, 0.0
    %v4788 = vmax.f32 %v4724, 0.0
    %4789 = vst [vmem:[#allocation3] sm:$0xff] %v4725
    %4790 = vst [vmem:[#allocation3 + $0x8] sm:$0xff] %v4726
    %4791 = vst [vmem:[#allocation3 + $0x10] sm:$0xff] %v4727
    %4792 = vst [vmem:[#allocation3 + $0x18] sm:$0xff] %v4728
    %4793 = vst [vmem:[#allocation3 + $0x20] sm:$0xff] %v4729
    %4794 = vst [vmem:[#allocation3 + $0x28] sm:$0xff] %v4730
    %4795 = vst [vmem:[#allocation3 + $0x30] sm:$0xff] %v4731
    %4796 = vst [vmem:[#allocation3 + $0x38] sm:$0xff] %v4732
    %4797 = vst [vmem:[#allocation3 + $0x40] sm:$0xff] %v4733
    %4798 = vst [vmem:[#allocation3 + $0x48] sm:$0xff] %v4734
    %4799 = vst [vmem:[#allocation3 + $0x50] sm:$0xff] %v4735
    %4800 = vst [vmem:[#allocation3 + $0x58] sm:$0xff] %v4736
    %4801 = vst [vmem:[#allocation3 + $0x60] sm:$0xff] %v4737
    %4802 = vst [vmem:[#allocation3 + $0x68] sm:$0xff] %v4738
    %4803 = vst [vmem:[#allocation3 + $0x70] sm:$0xff] %v4739
    %4804 = vst [vmem:[#allocation3 + $0x78] sm:$0xff] %v4740
    %4805 = vst [vmem:[#allocation3 + $0x80] sm:$0xff] %v4741
    %4806 = vst [vmem:[#allocation3 + $0x88] sm:$0xff] %v4742
    %4807 = vst [vmem:[#allocation3 + $0x90] sm:$0xff] %v4743
    %4808 = vst [vmem:[#allocation3 + $0x98] sm:$0xff] %v4744
    %4809 = vst [vmem:[#allocation3 + $0xa0] sm:$0xff] %v4745
    %4810 = vst [vmem:[#allocation3 + $0xa8] sm:$0xff] %v4746
    %4811 = vst [vmem:[#allocation3 + $0xb0] sm:$0xff] %v4747
    %4812 = vst [vmem:[#allocation3 + $0xb8] sm:$0xff] %v4748
    %4813 = vst [vmem:[#allocation3 + $0xc0] sm:$0xff] %v4749
    %4814 = vst [vmem:[#allocation3 + $0xc8] sm:$0xff] %v4750
    %4815 = vst [vmem:[#allocation3 + $0xd0] sm:$0xff] %v4751
    %4816 = vst [vmem:[#allocation3 + $0xd8] sm:$0xff] %v4752
    %4817 = vst [vmem:[#allocation3 + $0xe0] sm:$0xff] %v4753
    %4818 = vst [vmem:[#allocation3 + $0xe8] sm:$0xff] %v4754
    %4819 = vst [vmem:[#allocation3 + $0xf0] sm:$0xff] %v4755
    %4820 = vst [vmem:[#allocation3 + $0xf8] sm:$0xff] %v4756
    %4821 = vst [vmem:[#allocation3 + $0x100] sm:$0xff] %v4757
    %4822 = vst [vmem:[#allocation3 + $0x108] sm:$0xff] %v4758
    %4823 = vst [vmem:[#allocation3 + $0x110] sm:$0xff] %v4759
    %4824 = vst [vmem:[#allocation3 + $0x118] sm:$0xff] %v4760
    %4825 = vst [vmem:[#allocation3 + $0x120] sm:$0xff] %v4761
    %4826 = vst [vmem:[#allocation3 + $0x128] sm:$0xff] %v4762
    %4827 = vst [vmem:[#allocation3 + $0x130] sm:$0xff] %v4763
    %4828 = vst [vmem:[#allocation3 + $0x138] sm:$0xff] %v4764
    %4829 = vst [vmem:[#allocation3 + $0x140] sm:$0xff] %v4765
    %4830 = vst [vmem:[#allocation3 + $0x148] sm:$0xff] %v4766
    %4831 = vst [vmem:[#allocation3 + $0x150] sm:$0xff] %v4767
    %4832 = vst [vmem:[#allocation3 + $0x158] sm:$0xff] %v4768
    %4833 = vst [vmem:[#allocation3 + $0x160] sm:$0xff] %v4769
    %4834 = vst [vmem:[#allocation3 + $0x168] sm:$0xff] %v4770
    %4835 = vst [vmem:[#allocation3 + $0x170] sm:$0xff] %v4771
    %4836 = vst [vmem:[#allocation3 + $0x178] sm:$0xff] %v4772
    %4837 = vst [vmem:[#allocation3 + $0x180] sm:$0xff] %v4773
    %4838 = vst [vmem:[#allocation3 + $0x188] sm:$0xff] %v4774
    %4839 = vst [vmem:[#allocation3 + $0x190] sm:$0xff] %v4775
    %4840 = vst [vmem:[#allocation3 + $0x198] sm:$0xff] %v4776
    %4841 = vst [vmem:[#allocation3 + $0x1a0] sm:$0xff] %v4777
    %4842 = vst [vmem:[#allocation3 + $0x1a8] sm:$0xff] %v4778
    %4843 = vst [vmem:[#allocation3 + $0x1b0] sm:$0xff] %v4779
    %4844 = vst [vmem:[#allocation3 + $0x1b8] sm:$0xff] %v4780
    %4845 = vst [vmem:[#allocation3 + $0x1c0] sm:$0xff] %v4781
    %4846 = vst [vmem:[#allocation3 + $0x1c8] sm:$0xff] %v4782
    %4847 = vst [vmem:[#allocation3 + $0x1d0] sm:$0xff] %v4783
    %4848 = vst [vmem:[#allocation3 + $0x1d8] sm:$0xff] %v4784
    %4849 = vst [vmem:[#allocation3 + $0x1e0] sm:$0xff] %v4785
    %4850 = vst [vmem:[#allocation3 + $0x1e8] sm:$0xff] %v4786
    %4851 = vst [vmem:[#allocation3 + $0x1f0] sm:$0xff] %v4787
    %4852 = vst [vmem:[#allocation3 + $0x1f8] sm:$0xff] %v4788
    %v4853 = vld [vmem:[#allocation3] sm:$0xff]
    %v4854 = vld [vmem:[#allocation3 + $0x8] sm:$0xff]
    %v4855 = vld [vmem:[#allocation3 + $0x10] sm:$0xff]
    %v4856 = vld [vmem:[#allocation3 + $0x18] sm:$0xff]
    %v4857 = vld [vmem:[#allocation3 + $0x20] sm:$0xff]
    %v4858 = vld [vmem:[#allocation3 + $0x28] sm:$0xff]
    %v4859 = vld [vmem:[#allocation3 + $0x30] sm:$0xff]
    %v4860 = vld [vmem:[#allocation3 + $0x38] sm:$0xff]
    %v4861 = vld [vmem:[#allocation3 + $0x40] sm:$0xff]
    %v4862 = vld [vmem:[#allocation3 + $0x48] sm:$0xff]
    %v4863 = vld [vmem:[#allocation3 + $0x50] sm:$0xff]
    %v4864 = vld [vmem:[#allocation3 + $0x58] sm:$0xff]
    %v4865 = vld [vmem:[#allocation3 + $0x60] sm:$0xff]
    %v4866 = vld [vmem:[#allocation3 + $0x68] sm:$0xff]
    %v4867 = vld [vmem:[#allocation3 + $0x70] sm:$0xff]
    %v4868 = vld [vmem:[#allocation3 + $0x78] sm:$0xff]
    %v4869 = vld [vmem:[#allocation3 + $0x80] sm:$0xff]
    %v4870 = vld [vmem:[#allocation3 + $0x88] sm:$0xff]
    %v4871 = vld [vmem:[#allocation3 + $0x90] sm:$0xff]
    %v4872 = vld [vmem:[#allocation3 + $0x98] sm:$0xff]
    %v4873 = vld [vmem:[#allocation3 + $0xa0] sm:$0xff]
    %v4874 = vld [vmem:[#allocation3 + $0xa8] sm:$0xff]
    %v4875 = vld [vmem:[#allocation3 + $0xb0] sm:$0xff]
    %v4876 = vld [vmem:[#allocation3 + $0xb8] sm:$0xff]
    %v4877 = vld [vmem:[#allocation3 + $0xc0] sm:$0xff]
    %v4878 = vld [vmem:[#allocation3 + $0xc8] sm:$0xff]
    %v4879 = vld [vmem:[#allocation3 + $0xd0] sm:$0xff]
    %v4880 = vld [vmem:[#allocation3 + $0xd8] sm:$0xff]
    %v4881 = vld [vmem:[#allocation3 + $0xe0] sm:$0xff]
    %v4882 = vld [vmem:[#allocation3 + $0xe8] sm:$0xff]
    %v4883 = vld [vmem:[#allocation3 + $0xf0] sm:$0xff]
    %v4884 = vld [vmem:[#allocation3 + $0xf8] sm:$0xff]
    %v4885 = vld [vmem:[#allocation3 + $0x100] sm:$0xff]
    %v4886 = vld [vmem:[#allocation3 + $0x108] sm:$0xff]
    %v4887 = vld [vmem:[#allocation3 + $0x110] sm:$0xff]
    %v4888 = vld [vmem:[#allocation3 + $0x118] sm:$0xff]
    %v4889 = vld [vmem:[#allocation3 + $0x120] sm:$0xff]
    %v4890 = vld [vmem:[#allocation3 + $0x128] sm:$0xff]
    %v4891 = vld [vmem:[#allocation3 + $0x130] sm:$0xff]
    %v4892 = vld [vmem:[#allocation3 + $0x138] sm:$0xff]
    %v4893 = vld [vmem:[#allocation3 + $0x140] sm:$0xff]
    %v4894 = vld [vmem:[#allocation3 + $0x148] sm:$0xff]
    %v4895 = vld [vmem:[#allocation3 + $0x150] sm:$0xff]
    %v4896 = vld [vmem:[#allocation3 + $0x158] sm:$0xff]
    %v4897 = vld [vmem:[#allocation3 + $0x160] sm:$0xff]
    %v4898 = vld [vmem:[#allocation3 + $0x168] sm:$0xff]
    %v4899 = vld [vmem:[#allocation3 + $0x170] sm:$0xff]
    %v4900 = vld [vmem:[#allocation3 + $0x178] sm:$0xff]
    %v4901 = vld [vmem:[#allocation3 + $0x180] sm:$0xff]
    %v4902 = vld [vmem:[#allocation3 + $0x188] sm:$0xff]
    %v4903 = vld [vmem:[#allocation3 + $0x190] sm:$0xff]
    %v4904 = vld [vmem:[#allocation3 + $0x198] sm:$0xff]
    %v4905 = vld [vmem:[#allocation3 + $0x1a0] sm:$0xff]
    %v4906 = vld [vmem:[#allocation3 + $0x1a8] sm:$0xff]
    %v4907 = vld [vmem:[#allocation3 + $0x1b0] sm:$0xff]
    %v4908 = vld [vmem:[#allocation3 + $0x1b8] sm:$0xff]
    %v4909 = vld [vmem:[#allocation3 + $0x1c0] sm:$0xff]
    %v4910 = vld [vmem:[#allocation3 + $0x1c8] sm:$0xff]
    %v4911 = vld [vmem:[#allocation3 + $0x1d0] sm:$0xff]
    %v4912 = vld [vmem:[#allocation3 + $0x1d8] sm:$0xff]
    %v4913 = vld [vmem:[#allocation3 + $0x1e0] sm:$0xff]
    %v4914 = vld [vmem:[#allocation3 + $0x1e8] sm:$0xff]
    %v4915 = vld [vmem:[#allocation3 + $0x1f0] sm:$0xff]
    %v4916 = vld [vmem:[#allocation3 + $0x1f8] sm:$0xff]
    %v4917 = vpack.c.bf16 %v4854, %v4853
    %v4918 = vpack.c.bf16 %v4856, %v4855
    %v4919 = vpack.c.bf16 %v4858, %v4857
    %v4920 = vpack.c.bf16 %v4860, %v4859
    %v4921 = vpack.c.bf16 %v4862, %v4861
    %v4922 = vpack.c.bf16 %v4864, %v4863
    %v4923 = vpack.c.bf16 %v4866, %v4865
    %v4924 = vpack.c.bf16 %v4868, %v4867
    %v4925 = vpack.c.bf16 %v4870, %v4869
    %v4926 = vpack.c.bf16 %v4872, %v4871
    %v4927 = vpack.c.bf16 %v4874, %v4873
    %v4928 = vpack.c.bf16 %v4876, %v4875
    %v4929 = vpack.c.bf16 %v4878, %v4877
    %v4930 = vpack.c.bf16 %v4880, %v4879
    %v4931 = vpack.c.bf16 %v4882, %v4881
    %v4932 = vpack.c.bf16 %v4884, %v4883
    %v4933 = vpack.c.bf16 %v4886, %v4885
    %v4934 = vpack.c.bf16 %v4888, %v4887
    %v4935 = vpack.c.bf16 %v4890, %v4889
    %v4936 = vpack.c.bf16 %v4892, %v4891
    %v4937 = vpack.c.bf16 %v4894, %v4893
    %v4938 = vpack.c.bf16 %v4896, %v4895
    %v4939 = vpack.c.bf16 %v4898, %v4897
    %v4940 = vpack.c.bf16 %v4900, %v4899
    %v4941 = vpack.c.bf16 %v4902, %v4901
    %v4942 = vpack.c.bf16 %v4904, %v4903
    %v4943 = vpack.c.bf16 %v4906, %v4905
    %v4944 = vpack.c.bf16 %v4908, %v4907
    %v4945 = vpack.c.bf16 %v4910, %v4909
    %v4946 = vpack.c.bf16 %v4912, %v4911
    %v4947 = vpack.c.bf16 %v4914, %v4913
    %v4948 = vpack.c.bf16 %v4916, %v4915
    %v4949 = vld [vmem:[%s4] sm:$0xf]
    %v4950 = vld [vmem:[%s4 + $0x4] sm:$0xf]
    %v4951 = vld [vmem:[%s4 + $0x8] sm:$0xf]
    %v4952 = vld [vmem:[%s4 + $0xc] sm:$0xf]
    %v4953 = vld [vmem:[%s4 + $0x10] sm:$0xf]
    %v4954 = vld [vmem:[%s4 + $0x14] sm:$0xf]
    %v4955 = vld [vmem:[%s4 + $0x18] sm:$0xf]
    %v4956 = vld [vmem:[%s4 + $0x1c] sm:$0xf]
    %v4957 = vld [vmem:[%s4 + $0x20] sm:$0xf]
    %v4958 = vld [vmem:[%s4 + $0x24] sm:$0xf]
    %v4959 = vld [vmem:[%s4 + $0x28] sm:$0xf]
    %v4960 = vld [vmem:[%s4 + $0x2c] sm:$0xf]
    %v4961 = vld [vmem:[%s4 + $0x30] sm:$0xf]
    %v4962 = vld [vmem:[%s4 + $0x34] sm:$0xf]
    %v4963 = vld [vmem:[%s4 + $0x38] sm:$0xf]
    %v4964 = vld [vmem:[%s4 + $0x3c] sm:$0xf]
    %v4965 = vld [vmem:[%s5] sm:$0x1]
    %v4967 = vlaneseq
    %v4968 = vshrl.u32 %v4967, 7
    %v4969 = vsub.s32 0, %v4968
    %v4970 = vrot.slane %v4965, %v4969
    %v4988 = vunpack.c.l.b16 %v4949
    %v4989 = vunpack.c.l.b16 %v4950
    %v4990 = vunpack.c.l.b16 %v4951
    %v4991 = vunpack.c.l.b16 %v4952
    %v4992 = vunpack.c.l.b16 %v4953
    %v4993 = vunpack.c.l.b16 %v4954
    %v4994 = vunpack.c.l.b16 %v4955
    %v4995 = vunpack.c.l.b16 %v4956
    %v4996 = vunpack.c.l.b16 %v4957
    %v4997 = vunpack.c.l.b16 %v4958
    %v4998 = vunpack.c.l.b16 %v4959
    %v4999 = vunpack.c.l.b16 %v4960
    %v5000 = vunpack.c.l.b16 %v4961
    %v5001 = vunpack.c.l.b16 %v4962
    %v5002 = vunpack.c.l.b16 %v4963
    %v5003 = vunpack.c.l.b16 %v4964
    %v5004 = vpack.c.b16 %v4989, %v4988
    %v5005 = vpack.c.b16 %v4991, %v4990
    %v5006 = vpack.c.b16 %v4993, %v4992
    %v5007 = vpack.c.b16 %v4995, %v4994
    %v5008 = vpack.c.b16 %v4997, %v4996
    %v5009 = vpack.c.b16 %v4999, %v4998
    %v5010 = vpack.c.b16 %v5001, %v5000
    %v5011 = vpack.c.b16 %v5003, %v5002
    %5020 = vmatprep.subr.bf16.mxu0 0
    %5021 = vmatpush1.bf16.msra.mxu0 %v5011
    %5022 = vmatprep.subr.bf16.mxu0 0
    %5023 = vmatpush1.bf16.msra.mxu0 %v5010
    %5024 = vmatprep.subr.bf16.mxu0 0
    %5025 = vmatpush1.bf16.msra.mxu0 %v5009
    %5026 = vmatprep.subr.bf16.mxu0 0
    %5027 = vmatpush1.bf16.msra.mxu0 %v5008
    %5028 = vmatprep.subr.bf16.mxu0 0
    %5029 = vmatpush1.bf16.msra.mxu0 %v5007
    %5030 = vmatprep.subr.bf16.mxu0 0
    %5031 = vmatpush1.bf16.msra.mxu0 %v5006
    %5032 = vmatprep.subr.bf16.mxu0 0
    %5033 = vmatpush1.bf16.msra.mxu0 %v5005
    %5034 = vmatprep.subr.bf16.mxu0 0
    %5035 = vmatpush1.bf16.msra.mxu0 %v5004
    %5036 = vmatprep.subr.bf16.mxu0 0
    %5037 = vmatpush2.bf16.msra.mxu0 0
    %5038 = vmatprep.subr.bf16.mxu0 0
    %5039 = vmatpush2.bf16.msra.mxu0 0
    %5040 = vmatprep.subr.bf16.mxu0 0
    %5041 = vmatpush2.bf16.msra.mxu0 0
    %5042 = vmatprep.subr.bf16.mxu0 0
    %5043 = vmatpush2.bf16.msra.mxu0 0
    %5044 = vmatprep.subr.bf16.mxu0 0
    %5045 = vmatpush2.bf16.msra.mxu0 0
    %5046 = vmatprep.subr.bf16.mxu0 0
    %5047 = vmatpush2.bf16.msra.mxu0 0
    %5048 = vmatprep.subr.bf16.mxu0 0
    %5049 = vmatpush2.bf16.msra.mxu0 0
    %5050 = vmatprep.subr.bf16.mxu0 0
    %5051 = vmatpush2.bf16.msra.mxu0 0
    %5052 = vmatprep.mubr.bf16.mxu0 0
    %5053 = vmatmul.mubr.bf16.gmra.mxu0 %v4917
    %v5054 = vpop.f32.mrf.mxu0
    %v5055 = vadd.f32 %v4970, %v5054
    %v5056 = vpop.f32.mrf.mxu0
    %v5057 = vpop.f32.mrf.mxu0
    %v5058 = vadd.f32 %v4970, %v5057
    %v5059 = vpop.f32.mrf.mxu0
    %5060 = vmatprep.mubr.bf16.mxu0 0
    %5061 = vmatmul.mubr.bf16.gmra.mxu0 %v4918
    %v5062 = vpop.f32.mrf.mxu0
    %v5063 = vadd.f32 %v4970, %v5062
    %v5064 = vpop.f32.mrf.mxu0
    %v5065 = vpop.f32.mrf.mxu0
    %v5066 = vadd.f32 %v4970, %v5065
    %v5067 = vpop.f32.mrf.mxu0
    %5068 = vmatprep.mubr.bf16.mxu0 0
    %5069 = vmatmul.mubr.bf16.gmra.mxu0 %v4919
    %v5070 = vpop.f32.mrf.mxu0
    %v5071 = vadd.f32 %v4970, %v5070
    %v5072 = vpop.f32.mrf.mxu0
    %v5073 = vpop.f32.mrf.mxu0
    %v5074 = vadd.f32 %v4970, %v5073
    %v5075 = vpop.f32.mrf.mxu0
    %5076 = vmatprep.mubr.bf16.mxu0 0
    %5077 = vmatmul.mubr.bf16.gmra.mxu0 %v4920
    %v5078 = vpop.f32.mrf.mxu0
    %v5079 = vadd.f32 %v4970, %v5078
    %v5080 = vpop.f32.mrf.mxu0
    %v5081 = vpop.f32.mrf.mxu0
    %v5082 = vadd.f32 %v4970, %v5081
    %v5083 = vpop.f32.mrf.mxu0
    %5084 = vmatprep.mubr.bf16.mxu0 0
    %5085 = vmatmul.mubr.bf16.gmra.mxu0 %v4921
    %v5086 = vpop.f32.mrf.mxu0
    %v5087 = vadd.f32 %v4970, %v5086
    %v5088 = vpop.f32.mrf.mxu0
    %v5089 = vpop.f32.mrf.mxu0
    %v5090 = vadd.f32 %v4970, %v5089
    %v5091 = vpop.f32.mrf.mxu0
    %5092 = vmatprep.mubr.bf16.mxu0 0
    %5093 = vmatmul.mubr.bf16.gmra.mxu0 %v4922
    %v5094 = vpop.f32.mrf.mxu0
    %v5095 = vadd.f32 %v4970, %v5094
    %v5096 = vpop.f32.mrf.mxu0
    %v5097 = vpop.f32.mrf.mxu0
    %v5098 = vadd.f32 %v4970, %v5097
    %v5099 = vpop.f32.mrf.mxu0
    %5100 = vmatprep.mubr.bf16.mxu0 0
    %5101 = vmatmul.mubr.bf16.gmra.mxu0 %v4923
    %v5102 = vpop.f32.mrf.mxu0
    %v5103 = vadd.f32 %v4970, %v5102
    %v5104 = vpop.f32.mrf.mxu0
    %v5105 = vpop.f32.mrf.mxu0
    %v5106 = vadd.f32 %v4970, %v5105
    %v5107 = vpop.f32.mrf.mxu0
    %5108 = vmatprep.mubr.bf16.mxu0 0
    %5109 = vmatmul.mubr.bf16.gmra.mxu0 %v4924
    %v5110 = vpop.f32.mrf.mxu0
    %v5111 = vadd.f32 %v4970, %v5110
    %v5112 = vpop.f32.mrf.mxu0
    %v5113 = vpop.f32.mrf.mxu0
    %v5114 = vadd.f32 %v4970, %v5113
    %v5115 = vpop.f32.mrf.mxu0
    %5116 = vmatprep.mubr.bf16.mxu0 0
    %5117 = vmatmul.mubr.bf16.gmra.mxu0 %v4925
    %v5118 = vpop.f32.mrf.mxu0
    %v5119 = vadd.f32 %v4970, %v5118
    %v5120 = vpop.f32.mrf.mxu0
    %v5121 = vpop.f32.mrf.mxu0
    %v5122 = vadd.f32 %v4970, %v5121
    %v5123 = vpop.f32.mrf.mxu0
    %5124 = vmatprep.mubr.bf16.mxu0 0
    %5125 = vmatmul.mubr.bf16.gmra.mxu0 %v4926
    %v5126 = vpop.f32.mrf.mxu0
    %v5127 = vadd.f32 %v4970, %v5126
    %v5128 = vpop.f32.mrf.mxu0
    %v5129 = vpop.f32.mrf.mxu0
    %v5130 = vadd.f32 %v4970, %v5129
    %v5131 = vpop.f32.mrf.mxu0
    %5132 = vmatprep.mubr.bf16.mxu0 0
    %5133 = vmatmul.mubr.bf16.gmra.mxu0 %v4927
    %v5134 = vpop.f32.mrf.mxu0
    %v5135 = vadd.f32 %v4970, %v5134
    %v5136 = vpop.f32.mrf.mxu0
    %v5137 = vpop.f32.mrf.mxu0
    %v5138 = vadd.f32 %v4970, %v5137
    %v5139 = vpop.f32.mrf.mxu0
    %5140 = vmatprep.mubr.bf16.mxu0 0
    %5141 = vmatmul.mubr.bf16.gmra.mxu0 %v4928
    %v5142 = vpop.f32.mrf.mxu0
    %v5143 = vadd.f32 %v4970, %v5142
    %v5144 = vpop.f32.mrf.mxu0
    %v5145 = vpop.f32.mrf.mxu0
    %v5146 = vadd.f32 %v4970, %v5145
    %v5147 = vpop.f32.mrf.mxu0
    %5148 = vmatprep.mubr.bf16.mxu0 0
    %5149 = vmatmul.mubr.bf16.gmra.mxu0 %v4929
    %v5150 = vpop.f32.mrf.mxu0
    %v5151 = vadd.f32 %v4970, %v5150
    %v5152 = vpop.f32.mrf.mxu0
    %v5153 = vpop.f32.mrf.mxu0
    %v5154 = vadd.f32 %v4970, %v5153
    %v5155 = vpop.f32.mrf.mxu0
    %5156 = vmatprep.mubr.bf16.mxu0 0
    %5157 = vmatmul.mubr.bf16.gmra.mxu0 %v4930
    %v5158 = vpop.f32.mrf.mxu0
    %v5159 = vadd.f32 %v4970, %v5158
    %v5160 = vpop.f32.mrf.mxu0
    %v5161 = vpop.f32.mrf.mxu0
    %v5162 = vadd.f32 %v4970, %v5161
    %v5163 = vpop.f32.mrf.mxu0
    %5164 = vmatprep.mubr.bf16.mxu0 0
    %5165 = vmatmul.mubr.bf16.gmra.mxu0 %v4931
    %v5166 = vpop.f32.mrf.mxu0
    %v5167 = vadd.f32 %v4970, %v5166
    %v5168 = vpop.f32.mrf.mxu0
    %v5169 = vpop.f32.mrf.mxu0
    %v5170 = vadd.f32 %v4970, %v5169
    %v5171 = vpop.f32.mrf.mxu0
    %5172 = vmatprep.mubr.bf16.mxu0 0
    %5173 = vmatmul.mubr.bf16.gmra.mxu0 %v4932
    %v5174 = vpop.f32.mrf.mxu0
    %v5175 = vadd.f32 %v4970, %v5174
    %v5176 = vpop.f32.mrf.mxu0
    %v5177 = vpop.f32.mrf.mxu0
    %v5178 = vadd.f32 %v4970, %v5177
    %v5179 = vpop.f32.mrf.mxu0
    %5180 = vmatprep.mubr.bf16.mxu0 0
    %5181 = vmatmul.mubr.bf16.gmra.mxu0 %v4933
    %v5182 = vpop.f32.mrf.mxu0
    %v5183 = vadd.f32 %v4970, %v5182
    %v5184 = vpop.f32.mrf.mxu0
    %v5185 = vpop.f32.mrf.mxu0
    %v5186 = vadd.f32 %v4970, %v5185
    %v5187 = vpop.f32.mrf.mxu0
    %5188 = vmatprep.mubr.bf16.mxu0 0
    %5189 = vmatmul.mubr.bf16.gmra.mxu0 %v4934
    %v5190 = vpop.f32.mrf.mxu0
    %v5191 = vadd.f32 %v4970, %v5190
    %v5192 = vpop.f32.mrf.mxu0
    %v5193 = vpop.f32.mrf.mxu0
    %v5194 = vadd.f32 %v4970, %v5193
    %v5195 = vpop.f32.mrf.mxu0
    %5196 = vmatprep.mubr.bf16.mxu0 0
    %5197 = vmatmul.mubr.bf16.gmra.mxu0 %v4935
    %v5198 = vpop.f32.mrf.mxu0
    %v5199 = vadd.f32 %v4970, %v5198
    %v5200 = vpop.f32.mrf.mxu0
    %v5201 = vpop.f32.mrf.mxu0
    %v5202 = vadd.f32 %v4970, %v5201
    %v5203 = vpop.f32.mrf.mxu0
    %5204 = vmatprep.mubr.bf16.mxu0 0
    %5205 = vmatmul.mubr.bf16.gmra.mxu0 %v4936
    %v5206 = vpop.f32.mrf.mxu0
    %v5207 = vadd.f32 %v4970, %v5206
    %v5208 = vpop.f32.mrf.mxu0
    %v5209 = vpop.f32.mrf.mxu0
    %v5210 = vadd.f32 %v4970, %v5209
    %v5211 = vpop.f32.mrf.mxu0
    %5212 = vmatprep.mubr.bf16.mxu0 0
    %5213 = vmatmul.mubr.bf16.gmra.mxu0 %v4937
    %v5214 = vpop.f32.mrf.mxu0
    %v5215 = vadd.f32 %v4970, %v5214
    %v5216 = vpop.f32.mrf.mxu0
    %v5217 = vpop.f32.mrf.mxu0
    %v5218 = vadd.f32 %v4970, %v5217
    %v5219 = vpop.f32.mrf.mxu0
    %5220 = vmatprep.mubr.bf16.mxu0 0
    %5221 = vmatmul.mubr.bf16.gmra.mxu0 %v4938
    %v5222 = vpop.f32.mrf.mxu0
    %v5223 = vadd.f32 %v4970, %v5222
    %v5224 = vpop.f32.mrf.mxu0
    %v5225 = vpop.f32.mrf.mxu0
    %v5226 = vadd.f32 %v4970, %v5225
    %v5227 = vpop.f32.mrf.mxu0
    %5228 = vmatprep.mubr.bf16.mxu0 0
    %5229 = vmatmul.mubr.bf16.gmra.mxu0 %v4939
    %v5230 = vpop.f32.mrf.mxu0
    %v5231 = vadd.f32 %v4970, %v5230
    %v5232 = vpop.f32.mrf.mxu0
    %v5233 = vpop.f32.mrf.mxu0
    %v5234 = vadd.f32 %v4970, %v5233
    %v5235 = vpop.f32.mrf.mxu0
    %5236 = vmatprep.mubr.bf16.mxu0 0
    %5237 = vmatmul.mubr.bf16.gmra.mxu0 %v4940
    %v5238 = vpop.f32.mrf.mxu0
    %v5239 = vadd.f32 %v4970, %v5238
    %v5240 = vpop.f32.mrf.mxu0
    %v5241 = vpop.f32.mrf.mxu0
    %v5242 = vadd.f32 %v4970, %v5241
    %v5243 = vpop.f32.mrf.mxu0
    %5244 = vmatprep.mubr.bf16.mxu0 0
    %5245 = vmatmul.mubr.bf16.gmra.mxu0 %v4941
    %v5246 = vpop.f32.mrf.mxu0
    %v5247 = vadd.f32 %v4970, %v5246
    %v5248 = vpop.f32.mrf.mxu0
    %v5249 = vpop.f32.mrf.mxu0
    %v5250 = vadd.f32 %v4970, %v5249
    %v5251 = vpop.f32.mrf.mxu0
    %5252 = vmatprep.mubr.bf16.mxu0 0
    %5253 = vmatmul.mubr.bf16.gmra.mxu0 %v4942
    %v5254 = vpop.f32.mrf.mxu0
    %v5255 = vadd.f32 %v4970, %v5254
    %v5256 = vpop.f32.mrf.mxu0
    %v5257 = vpop.f32.mrf.mxu0
    %v5258 = vadd.f32 %v4970, %v5257
    %v5259 = vpop.f32.mrf.mxu0
    %5260 = vmatprep.mubr.bf16.mxu0 0
    %5261 = vmatmul.mubr.bf16.gmra.mxu0 %v4943
    %v5262 = vpop.f32.mrf.mxu0
    %v5263 = vadd.f32 %v4970, %v5262
    %v5264 = vpop.f32.mrf.mxu0
    %v5265 = vpop.f32.mrf.mxu0
    %v5266 = vadd.f32 %v4970, %v5265
    %v5267 = vpop.f32.mrf.mxu0
    %5268 = vmatprep.mubr.bf16.mxu0 0
    %5269 = vmatmul.mubr.bf16.gmra.mxu0 %v4944
    %v5270 = vpop.f32.mrf.mxu0
    %v5271 = vadd.f32 %v4970, %v5270
    %v5272 = vpop.f32.mrf.mxu0
    %v5273 = vpop.f32.mrf.mxu0
    %v5274 = vadd.f32 %v4970, %v5273
    %v5275 = vpop.f32.mrf.mxu0
    %5276 = vmatprep.mubr.bf16.mxu0 0
    %5277 = vmatmul.mubr.bf16.gmra.mxu0 %v4945
    %v5278 = vpop.f32.mrf.mxu0
    %v5279 = vadd.f32 %v4970, %v5278
    %v5280 = vpop.f32.mrf.mxu0
    %v5281 = vpop.f32.mrf.mxu0
    %v5282 = vadd.f32 %v4970, %v5281
    %v5283 = vpop.f32.mrf.mxu0
    %5284 = vmatprep.mubr.bf16.mxu0 0
    %5285 = vmatmul.mubr.bf16.gmra.mxu0 %v4946
    %v5286 = vpop.f32.mrf.mxu0
    %v5287 = vadd.f32 %v4970, %v5286
    %v5288 = vpop.f32.mrf.mxu0
    %v5289 = vpop.f32.mrf.mxu0
    %v5290 = vadd.f32 %v4970, %v5289
    %v5291 = vpop.f32.mrf.mxu0
    %5292 = vmatprep.mubr.bf16.mxu0 0
    %5293 = vmatmul.mubr.bf16.gmra.mxu0 %v4947
    %v5294 = vpop.f32.mrf.mxu0
    %v5295 = vadd.f32 %v4970, %v5294
    %v5296 = vpop.f32.mrf.mxu0
    %v5297 = vpop.f32.mrf.mxu0
    %v5298 = vadd.f32 %v4970, %v5297
    %v5299 = vpop.f32.mrf.mxu0
    %5300 = vmatprep.mubr.bf16.mxu0 0
    %5301 = vmatmul.mubr.bf16.gmra.mxu0 %v4948
    %v5302 = vpop.f32.mrf.mxu0
    %v5303 = vadd.f32 %v4970, %v5302
    %v5304 = vpop.f32.mrf.mxu0
    %v5305 = vpop.f32.mrf.mxu0
    %v5306 = vadd.f32 %v4970, %v5305
    %v5307 = vpop.f32.mrf.mxu0
    %5308 = vdwg.mxu0
    %v5309 = vmax.f32 %v5055, 0.0
    %v5310 = vmax.f32 %v5058, 0.0
    %v5311 = vmax.f32 %v5063, 0.0
    %v5312 = vmax.f32 %v5066, 0.0
    %v5313 = vmax.f32 %v5071, 0.0
    %v5314 = vmax.f32 %v5074, 0.0
    %v5315 = vmax.f32 %v5079, 0.0
    %v5316 = vmax.f32 %v5082, 0.0
    %v5317 = vmax.f32 %v5087, 0.0
    %v5318 = vmax.f32 %v5090, 0.0
    %v5319 = vmax.f32 %v5095, 0.0
    %v5320 = vmax.f32 %v5098, 0.0
    %v5321 = vmax.f32 %v5103, 0.0
    %v5322 = vmax.f32 %v5106, 0.0
    %v5323 = vmax.f32 %v5111, 0.0
    %v5324 = vmax.f32 %v5114, 0.0
    %v5325 = vmax.f32 %v5119, 0.0
    %v5326 = vmax.f32 %v5122, 0.0
    %v5327 = vmax.f32 %v5127, 0.0
    %v5328 = vmax.f32 %v5130, 0.0
    %v5329 = vmax.f32 %v5135, 0.0
    %v5330 = vmax.f32 %v5138, 0.0
    %v5331 = vmax.f32 %v5143, 0.0
    %v5332 = vmax.f32 %v5146, 0.0
    %v5333 = vmax.f32 %v5151, 0.0
    %v5334 = vmax.f32 %v5154, 0.0
    %v5335 = vmax.f32 %v5159, 0.0
    %v5336 = vmax.f32 %v5162, 0.0
    %v5337 = vmax.f32 %v5167, 0.0
    %v5338 = vmax.f32 %v5170, 0.0
    %v5339 = vmax.f32 %v5175, 0.0
    %v5340 = vmax.f32 %v5178, 0.0
    %v5341 = vmax.f32 %v5183, 0.0
    %v5342 = vmax.f32 %v5186, 0.0
    %v5343 = vmax.f32 %v5191, 0.0
    %v5344 = vmax.f32 %v5194, 0.0
    %v5345 = vmax.f32 %v5199, 0.0
    %v5346 = vmax.f32 %v5202, 0.0
    %v5347 = vmax.f32 %v5207, 0.0
    %v5348 = vmax.f32 %v5210, 0.0
    %v5349 = vmax.f32 %v5215, 0.0
    %v5350 = vmax.f32 %v5218, 0.0
    %v5351 = vmax.f32 %v5223, 0.0
    %v5352 = vmax.f32 %v5226, 0.0
    %v5353 = vmax.f32 %v5231, 0.0
    %v5354 = vmax.f32 %v5234, 0.0
    %v5355 = vmax.f32 %v5239, 0.0
    %v5356 = vmax.f32 %v5242, 0.0
    %v5357 = vmax.f32 %v5247, 0.0
    %v5358 = vmax.f32 %v5250, 0.0
    %v5359 = vmax.f32 %v5255, 0.0
    %v5360 = vmax.f32 %v5258, 0.0
    %v5361 = vmax.f32 %v5263, 0.0
    %v5362 = vmax.f32 %v5266, 0.0
    %v5363 = vmax.f32 %v5271, 0.0
    %v5364 = vmax.f32 %v5274, 0.0
    %v5365 = vmax.f32 %v5279, 0.0
    %v5366 = vmax.f32 %v5282, 0.0
    %v5367 = vmax.f32 %v5287, 0.0
    %v5368 = vmax.f32 %v5290, 0.0
    %v5369 = vmax.f32 %v5295, 0.0
    %v5370 = vmax.f32 %v5298, 0.0
    %v5371 = vmax.f32 %v5303, 0.0
    %v5372 = vmax.f32 %v5306, 0.0
    %s5373 = scalar_lea.vmem [#allocation2], 24
    %5374 = vst [vmem:[%s5373 + $0x1] sm:$0xff] %v5309
    %5375 = vst [vmem:[%s5373 + $0x9] sm:$0xff] %v5310
    %5376 = vst [vmem:[%s5373 + $0x19] sm:$0xff] %v5311
    %5377 = vst [vmem:[%s5373 + $0x21] sm:$0xff] %v5312
    %5378 = vst [vmem:[%s5373 + $0x31] sm:$0xff] %v5313
    %5379 = vst [vmem:[%s5373 + $0x39] sm:$0xff] %v5314
    %5380 = vst [vmem:[%s5373 + $0x49] sm:$0xff] %v5315
    %5381 = vst [vmem:[%s5373 + $0x51] sm:$0xff] %v5316
    %5382 = vst [vmem:[%s5373 + $0x61] sm:$0xff] %v5317
    %5383 = vst [vmem:[%s5373 + $0x69] sm:$0xff] %v5318
    %5384 = vst [vmem:[%s5373 + $0x79] sm:$0xff] %v5319
    %5385 = vst [vmem:[%s5373 + $0x81] sm:$0xff] %v5320
    %5386 = vst [vmem:[%s5373 + $0x91] sm:$0xff] %v5321
    %5387 = vst [vmem:[%s5373 + $0x99] sm:$0xff] %v5322
    %5388 = vst [vmem:[%s5373 + $0xa9] sm:$0xff] %v5323
    %5389 = vst [vmem:[%s5373 + $0xb1] sm:$0xff] %v5324
    %5390 = vst [vmem:[%s5373 + $0xc1] sm:$0xff] %v5325
    %5391 = vst [vmem:[%s5373 + $0xc9] sm:$0xff] %v5326
    %5392 = vst [vmem:[%s5373 + $0xd9] sm:$0xff] %v5327
    %5393 = vst [vmem:[%s5373 + $0xe1] sm:$0xff] %v5328
    %5394 = vst [vmem:[%s5373 + $0xf1] sm:$0xff] %v5329
    %5395 = vst [vmem:[%s5373 + $0xf9] sm:$0xff] %v5330
    %5396 = vst [vmem:[%s5373 + $0x109] sm:$0xff] %v5331
    %5397 = vst [vmem:[%s5373 + $0x111] sm:$0xff] %v5332
    %5398 = vst [vmem:[%s5373 + $0x121] sm:$0xff] %v5333
    %5399 = vst [vmem:[%s5373 + $0x129] sm:$0xff] %v5334
    %5400 = vst [vmem:[%s5373 + $0x139] sm:$0xff] %v5335
    %5401 = vst [vmem:[%s5373 + $0x141] sm:$0xff] %v5336
    %5402 = vst [vmem:[%s5373 + $0x151] sm:$0xff] %v5337
    %5403 = vst [vmem:[%s5373 + $0x159] sm:$0xff] %v5338
    %5404 = vst [vmem:[%s5373 + $0x169] sm:$0xff] %v5339
    %5405 = vst [vmem:[%s5373 + $0x171] sm:$0xff] %v5340
    %5406 = vst [vmem:[%s5373 + $0x1b1] sm:$0xff] %v5341
    %5407 = vst [vmem:[%s5373 + $0x1b9] sm:$0xff] %v5342
    %5408 = vst [vmem:[%s5373 + $0x1c9] sm:$0xff] %v5343
    %5409 = vst [vmem:[%s5373 + $0x1d1] sm:$0xff] %v5344
    %5410 = vst [vmem:[%s5373 + $0x1e1] sm:$0xff] %v5345
    %5411 = vst [vmem:[%s5373 + $0x1e9] sm:$0xff] %v5346
    %5412 = vst [vmem:[%s5373 + $0x1f9] sm:$0xff] %v5347
    %5413 = vst [vmem:[%s5373 + $0x201] sm:$0xff] %v5348
    %5414 = vst [vmem:[%s5373 + $0x211] sm:$0xff] %v5349
    %5415 = vst [vmem:[%s5373 + $0x219] sm:$0xff] %v5350
    %5416 = vst [vmem:[%s5373 + $0x229] sm:$0xff] %v5351
    %5417 = vst [vmem:[%s5373 + $0x231] sm:$0xff] %v5352
    %5418 = vst [vmem:[%s5373 + $0x241] sm:$0xff] %v5353
    %5419 = vst [vmem:[%s5373 + $0x249] sm:$0xff] %v5354
    %5420 = vst [vmem:[%s5373 + $0x259] sm:$0xff] %v5355
    %5421 = vst [vmem:[%s5373 + $0x261] sm:$0xff] %v5356
    %5422 = vst [vmem:[%s5373 + $0x271] sm:$0xff] %v5357
    %5423 = vst [vmem:[%s5373 + $0x279] sm:$0xff] %v5358
    %5424 = vst [vmem:[%s5373 + $0x289] sm:$0xff] %v5359
    %5425 = vst [vmem:[%s5373 + $0x291] sm:$0xff] %v5360
    %5426 = vst [vmem:[%s5373 + $0x2a1] sm:$0xff] %v5361
    %5427 = vst [vmem:[%s5373 + $0x2a9] sm:$0xff] %v5362
    %5428 = vst [vmem:[%s5373 + $0x2b9] sm:$0xff] %v5363
    %5429 = vst [vmem:[%s5373 + $0x2c1] sm:$0xff] %v5364
    %5430 = vst [vmem:[%s5373 + $0x2d1] sm:$0xff] %v5365
    %5431 = vst [vmem:[%s5373 + $0x2d9] sm:$0xff] %v5366
    %5432 = vst [vmem:[%s5373 + $0x2e9] sm:$0xff] %v5367
    %5433 = vst [vmem:[%s5373 + $0x2f1] sm:$0xff] %v5368
    %5434 = vst [vmem:[%s5373 + $0x301] sm:$0xff] %v5369
    %5435 = vst [vmem:[%s5373 + $0x309] sm:$0xff] %v5370
    %5436 = vst [vmem:[%s5373 + $0x319] sm:$0xff] %v5371
    %5437 = vst [vmem:[%s5373 + $0x321] sm:$0xff] %v5372
    %v5438 = vld [vmem:[#allocation2] sm:$0xff]
    %v5439 = vld [vmem:[#allocation2 + $0x8] sm:$0xff]
    %v5440 = vld [vmem:[#allocation2 + $0x18] sm:$0xff]
    %v5441 = vld [vmem:[#allocation2 + $0x20] sm:$0xff]
    %v5442 = vld [vmem:[#allocation2 + $0x30] sm:$0xff]
    %v5443 = vld [vmem:[#allocation2 + $0x38] sm:$0xff]
    %v5444 = vld [vmem:[#allocation2 + $0x48] sm:$0xff]
    %v5445 = vld [vmem:[#allocation2 + $0x50] sm:$0xff]
    %v5446 = vld [vmem:[#allocation2 + $0x60] sm:$0xff]
    %v5447 = vld [vmem:[#allocation2 + $0x68] sm:$0xff]
    %v5448 = vld [vmem:[#allocation2 + $0x78] sm:$0xff]
    %v5449 = vld [vmem:[#allocation2 + $0x80] sm:$0xff]
    %v5450 = vld [vmem:[#allocation2 + $0x90] sm:$0xff]
    %v5451 = vld [vmem:[#allocation2 + $0x98] sm:$0xff]
    %v5452 = vld [vmem:[#allocation2 + $0xa8] sm:$0xff]
    %v5453 = vld [vmem:[#allocation2 + $0xb0] sm:$0xff]
    %v5454 = vld [vmem:[#allocation2 + $0xc0] sm:$0xff]
    %v5455 = vld [vmem:[#allocation2 + $0xc8] sm:$0xff]
    %v5456 = vld [vmem:[#allocation2 + $0xd8] sm:$0xff]
    %v5457 = vld [vmem:[#allocation2 + $0xe0] sm:$0xff]
    %v5458 = vld [vmem:[#allocation2 + $0xf0] sm:$0xff]
    %v5459 = vld [vmem:[#allocation2 + $0xf8] sm:$0xff]
    %v5460 = vld [vmem:[#allocation2 + $0x108] sm:$0xff]
    %v5461 = vld [vmem:[#allocation2 + $0x110] sm:$0xff]
    %v5462 = vld [vmem:[#allocation2 + $0x120] sm:$0xff]
    %v5463 = vld [vmem:[#allocation2 + $0x128] sm:$0xff]
    %v5464 = vld [vmem:[#allocation2 + $0x138] sm:$0xff]
    %v5465 = vld [vmem:[#allocation2 + $0x140] sm:$0xff]
    %v5466 = vld [vmem:[#allocation2 + $0x150] sm:$0xff]
    %v5467 = vld [vmem:[#allocation2 + $0x158] sm:$0xff]
    %v5468 = vld [vmem:[#allocation2 + $0x168] sm:$0xff]
    %v5469 = vld [vmem:[#allocation2 + $0x170] sm:$0xff]
    %v5470 = vld [vmem:[#allocation2 + $0x1b0] sm:$0xff]
    %v5471 = vld [vmem:[#allocation2 + $0x1b8] sm:$0xff]
    %v5472 = vld [vmem:[#allocation2 + $0x1c8] sm:$0xff]
    %v5473 = vld [vmem:[#allocation2 + $0x1d0] sm:$0xff]
    %v5474 = vld [vmem:[#allocation2 + $0x1e0] sm:$0xff]
    %v5475 = vld [vmem:[#allocation2 + $0x1e8] sm:$0xff]
    %v5476 = vld [vmem:[#allocation2 + $0x1f8] sm:$0xff]
    %v5477 = vld [vmem:[#allocation2 + $0x200] sm:$0xff]
    %v5478 = vld [vmem:[#allocation2 + $0x210] sm:$0xff]
    %v5479 = vld [vmem:[#allocation2 + $0x218] sm:$0xff]
    %v5480 = vld [vmem:[#allocation2 + $0x228] sm:$0xff]
    %v5481 = vld [vmem:[#allocation2 + $0x230] sm:$0xff]
    %v5482 = vld [vmem:[#allocation2 + $0x240] sm:$0xff]
    %v5483 = vld [vmem:[#allocation2 + $0x248] sm:$0xff]
    %v5484 = vld [vmem:[#allocation2 + $0x258] sm:$0xff]
    %v5485 = vld [vmem:[#allocation2 + $0x260] sm:$0xff]
    %v5486 = vld [vmem:[#allocation2 + $0x270] sm:$0xff]
    %v5487 = vld [vmem:[#allocation2 + $0x278] sm:$0xff]
    %v5488 = vld [vmem:[#allocation2 + $0x288] sm:$0xff]
    %v5489 = vld [vmem:[#allocation2 + $0x290] sm:$0xff]
    %v5490 = vld [vmem:[#allocation2 + $0x2a0] sm:$0xff]
    %v5491 = vld [vmem:[#allocation2 + $0x2a8] sm:$0xff]
    %v5492 = vld [vmem:[#allocation2 + $0x2b8] sm:$0xff]
    %v5493 = vld [vmem:[#allocation2 + $0x2c0] sm:$0xff]
    %v5494 = vld [vmem:[#allocation2 + $0x2d0] sm:$0xff]
    %v5495 = vld [vmem:[#allocation2 + $0x2d8] sm:$0xff]
    %v5496 = vld [vmem:[#allocation2 + $0x2e8] sm:$0xff]
    %v5497 = vld [vmem:[#allocation2 + $0x2f0] sm:$0xff]
    %v5498 = vld [vmem:[#allocation2 + $0x300] sm:$0xff]
    %v5499 = vld [vmem:[#allocation2 + $0x308] sm:$0xff]
    %v5500 = vld [vmem:[#allocation2 + $0x318] sm:$0xff]
    %v5501 = vld [vmem:[#allocation2 + $0x320] sm:$0xff]
    %v5502 = vpack.c.bf16 %v5439, %v5438
    %v5503 = vpack.c.bf16 %v5441, %v5440
    %v5504 = vpack.c.bf16 %v5443, %v5442
    %v5505 = vpack.c.bf16 %v5445, %v5444
    %v5506 = vpack.c.bf16 %v5447, %v5446
    %v5507 = vpack.c.bf16 %v5449, %v5448
    %v5508 = vpack.c.bf16 %v5451, %v5450
    %v5509 = vpack.c.bf16 %v5453, %v5452
    %v5510 = vpack.c.bf16 %v5455, %v5454
    %v5511 = vpack.c.bf16 %v5457, %v5456
    %v5512 = vpack.c.bf16 %v5459, %v5458
    %v5513 = vpack.c.bf16 %v5461, %v5460
    %v5514 = vpack.c.bf16 %v5463, %v5462
    %v5515 = vpack.c.bf16 %v5465, %v5464
    %v5516 = vpack.c.bf16 %v5467, %v5466
    %v5517 = vpack.c.bf16 %v5469, %v5468
    %v5518 = vpack.c.bf16 %v5471, %v5470
    %v5519 = vpack.c.bf16 %v5473, %v5472
    %v5520 = vpack.c.bf16 %v5475, %v5474
    %v5521 = vpack.c.bf16 %v5477, %v5476
    %v5522 = vpack.c.bf16 %v5479, %v5478
    %v5523 = vpack.c.bf16 %v5481, %v5480
    %v5524 = vpack.c.bf16 %v5483, %v5482
    %v5525 = vpack.c.bf16 %v5485, %v5484
    %v5526 = vpack.c.bf16 %v5487, %v5486
    %v5527 = vpack.c.bf16 %v5489, %v5488
    %v5528 = vpack.c.bf16 %v5491, %v5490
    %v5529 = vpack.c.bf16 %v5493, %v5492
    %v5530 = vpack.c.bf16 %v5495, %v5494
    %v5531 = vpack.c.bf16 %v5497, %v5496
    %v5532 = vpack.c.bf16 %v5499, %v5498
    %v5533 = vpack.c.bf16 %v5501, %v5500
    %v5534 = vld [vmem:[%s6] sm:$0xf]
    %v5535 = vld [vmem:[%s6 + $0x4] sm:$0xf]
    %v5536 = vld [vmem:[%s6 + $0x8] sm:$0xf]
    %v5537 = vld [vmem:[%s6 + $0xc] sm:$0xf]
    %v5538 = vld [vmem:[%s6 + $0x10] sm:$0xf]
    %v5539 = vld [vmem:[%s6 + $0x14] sm:$0xf]
    %v5540 = vld [vmem:[%s6 + $0x18] sm:$0xf]
    %v5541 = vld [vmem:[%s6 + $0x1c] sm:$0xf]
    %v5542 = vld [vmem:[%s6 + $0x20] sm:$0xf]
    %v5543 = vld [vmem:[%s6 + $0x24] sm:$0xf]
    %v5544 = vld [vmem:[%s6 + $0x28] sm:$0xf]
    %v5545 = vld [vmem:[%s6 + $0x2c] sm:$0xf]
    %v5546 = vld [vmem:[%s6 + $0x30] sm:$0xf]
    %v5547 = vld [vmem:[%s6 + $0x34] sm:$0xf]
    %v5548 = vld [vmem:[%s6 + $0x38] sm:$0xf]
    %v5549 = vld [vmem:[%s6 + $0x3c] sm:$0xf]
    %v5550 = vld [vmem:[#allocation2 + $0x1] sm:$0xff]
    %v5551 = vld [vmem:[#allocation2 + $0x9] sm:$0xff]
    %v5552 = vld [vmem:[#allocation2 + $0x19] sm:$0xff]
    %v5553 = vld [vmem:[#allocation2 + $0x21] sm:$0xff]
    %v5554 = vld [vmem:[#allocation2 + $0x31] sm:$0xff]
    %v5555 = vld [vmem:[#allocation2 + $0x39] sm:$0xff]
    %v5556 = vld [vmem:[#allocation2 + $0x49] sm:$0xff]
    %v5557 = vld [vmem:[#allocation2 + $0x51] sm:$0xff]
    %v5558 = vld [vmem:[#allocation2 + $0x61] sm:$0xff]
    %v5559 = vld [vmem:[#allocation2 + $0x69] sm:$0xff]
    %v5560 = vld [vmem:[#allocation2 + $0x79] sm:$0xff]
    %v5561 = vld [vmem:[#allocation2 + $0x81] sm:$0xff]
    %v5562 = vld [vmem:[#allocation2 + $0x91] sm:$0xff]
    %v5563 = vld [vmem:[#allocation2 + $0x99] sm:$0xff]
    %v5564 = vld [vmem:[#allocation2 + $0xa9] sm:$0xff]
    %v5565 = vld [vmem:[#allocation2 + $0xb1] sm:$0xff]
    %v5566 = vld [vmem:[#allocation2 + $0xc1] sm:$0xff]
    %v5567 = vld [vmem:[#allocation2 + $0xc9] sm:$0xff]
    %v5568 = vld [vmem:[#allocation2 + $0xd9] sm:$0xff]
    %v5569 = vld [vmem:[#allocation2 + $0xe1] sm:$0xff]
    %v5570 = vld [vmem:[#allocation2 + $0xf1] sm:$0xff]
    %v5571 = vld [vmem:[#allocation2 + $0xf9] sm:$0xff]
    %v5572 = vld [vmem:[#allocation2 + $0x109] sm:$0xff]
    %v5573 = vld [vmem:[#allocation2 + $0x111] sm:$0xff]
    %v5574 = vld [vmem:[#allocation2 + $0x121] sm:$0xff]
    %v5575 = vld [vmem:[#allocation2 + $0x129] sm:$0xff]
    %v5576 = vld [vmem:[#allocation2 + $0x139] sm:$0xff]
    %v5577 = vld [vmem:[#allocation2 + $0x141] sm:$0xff]
    %v5578 = vld [vmem:[#allocation2 + $0x151] sm:$0xff]
    %v5579 = vld [vmem:[#allocation2 + $0x159] sm:$0xff]
    %v5580 = vld [vmem:[#allocation2 + $0x169] sm:$0xff]
    %v5581 = vld [vmem:[#allocation2 + $0x171] sm:$0xff]
    %v5582 = vld [vmem:[#allocation2 + $0x1b1] sm:$0xff]
    %v5583 = vld [vmem:[#allocation2 + $0x1b9] sm:$0xff]
    %v5584 = vld [vmem:[#allocation2 + $0x1c9] sm:$0xff]
    %v5585 = vld [vmem:[#allocation2 + $0x1d1] sm:$0xff]
    %v5586 = vld [vmem:[#allocation2 + $0x1e1] sm:$0xff]
    %v5587 = vld [vmem:[#allocation2 + $0x1e9] sm:$0xff]
    %v5588 = vld [vmem:[#allocation2 + $0x1f9] sm:$0xff]
    %v5589 = vld [vmem:[#allocation2 + $0x201] sm:$0xff]
    %v5590 = vld [vmem:[#allocation2 + $0x211] sm:$0xff]
    %v5591 = vld [vmem:[#allocation2 + $0x219] sm:$0xff]
    %v5592 = vld [vmem:[#allocation2 + $0x229] sm:$0xff]
    %v5593 = vld [vmem:[#allocation2 + $0x231] sm:$0xff]
    %v5594 = vld [vmem:[#allocation2 + $0x241] sm:$0xff]
    %v5595 = vld [vmem:[#allocation2 + $0x249] sm:$0xff]
    %v5596 = vld [vmem:[#allocation2 + $0x259] sm:$0xff]
    %v5597 = vld [vmem:[#allocation2 + $0x261] sm:$0xff]
    %v5598 = vld [vmem:[#allocation2 + $0x271] sm:$0xff]
    %v5599 = vld [vmem:[#allocation2 + $0x279] sm:$0xff]
    %v5600 = vld [vmem:[#allocation2 + $0x289] sm:$0xff]
    %v5601 = vld [vmem:[#allocation2 + $0x291] sm:$0xff]
    %v5602 = vld [vmem:[#allocation2 + $0x2a1] sm:$0xff]
    %v5603 = vld [vmem:[#allocation2 + $0x2a9] sm:$0xff]
    %v5604 = vld [vmem:[#allocation2 + $0x2b9] sm:$0xff]
    %v5605 = vld [vmem:[#allocation2 + $0x2c1] sm:$0xff]
    %v5606 = vld [vmem:[#allocation2 + $0x2d1] sm:$0xff]
    %v5607 = vld [vmem:[#allocation2 + $0x2d9] sm:$0xff]
    %v5608 = vld [vmem:[#allocation2 + $0x2e9] sm:$0xff]
    %v5609 = vld [vmem:[#allocation2 + $0x2f1] sm:$0xff]
    %v5610 = vld [vmem:[#allocation2 + $0x301] sm:$0xff]
    %v5611 = vld [vmem:[#allocation2 + $0x309] sm:$0xff]
    %v5612 = vld [vmem:[#allocation2 + $0x319] sm:$0xff]
    %v5613 = vld [vmem:[#allocation2 + $0x321] sm:$0xff]
    %v5614 = vpack.c.bf16 %v5551, %v5550
    %v5615 = vpack.c.bf16 %v5553, %v5552
    %v5616 = vpack.c.bf16 %v5555, %v5554
    %v5617 = vpack.c.bf16 %v5557, %v5556
    %v5618 = vpack.c.bf16 %v5559, %v5558
    %v5619 = vpack.c.bf16 %v5561, %v5560
    %v5620 = vpack.c.bf16 %v5563, %v5562
    %v5621 = vpack.c.bf16 %v5565, %v5564
    %v5622 = vpack.c.bf16 %v5567, %v5566
    %v5623 = vpack.c.bf16 %v5569, %v5568
    %v5624 = vpack.c.bf16 %v5571, %v5570
    %v5625 = vpack.c.bf16 %v5573, %v5572
    %v5626 = vpack.c.bf16 %v5575, %v5574
    %v5627 = vpack.c.bf16 %v5577, %v5576
    %v5628 = vpack.c.bf16 %v5579, %v5578
    %v5629 = vpack.c.bf16 %v5581, %v5580
    %v5630 = vpack.c.bf16 %v5583, %v5582
    %v5631 = vpack.c.bf16 %v5585, %v5584
    %v5632 = vpack.c.bf16 %v5587, %v5586
    %v5633 = vpack.c.bf16 %v5589, %v5588
    %v5634 = vpack.c.bf16 %v5591, %v5590
    %v5635 = vpack.c.bf16 %v5593, %v5592
    %v5636 = vpack.c.bf16 %v5595, %v5594
    %v5637 = vpack.c.bf16 %v5597, %v5596
    %v5638 = vpack.c.bf16 %v5599, %v5598
    %v5639 = vpack.c.bf16 %v5601, %v5600
    %v5640 = vpack.c.bf16 %v5603, %v5602
    %v5641 = vpack.c.bf16 %v5605, %v5604
    %v5642 = vpack.c.bf16 %v5607, %v5606
    %v5643 = vpack.c.bf16 %v5609, %v5608
    %v5644 = vpack.c.bf16 %v5611, %v5610
    %v5645 = vpack.c.bf16 %v5613, %v5612
    %s5646 = scalar_lea.vmem %s6, 64
    %v5647 = vld [vmem:[%s5646] sm:$0xf]
    %v5648 = vld [vmem:[%s5646 + $0x4] sm:$0xf]
    %v5649 = vld [vmem:[%s5646 + $0x8] sm:$0xf]
    %v5650 = vld [vmem:[%s5646 + $0xc] sm:$0xf]
    %v5651 = vld [vmem:[%s5646 + $0x10] sm:$0xf]
    %v5652 = vld [vmem:[%s5646 + $0x14] sm:$0xf]
    %v5653 = vld [vmem:[%s5646 + $0x18] sm:$0xf]
    %v5654 = vld [vmem:[%s5646 + $0x1c] sm:$0xf]
    %v5655 = vld [vmem:[%s5646 + $0x20] sm:$0xf]
    %v5656 = vld [vmem:[%s5646 + $0x24] sm:$0xf]
    %v5657 = vld [vmem:[%s5646 + $0x28] sm:$0xf]
    %v5658 = vld [vmem:[%s5646 + $0x2c] sm:$0xf]
    %v5659 = vld [vmem:[%s5646 + $0x30] sm:$0xf]
    %v5660 = vld [vmem:[%s5646 + $0x34] sm:$0xf]
    %v5661 = vld [vmem:[%s5646 + $0x38] sm:$0xf]
    %v5662 = vld [vmem:[%s5646 + $0x3c] sm:$0xf]
    %v5679 = vunpack.c.l.b16 %v5647
    %v5680 = vunpack.c.l.b16 %v5648
    %v5681 = vunpack.c.l.b16 %v5649
    %v5682 = vunpack.c.l.b16 %v5650
    %v5683 = vunpack.c.l.b16 %v5651
    %v5684 = vunpack.c.l.b16 %v5652
    %v5685 = vunpack.c.l.b16 %v5653
    %v5686 = vunpack.c.l.b16 %v5654
    %v5687 = vunpack.c.l.b16 %v5655
    %v5688 = vunpack.c.l.b16 %v5656
    %v5689 = vunpack.c.l.b16 %v5657
    %v5690 = vunpack.c.l.b16 %v5658
    %v5691 = vunpack.c.l.b16 %v5659
    %v5692 = vunpack.c.l.b16 %v5660
    %v5693 = vunpack.c.l.b16 %v5661
    %v5694 = vunpack.c.l.b16 %v5662
    %v5695 = vpack.c.b16 %v5680, %v5679
    %v5696 = vpack.c.b16 %v5682, %v5681
    %v5697 = vpack.c.b16 %v5684, %v5683
    %v5698 = vpack.c.b16 %v5686, %v5685
    %v5699 = vpack.c.b16 %v5688, %v5687
    %v5700 = vpack.c.b16 %v5690, %v5689
    %v5701 = vpack.c.b16 %v5692, %v5691
    %v5702 = vpack.c.b16 %v5694, %v5693
    %5711 = vmatprep.subr.bf16.mxu0 0
    %5712 = vmatpush1.bf16.msra.mxu0 %v5702
    %5713 = vmatprep.subr.bf16.mxu0 0
    %5714 = vmatpush1.bf16.msra.mxu0 %v5701
    %5715 = vmatprep.subr.bf16.mxu0 0
    %5716 = vmatpush1.bf16.msra.mxu0 %v5700
    %5717 = vmatprep.subr.bf16.mxu0 0
    %5718 = vmatpush1.bf16.msra.mxu0 %v5699
    %5719 = vmatprep.subr.bf16.mxu0 0
    %5720 = vmatpush1.bf16.msra.mxu0 %v5698
    %5721 = vmatprep.subr.bf16.mxu0 0
    %5722 = vmatpush1.bf16.msra.mxu0 %v5697
    %5723 = vmatprep.subr.bf16.mxu0 0
    %5724 = vmatpush1.bf16.msra.mxu0 %v5696
    %5725 = vmatprep.subr.bf16.mxu0 0
    %5726 = vmatpush1.bf16.msra.mxu0 %v5695
    %5727 = vmatprep.subr.bf16.mxu0 0
    %5728 = vmatpush2.bf16.msra.mxu0 0
    %5729 = vmatprep.subr.bf16.mxu0 0
    %5730 = vmatpush2.bf16.msra.mxu0 0
    %5731 = vmatprep.subr.bf16.mxu0 0
    %5732 = vmatpush2.bf16.msra.mxu0 0
    %5733 = vmatprep.subr.bf16.mxu0 0
    %5734 = vmatpush2.bf16.msra.mxu0 0
    %5735 = vmatprep.subr.bf16.mxu0 0
    %5736 = vmatpush2.bf16.msra.mxu0 0
    %5737 = vmatprep.subr.bf16.mxu0 0
    %5738 = vmatpush2.bf16.msra.mxu0 0
    %5739 = vmatprep.subr.bf16.mxu0 0
    %5740 = vmatpush2.bf16.msra.mxu0 0
    %5741 = vmatprep.subr.bf16.mxu0 0
    %5742 = vmatpush2.bf16.msra.mxu0 0
    %5743 = vmatprep.mubr.bf16.mxu0 0
    %5744 = vmatmul.mubr.bf16.gmra.mxu0 %v5614
    %v5745 = vpop.f32.mrf.mxu0
    %v5746 = vadd.f32 0.0, %v5745
    %v5747 = vpop.f32.mrf.mxu0
    %v5748 = vpop.f32.mrf.mxu0
    %v5749 = vadd.f32 0.0, %v5748
    %v5750 = vpop.f32.mrf.mxu0
    %5751 = vmatprep.mubr.bf16.mxu0 0
    %5752 = vmatmul.mubr.bf16.gmra.mxu0 %v5615
    %v5753 = vpop.f32.mrf.mxu0
    %v5754 = vadd.f32 0.0, %v5753
    %v5755 = vpop.f32.mrf.mxu0
    %v5756 = vpop.f32.mrf.mxu0
    %v5757 = vadd.f32 0.0, %v5756
    %v5758 = vpop.f32.mrf.mxu0
    %5759 = vmatprep.mubr.bf16.mxu0 0
    %5760 = vmatmul.mubr.bf16.gmra.mxu0 %v5616
    %v5761 = vpop.f32.mrf.mxu0
    %v5762 = vadd.f32 0.0, %v5761
    %v5763 = vpop.f32.mrf.mxu0
    %v5764 = vpop.f32.mrf.mxu0
    %v5765 = vadd.f32 0.0, %v5764
    %v5766 = vpop.f32.mrf.mxu0
    %5767 = vmatprep.mubr.bf16.mxu0 0
    %5768 = vmatmul.mubr.bf16.gmra.mxu0 %v5617
    %v5769 = vpop.f32.mrf.mxu0
    %v5770 = vadd.f32 0.0, %v5769
    %v5771 = vpop.f32.mrf.mxu0
    %v5772 = vpop.f32.mrf.mxu0
    %v5773 = vadd.f32 0.0, %v5772
    %v5774 = vpop.f32.mrf.mxu0
    %5775 = vmatprep.mubr.bf16.mxu0 0
    %5776 = vmatmul.mubr.bf16.gmra.mxu0 %v5618
    %v5777 = vpop.f32.mrf.mxu0
    %v5778 = vadd.f32 0.0, %v5777
    %v5779 = vpop.f32.mrf.mxu0
    %v5780 = vpop.f32.mrf.mxu0
    %v5781 = vadd.f32 0.0, %v5780
    %v5782 = vpop.f32.mrf.mxu0
    %5783 = vmatprep.mubr.bf16.mxu0 0
    %5784 = vmatmul.mubr.bf16.gmra.mxu0 %v5619
    %v5785 = vpop.f32.mrf.mxu0
    %v5786 = vadd.f32 0.0, %v5785
    %v5787 = vpop.f32.mrf.mxu0
    %v5788 = vpop.f32.mrf.mxu0
    %v5789 = vadd.f32 0.0, %v5788
    %v5790 = vpop.f32.mrf.mxu0
    %5791 = vmatprep.mubr.bf16.mxu0 0
    %5792 = vmatmul.mubr.bf16.gmra.mxu0 %v5620
    %v5793 = vpop.f32.mrf.mxu0
    %v5794 = vadd.f32 0.0, %v5793
    %v5795 = vpop.f32.mrf.mxu0
    %v5796 = vpop.f32.mrf.mxu0
    %v5797 = vadd.f32 0.0, %v5796
    %v5798 = vpop.f32.mrf.mxu0
    %5799 = vmatprep.mubr.bf16.mxu0 0
    %5800 = vmatmul.mubr.bf16.gmra.mxu0 %v5621
    %v5801 = vpop.f32.mrf.mxu0
    %v5802 = vadd.f32 0.0, %v5801
    %v5803 = vpop.f32.mrf.mxu0
    %v5804 = vpop.f32.mrf.mxu0
    %v5805 = vadd.f32 0.0, %v5804
    %v5806 = vpop.f32.mrf.mxu0
    %5807 = vmatprep.mubr.bf16.mxu0 0
    %5808 = vmatmul.mubr.bf16.gmra.mxu0 %v5622
    %v5809 = vpop.f32.mrf.mxu0
    %v5810 = vadd.f32 0.0, %v5809
    %v5811 = vpop.f32.mrf.mxu0
    %v5812 = vpop.f32.mrf.mxu0
    %v5813 = vadd.f32 0.0, %v5812
    %v5814 = vpop.f32.mrf.mxu0
    %5815 = vmatprep.mubr.bf16.mxu0 0
    %5816 = vmatmul.mubr.bf16.gmra.mxu0 %v5623
    %v5817 = vpop.f32.mrf.mxu0
    %v5818 = vadd.f32 0.0, %v5817
    %v5819 = vpop.f32.mrf.mxu0
    %v5820 = vpop.f32.mrf.mxu0
    %v5821 = vadd.f32 0.0, %v5820
    %v5822 = vpop.f32.mrf.mxu0
    %5823 = vmatprep.mubr.bf16.mxu0 0
    %5824 = vmatmul.mubr.bf16.gmra.mxu0 %v5624
    %v5825 = vpop.f32.mrf.mxu0
    %v5826 = vadd.f32 0.0, %v5825
    %v5827 = vpop.f32.mrf.mxu0
    %v5828 = vpop.f32.mrf.mxu0
    %v5829 = vadd.f32 0.0, %v5828
    %v5830 = vpop.f32.mrf.mxu0
    %5831 = vmatprep.mubr.bf16.mxu0 0
    %5832 = vmatmul.mubr.bf16.gmra.mxu0 %v5625
    %v5833 = vpop.f32.mrf.mxu0
    %v5834 = vadd.f32 0.0, %v5833
    %v5835 = vpop.f32.mrf.mxu0
    %v5836 = vpop.f32.mrf.mxu0
    %v5837 = vadd.f32 0.0, %v5836
    %v5838 = vpop.f32.mrf.mxu0
    %5839 = vmatprep.mubr.bf16.mxu0 0
    %5840 = vmatmul.mubr.bf16.gmra.mxu0 %v5626
    %v5841 = vpop.f32.mrf.mxu0
    %v5842 = vadd.f32 0.0, %v5841
    %v5843 = vpop.f32.mrf.mxu0
    %v5844 = vpop.f32.mrf.mxu0
    %v5845 = vadd.f32 0.0, %v5844
    %v5846 = vpop.f32.mrf.mxu0
    %5847 = vmatprep.mubr.bf16.mxu0 0
    %5848 = vmatmul.mubr.bf16.gmra.mxu0 %v5627
    %v5849 = vpop.f32.mrf.mxu0
    %v5850 = vadd.f32 0.0, %v5849
    %v5851 = vpop.f32.mrf.mxu0
    %v5852 = vpop.f32.mrf.mxu0
    %v5853 = vadd.f32 0.0, %v5852
    %v5854 = vpop.f32.mrf.mxu0
    %5855 = vmatprep.mubr.bf16.mxu0 0
    %5856 = vmatmul.mubr.bf16.gmra.mxu0 %v5628
    %v5857 = vpop.f32.mrf.mxu0
    %v5858 = vadd.f32 0.0, %v5857
    %v5859 = vpop.f32.mrf.mxu0
    %v5860 = vpop.f32.mrf.mxu0
    %v5861 = vadd.f32 0.0, %v5860
    %v5862 = vpop.f32.mrf.mxu0
    %5863 = vmatprep.mubr.bf16.mxu0 0
    %5864 = vmatmul.mubr.bf16.gmra.mxu0 %v5629
    %v5865 = vpop.f32.mrf.mxu0
    %v5866 = vadd.f32 0.0, %v5865
    %v5867 = vpop.f32.mrf.mxu0
    %v5868 = vpop.f32.mrf.mxu0
    %v5869 = vadd.f32 0.0, %v5868
    %v5870 = vpop.f32.mrf.mxu0
    %5871 = vmatprep.mubr.bf16.mxu0 0
    %5872 = vmatmul.mubr.bf16.gmra.mxu0 %v5630
    %v5873 = vpop.f32.mrf.mxu0
    %v5874 = vadd.f32 0.0, %v5873
    %v5875 = vpop.f32.mrf.mxu0
    %v5876 = vpop.f32.mrf.mxu0
    %v5877 = vadd.f32 0.0, %v5876
    %v5878 = vpop.f32.mrf.mxu0
    %5879 = vmatprep.mubr.bf16.mxu0 0
    %5880 = vmatmul.mubr.bf16.gmra.mxu0 %v5631
    %v5881 = vpop.f32.mrf.mxu0
    %v5882 = vadd.f32 0.0, %v5881
    %v5883 = vpop.f32.mrf.mxu0
    %v5884 = vpop.f32.mrf.mxu0
    %v5885 = vadd.f32 0.0, %v5884
    %v5886 = vpop.f32.mrf.mxu0
    %5887 = vmatprep.mubr.bf16.mxu0 0
    %5888 = vmatmul.mubr.bf16.gmra.mxu0 %v5632
    %v5889 = vpop.f32.mrf.mxu0
    %v5890 = vadd.f32 0.0, %v5889
    %v5891 = vpop.f32.mrf.mxu0
    %v5892 = vpop.f32.mrf.mxu0
    %v5893 = vadd.f32 0.0, %v5892
    %v5894 = vpop.f32.mrf.mxu0
    %5895 = vmatprep.mubr.bf16.mxu0 0
    %5896 = vmatmul.mubr.bf16.gmra.mxu0 %v5633
    %v5897 = vpop.f32.mrf.mxu0
    %v5898 = vadd.f32 0.0, %v5897
    %v5899 = vpop.f32.mrf.mxu0
    %v5900 = vpop.f32.mrf.mxu0
    %v5901 = vadd.f32 0.0, %v5900
    %v5902 = vpop.f32.mrf.mxu0
    %5903 = vmatprep.mubr.bf16.mxu0 0
    %5904 = vmatmul.mubr.bf16.gmra.mxu0 %v5634
    %v5905 = vpop.f32.mrf.mxu0
    %v5906 = vadd.f32 0.0, %v5905
    %v5907 = vpop.f32.mrf.mxu0
    %v5908 = vpop.f32.mrf.mxu0
    %v5909 = vadd.f32 0.0, %v5908
    %v5910 = vpop.f32.mrf.mxu0
    %5911 = vmatprep.mubr.bf16.mxu0 0
    %5912 = vmatmul.mubr.bf16.gmra.mxu0 %v5635
    %v5913 = vpop.f32.mrf.mxu0
    %v5914 = vadd.f32 0.0, %v5913
    %v5915 = vpop.f32.mrf.mxu0
    %v5916 = vpop.f32.mrf.mxu0
    %v5917 = vadd.f32 0.0, %v5916
    %v5918 = vpop.f32.mrf.mxu0
    %5919 = vmatprep.mubr.bf16.mxu0 0
    %5920 = vmatmul.mubr.bf16.gmra.mxu0 %v5636
    %v5921 = vpop.f32.mrf.mxu0
    %v5922 = vadd.f32 0.0, %v5921
    %v5923 = vpop.f32.mrf.mxu0
    %v5924 = vpop.f32.mrf.mxu0
    %v5925 = vadd.f32 0.0, %v5924
    %v5926 = vpop.f32.mrf.mxu0
    %5927 = vmatprep.mubr.bf16.mxu0 0
    %5928 = vmatmul.mubr.bf16.gmra.mxu0 %v5637
    %v5929 = vpop.f32.mrf.mxu0
    %v5930 = vadd.f32 0.0, %v5929
    %v5931 = vpop.f32.mrf.mxu0
    %v5932 = vpop.f32.mrf.mxu0
    %v5933 = vadd.f32 0.0, %v5932
    %v5934 = vpop.f32.mrf.mxu0
    %5935 = vmatprep.mubr.bf16.mxu0 0
    %5936 = vmatmul.mubr.bf16.gmra.mxu0 %v5638
    %v5937 = vpop.f32.mrf.mxu0
    %v5938 = vadd.f32 0.0, %v5937
    %v5939 = vpop.f32.mrf.mxu0
    %v5940 = vpop.f32.mrf.mxu0
    %v5941 = vadd.f32 0.0, %v5940
    %v5942 = vpop.f32.mrf.mxu0
    %5943 = vmatprep.mubr.bf16.mxu0 0
    %5944 = vmatmul.mubr.bf16.gmra.mxu0 %v5639
    %v5945 = vpop.f32.mrf.mxu0
    %v5946 = vadd.f32 0.0, %v5945
    %v5947 = vpop.f32.mrf.mxu0
    %v5948 = vpop.f32.mrf.mxu0
    %v5949 = vadd.f32 0.0, %v5948
    %v5950 = vpop.f32.mrf.mxu0
    %5951 = vmatprep.mubr.bf16.mxu0 0
    %5952 = vmatmul.mubr.bf16.gmra.mxu0 %v5640
    %v5953 = vpop.f32.mrf.mxu0
    %v5954 = vadd.f32 0.0, %v5953
    %v5955 = vpop.f32.mrf.mxu0
    %v5956 = vpop.f32.mrf.mxu0
    %v5957 = vadd.f32 0.0, %v5956
    %v5958 = vpop.f32.mrf.mxu0
    %5959 = vmatprep.mubr.bf16.mxu0 0
    %5960 = vmatmul.mubr.bf16.gmra.mxu0 %v5641
    %v5961 = vpop.f32.mrf.mxu0
    %v5962 = vadd.f32 0.0, %v5961
    %v5963 = vpop.f32.mrf.mxu0
    %v5964 = vpop.f32.mrf.mxu0
    %v5965 = vadd.f32 0.0, %v5964
    %v5966 = vpop.f32.mrf.mxu0
    %5967 = vmatprep.mubr.bf16.mxu0 0
    %5968 = vmatmul.mubr.bf16.gmra.mxu0 %v5642
    %v5969 = vpop.f32.mrf.mxu0
    %v5970 = vadd.f32 0.0, %v5969
    %v5971 = vpop.f32.mrf.mxu0
    %v5972 = vpop.f32.mrf.mxu0
    %v5973 = vadd.f32 0.0, %v5972
    %v5974 = vpop.f32.mrf.mxu0
    %5975 = vmatprep.mubr.bf16.mxu0 0
    %5976 = vmatmul.mubr.bf16.gmra.mxu0 %v5643
    %v5977 = vpop.f32.mrf.mxu0
    %v5978 = vadd.f32 0.0, %v5977
    %v5979 = vpop.f32.mrf.mxu0
    %v5980 = vpop.f32.mrf.mxu0
    %v5981 = vadd.f32 0.0, %v5980
    %v5982 = vpop.f32.mrf.mxu0
    %5983 = vmatprep.mubr.bf16.mxu0 0
    %5984 = vmatmul.mubr.bf16.gmra.mxu0 %v5644
    %v5985 = vpop.f32.mrf.mxu0
    %v5986 = vadd.f32 0.0, %v5985
    %v5987 = vpop.f32.mrf.mxu0
    %v5988 = vpop.f32.mrf.mxu0
    %v5989 = vadd.f32 0.0, %v5988
    %v5990 = vpop.f32.mrf.mxu0
    %5991 = vmatprep.mubr.bf16.mxu0 0
    %5992 = vmatmul.mubr.bf16.gmra.mxu0 %v5645
    %v5993 = vpop.f32.mrf.mxu0
    %v5994 = vadd.f32 0.0, %v5993
    %v5995 = vpop.f32.mrf.mxu0
    %v5996 = vpop.f32.mrf.mxu0
    %v5997 = vadd.f32 0.0, %v5996
    %v5998 = vpop.f32.mrf.mxu0
    %5999 = vdwg.mxu0
    %v6016 = vunpack.c.l.b16 %v5534
    %v6017 = vunpack.c.l.b16 %v5535
    %v6018 = vunpack.c.l.b16 %v5536
    %v6019 = vunpack.c.l.b16 %v5537
    %v6020 = vunpack.c.l.b16 %v5538
    %v6021 = vunpack.c.l.b16 %v5539
    %v6022 = vunpack.c.l.b16 %v5540
    %v6023 = vunpack.c.l.b16 %v5541
    %v6024 = vunpack.c.l.b16 %v5542
    %v6025 = vunpack.c.l.b16 %v5543
    %v6026 = vunpack.c.l.b16 %v5544
    %v6027 = vunpack.c.l.b16 %v5545
    %v6028 = vunpack.c.l.b16 %v5546
    %v6029 = vunpack.c.l.b16 %v5547
    %v6030 = vunpack.c.l.b16 %v5548
    %v6031 = vunpack.c.l.b16 %v5549
    %v6032 = vpack.c.b16 %v6017, %v6016
    %v6033 = vpack.c.b16 %v6019, %v6018
    %v6034 = vpack.c.b16 %v6021, %v6020
    %v6035 = vpack.c.b16 %v6023, %v6022
    %v6036 = vpack.c.b16 %v6025, %v6024
    %v6037 = vpack.c.b16 %v6027, %v6026
    %v6038 = vpack.c.b16 %v6029, %v6028
    %v6039 = vpack.c.b16 %v6031, %v6030
    %6048 = vmatprep.subr.bf16.mxu0 0
    %6049 = vmatpush1.bf16.msra.mxu0 %v6039
    %6050 = vmatprep.subr.bf16.mxu0 0
    %6051 = vmatpush1.bf16.msra.mxu0 %v6038
    %6052 = vmatprep.subr.bf16.mxu0 0
    %6053 = vmatpush1.bf16.msra.mxu0 %v6037
    %6054 = vmatprep.subr.bf16.mxu0 0
    %6055 = vmatpush1.bf16.msra.mxu0 %v6036
    %6056 = vmatprep.subr.bf16.mxu0 0
    %6057 = vmatpush1.bf16.msra.mxu0 %v6035
    %6058 = vmatprep.subr.bf16.mxu0 0
    %6059 = vmatpush1.bf16.msra.mxu0 %v6034
    %6060 = vmatprep.subr.bf16.mxu0 0
    %6061 = vmatpush1.bf16.msra.mxu0 %v6033
    %6062 = vmatprep.subr.bf16.mxu0 0
    %6063 = vmatpush1.bf16.msra.mxu0 %v6032
    %6064 = vmatprep.subr.bf16.mxu0 0
    %6065 = vmatpush2.bf16.msra.mxu0 0
    %6066 = vmatprep.subr.bf16.mxu0 0
    %6067 = vmatpush2.bf16.msra.mxu0 0
    %6068 = vmatprep.subr.bf16.mxu0 0
    %6069 = vmatpush2.bf16.msra.mxu0 0
    %6070 = vmatprep.subr.bf16.mxu0 0
    %6071 = vmatpush2.bf16.msra.mxu0 0
    %6072 = vmatprep.subr.bf16.mxu0 0
    %6073 = vmatpush2.bf16.msra.mxu0 0
    %6074 = vmatprep.subr.bf16.mxu0 0
    %6075 = vmatpush2.bf16.msra.mxu0 0
    %6076 = vmatprep.subr.bf16.mxu0 0
    %6077 = vmatpush2.bf16.msra.mxu0 0
    %6078 = vmatprep.subr.bf16.mxu0 0
    %6079 = vmatpush2.bf16.msra.mxu0 0
    %6080 = vmatprep.mubr.bf16.mxu0 0
    %6081 = vmatmul.mubr.bf16.gmra.mxu0 %v5502
    %v6082 = vpop.f32.mrf.mxu0
    %v6083 = vadd.f32 %v5746, %v6082
    %v6084 = vpop.f32.mrf.mxu0
    %v6085 = vpop.f32.mrf.mxu0
    %v6086 = vadd.f32 %v5749, %v6085
    %v6087 = vpop.f32.mrf.mxu0
    %6088 = vmatprep.mubr.bf16.mxu0 0
    %6089 = vmatmul.mubr.bf16.gmra.mxu0 %v5503
    %v6090 = vpop.f32.mrf.mxu0
    %v6091 = vadd.f32 %v5754, %v6090
    %v6092 = vpop.f32.mrf.mxu0
    %v6093 = vpop.f32.mrf.mxu0
    %v6094 = vadd.f32 %v5757, %v6093
    %v6095 = vpop.f32.mrf.mxu0
    %6096 = vmatprep.mubr.bf16.mxu0 0
    %6097 = vmatmul.mubr.bf16.gmra.mxu0 %v5504
    %v6098 = vpop.f32.mrf.mxu0
    %v6099 = vadd.f32 %v5762, %v6098
    %v6100 = vpop.f32.mrf.mxu0
    %v6101 = vpop.f32.mrf.mxu0
    %v6102 = vadd.f32 %v5765, %v6101
    %v6103 = vpop.f32.mrf.mxu0
    %6104 = vmatprep.mubr.bf16.mxu0 0
    %6105 = vmatmul.mubr.bf16.gmra.mxu0 %v5505
    %v6106 = vpop.f32.mrf.mxu0
    %v6107 = vadd.f32 %v5770, %v6106
    %v6108 = vpop.f32.mrf.mxu0
    %v6109 = vpop.f32.mrf.mxu0
    %v6110 = vadd.f32 %v5773, %v6109
    %v6111 = vpop.f32.mrf.mxu0
    %6112 = vmatprep.mubr.bf16.mxu0 0
    %6113 = vmatmul.mubr.bf16.gmra.mxu0 %v5506
    %v6114 = vpop.f32.mrf.mxu0
    %v6115 = vadd.f32 %v5778, %v6114
    %v6116 = vpop.f32.mrf.mxu0
    %v6117 = vpop.f32.mrf.mxu0
    %v6118 = vadd.f32 %v5781, %v6117
    %v6119 = vpop.f32.mrf.mxu0
    %6120 = vmatprep.mubr.bf16.mxu0 0
    %6121 = vmatmul.mubr.bf16.gmra.mxu0 %v5507
    %v6122 = vpop.f32.mrf.mxu0
    %v6123 = vadd.f32 %v5786, %v6122
    %v6124 = vpop.f32.mrf.mxu0
    %v6125 = vpop.f32.mrf.mxu0
    %v6126 = vadd.f32 %v5789, %v6125
    %v6127 = vpop.f32.mrf.mxu0
    %6128 = vmatprep.mubr.bf16.mxu0 0
    %6129 = vmatmul.mubr.bf16.gmra.mxu0 %v5508
    %v6130 = vpop.f32.mrf.mxu0
    %v6131 = vadd.f32 %v5794, %v6130
    %v6132 = vpop.f32.mrf.mxu0
    %v6133 = vpop.f32.mrf.mxu0
    %v6134 = vadd.f32 %v5797, %v6133
    %v6135 = vpop.f32.mrf.mxu0
    %6136 = vmatprep.mubr.bf16.mxu0 0
    %6137 = vmatmul.mubr.bf16.gmra.mxu0 %v5509
    %v6138 = vpop.f32.mrf.mxu0
    %v6139 = vadd.f32 %v5802, %v6138
    %v6140 = vpop.f32.mrf.mxu0
    %v6141 = vpop.f32.mrf.mxu0
    %v6142 = vadd.f32 %v5805, %v6141
    %v6143 = vpop.f32.mrf.mxu0
    %6144 = vmatprep.mubr.bf16.mxu0 0
    %6145 = vmatmul.mubr.bf16.gmra.mxu0 %v5510
    %v6146 = vpop.f32.mrf.mxu0
    %v6147 = vadd.f32 %v5810, %v6146
    %v6148 = vpop.f32.mrf.mxu0
    %v6149 = vpop.f32.mrf.mxu0
    %v6150 = vadd.f32 %v5813, %v6149
    %v6151 = vpop.f32.mrf.mxu0
    %6152 = vmatprep.mubr.bf16.mxu0 0
    %6153 = vmatmul.mubr.bf16.gmra.mxu0 %v5511
    %v6154 = vpop.f32.mrf.mxu0
    %v6155 = vadd.f32 %v5818, %v6154
    %v6156 = vpop.f32.mrf.mxu0
    %v6157 = vpop.f32.mrf.mxu0
    %v6158 = vadd.f32 %v5821, %v6157
    %v6159 = vpop.f32.mrf.mxu0
    %6160 = vmatprep.mubr.bf16.mxu0 0
    %6161 = vmatmul.mubr.bf16.gmra.mxu0 %v5512
    %v6162 = vpop.f32.mrf.mxu0
    %v6163 = vadd.f32 %v5826, %v6162
    %v6164 = vpop.f32.mrf.mxu0
    %v6165 = vpop.f32.mrf.mxu0
    %v6166 = vadd.f32 %v5829, %v6165
    %v6167 = vpop.f32.mrf.mxu0
    %6168 = vmatprep.mubr.bf16.mxu0 0
    %6169 = vmatmul.mubr.bf16.gmra.mxu0 %v5513
    %v6170 = vpop.f32.mrf.mxu0
    %v6171 = vadd.f32 %v5834, %v6170
    %v6172 = vpop.f32.mrf.mxu0
    %v6173 = vpop.f32.mrf.mxu0
    %v6174 = vadd.f32 %v5837, %v6173
    %v6175 = vpop.f32.mrf.mxu0
    %6176 = vmatprep.mubr.bf16.mxu0 0
    %6177 = vmatmul.mubr.bf16.gmra.mxu0 %v5514
    %v6178 = vpop.f32.mrf.mxu0
    %v6179 = vadd.f32 %v5842, %v6178
    %v6180 = vpop.f32.mrf.mxu0
    %v6181 = vpop.f32.mrf.mxu0
    %v6182 = vadd.f32 %v5845, %v6181
    %v6183 = vpop.f32.mrf.mxu0
    %6184 = vmatprep.mubr.bf16.mxu0 0
    %6185 = vmatmul.mubr.bf16.gmra.mxu0 %v5515
    %v6186 = vpop.f32.mrf.mxu0
    %v6187 = vadd.f32 %v5850, %v6186
    %v6188 = vpop.f32.mrf.mxu0
    %v6189 = vpop.f32.mrf.mxu0
    %v6190 = vadd.f32 %v5853, %v6189
    %v6191 = vpop.f32.mrf.mxu0
    %6192 = vmatprep.mubr.bf16.mxu0 0
    %6193 = vmatmul.mubr.bf16.gmra.mxu0 %v5516
    %v6194 = vpop.f32.mrf.mxu0
    %v6195 = vadd.f32 %v5858, %v6194
    %v6196 = vpop.f32.mrf.mxu0
    %v6197 = vpop.f32.mrf.mxu0
    %v6198 = vadd.f32 %v5861, %v6197
    %v6199 = vpop.f32.mrf.mxu0
    %6200 = vmatprep.mubr.bf16.mxu0 0
    %6201 = vmatmul.mubr.bf16.gmra.mxu0 %v5517
    %v6202 = vpop.f32.mrf.mxu0
    %v6203 = vadd.f32 %v5866, %v6202
    %v6204 = vpop.f32.mrf.mxu0
    %v6205 = vpop.f32.mrf.mxu0
    %v6206 = vadd.f32 %v5869, %v6205
    %v6207 = vpop.f32.mrf.mxu0
    %6208 = vmatprep.mubr.bf16.mxu0 0
    %6209 = vmatmul.mubr.bf16.gmra.mxu0 %v5518
    %v6210 = vpop.f32.mrf.mxu0
    %v6211 = vadd.f32 %v5874, %v6210
    %v6212 = vpop.f32.mrf.mxu0
    %v6213 = vpop.f32.mrf.mxu0
    %v6214 = vadd.f32 %v5877, %v6213
    %v6215 = vpop.f32.mrf.mxu0
    %6216 = vmatprep.mubr.bf16.mxu0 0
    %6217 = vmatmul.mubr.bf16.gmra.mxu0 %v5519
    %v6218 = vpop.f32.mrf.mxu0
    %v6219 = vadd.f32 %v5882, %v6218
    %v6220 = vpop.f32.mrf.mxu0
    %v6221 = vpop.f32.mrf.mxu0
    %v6222 = vadd.f32 %v5885, %v6221
    %v6223 = vpop.f32.mrf.mxu0
    %6224 = vmatprep.mubr.bf16.mxu0 0
    %6225 = vmatmul.mubr.bf16.gmra.mxu0 %v5520
    %v6226 = vpop.f32.mrf.mxu0
    %v6227 = vadd.f32 %v5890, %v6226
    %v6228 = vpop.f32.mrf.mxu0
    %v6229 = vpop.f32.mrf.mxu0
    %v6230 = vadd.f32 %v5893, %v6229
    %v6231 = vpop.f32.mrf.mxu0
    %6232 = vmatprep.mubr.bf16.mxu0 0
    %6233 = vmatmul.mubr.bf16.gmra.mxu0 %v5521
    %v6234 = vpop.f32.mrf.mxu0
    %v6235 = vadd.f32 %v5898, %v6234
    %v6236 = vpop.f32.mrf.mxu0
    %v6237 = vpop.f32.mrf.mxu0
    %v6238 = vadd.f32 %v5901, %v6237
    %v6239 = vpop.f32.mrf.mxu0
    %6240 = vmatprep.mubr.bf16.mxu0 0
    %6241 = vmatmul.mubr.bf16.gmra.mxu0 %v5522
    %v6242 = vpop.f32.mrf.mxu0
    %v6243 = vadd.f32 %v5906, %v6242
    %v6244 = vpop.f32.mrf.mxu0
    %v6245 = vpop.f32.mrf.mxu0
    %v6246 = vadd.f32 %v5909, %v6245
    %v6247 = vpop.f32.mrf.mxu0
    %6248 = vmatprep.mubr.bf16.mxu0 0
    %6249 = vmatmul.mubr.bf16.gmra.mxu0 %v5523
    %v6250 = vpop.f32.mrf.mxu0
    %v6251 = vadd.f32 %v5914, %v6250
    %v6252 = vpop.f32.mrf.mxu0
    %v6253 = vpop.f32.mrf.mxu0
    %v6254 = vadd.f32 %v5917, %v6253
    %v6255 = vpop.f32.mrf.mxu0
    %6256 = vmatprep.mubr.bf16.mxu0 0
    %6257 = vmatmul.mubr.bf16.gmra.mxu0 %v5524
    %v6258 = vpop.f32.mrf.mxu0
    %v6259 = vadd.f32 %v5922, %v6258
    %v6260 = vpop.f32.mrf.mxu0
    %v6261 = vpop.f32.mrf.mxu0
    %v6262 = vadd.f32 %v5925, %v6261
    %v6263 = vpop.f32.mrf.mxu0
    %6264 = vmatprep.mubr.bf16.mxu0 0
    %6265 = vmatmul.mubr.bf16.gmra.mxu0 %v5525
    %v6266 = vpop.f32.mrf.mxu0
    %v6267 = vadd.f32 %v5930, %v6266
    %v6268 = vpop.f32.mrf.mxu0
    %v6269 = vpop.f32.mrf.mxu0
    %v6270 = vadd.f32 %v5933, %v6269
    %v6271 = vpop.f32.mrf.mxu0
    %6272 = vmatprep.mubr.bf16.mxu0 0
    %6273 = vmatmul.mubr.bf16.gmra.mxu0 %v5526
    %v6274 = vpop.f32.mrf.mxu0
    %v6275 = vadd.f32 %v5938, %v6274
    %v6276 = vpop.f32.mrf.mxu0
    %v6277 = vpop.f32.mrf.mxu0
    %v6278 = vadd.f32 %v5941, %v6277
    %v6279 = vpop.f32.mrf.mxu0
    %6280 = vmatprep.mubr.bf16.mxu0 0
    %6281 = vmatmul.mubr.bf16.gmra.mxu0 %v5527
    %v6282 = vpop.f32.mrf.mxu0
    %v6283 = vadd.f32 %v5946, %v6282
    %v6284 = vpop.f32.mrf.mxu0
    %v6285 = vpop.f32.mrf.mxu0
    %v6286 = vadd.f32 %v5949, %v6285
    %v6287 = vpop.f32.mrf.mxu0
    %6288 = vmatprep.mubr.bf16.mxu0 0
    %6289 = vmatmul.mubr.bf16.gmra.mxu0 %v5528
    %v6290 = vpop.f32.mrf.mxu0
    %v6291 = vadd.f32 %v5954, %v6290
    %v6292 = vpop.f32.mrf.mxu0
    %v6293 = vpop.f32.mrf.mxu0
    %v6294 = vadd.f32 %v5957, %v6293
    %v6295 = vpop.f32.mrf.mxu0
    %6296 = vmatprep.mubr.bf16.mxu0 0
    %6297 = vmatmul.mubr.bf16.gmra.mxu0 %v5529
    %v6298 = vpop.f32.mrf.mxu0
    %v6299 = vadd.f32 %v5962, %v6298
    %v6300 = vpop.f32.mrf.mxu0
    %v6301 = vpop.f32.mrf.mxu0
    %v6302 = vadd.f32 %v5965, %v6301
    %v6303 = vpop.f32.mrf.mxu0
    %6304 = vmatprep.mubr.bf16.mxu0 0
    %6305 = vmatmul.mubr.bf16.gmra.mxu0 %v5530
    %v6306 = vpop.f32.mrf.mxu0
    %v6307 = vadd.f32 %v5970, %v6306
    %v6308 = vpop.f32.mrf.mxu0
    %v6309 = vpop.f32.mrf.mxu0
    %v6310 = vadd.f32 %v5973, %v6309
    %v6311 = vpop.f32.mrf.mxu0
    %6312 = vmatprep.mubr.bf16.mxu0 0
    %6313 = vmatmul.mubr.bf16.gmra.mxu0 %v5531
    %v6314 = vpop.f32.mrf.mxu0
    %v6315 = vadd.f32 %v5978, %v6314
    %v6316 = vpop.f32.mrf.mxu0
    %v6317 = vpop.f32.mrf.mxu0
    %v6318 = vadd.f32 %v5981, %v6317
    %v6319 = vpop.f32.mrf.mxu0
    %6320 = vmatprep.mubr.bf16.mxu0 0
    %6321 = vmatmul.mubr.bf16.gmra.mxu0 %v5532
    %v6322 = vpop.f32.mrf.mxu0
    %v6323 = vadd.f32 %v5986, %v6322
    %v6324 = vpop.f32.mrf.mxu0
    %v6325 = vpop.f32.mrf.mxu0
    %v6326 = vadd.f32 %v5989, %v6325
    %v6327 = vpop.f32.mrf.mxu0
    %6328 = vmatprep.mubr.bf16.mxu0 0
    %6329 = vmatmul.mubr.bf16.gmra.mxu0 %v5533
    %v6330 = vpop.f32.mrf.mxu0
    %v6331 = vadd.f32 %v5994, %v6330
    %v6332 = vpop.f32.mrf.mxu0
    %v6333 = vpop.f32.mrf.mxu0
    %v6334 = vadd.f32 %v5997, %v6333
    %v6335 = vpop.f32.mrf.mxu0
    %6336 = vdwg.mxu0
    %v6337 = vld [vmem:[#allocation2 + $0x2] sm:$0xff]
    %v6338 = vld [vmem:[#allocation2 + $0xa] sm:$0xff]
    %v6339 = vld [vmem:[#allocation2 + $0x1a] sm:$0xff]
    %v6340 = vld [vmem:[#allocation2 + $0x22] sm:$0xff]
    %v6341 = vld [vmem:[#allocation2 + $0x32] sm:$0xff]
    %v6342 = vld [vmem:[#allocation2 + $0x3a] sm:$0xff]
    %v6343 = vld [vmem:[#allocation2 + $0x4a] sm:$0xff]
    %v6344 = vld [vmem:[#allocation2 + $0x52] sm:$0xff]
    %v6345 = vld [vmem:[#allocation2 + $0x62] sm:$0xff]
    %v6346 = vld [vmem:[#allocation2 + $0x6a] sm:$0xff]
    %v6347 = vld [vmem:[#allocation2 + $0x7a] sm:$0xff]
    %v6348 = vld [vmem:[#allocation2 + $0x82] sm:$0xff]
    %v6349 = vld [vmem:[#allocation2 + $0x92] sm:$0xff]
    %v6350 = vld [vmem:[#allocation2 + $0x9a] sm:$0xff]
    %v6351 = vld [vmem:[#allocation2 + $0xaa] sm:$0xff]
    %v6352 = vld [vmem:[#allocation2 + $0xb2] sm:$0xff]
    %v6353 = vld [vmem:[#allocation2 + $0xc2] sm:$0xff]
    %v6354 = vld [vmem:[#allocation2 + $0xca] sm:$0xff]
    %v6355 = vld [vmem:[#allocation2 + $0xda] sm:$0xff]
    %v6356 = vld [vmem:[#allocation2 + $0xe2] sm:$0xff]
    %v6357 = vld [vmem:[#allocation2 + $0xf2] sm:$0xff]
    %v6358 = vld [vmem:[#allocation2 + $0xfa] sm:$0xff]
    %v6359 = vld [vmem:[#allocation2 + $0x10a] sm:$0xff]
    %v6360 = vld [vmem:[#allocation2 + $0x112] sm:$0xff]
    %v6361 = vld [vmem:[#allocation2 + $0x122] sm:$0xff]
    %v6362 = vld [vmem:[#allocation2 + $0x12a] sm:$0xff]
    %v6363 = vld [vmem:[#allocation2 + $0x13a] sm:$0xff]
    %v6364 = vld [vmem:[#allocation2 + $0x142] sm:$0xff]
    %v6365 = vld [vmem:[#allocation2 + $0x152] sm:$0xff]
    %v6366 = vld [vmem:[#allocation2 + $0x15a] sm:$0xff]
    %v6367 = vld [vmem:[#allocation2 + $0x16a] sm:$0xff]
    %v6368 = vld [vmem:[#allocation2 + $0x172] sm:$0xff]
    %v6369 = vld [vmem:[#allocation2 + $0x1b2] sm:$0xff]
    %v6370 = vld [vmem:[#allocation2 + $0x1ba] sm:$0xff]
    %v6371 = vld [vmem:[#allocation2 + $0x1ca] sm:$0xff]
    %v6372 = vld [vmem:[#allocation2 + $0x1d2] sm:$0xff]
    %v6373 = vld [vmem:[#allocation2 + $0x1e2] sm:$0xff]
    %v6374 = vld [vmem:[#allocation2 + $0x1ea] sm:$0xff]
    %v6375 = vld [vmem:[#allocation2 + $0x1fa] sm:$0xff]
    %v6376 = vld [vmem:[#allocation2 + $0x202] sm:$0xff]
    %v6377 = vld [vmem:[#allocation2 + $0x212] sm:$0xff]
    %v6378 = vld [vmem:[#allocation2 + $0x21a] sm:$0xff]
    %v6379 = vld [vmem:[#allocation2 + $0x22a] sm:$0xff]
    %v6380 = vld [vmem:[#allocation2 + $0x232] sm:$0xff]
    %v6381 = vld [vmem:[#allocation2 + $0x242] sm:$0xff]
    %v6382 = vld [vmem:[#allocation2 + $0x24a] sm:$0xff]
    %v6383 = vld [vmem:[#allocation2 + $0x25a] sm:$0xff]
    %v6384 = vld [vmem:[#allocation2 + $0x262] sm:$0xff]
    %v6385 = vld [vmem:[#allocation2 + $0x272] sm:$0xff]
    %v6386 = vld [vmem:[#allocation2 + $0x27a] sm:$0xff]
    %v6387 = vld [vmem:[#allocation2 + $0x28a] sm:$0xff]
    %v6388 = vld [vmem:[#allocation2 + $0x292] sm:$0xff]
    %v6389 = vld [vmem:[#allocation2 + $0x2a2] sm:$0xff]
    %v6390 = vld [vmem:[#allocation2 + $0x2aa] sm:$0xff]
    %v6391 = vld [vmem:[#allocation2 + $0x2ba] sm:$0xff]
    %v6392 = vld [vmem:[#allocation2 + $0x2c2] sm:$0xff]
    %v6393 = vld [vmem:[#allocation2 + $0x2d2] sm:$0xff]
    %v6394 = vld [vmem:[#allocation2 + $0x2da] sm:$0xff]
    %v6395 = vld [vmem:[#allocation2 + $0x2ea] sm:$0xff]
    %v6396 = vld [vmem:[#allocation2 + $0x2f2] sm:$0xff]
    %v6397 = vld [vmem:[#allocation2 + $0x302] sm:$0xff]
    %v6398 = vld [vmem:[#allocation2 + $0x30a] sm:$0xff]
    %v6399 = vld [vmem:[#allocation2 + $0x31a] sm:$0xff]
    %v6400 = vld [vmem:[#allocation2 + $0x322] sm:$0xff]
    %v6401 = vpack.c.bf16 %v6338, %v6337
    %v6402 = vpack.c.bf16 %v6340, %v6339
    %v6403 = vpack.c.bf16 %v6342, %v6341
    %v6404 = vpack.c.bf16 %v6344, %v6343
    %v6405 = vpack.c.bf16 %v6346, %v6345
    %v6406 = vpack.c.bf16 %v6348, %v6347
    %v6407 = vpack.c.bf16 %v6350, %v6349
    %v6408 = vpack.c.bf16 %v6352, %v6351
    %v6409 = vpack.c.bf16 %v6354, %v6353
    %v6410 = vpack.c.bf16 %v6356, %v6355
    %v6411 = vpack.c.bf16 %v6358, %v6357
    %v6412 = vpack.c.bf16 %v6360, %v6359
    %v6413 = vpack.c.bf16 %v6362, %v6361
    %v6414 = vpack.c.bf16 %v6364, %v6363
    %v6415 = vpack.c.bf16 %v6366, %v6365
    %v6416 = vpack.c.bf16 %v6368, %v6367
    %v6417 = vpack.c.bf16 %v6370, %v6369
    %v6418 = vpack.c.bf16 %v6372, %v6371
    %v6419 = vpack.c.bf16 %v6374, %v6373
    %v6420 = vpack.c.bf16 %v6376, %v6375
    %v6421 = vpack.c.bf16 %v6378, %v6377
    %v6422 = vpack.c.bf16 %v6380, %v6379
    %v6423 = vpack.c.bf16 %v6382, %v6381
    %v6424 = vpack.c.bf16 %v6384, %v6383
    %v6425 = vpack.c.bf16 %v6386, %v6385
    %v6426 = vpack.c.bf16 %v6388, %v6387
    %v6427 = vpack.c.bf16 %v6390, %v6389
    %v6428 = vpack.c.bf16 %v6392, %v6391
    %v6429 = vpack.c.bf16 %v6394, %v6393
    %v6430 = vpack.c.bf16 %v6396, %v6395
    %v6431 = vpack.c.bf16 %v6398, %v6397
    %v6432 = vpack.c.bf16 %v6400, %v6399
    %s6433 = scalar_lea.vmem %s6, 128
    %v6434 = vld [vmem:[%s6433] sm:$0xf]
    %v6435 = vld [vmem:[%s6433 + $0x4] sm:$0xf]
    %v6436 = vld [vmem:[%s6433 + $0x8] sm:$0xf]
    %v6437 = vld [vmem:[%s6433 + $0xc] sm:$0xf]
    %v6438 = vld [vmem:[%s6433 + $0x10] sm:$0xf]
    %v6439 = vld [vmem:[%s6433 + $0x14] sm:$0xf]
    %v6440 = vld [vmem:[%s6433 + $0x18] sm:$0xf]
    %v6441 = vld [vmem:[%s6433 + $0x1c] sm:$0xf]
    %v6442 = vld [vmem:[%s6433 + $0x20] sm:$0xf]
    %v6443 = vld [vmem:[%s6433 + $0x24] sm:$0xf]
    %v6444 = vld [vmem:[%s6433 + $0x28] sm:$0xf]
    %v6445 = vld [vmem:[%s6433 + $0x2c] sm:$0xf]
    %v6446 = vld [vmem:[%s6433 + $0x30] sm:$0xf]
    %v6447 = vld [vmem:[%s6433 + $0x34] sm:$0xf]
    %v6448 = vld [vmem:[%s6433 + $0x38] sm:$0xf]
    %v6449 = vld [vmem:[%s6433 + $0x3c] sm:$0xf]
    %v6466 = vunpack.c.l.b16 %v6434
    %v6467 = vunpack.c.l.b16 %v6435
    %v6468 = vunpack.c.l.b16 %v6436
    %v6469 = vunpack.c.l.b16 %v6437
    %v6470 = vunpack.c.l.b16 %v6438
    %v6471 = vunpack.c.l.b16 %v6439
    %v6472 = vunpack.c.l.b16 %v6440
    %v6473 = vunpack.c.l.b16 %v6441
    %v6474 = vunpack.c.l.b16 %v6442
    %v6475 = vunpack.c.l.b16 %v6443
    %v6476 = vunpack.c.l.b16 %v6444
    %v6477 = vunpack.c.l.b16 %v6445
    %v6478 = vunpack.c.l.b16 %v6446
    %v6479 = vunpack.c.l.b16 %v6447
    %v6480 = vunpack.c.l.b16 %v6448
    %v6481 = vunpack.c.l.b16 %v6449
    %v6482 = vpack.c.b16 %v6467, %v6466
    %v6483 = vpack.c.b16 %v6469, %v6468
    %v6484 = vpack.c.b16 %v6471, %v6470
    %v6485 = vpack.c.b16 %v6473, %v6472
    %v6486 = vpack.c.b16 %v6475, %v6474
    %v6487 = vpack.c.b16 %v6477, %v6476
    %v6488 = vpack.c.b16 %v6479, %v6478
    %v6489 = vpack.c.b16 %v6481, %v6480
    %6498 = vmatprep.subr.bf16.mxu0 0
    %6499 = vmatpush1.bf16.msra.mxu0 %v6489
    %6500 = vmatprep.subr.bf16.mxu0 0
    %6501 = vmatpush1.bf16.msra.mxu0 %v6488
    %6502 = vmatprep.subr.bf16.mxu0 0
    %6503 = vmatpush1.bf16.msra.mxu0 %v6487
    %6504 = vmatprep.subr.bf16.mxu0 0
    %6505 = vmatpush1.bf16.msra.mxu0 %v6486
    %6506 = vmatprep.subr.bf16.mxu0 0
    %6507 = vmatpush1.bf16.msra.mxu0 %v6485
    %6508 = vmatprep.subr.bf16.mxu0 0
    %6509 = vmatpush1.bf16.msra.mxu0 %v6484
    %6510 = vmatprep.subr.bf16.mxu0 0
    %6511 = vmatpush1.bf16.msra.mxu0 %v6483
    %6512 = vmatprep.subr.bf16.mxu0 0
    %6513 = vmatpush1.bf16.msra.mxu0 %v6482
    %6514 = vmatprep.subr.bf16.mxu0 0
    %6515 = vmatpush2.bf16.msra.mxu0 0
    %6516 = vmatprep.subr.bf16.mxu0 0
    %6517 = vmatpush2.bf16.msra.mxu0 0
    %6518 = vmatprep.subr.bf16.mxu0 0
    %6519 = vmatpush2.bf16.msra.mxu0 0
    %6520 = vmatprep.subr.bf16.mxu0 0
    %6521 = vmatpush2.bf16.msra.mxu0 0
    %6522 = vmatprep.subr.bf16.mxu0 0
    %6523 = vmatpush2.bf16.msra.mxu0 0
    %6524 = vmatprep.subr.bf16.mxu0 0
    %6525 = vmatpush2.bf16.msra.mxu0 0
    %6526 = vmatprep.subr.bf16.mxu0 0
    %6527 = vmatpush2.bf16.msra.mxu0 0
    %6528 = vmatprep.subr.bf16.mxu0 0
    %6529 = vmatpush2.bf16.msra.mxu0 0
    %6530 = vmatprep.mubr.bf16.mxu0 0
    %6531 = vmatmul.mubr.bf16.gmra.mxu0 %v6401
    %v6532 = vpop.f32.mrf.mxu0
    %v6533 = vadd.f32 0.0, %v6532
    %v6534 = vpop.f32.mrf.mxu0
    %v6535 = vpop.f32.mrf.mxu0
    %v6536 = vadd.f32 0.0, %v6535
    %v6537 = vpop.f32.mrf.mxu0
    %6538 = vmatprep.mubr.bf16.mxu0 0
    %6539 = vmatmul.mubr.bf16.gmra.mxu0 %v6402
    %v6540 = vpop.f32.mrf.mxu0
    %v6541 = vadd.f32 0.0, %v6540
    %v6542 = vpop.f32.mrf.mxu0
    %v6543 = vpop.f32.mrf.mxu0
    %v6544 = vadd.f32 0.0, %v6543
    %v6545 = vpop.f32.mrf.mxu0
    %6546 = vmatprep.mubr.bf16.mxu0 0
    %6547 = vmatmul.mubr.bf16.gmra.mxu0 %v6403
    %v6548 = vpop.f32.mrf.mxu0
    %v6549 = vadd.f32 0.0, %v6548
    %v6550 = vpop.f32.mrf.mxu0
    %v6551 = vpop.f32.mrf.mxu0
    %v6552 = vadd.f32 0.0, %v6551
    %v6553 = vpop.f32.mrf.mxu0
    %6554 = vmatprep.mubr.bf16.mxu0 0
    %6555 = vmatmul.mubr.bf16.gmra.mxu0 %v6404
    %v6556 = vpop.f32.mrf.mxu0
    %v6557 = vadd.f32 0.0, %v6556
    %v6558 = vpop.f32.mrf.mxu0
    %v6559 = vpop.f32.mrf.mxu0
    %v6560 = vadd.f32 0.0, %v6559
    %v6561 = vpop.f32.mrf.mxu0
    %6562 = vmatprep.mubr.bf16.mxu0 0
    %6563 = vmatmul.mubr.bf16.gmra.mxu0 %v6405
    %v6564 = vpop.f32.mrf.mxu0
    %v6565 = vadd.f32 0.0, %v6564
    %v6566 = vpop.f32.mrf.mxu0
    %v6567 = vpop.f32.mrf.mxu0
    %v6568 = vadd.f32 0.0, %v6567
    %v6569 = vpop.f32.mrf.mxu0
    %6570 = vmatprep.mubr.bf16.mxu0 0
    %6571 = vmatmul.mubr.bf16.gmra.mxu0 %v6406
    %v6572 = vpop.f32.mrf.mxu0
    %v6573 = vadd.f32 0.0, %v6572
    %v6574 = vpop.f32.mrf.mxu0
    %v6575 = vpop.f32.mrf.mxu0
    %v6576 = vadd.f32 0.0, %v6575
    %v6577 = vpop.f32.mrf.mxu0
    %6578 = vmatprep.mubr.bf16.mxu0 0
    %6579 = vmatmul.mubr.bf16.gmra.mxu0 %v6407
    %v6580 = vpop.f32.mrf.mxu0
    %v6581 = vadd.f32 0.0, %v6580
    %v6582 = vpop.f32.mrf.mxu0
    %v6583 = vpop.f32.mrf.mxu0
    %v6584 = vadd.f32 0.0, %v6583
    %v6585 = vpop.f32.mrf.mxu0
    %6586 = vmatprep.mubr.bf16.mxu0 0
    %6587 = vmatmul.mubr.bf16.gmra.mxu0 %v6408
    %v6588 = vpop.f32.mrf.mxu0
    %v6589 = vadd.f32 0.0, %v6588
    %v6590 = vpop.f32.mrf.mxu0
    %v6591 = vpop.f32.mrf.mxu0
    %v6592 = vadd.f32 0.0, %v6591
    %v6593 = vpop.f32.mrf.mxu0
    %6594 = vmatprep.mubr.bf16.mxu0 0
    %6595 = vmatmul.mubr.bf16.gmra.mxu0 %v6409
    %v6596 = vpop.f32.mrf.mxu0
    %v6597 = vadd.f32 0.0, %v6596
    %v6598 = vpop.f32.mrf.mxu0
    %v6599 = vpop.f32.mrf.mxu0
    %v6600 = vadd.f32 0.0, %v6599
    %v6601 = vpop.f32.mrf.mxu0
    %6602 = vmatprep.mubr.bf16.mxu0 0
    %6603 = vmatmul.mubr.bf16.gmra.mxu0 %v6410
    %v6604 = vpop.f32.mrf.mxu0
    %v6605 = vadd.f32 0.0, %v6604
    %v6606 = vpop.f32.mrf.mxu0
    %v6607 = vpop.f32.mrf.mxu0
    %v6608 = vadd.f32 0.0, %v6607
    %v6609 = vpop.f32.mrf.mxu0
    %6610 = vmatprep.mubr.bf16.mxu0 0
    %6611 = vmatmul.mubr.bf16.gmra.mxu0 %v6411
    %v6612 = vpop.f32.mrf.mxu0
    %v6613 = vadd.f32 0.0, %v6612
    %v6614 = vpop.f32.mrf.mxu0
    %v6615 = vpop.f32.mrf.mxu0
    %v6616 = vadd.f32 0.0, %v6615
    %v6617 = vpop.f32.mrf.mxu0
    %6618 = vmatprep.mubr.bf16.mxu0 0
    %6619 = vmatmul.mubr.bf16.gmra.mxu0 %v6412
    %v6620 = vpop.f32.mrf.mxu0
    %v6621 = vadd.f32 0.0, %v6620
    %v6622 = vpop.f32.mrf.mxu0
    %v6623 = vpop.f32.mrf.mxu0
    %v6624 = vadd.f32 0.0, %v6623
    %v6625 = vpop.f32.mrf.mxu0
    %6626 = vmatprep.mubr.bf16.mxu0 0
    %6627 = vmatmul.mubr.bf16.gmra.mxu0 %v6413
    %v6628 = vpop.f32.mrf.mxu0
    %v6629 = vadd.f32 0.0, %v6628
    %v6630 = vpop.f32.mrf.mxu0
    %v6631 = vpop.f32.mrf.mxu0
    %v6632 = vadd.f32 0.0, %v6631
    %v6633 = vpop.f32.mrf.mxu0
    %6634 = vmatprep.mubr.bf16.mxu0 0
    %6635 = vmatmul.mubr.bf16.gmra.mxu0 %v6414
    %v6636 = vpop.f32.mrf.mxu0
    %v6637 = vadd.f32 0.0, %v6636
    %v6638 = vpop.f32.mrf.mxu0
    %v6639 = vpop.f32.mrf.mxu0
    %v6640 = vadd.f32 0.0, %v6639
    %v6641 = vpop.f32.mrf.mxu0
    %6642 = vmatprep.mubr.bf16.mxu0 0
    %6643 = vmatmul.mubr.bf16.gmra.mxu0 %v6415
    %v6644 = vpop.f32.mrf.mxu0
    %v6645 = vadd.f32 0.0, %v6644
    %v6646 = vpop.f32.mrf.mxu0
    %v6647 = vpop.f32.mrf.mxu0
    %v6648 = vadd.f32 0.0, %v6647
    %v6649 = vpop.f32.mrf.mxu0
    %6650 = vmatprep.mubr.bf16.mxu0 0
    %6651 = vmatmul.mubr.bf16.gmra.mxu0 %v6416
    %v6652 = vpop.f32.mrf.mxu0
    %v6653 = vadd.f32 0.0, %v6652
    %v6654 = vpop.f32.mrf.mxu0
    %v6655 = vpop.f32.mrf.mxu0
    %v6656 = vadd.f32 0.0, %v6655
    %v6657 = vpop.f32.mrf.mxu0
    %6658 = vmatprep.mubr.bf16.mxu0 0
    %6659 = vmatmul.mubr.bf16.gmra.mxu0 %v6417
    %v6660 = vpop.f32.mrf.mxu0
    %v6661 = vadd.f32 0.0, %v6660
    %v6662 = vpop.f32.mrf.mxu0
    %v6663 = vpop.f32.mrf.mxu0
    %v6664 = vadd.f32 0.0, %v6663
    %v6665 = vpop.f32.mrf.mxu0
    %6666 = vmatprep.mubr.bf16.mxu0 0
    %6667 = vmatmul.mubr.bf16.gmra.mxu0 %v6418
    %v6668 = vpop.f32.mrf.mxu0
    %v6669 = vadd.f32 0.0, %v6668
    %v6670 = vpop.f32.mrf.mxu0
    %v6671 = vpop.f32.mrf.mxu0
    %v6672 = vadd.f32 0.0, %v6671
    %v6673 = vpop.f32.mrf.mxu0
    %6674 = vmatprep.mubr.bf16.mxu0 0
    %6675 = vmatmul.mubr.bf16.gmra.mxu0 %v6419
    %v6676 = vpop.f32.mrf.mxu0
    %v6677 = vadd.f32 0.0, %v6676
    %v6678 = vpop.f32.mrf.mxu0
    %v6679 = vpop.f32.mrf.mxu0
    %v6680 = vadd.f32 0.0, %v6679
    %v6681 = vpop.f32.mrf.mxu0
    %6682 = vmatprep.mubr.bf16.mxu0 0
    %6683 = vmatmul.mubr.bf16.gmra.mxu0 %v6420
    %v6684 = vpop.f32.mrf.mxu0
    %v6685 = vadd.f32 0.0, %v6684
    %v6686 = vpop.f32.mrf.mxu0
    %v6687 = vpop.f32.mrf.mxu0
    %v6688 = vadd.f32 0.0, %v6687
    %v6689 = vpop.f32.mrf.mxu0
    %6690 = vmatprep.mubr.bf16.mxu0 0
    %6691 = vmatmul.mubr.bf16.gmra.mxu0 %v6421
    %v6692 = vpop.f32.mrf.mxu0
    %v6693 = vadd.f32 0.0, %v6692
    %v6694 = vpop.f32.mrf.mxu0
    %v6695 = vpop.f32.mrf.mxu0
    %v6696 = vadd.f32 0.0, %v6695
    %v6697 = vpop.f32.mrf.mxu0
    %6698 = vmatprep.mubr.bf16.mxu0 0
    %6699 = vmatmul.mubr.bf16.gmra.mxu0 %v6422
    %v6700 = vpop.f32.mrf.mxu0
    %v6701 = vadd.f32 0.0, %v6700
    %v6702 = vpop.f32.mrf.mxu0
    %v6703 = vpop.f32.mrf.mxu0
    %v6704 = vadd.f32 0.0, %v6703
    %v6705 = vpop.f32.mrf.mxu0
    %6706 = vmatprep.mubr.bf16.mxu0 0
    %6707 = vmatmul.mubr.bf16.gmra.mxu0 %v6423
    %v6708 = vpop.f32.mrf.mxu0
    %v6709 = vadd.f32 0.0, %v6708
    %v6710 = vpop.f32.mrf.mxu0
    %v6711 = vpop.f32.mrf.mxu0
    %v6712 = vadd.f32 0.0, %v6711
    %v6713 = vpop.f32.mrf.mxu0
    %6714 = vmatprep.mubr.bf16.mxu0 0
    %6715 = vmatmul.mubr.bf16.gmra.mxu0 %v6424
    %v6716 = vpop.f32.mrf.mxu0
    %v6717 = vadd.f32 0.0, %v6716
    %v6718 = vpop.f32.mrf.mxu0
    %v6719 = vpop.f32.mrf.mxu0
    %v6720 = vadd.f32 0.0, %v6719
    %v6721 = vpop.f32.mrf.mxu0
    %6722 = vmatprep.mubr.bf16.mxu0 0
    %6723 = vmatmul.mubr.bf16.gmra.mxu0 %v6425
    %v6724 = vpop.f32.mrf.mxu0
    %v6725 = vadd.f32 0.0, %v6724
    %v6726 = vpop.f32.mrf.mxu0
    %v6727 = vpop.f32.mrf.mxu0
    %v6728 = vadd.f32 0.0, %v6727
    %v6729 = vpop.f32.mrf.mxu0
    %6730 = vmatprep.mubr.bf16.mxu0 0
    %6731 = vmatmul.mubr.bf16.gmra.mxu0 %v6426
    %v6732 = vpop.f32.mrf.mxu0
    %v6733 = vadd.f32 0.0, %v6732
    %v6734 = vpop.f32.mrf.mxu0
    %v6735 = vpop.f32.mrf.mxu0
    %v6736 = vadd.f32 0.0, %v6735
    %v6737 = vpop.f32.mrf.mxu0
    %6738 = vmatprep.mubr.bf16.mxu0 0
    %6739 = vmatmul.mubr.bf16.gmra.mxu0 %v6427
    %v6740 = vpop.f32.mrf.mxu0
    %v6741 = vadd.f32 0.0, %v6740
    %v6742 = vpop.f32.mrf.mxu0
    %v6743 = vpop.f32.mrf.mxu0
    %v6744 = vadd.f32 0.0, %v6743
    %v6745 = vpop.f32.mrf.mxu0
    %6746 = vmatprep.mubr.bf16.mxu0 0
    %6747 = vmatmul.mubr.bf16.gmra.mxu0 %v6428
    %v6748 = vpop.f32.mrf.mxu0
    %v6749 = vadd.f32 0.0, %v6748
    %v6750 = vpop.f32.mrf.mxu0
    %v6751 = vpop.f32.mrf.mxu0
    %v6752 = vadd.f32 0.0, %v6751
    %v6753 = vpop.f32.mrf.mxu0
    %6754 = vmatprep.mubr.bf16.mxu0 0
    %6755 = vmatmul.mubr.bf16.gmra.mxu0 %v6429
    %v6756 = vpop.f32.mrf.mxu0
    %v6757 = vadd.f32 0.0, %v6756
    %v6758 = vpop.f32.mrf.mxu0
    %v6759 = vpop.f32.mrf.mxu0
    %v6760 = vadd.f32 0.0, %v6759
    %v6761 = vpop.f32.mrf.mxu0
    %6762 = vmatprep.mubr.bf16.mxu0 0
    %6763 = vmatmul.mubr.bf16.gmra.mxu0 %v6430
    %v6764 = vpop.f32.mrf.mxu0
    %v6765 = vadd.f32 0.0, %v6764
    %v6766 = vpop.f32.mrf.mxu0
    %v6767 = vpop.f32.mrf.mxu0
    %v6768 = vadd.f32 0.0, %v6767
    %v6769 = vpop.f32.mrf.mxu0
    %6770 = vmatprep.mubr.bf16.mxu0 0
    %6771 = vmatmul.mubr.bf16.gmra.mxu0 %v6431
    %v6772 = vpop.f32.mrf.mxu0
    %v6773 = vadd.f32 0.0, %v6772
    %v6774 = vpop.f32.mrf.mxu0
    %v6775 = vpop.f32.mrf.mxu0
    %v6776 = vadd.f32 0.0, %v6775
    %v6777 = vpop.f32.mrf.mxu0
    %6778 = vmatprep.mubr.bf16.mxu0 0
    %6779 = vmatmul.mubr.bf16.gmra.mxu0 %v6432
    %v6780 = vpop.f32.mrf.mxu0
    %v6781 = vadd.f32 0.0, %v6780
    %v6782 = vpop.f32.mrf.mxu0
    %v6783 = vpop.f32.mrf.mxu0
    %v6784 = vadd.f32 0.0, %v6783
    %v6785 = vpop.f32.mrf.mxu0
    %6786 = vdwg.mxu0
    %v6787 = vadd.f32 %v6083, %v6533
    %v6788 = vadd.f32 %v6086, %v6536
    %v6789 = vadd.f32 %v6091, %v6541
    %v6790 = vadd.f32 %v6094, %v6544
    %v6791 = vadd.f32 %v6099, %v6549
    %v6792 = vadd.f32 %v6102, %v6552
    %v6793 = vadd.f32 %v6107, %v6557
    %v6794 = vadd.f32 %v6110, %v6560
    %v6795 = vadd.f32 %v6115, %v6565
    %v6796 = vadd.f32 %v6118, %v6568
    %v6797 = vadd.f32 %v6123, %v6573
    %v6798 = vadd.f32 %v6126, %v6576
    %v6799 = vadd.f32 %v6131, %v6581
    %v6800 = vadd.f32 %v6134, %v6584
    %v6801 = vadd.f32 %v6139, %v6589
    %v6802 = vadd.f32 %v6142, %v6592
    %v6803 = vadd.f32 %v6147, %v6597
    %v6804 = vadd.f32 %v6150, %v6600
    %v6805 = vadd.f32 %v6155, %v6605
    %v6806 = vadd.f32 %v6158, %v6608
    %v6807 = vadd.f32 %v6163, %v6613
    %v6808 = vadd.f32 %v6166, %v6616
    %v6809 = vadd.f32 %v6171, %v6621
    %v6810 = vadd.f32 %v6174, %v6624
    %v6811 = vadd.f32 %v6179, %v6629
    %v6812 = vadd.f32 %v6182, %v6632
    %v6813 = vadd.f32 %v6187, %v6637
    %v6814 = vadd.f32 %v6190, %v6640
    %v6815 = vadd.f32 %v6195, %v6645
    %v6816 = vadd.f32 %v6198, %v6648
    %v6817 = vadd.f32 %v6203, %v6653
    %v6818 = vadd.f32 %v6206, %v6656
    %v6819 = vadd.f32 %v6211, %v6661
    %v6820 = vadd.f32 %v6214, %v6664
    %v6821 = vadd.f32 %v6219, %v6669
    %v6822 = vadd.f32 %v6222, %v6672
    %v6823 = vadd.f32 %v6227, %v6677
    %v6824 = vadd.f32 %v6230, %v6680
    %v6825 = vadd.f32 %v6235, %v6685
    %v6826 = vadd.f32 %v6238, %v6688
    %v6827 = vadd.f32 %v6243, %v6693
    %v6828 = vadd.f32 %v6246, %v6696
    %v6829 = vadd.f32 %v6251, %v6701
    %v6830 = vadd.f32 %v6254, %v6704
    %v6831 = vadd.f32 %v6259, %v6709
    %v6832 = vadd.f32 %v6262, %v6712
    %v6833 = vadd.f32 %v6267, %v6717
    %v6834 = vadd.f32 %v6270, %v6720
    %v6835 = vadd.f32 %v6275, %v6725
    %v6836 = vadd.f32 %v6278, %v6728
    %v6837 = vadd.f32 %v6283, %v6733
    %v6838 = vadd.f32 %v6286, %v6736
    %v6839 = vadd.f32 %v6291, %v6741
    %v6840 = vadd.f32 %v6294, %v6744
    %v6841 = vadd.f32 %v6299, %v6749
    %v6842 = vadd.f32 %v6302, %v6752
    %v6843 = vadd.f32 %v6307, %v6757
    %v6844 = vadd.f32 %v6310, %v6760
    %v6845 = vadd.f32 %v6315, %v6765
    %v6846 = vadd.f32 %v6318, %v6768
    %v6847 = vadd.f32 %v6323, %v6773
    %v6848 = vadd.f32 %v6326, %v6776
    %v6849 = vadd.f32 %v6331, %v6781
    %v6850 = vadd.f32 %v6334, %v6784
    %v6851 = vld [vmem:[%s5373] sm:$0xff]
    %v6852 = vld [vmem:[%s5373 + $0x8] sm:$0xff]
    %v6853 = vld [vmem:[%s5373 + $0x18] sm:$0xff]
    %v6854 = vld [vmem:[%s5373 + $0x20] sm:$0xff]
    %v6855 = vld [vmem:[%s5373 + $0x30] sm:$0xff]
    %v6856 = vld [vmem:[%s5373 + $0x38] sm:$0xff]
    %v6857 = vld [vmem:[%s5373 + $0x48] sm:$0xff]
    %v6858 = vld [vmem:[%s5373 + $0x50] sm:$0xff]
    %v6859 = vld [vmem:[%s5373 + $0x60] sm:$0xff]
    %v6860 = vld [vmem:[%s5373 + $0x68] sm:$0xff]
    %v6861 = vld [vmem:[%s5373 + $0x78] sm:$0xff]
    %v6862 = vld [vmem:[%s5373 + $0x80] sm:$0xff]
    %v6863 = vld [vmem:[%s5373 + $0x90] sm:$0xff]
    %v6864 = vld [vmem:[%s5373 + $0x98] sm:$0xff]
    %v6865 = vld [vmem:[%s5373 + $0xa8] sm:$0xff]
    %v6866 = vld [vmem:[%s5373 + $0xb0] sm:$0xff]
    %v6867 = vld [vmem:[%s5373 + $0xc0] sm:$0xff]
    %v6868 = vld [vmem:[%s5373 + $0xc8] sm:$0xff]
    %v6869 = vld [vmem:[%s5373 + $0xd8] sm:$0xff]
    %v6870 = vld [vmem:[%s5373 + $0xe0] sm:$0xff]
    %v6871 = vld [vmem:[%s5373 + $0xf0] sm:$0xff]
    %v6872 = vld [vmem:[%s5373 + $0xf8] sm:$0xff]
    %v6873 = vld [vmem:[%s5373 + $0x108] sm:$0xff]
    %v6874 = vld [vmem:[%s5373 + $0x110] sm:$0xff]
    %v6875 = vld [vmem:[%s5373 + $0x120] sm:$0xff]
    %v6876 = vld [vmem:[%s5373 + $0x128] sm:$0xff]
    %v6877 = vld [vmem:[%s5373 + $0x138] sm:$0xff]
    %v6878 = vld [vmem:[%s5373 + $0x140] sm:$0xff]
    %v6879 = vld [vmem:[%s5373 + $0x150] sm:$0xff]
    %v6880 = vld [vmem:[%s5373 + $0x158] sm:$0xff]
    %v6881 = vld [vmem:[%s5373 + $0x168] sm:$0xff]
    %v6882 = vld [vmem:[%s5373 + $0x170] sm:$0xff]
    %v6883 = vld [vmem:[%s5373 + $0x1b0] sm:$0xff]
    %v6884 = vld [vmem:[%s5373 + $0x1b8] sm:$0xff]
    %v6885 = vld [vmem:[%s5373 + $0x1c8] sm:$0xff]
    %v6886 = vld [vmem:[%s5373 + $0x1d0] sm:$0xff]
    %v6887 = vld [vmem:[%s5373 + $0x1e0] sm:$0xff]
    %v6888 = vld [vmem:[%s5373 + $0x1e8] sm:$0xff]
    %v6889 = vld [vmem:[%s5373 + $0x1f8] sm:$0xff]
    %v6890 = vld [vmem:[%s5373 + $0x200] sm:$0xff]
    %v6891 = vld [vmem:[%s5373 + $0x210] sm:$0xff]
    %v6892 = vld [vmem:[%s5373 + $0x218] sm:$0xff]
    %v6893 = vld [vmem:[%s5373 + $0x228] sm:$0xff]
    %v6894 = vld [vmem:[%s5373 + $0x230] sm:$0xff]
    %v6895 = vld [vmem:[%s5373 + $0x240] sm:$0xff]
    %v6896 = vld [vmem:[%s5373 + $0x248] sm:$0xff]
    %v6897 = vld [vmem:[%s5373 + $0x258] sm:$0xff]
    %v6898 = vld [vmem:[%s5373 + $0x260] sm:$0xff]
    %v6899 = vld [vmem:[%s5373 + $0x270] sm:$0xff]
    %v6900 = vld [vmem:[%s5373 + $0x278] sm:$0xff]
    %v6901 = vld [vmem:[%s5373 + $0x288] sm:$0xff]
    %v6902 = vld [vmem:[%s5373 + $0x290] sm:$0xff]
    %v6903 = vld [vmem:[%s5373 + $0x2a0] sm:$0xff]
    %v6904 = vld [vmem:[%s5373 + $0x2a8] sm:$0xff]
    %v6905 = vld [vmem:[%s5373 + $0x2b8] sm:$0xff]
    %v6906 = vld [vmem:[%s5373 + $0x2c0] sm:$0xff]
    %v6907 = vld [vmem:[%s5373 + $0x2d0] sm:$0xff]
    %v6908 = vld [vmem:[%s5373 + $0x2d8] sm:$0xff]
    %v6909 = vld [vmem:[%s5373 + $0x2e8] sm:$0xff]
    %v6910 = vld [vmem:[%s5373 + $0x2f0] sm:$0xff]
    %v6911 = vld [vmem:[%s5373 + $0x300] sm:$0xff]
    %v6912 = vld [vmem:[%s5373 + $0x308] sm:$0xff]
    %v6913 = vld [vmem:[%s5373 + $0x318] sm:$0xff]
    %v6914 = vld [vmem:[%s5373 + $0x320] sm:$0xff]
    %v6915 = vpack.c.bf16 %v6852, %v6851
    %v6916 = vpack.c.bf16 %v6854, %v6853
    %v6917 = vpack.c.bf16 %v6856, %v6855
    %v6918 = vpack.c.bf16 %v6858, %v6857
    %v6919 = vpack.c.bf16 %v6860, %v6859
    %v6920 = vpack.c.bf16 %v6862, %v6861
    %v6921 = vpack.c.bf16 %v6864, %v6863
    %v6922 = vpack.c.bf16 %v6866, %v6865
    %v6923 = vpack.c.bf16 %v6868, %v6867
    %v6924 = vpack.c.bf16 %v6870, %v6869
    %v6925 = vpack.c.bf16 %v6872, %v6871
    %v6926 = vpack.c.bf16 %v6874, %v6873
    %v6927 = vpack.c.bf16 %v6876, %v6875
    %v6928 = vpack.c.bf16 %v6878, %v6877
    %v6929 = vpack.c.bf16 %v6880, %v6879
    %v6930 = vpack.c.bf16 %v6882, %v6881
    %v6931 = vpack.c.bf16 %v6884, %v6883
    %v6932 = vpack.c.bf16 %v6886, %v6885
    %v6933 = vpack.c.bf16 %v6888, %v6887
    %v6934 = vpack.c.bf16 %v6890, %v6889
    %v6935 = vpack.c.bf16 %v6892, %v6891
    %v6936 = vpack.c.bf16 %v6894, %v6893
    %v6937 = vpack.c.bf16 %v6896, %v6895
    %v6938 = vpack.c.bf16 %v6898, %v6897
    %v6939 = vpack.c.bf16 %v6900, %v6899
    %v6940 = vpack.c.bf16 %v6902, %v6901
    %v6941 = vpack.c.bf16 %v6904, %v6903
    %v6942 = vpack.c.bf16 %v6906, %v6905
    %v6943 = vpack.c.bf16 %v6908, %v6907
    %v6944 = vpack.c.bf16 %v6910, %v6909
    %v6945 = vpack.c.bf16 %v6912, %v6911
    %v6946 = vpack.c.bf16 %v6914, %v6913
    %s6947 = scalar_lea.vmem %s6, 192
    %v6948 = vld [vmem:[%s6947] sm:$0xf]
    %v6949 = vld [vmem:[%s6947 + $0x4] sm:$0xf]
    %v6950 = vld [vmem:[%s6947 + $0x8] sm:$0xf]
    %v6951 = vld [vmem:[%s6947 + $0xc] sm:$0xf]
    %v6952 = vld [vmem:[%s6947 + $0x10] sm:$0xf]
    %v6953 = vld [vmem:[%s6947 + $0x14] sm:$0xf]
    %v6954 = vld [vmem:[%s6947 + $0x18] sm:$0xf]
    %v6955 = vld [vmem:[%s6947 + $0x1c] sm:$0xf]
    %v6956 = vld [vmem:[%s6947 + $0x20] sm:$0xf]
    %v6957 = vld [vmem:[%s6947 + $0x24] sm:$0xf]
    %v6958 = vld [vmem:[%s6947 + $0x28] sm:$0xf]
    %v6959 = vld [vmem:[%s6947 + $0x2c] sm:$0xf]
    %v6960 = vld [vmem:[%s6947 + $0x30] sm:$0xf]
    %v6961 = vld [vmem:[%s6947 + $0x34] sm:$0xf]
    %v6962 = vld [vmem:[%s6947 + $0x38] sm:$0xf]
    %v6963 = vld [vmem:[%s6947 + $0x3c] sm:$0xf]
    %v6980 = vunpack.c.l.b16 %v6948
    %v6981 = vunpack.c.l.b16 %v6949
    %v6982 = vunpack.c.l.b16 %v6950
    %v6983 = vunpack.c.l.b16 %v6951
    %v6984 = vunpack.c.l.b16 %v6952
    %v6985 = vunpack.c.l.b16 %v6953
    %v6986 = vunpack.c.l.b16 %v6954
    %v6987 = vunpack.c.l.b16 %v6955
    %v6988 = vunpack.c.l.b16 %v6956
    %v6989 = vunpack.c.l.b16 %v6957
    %v6990 = vunpack.c.l.b16 %v6958
    %v6991 = vunpack.c.l.b16 %v6959
    %v6992 = vunpack.c.l.b16 %v6960
    %v6993 = vunpack.c.l.b16 %v6961
    %v6994 = vunpack.c.l.b16 %v6962
    %v6995 = vunpack.c.l.b16 %v6963
    %v6996 = vpack.c.b16 %v6981, %v6980
    %v6997 = vpack.c.b16 %v6983, %v6982
    %v6998 = vpack.c.b16 %v6985, %v6984
    %v6999 = vpack.c.b16 %v6987, %v6986
    %v7000 = vpack.c.b16 %v6989, %v6988
    %v7001 = vpack.c.b16 %v6991, %v6990
    %v7002 = vpack.c.b16 %v6993, %v6992
    %v7003 = vpack.c.b16 %v6995, %v6994
    %7012 = vmatprep.subr.bf16.mxu0 0
    %7013 = vmatpush1.bf16.msra.mxu0 %v7003
    %7014 = vmatprep.subr.bf16.mxu0 0
    %7015 = vmatpush1.bf16.msra.mxu0 %v7002
    %7016 = vmatprep.subr.bf16.mxu0 0
    %7017 = vmatpush1.bf16.msra.mxu0 %v7001
    %7018 = vmatprep.subr.bf16.mxu0 0
    %7019 = vmatpush1.bf16.msra.mxu0 %v7000
    %7020 = vmatprep.subr.bf16.mxu0 0
    %7021 = vmatpush1.bf16.msra.mxu0 %v6999
    %7022 = vmatprep.subr.bf16.mxu0 0
    %7023 = vmatpush1.bf16.msra.mxu0 %v6998
    %7024 = vmatprep.subr.bf16.mxu0 0
    %7025 = vmatpush1.bf16.msra.mxu0 %v6997
    %7026 = vmatprep.subr.bf16.mxu0 0
    %7027 = vmatpush1.bf16.msra.mxu0 %v6996
    %7028 = vmatprep.subr.bf16.mxu0 0
    %7029 = vmatpush2.bf16.msra.mxu0 0
    %7030 = vmatprep.subr.bf16.mxu0 0
    %7031 = vmatpush2.bf16.msra.mxu0 0
    %7032 = vmatprep.subr.bf16.mxu0 0
    %7033 = vmatpush2.bf16.msra.mxu0 0
    %7034 = vmatprep.subr.bf16.mxu0 0
    %7035 = vmatpush2.bf16.msra.mxu0 0
    %7036 = vmatprep.subr.bf16.mxu0 0
    %7037 = vmatpush2.bf16.msra.mxu0 0
    %7038 = vmatprep.subr.bf16.mxu0 0
    %7039 = vmatpush2.bf16.msra.mxu0 0
    %7040 = vmatprep.subr.bf16.mxu0 0
    %7041 = vmatpush2.bf16.msra.mxu0 0
    %7042 = vmatprep.subr.bf16.mxu0 0
    %7043 = vmatpush2.bf16.msra.mxu0 0
    %7044 = vmatprep.mubr.bf16.mxu0 0
    %7045 = vmatmul.mubr.bf16.gmra.mxu0 %v6915
    %v7046 = vpop.f32.mrf.mxu0
    %v7047 = vadd.f32 0.0, %v7046
    %v7048 = vpop.f32.mrf.mxu0
    %v7049 = vpop.f32.mrf.mxu0
    %v7050 = vadd.f32 0.0, %v7049
    %v7051 = vpop.f32.mrf.mxu0
    %7052 = vmatprep.mubr.bf16.mxu0 0
    %7053 = vmatmul.mubr.bf16.gmra.mxu0 %v6916
    %v7054 = vpop.f32.mrf.mxu0
    %v7055 = vadd.f32 0.0, %v7054
    %v7056 = vpop.f32.mrf.mxu0
    %v7057 = vpop.f32.mrf.mxu0
    %v7058 = vadd.f32 0.0, %v7057
    %v7059 = vpop.f32.mrf.mxu0
    %7060 = vmatprep.mubr.bf16.mxu0 0
    %7061 = vmatmul.mubr.bf16.gmra.mxu0 %v6917
    %v7062 = vpop.f32.mrf.mxu0
    %v7063 = vadd.f32 0.0, %v7062
    %v7064 = vpop.f32.mrf.mxu0
    %v7065 = vpop.f32.mrf.mxu0
    %v7066 = vadd.f32 0.0, %v7065
    %v7067 = vpop.f32.mrf.mxu0
    %7068 = vmatprep.mubr.bf16.mxu0 0
    %7069 = vmatmul.mubr.bf16.gmra.mxu0 %v6918
    %v7070 = vpop.f32.mrf.mxu0
    %v7071 = vadd.f32 0.0, %v7070
    %v7072 = vpop.f32.mrf.mxu0
    %v7073 = vpop.f32.mrf.mxu0
    %v7074 = vadd.f32 0.0, %v7073
    %v7075 = vpop.f32.mrf.mxu0
    %7076 = vmatprep.mubr.bf16.mxu0 0
    %7077 = vmatmul.mubr.bf16.gmra.mxu0 %v6919
    %v7078 = vpop.f32.mrf.mxu0
    %v7079 = vadd.f32 0.0, %v7078
    %v7080 = vpop.f32.mrf.mxu0
    %v7081 = vpop.f32.mrf.mxu0
    %v7082 = vadd.f32 0.0, %v7081
    %v7083 = vpop.f32.mrf.mxu0
    %7084 = vmatprep.mubr.bf16.mxu0 0
    %7085 = vmatmul.mubr.bf16.gmra.mxu0 %v6920
    %v7086 = vpop.f32.mrf.mxu0
    %v7087 = vadd.f32 0.0, %v7086
    %v7088 = vpop.f32.mrf.mxu0
    %v7089 = vpop.f32.mrf.mxu0
    %v7090 = vadd.f32 0.0, %v7089
    %v7091 = vpop.f32.mrf.mxu0
    %7092 = vmatprep.mubr.bf16.mxu0 0
    %7093 = vmatmul.mubr.bf16.gmra.mxu0 %v6921
    %v7094 = vpop.f32.mrf.mxu0
    %v7095 = vadd.f32 0.0, %v7094
    %v7096 = vpop.f32.mrf.mxu0
    %v7097 = vpop.f32.mrf.mxu0
    %v7098 = vadd.f32 0.0, %v7097
    %v7099 = vpop.f32.mrf.mxu0
    %7100 = vmatprep.mubr.bf16.mxu0 0
    %7101 = vmatmul.mubr.bf16.gmra.mxu0 %v6922
    %v7102 = vpop.f32.mrf.mxu0
    %v7103 = vadd.f32 0.0, %v7102
    %v7104 = vpop.f32.mrf.mxu0
    %v7105 = vpop.f32.mrf.mxu0
    %v7106 = vadd.f32 0.0, %v7105
    %v7107 = vpop.f32.mrf.mxu0
    %7108 = vmatprep.mubr.bf16.mxu0 0
    %7109 = vmatmul.mubr.bf16.gmra.mxu0 %v6923
    %v7110 = vpop.f32.mrf.mxu0
    %v7111 = vadd.f32 0.0, %v7110
    %v7112 = vpop.f32.mrf.mxu0
    %v7113 = vpop.f32.mrf.mxu0
    %v7114 = vadd.f32 0.0, %v7113
    %v7115 = vpop.f32.mrf.mxu0
    %7116 = vmatprep.mubr.bf16.mxu0 0
    %7117 = vmatmul.mubr.bf16.gmra.mxu0 %v6924
    %v7118 = vpop.f32.mrf.mxu0
    %v7119 = vadd.f32 0.0, %v7118
    %v7120 = vpop.f32.mrf.mxu0
    %v7121 = vpop.f32.mrf.mxu0
    %v7122 = vadd.f32 0.0, %v7121
    %v7123 = vpop.f32.mrf.mxu0
    %7124 = vmatprep.mubr.bf16.mxu0 0
    %7125 = vmatmul.mubr.bf16.gmra.mxu0 %v6925
    %v7126 = vpop.f32.mrf.mxu0
    %v7127 = vadd.f32 0.0, %v7126
    %v7128 = vpop.f32.mrf.mxu0
    %v7129 = vpop.f32.mrf.mxu0
    %v7130 = vadd.f32 0.0, %v7129
    %v7131 = vpop.f32.mrf.mxu0
    %7132 = vmatprep.mubr.bf16.mxu0 0
    %7133 = vmatmul.mubr.bf16.gmra.mxu0 %v6926
    %v7134 = vpop.f32.mrf.mxu0
    %v7135 = vadd.f32 0.0, %v7134
    %v7136 = vpop.f32.mrf.mxu0
    %v7137 = vpop.f32.mrf.mxu0
    %v7138 = vadd.f32 0.0, %v7137
    %v7139 = vpop.f32.mrf.mxu0
    %7140 = vmatprep.mubr.bf16.mxu0 0
    %7141 = vmatmul.mubr.bf16.gmra.mxu0 %v6927
    %v7142 = vpop.f32.mrf.mxu0
    %v7143 = vadd.f32 0.0, %v7142
    %v7144 = vpop.f32.mrf.mxu0
    %v7145 = vpop.f32.mrf.mxu0
    %v7146 = vadd.f32 0.0, %v7145
    %v7147 = vpop.f32.mrf.mxu0
    %7148 = vmatprep.mubr.bf16.mxu0 0
    %7149 = vmatmul.mubr.bf16.gmra.mxu0 %v6928
    %v7150 = vpop.f32.mrf.mxu0
    %v7151 = vadd.f32 0.0, %v7150
    %v7152 = vpop.f32.mrf.mxu0
    %v7153 = vpop.f32.mrf.mxu0
    %v7154 = vadd.f32 0.0, %v7153
    %v7155 = vpop.f32.mrf.mxu0
    %7156 = vmatprep.mubr.bf16.mxu0 0
    %7157 = vmatmul.mubr.bf16.gmra.mxu0 %v6929
    %v7158 = vpop.f32.mrf.mxu0
    %v7159 = vadd.f32 0.0, %v7158
    %v7160 = vpop.f32.mrf.mxu0
    %v7161 = vpop.f32.mrf.mxu0
    %v7162 = vadd.f32 0.0, %v7161
    %v7163 = vpop.f32.mrf.mxu0
    %7164 = vmatprep.mubr.bf16.mxu0 0
    %7165 = vmatmul.mubr.bf16.gmra.mxu0 %v6930
    %v7166 = vpop.f32.mrf.mxu0
    %v7167 = vadd.f32 0.0, %v7166
    %v7168 = vpop.f32.mrf.mxu0
    %v7169 = vpop.f32.mrf.mxu0
    %v7170 = vadd.f32 0.0, %v7169
    %v7171 = vpop.f32.mrf.mxu0
    %7172 = vmatprep.mubr.bf16.mxu0 0
    %7173 = vmatmul.mubr.bf16.gmra.mxu0 %v6931
    %v7174 = vpop.f32.mrf.mxu0
    %v7175 = vadd.f32 0.0, %v7174
    %v7176 = vpop.f32.mrf.mxu0
    %v7177 = vpop.f32.mrf.mxu0
    %v7178 = vadd.f32 0.0, %v7177
    %v7179 = vpop.f32.mrf.mxu0
    %7180 = vmatprep.mubr.bf16.mxu0 0
    %7181 = vmatmul.mubr.bf16.gmra.mxu0 %v6932
    %v7182 = vpop.f32.mrf.mxu0
    %v7183 = vadd.f32 0.0, %v7182
    %v7184 = vpop.f32.mrf.mxu0
    %v7185 = vpop.f32.mrf.mxu0
    %v7186 = vadd.f32 0.0, %v7185
    %v7187 = vpop.f32.mrf.mxu0
    %7188 = vmatprep.mubr.bf16.mxu0 0
    %7189 = vmatmul.mubr.bf16.gmra.mxu0 %v6933
    %v7190 = vpop.f32.mrf.mxu0
    %v7191 = vadd.f32 0.0, %v7190
    %v7192 = vpop.f32.mrf.mxu0
    %v7193 = vpop.f32.mrf.mxu0
    %v7194 = vadd.f32 0.0, %v7193
    %v7195 = vpop.f32.mrf.mxu0
    %7196 = vmatprep.mubr.bf16.mxu0 0
    %7197 = vmatmul.mubr.bf16.gmra.mxu0 %v6934
    %v7198 = vpop.f32.mrf.mxu0
    %v7199 = vadd.f32 0.0, %v7198
    %v7200 = vpop.f32.mrf.mxu0
    %v7201 = vpop.f32.mrf.mxu0
    %v7202 = vadd.f32 0.0, %v7201
    %v7203 = vpop.f32.mrf.mxu0
    %7204 = vmatprep.mubr.bf16.mxu0 0
    %7205 = vmatmul.mubr.bf16.gmra.mxu0 %v6935
    %v7206 = vpop.f32.mrf.mxu0
    %v7207 = vadd.f32 0.0, %v7206
    %v7208 = vpop.f32.mrf.mxu0
    %v7209 = vpop.f32.mrf.mxu0
    %v7210 = vadd.f32 0.0, %v7209
    %v7211 = vpop.f32.mrf.mxu0
    %7212 = vmatprep.mubr.bf16.mxu0 0
    %7213 = vmatmul.mubr.bf16.gmra.mxu0 %v6936
    %v7214 = vpop.f32.mrf.mxu0
    %v7215 = vadd.f32 0.0, %v7214
    %v7216 = vpop.f32.mrf.mxu0
    %v7217 = vpop.f32.mrf.mxu0
    %v7218 = vadd.f32 0.0, %v7217
    %v7219 = vpop.f32.mrf.mxu0
    %7220 = vmatprep.mubr.bf16.mxu0 0
    %7221 = vmatmul.mubr.bf16.gmra.mxu0 %v6937
    %v7222 = vpop.f32.mrf.mxu0
    %v7223 = vadd.f32 0.0, %v7222
    %v7224 = vpop.f32.mrf.mxu0
    %v7225 = vpop.f32.mrf.mxu0
    %v7226 = vadd.f32 0.0, %v7225
    %v7227 = vpop.f32.mrf.mxu0
    %7228 = vmatprep.mubr.bf16.mxu0 0
    %7229 = vmatmul.mubr.bf16.gmra.mxu0 %v6938
    %v7230 = vpop.f32.mrf.mxu0
    %v7231 = vadd.f32 0.0, %v7230
    %v7232 = vpop.f32.mrf.mxu0
    %v7233 = vpop.f32.mrf.mxu0
    %v7234 = vadd.f32 0.0, %v7233
    %v7235 = vpop.f32.mrf.mxu0
    %7236 = vmatprep.mubr.bf16.mxu0 0
    %7237 = vmatmul.mubr.bf16.gmra.mxu0 %v6939
    %v7238 = vpop.f32.mrf.mxu0
    %v7239 = vadd.f32 0.0, %v7238
    %v7240 = vpop.f32.mrf.mxu0
    %v7241 = vpop.f32.mrf.mxu0
    %v7242 = vadd.f32 0.0, %v7241
    %v7243 = vpop.f32.mrf.mxu0
    %7244 = vmatprep.mubr.bf16.mxu0 0
    %7245 = vmatmul.mubr.bf16.gmra.mxu0 %v6940
    %v7246 = vpop.f32.mrf.mxu0
    %v7247 = vadd.f32 0.0, %v7246
    %v7248 = vpop.f32.mrf.mxu0
    %v7249 = vpop.f32.mrf.mxu0
    %v7250 = vadd.f32 0.0, %v7249
    %v7251 = vpop.f32.mrf.mxu0
    %7252 = vmatprep.mubr.bf16.mxu0 0
    %7253 = vmatmul.mubr.bf16.gmra.mxu0 %v6941
    %v7254 = vpop.f32.mrf.mxu0
    %v7255 = vadd.f32 0.0, %v7254
    %v7256 = vpop.f32.mrf.mxu0
    %v7257 = vpop.f32.mrf.mxu0
    %v7258 = vadd.f32 0.0, %v7257
    %v7259 = vpop.f32.mrf.mxu0
    %7260 = vmatprep.mubr.bf16.mxu0 0
    %7261 = vmatmul.mubr.bf16.gmra.mxu0 %v6942
    %v7262 = vpop.f32.mrf.mxu0
    %v7263 = vadd.f32 0.0, %v7262
    %v7264 = vpop.f32.mrf.mxu0
    %v7265 = vpop.f32.mrf.mxu0
    %v7266 = vadd.f32 0.0, %v7265
    %v7267 = vpop.f32.mrf.mxu0
    %7268 = vmatprep.mubr.bf16.mxu0 0
    %7269 = vmatmul.mubr.bf16.gmra.mxu0 %v6943
    %v7270 = vpop.f32.mrf.mxu0
    %v7271 = vadd.f32 0.0, %v7270
    %v7272 = vpop.f32.mrf.mxu0
    %v7273 = vpop.f32.mrf.mxu0
    %v7274 = vadd.f32 0.0, %v7273
    %v7275 = vpop.f32.mrf.mxu0
    %7276 = vmatprep.mubr.bf16.mxu0 0
    %7277 = vmatmul.mubr.bf16.gmra.mxu0 %v6944
    %v7278 = vpop.f32.mrf.mxu0
    %v7279 = vadd.f32 0.0, %v7278
    %v7280 = vpop.f32.mrf.mxu0
    %v7281 = vpop.f32.mrf.mxu0
    %v7282 = vadd.f32 0.0, %v7281
    %v7283 = vpop.f32.mrf.mxu0
    %7284 = vmatprep.mubr.bf16.mxu0 0
    %7285 = vmatmul.mubr.bf16.gmra.mxu0 %v6945
    %v7286 = vpop.f32.mrf.mxu0
    %v7287 = vadd.f32 0.0, %v7286
    %v7288 = vpop.f32.mrf.mxu0
    %v7289 = vpop.f32.mrf.mxu0
    %v7290 = vadd.f32 0.0, %v7289
    %v7291 = vpop.f32.mrf.mxu0
    %7292 = vmatprep.mubr.bf16.mxu0 0
    %7293 = vmatmul.mubr.bf16.gmra.mxu0 %v6946
    %v7294 = vpop.f32.mrf.mxu0
    %v7295 = vadd.f32 0.0, %v7294
    %v7296 = vpop.f32.mrf.mxu0
    %v7297 = vpop.f32.mrf.mxu0
    %v7298 = vadd.f32 0.0, %v7297
    %v7299 = vpop.f32.mrf.mxu0
    %7300 = vdwg.mxu0
    %v7301 = vadd.f32 %v6787, %v7047
    %v7302 = vadd.f32 %v6788, %v7050
    %v7303 = vadd.f32 %v6789, %v7055
    %v7304 = vadd.f32 %v6790, %v7058
    %v7305 = vadd.f32 %v6791, %v7063
    %v7306 = vadd.f32 %v6792, %v7066
    %v7307 = vadd.f32 %v6793, %v7071
    %v7308 = vadd.f32 %v6794, %v7074
    %v7309 = vadd.f32 %v6795, %v7079
    %v7310 = vadd.f32 %v6796, %v7082
    %v7311 = vadd.f32 %v6797, %v7087
    %v7312 = vadd.f32 %v6798, %v7090
    %v7313 = vadd.f32 %v6799, %v7095
    %v7314 = vadd.f32 %v6800, %v7098
    %v7315 = vadd.f32 %v6801, %v7103
    %v7316 = vadd.f32 %v6802, %v7106
    %v7317 = vadd.f32 %v6803, %v7111
    %v7318 = vadd.f32 %v6804, %v7114
    %v7319 = vadd.f32 %v6805, %v7119
    %v7320 = vadd.f32 %v6806, %v7122
    %v7321 = vadd.f32 %v6807, %v7127
    %v7322 = vadd.f32 %v6808, %v7130
    %v7323 = vadd.f32 %v6809, %v7135
    %v7324 = vadd.f32 %v6810, %v7138
    %v7325 = vadd.f32 %v6811, %v7143
    %v7326 = vadd.f32 %v6812, %v7146
    %v7327 = vadd.f32 %v6813, %v7151
    %v7328 = vadd.f32 %v6814, %v7154
    %v7329 = vadd.f32 %v6815, %v7159
    %v7330 = vadd.f32 %v6816, %v7162
    %v7331 = vadd.f32 %v6817, %v7167
    %v7332 = vadd.f32 %v6818, %v7170
    %v7333 = vadd.f32 %v6819, %v7175
    %v7334 = vadd.f32 %v6820, %v7178
    %v7335 = vadd.f32 %v6821, %v7183
    %v7336 = vadd.f32 %v6822, %v7186
    %v7337 = vadd.f32 %v6823, %v7191
    %v7338 = vadd.f32 %v6824, %v7194
    %v7339 = vadd.f32 %v6825, %v7199
    %v7340 = vadd.f32 %v6826, %v7202
    %v7341 = vadd.f32 %v6827, %v7207
    %v7342 = vadd.f32 %v6828, %v7210
    %v7343 = vadd.f32 %v6829, %v7215
    %v7344 = vadd.f32 %v6830, %v7218
    %v7345 = vadd.f32 %v6831, %v7223
    %v7346 = vadd.f32 %v6832, %v7226
    %v7347 = vadd.f32 %v6833, %v7231
    %v7348 = vadd.f32 %v6834, %v7234
    %v7349 = vadd.f32 %v6835, %v7239
    %v7350 = vadd.f32 %v6836, %v7242
    %v7351 = vadd.f32 %v6837, %v7247
    %v7352 = vadd.f32 %v6838, %v7250
    %v7353 = vadd.f32 %v6839, %v7255
    %v7354 = vadd.f32 %v6840, %v7258
    %v7355 = vadd.f32 %v6841, %v7263
    %v7356 = vadd.f32 %v6842, %v7266
    %v7357 = vadd.f32 %v6843, %v7271
    %v7358 = vadd.f32 %v6844, %v7274
    %v7359 = vadd.f32 %v6845, %v7279
    %v7360 = vadd.f32 %v6846, %v7282
    %v7361 = vadd.f32 %v6847, %v7287
    %v7362 = vadd.f32 %v6848, %v7290
    %v7363 = vadd.f32 %v6849, %v7295
    %v7364 = vadd.f32 %v6850, %v7298
    %v7365 = vld [vmem:[%s5373 + $0x1] sm:$0xff]
    %v7366 = vld [vmem:[%s5373 + $0x9] sm:$0xff]
    %v7367 = vld [vmem:[%s5373 + $0x19] sm:$0xff]
    %v7368 = vld [vmem:[%s5373 + $0x21] sm:$0xff]
    %v7369 = vld [vmem:[%s5373 + $0x31] sm:$0xff]
    %v7370 = vld [vmem:[%s5373 + $0x39] sm:$0xff]
    %v7371 = vld [vmem:[%s5373 + $0x49] sm:$0xff]
    %v7372 = vld [vmem:[%s5373 + $0x51] sm:$0xff]
    %v7373 = vld [vmem:[%s5373 + $0x61] sm:$0xff]
    %v7374 = vld [vmem:[%s5373 + $0x69] sm:$0xff]
    %v7375 = vld [vmem:[%s5373 + $0x79] sm:$0xff]
    %v7376 = vld [vmem:[%s5373 + $0x81] sm:$0xff]
    %v7377 = vld [vmem:[%s5373 + $0x91] sm:$0xff]
    %v7378 = vld [vmem:[%s5373 + $0x99] sm:$0xff]
    %v7379 = vld [vmem:[%s5373 + $0xa9] sm:$0xff]
    %v7380 = vld [vmem:[%s5373 + $0xb1] sm:$0xff]
    %v7381 = vld [vmem:[%s5373 + $0xc1] sm:$0xff]
    %v7382 = vld [vmem:[%s5373 + $0xc9] sm:$0xff]
    %v7383 = vld [vmem:[%s5373 + $0xd9] sm:$0xff]
    %v7384 = vld [vmem:[%s5373 + $0xe1] sm:$0xff]
    %v7385 = vld [vmem:[%s5373 + $0xf1] sm:$0xff]
    %v7386 = vld [vmem:[%s5373 + $0xf9] sm:$0xff]
    %v7387 = vld [vmem:[%s5373 + $0x109] sm:$0xff]
    %v7388 = vld [vmem:[%s5373 + $0x111] sm:$0xff]
    %v7389 = vld [vmem:[%s5373 + $0x121] sm:$0xff]
    %v7390 = vld [vmem:[%s5373 + $0x129] sm:$0xff]
    %v7391 = vld [vmem:[%s5373 + $0x139] sm:$0xff]
    %v7392 = vld [vmem:[%s5373 + $0x141] sm:$0xff]
    %v7393 = vld [vmem:[%s5373 + $0x151] sm:$0xff]
    %v7394 = vld [vmem:[%s5373 + $0x159] sm:$0xff]
    %v7395 = vld [vmem:[%s5373 + $0x169] sm:$0xff]
    %v7396 = vld [vmem:[%s5373 + $0x171] sm:$0xff]
    %v7397 = vld [vmem:[%s5373 + $0x1b1] sm:$0xff]
    %v7398 = vld [vmem:[%s5373 + $0x1b9] sm:$0xff]
    %v7399 = vld [vmem:[%s5373 + $0x1c9] sm:$0xff]
    %v7400 = vld [vmem:[%s5373 + $0x1d1] sm:$0xff]
    %v7401 = vld [vmem:[%s5373 + $0x1e1] sm:$0xff]
    %v7402 = vld [vmem:[%s5373 + $0x1e9] sm:$0xff]
    %v7403 = vld [vmem:[%s5373 + $0x1f9] sm:$0xff]
    %v7404 = vld [vmem:[%s5373 + $0x201] sm:$0xff]
    %v7405 = vld [vmem:[%s5373 + $0x211] sm:$0xff]
    %v7406 = vld [vmem:[%s5373 + $0x219] sm:$0xff]
    %v7407 = vld [vmem:[%s5373 + $0x229] sm:$0xff]
    %v7408 = vld [vmem:[%s5373 + $0x231] sm:$0xff]
    %v7409 = vld [vmem:[%s5373 + $0x241] sm:$0xff]
    %v7410 = vld [vmem:[%s5373 + $0x249] sm:$0xff]
    %v7411 = vld [vmem:[%s5373 + $0x259] sm:$0xff]
    %v7412 = vld [vmem:[%s5373 + $0x261] sm:$0xff]
    %v7413 = vld [vmem:[%s5373 + $0x271] sm:$0xff]
    %v7414 = vld [vmem:[%s5373 + $0x279] sm:$0xff]
    %v7415 = vld [vmem:[%s5373 + $0x289] sm:$0xff]
    %v7416 = vld [vmem:[%s5373 + $0x291] sm:$0xff]
    %v7417 = vld [vmem:[%s5373 + $0x2a1] sm:$0xff]
    %v7418 = vld [vmem:[%s5373 + $0x2a9] sm:$0xff]
    %v7419 = vld [vmem:[%s5373 + $0x2b9] sm:$0xff]
    %v7420 = vld [vmem:[%s5373 + $0x2c1] sm:$0xff]
    %v7421 = vld [vmem:[%s5373 + $0x2d1] sm:$0xff]
    %v7422 = vld [vmem:[%s5373 + $0x2d9] sm:$0xff]
    %v7423 = vld [vmem:[%s5373 + $0x2e9] sm:$0xff]
    %v7424 = vld [vmem:[%s5373 + $0x2f1] sm:$0xff]
    %v7425 = vld [vmem:[%s5373 + $0x301] sm:$0xff]
    %v7426 = vld [vmem:[%s5373 + $0x309] sm:$0xff]
    %v7427 = vld [vmem:[%s5373 + $0x319] sm:$0xff]
    %v7428 = vld [vmem:[%s5373 + $0x321] sm:$0xff]
    %v7429 = vpack.c.bf16 %v7366, %v7365
    %v7430 = vpack.c.bf16 %v7368, %v7367
    %v7431 = vpack.c.bf16 %v7370, %v7369
    %v7432 = vpack.c.bf16 %v7372, %v7371
    %v7433 = vpack.c.bf16 %v7374, %v7373
    %v7434 = vpack.c.bf16 %v7376, %v7375
    %v7435 = vpack.c.bf16 %v7378, %v7377
    %v7436 = vpack.c.bf16 %v7380, %v7379
    %v7437 = vpack.c.bf16 %v7382, %v7381
    %v7438 = vpack.c.bf16 %v7384, %v7383
    %v7439 = vpack.c.bf16 %v7386, %v7385
    %v7440 = vpack.c.bf16 %v7388, %v7387
    %v7441 = vpack.c.bf16 %v7390, %v7389
    %v7442 = vpack.c.bf16 %v7392, %v7391
    %v7443 = vpack.c.bf16 %v7394, %v7393
    %v7444 = vpack.c.bf16 %v7396, %v7395
    %v7445 = vpack.c.bf16 %v7398, %v7397
    %v7446 = vpack.c.bf16 %v7400, %v7399
    %v7447 = vpack.c.bf16 %v7402, %v7401
    %v7448 = vpack.c.bf16 %v7404, %v7403
    %v7449 = vpack.c.bf16 %v7406, %v7405
    %v7450 = vpack.c.bf16 %v7408, %v7407
    %v7451 = vpack.c.bf16 %v7410, %v7409
    %v7452 = vpack.c.bf16 %v7412, %v7411
    %v7453 = vpack.c.bf16 %v7414, %v7413
    %v7454 = vpack.c.bf16 %v7416, %v7415
    %v7455 = vpack.c.bf16 %v7418, %v7417
    %v7456 = vpack.c.bf16 %v7420, %v7419
    %v7457 = vpack.c.bf16 %v7422, %v7421
    %v7458 = vpack.c.bf16 %v7424, %v7423
    %v7459 = vpack.c.bf16 %v7426, %v7425
    %v7460 = vpack.c.bf16 %v7428, %v7427
    %s7461 = scalar_lea.vmem %s6, 256
    %v7462 = vld [vmem:[%s7461] sm:$0xf]
    %v7463 = vld [vmem:[%s7461 + $0x4] sm:$0xf]
    %v7464 = vld [vmem:[%s7461 + $0x8] sm:$0xf]
    %v7465 = vld [vmem:[%s7461 + $0xc] sm:$0xf]
    %v7466 = vld [vmem:[%s7461 + $0x10] sm:$0xf]
    %v7467 = vld [vmem:[%s7461 + $0x14] sm:$0xf]
    %v7468 = vld [vmem:[%s7461 + $0x18] sm:$0xf]
    %v7469 = vld [vmem:[%s7461 + $0x1c] sm:$0xf]
    %v7470 = vld [vmem:[%s7461 + $0x20] sm:$0xf]
    %v7471 = vld [vmem:[%s7461 + $0x24] sm:$0xf]
    %v7472 = vld [vmem:[%s7461 + $0x28] sm:$0xf]
    %v7473 = vld [vmem:[%s7461 + $0x2c] sm:$0xf]
    %v7474 = vld [vmem:[%s7461 + $0x30] sm:$0xf]
    %v7475 = vld [vmem:[%s7461 + $0x34] sm:$0xf]
    %v7476 = vld [vmem:[%s7461 + $0x38] sm:$0xf]
    %v7477 = vld [vmem:[%s7461 + $0x3c] sm:$0xf]
    %v7494 = vunpack.c.l.b16 %v7462
    %v7495 = vunpack.c.l.b16 %v7463
    %v7496 = vunpack.c.l.b16 %v7464
    %v7497 = vunpack.c.l.b16 %v7465
    %v7498 = vunpack.c.l.b16 %v7466
    %v7499 = vunpack.c.l.b16 %v7467
    %v7500 = vunpack.c.l.b16 %v7468
    %v7501 = vunpack.c.l.b16 %v7469
    %v7502 = vunpack.c.l.b16 %v7470
    %v7503 = vunpack.c.l.b16 %v7471
    %v7504 = vunpack.c.l.b16 %v7472
    %v7505 = vunpack.c.l.b16 %v7473
    %v7506 = vunpack.c.l.b16 %v7474
    %v7507 = vunpack.c.l.b16 %v7475
    %v7508 = vunpack.c.l.b16 %v7476
    %v7509 = vunpack.c.l.b16 %v7477
    %v7510 = vpack.c.b16 %v7495, %v7494
    %v7511 = vpack.c.b16 %v7497, %v7496
    %v7512 = vpack.c.b16 %v7499, %v7498
    %v7513 = vpack.c.b16 %v7501, %v7500
    %v7514 = vpack.c.b16 %v7503, %v7502
    %v7515 = vpack.c.b16 %v7505, %v7504
    %v7516 = vpack.c.b16 %v7507, %v7506
    %v7517 = vpack.c.b16 %v7509, %v7508
    %7526 = vmatprep.subr.bf16.mxu0 0
    %7527 = vmatpush1.bf16.msra.mxu0 %v7517
    %7528 = vmatprep.subr.bf16.mxu0 0
    %7529 = vmatpush1.bf16.msra.mxu0 %v7516
    %7530 = vmatprep.subr.bf16.mxu0 0
    %7531 = vmatpush1.bf16.msra.mxu0 %v7515
    %7532 = vmatprep.subr.bf16.mxu0 0
    %7533 = vmatpush1.bf16.msra.mxu0 %v7514
    %7534 = vmatprep.subr.bf16.mxu0 0
    %7535 = vmatpush1.bf16.msra.mxu0 %v7513
    %7536 = vmatprep.subr.bf16.mxu0 0
    %7537 = vmatpush1.bf16.msra.mxu0 %v7512
    %7538 = vmatprep.subr.bf16.mxu0 0
    %7539 = vmatpush1.bf16.msra.mxu0 %v7511
    %7540 = vmatprep.subr.bf16.mxu0 0
    %7541 = vmatpush1.bf16.msra.mxu0 %v7510
    %7542 = vmatprep.subr.bf16.mxu0 0
    %7543 = vmatpush2.bf16.msra.mxu0 0
    %7544 = vmatprep.subr.bf16.mxu0 0
    %7545 = vmatpush2.bf16.msra.mxu0 0
    %7546 = vmatprep.subr.bf16.mxu0 0
    %7547 = vmatpush2.bf16.msra.mxu0 0
    %7548 = vmatprep.subr.bf16.mxu0 0
    %7549 = vmatpush2.bf16.msra.mxu0 0
    %7550 = vmatprep.subr.bf16.mxu0 0
    %7551 = vmatpush2.bf16.msra.mxu0 0
    %7552 = vmatprep.subr.bf16.mxu0 0
    %7553 = vmatpush2.bf16.msra.mxu0 0
    %7554 = vmatprep.subr.bf16.mxu0 0
    %7555 = vmatpush2.bf16.msra.mxu0 0
    %7556 = vmatprep.subr.bf16.mxu0 0
    %7557 = vmatpush2.bf16.msra.mxu0 0
    %7558 = vmatprep.mubr.bf16.mxu0 0
    %7559 = vmatmul.mubr.bf16.gmra.mxu0 %v7429
    %v7560 = vpop.f32.mrf.mxu0
    %v7561 = vadd.f32 0.0, %v7560
    %v7562 = vpop.f32.mrf.mxu0
    %v7563 = vpop.f32.mrf.mxu0
    %v7564 = vadd.f32 0.0, %v7563
    %v7565 = vpop.f32.mrf.mxu0
    %7566 = vmatprep.mubr.bf16.mxu0 0
    %7567 = vmatmul.mubr.bf16.gmra.mxu0 %v7430
    %v7568 = vpop.f32.mrf.mxu0
    %v7569 = vadd.f32 0.0, %v7568
    %v7570 = vpop.f32.mrf.mxu0
    %v7571 = vpop.f32.mrf.mxu0
    %v7572 = vadd.f32 0.0, %v7571
    %v7573 = vpop.f32.mrf.mxu0
    %7574 = vmatprep.mubr.bf16.mxu0 0
    %7575 = vmatmul.mubr.bf16.gmra.mxu0 %v7431
    %v7576 = vpop.f32.mrf.mxu0
    %v7577 = vadd.f32 0.0, %v7576
    %v7578 = vpop.f32.mrf.mxu0
    %v7579 = vpop.f32.mrf.mxu0
    %v7580 = vadd.f32 0.0, %v7579
    %v7581 = vpop.f32.mrf.mxu0
    %7582 = vmatprep.mubr.bf16.mxu0 0
    %7583 = vmatmul.mubr.bf16.gmra.mxu0 %v7432
    %v7584 = vpop.f32.mrf.mxu0
    %v7585 = vadd.f32 0.0, %v7584
    %v7586 = vpop.f32.mrf.mxu0
    %v7587 = vpop.f32.mrf.mxu0
    %v7588 = vadd.f32 0.0, %v7587
    %v7589 = vpop.f32.mrf.mxu0
    %7590 = vmatprep.mubr.bf16.mxu0 0
    %7591 = vmatmul.mubr.bf16.gmra.mxu0 %v7433
    %v7592 = vpop.f32.mrf.mxu0
    %v7593 = vadd.f32 0.0, %v7592
    %v7594 = vpop.f32.mrf.mxu0
    %v7595 = vpop.f32.mrf.mxu0
    %v7596 = vadd.f32 0.0, %v7595
    %v7597 = vpop.f32.mrf.mxu0
    %7598 = vmatprep.mubr.bf16.mxu0 0
    %7599 = vmatmul.mubr.bf16.gmra.mxu0 %v7434
    %v7600 = vpop.f32.mrf.mxu0
    %v7601 = vadd.f32 0.0, %v7600
    %v7602 = vpop.f32.mrf.mxu0
    %v7603 = vpop.f32.mrf.mxu0
    %v7604 = vadd.f32 0.0, %v7603
    %v7605 = vpop.f32.mrf.mxu0
    %7606 = vmatprep.mubr.bf16.mxu0 0
    %7607 = vmatmul.mubr.bf16.gmra.mxu0 %v7435
    %v7608 = vpop.f32.mrf.mxu0
    %v7609 = vadd.f32 0.0, %v7608
    %v7610 = vpop.f32.mrf.mxu0
    %v7611 = vpop.f32.mrf.mxu0
    %v7612 = vadd.f32 0.0, %v7611
    %v7613 = vpop.f32.mrf.mxu0
    %7614 = vmatprep.mubr.bf16.mxu0 0
    %7615 = vmatmul.mubr.bf16.gmra.mxu0 %v7436
    %v7616 = vpop.f32.mrf.mxu0
    %v7617 = vadd.f32 0.0, %v7616
    %v7618 = vpop.f32.mrf.mxu0
    %v7619 = vpop.f32.mrf.mxu0
    %v7620 = vadd.f32 0.0, %v7619
    %v7621 = vpop.f32.mrf.mxu0
    %7622 = vmatprep.mubr.bf16.mxu0 0
    %7623 = vmatmul.mubr.bf16.gmra.mxu0 %v7437
    %v7624 = vpop.f32.mrf.mxu0
    %v7625 = vadd.f32 0.0, %v7624
    %v7626 = vpop.f32.mrf.mxu0
    %v7627 = vpop.f32.mrf.mxu0
    %v7628 = vadd.f32 0.0, %v7627
    %v7629 = vpop.f32.mrf.mxu0
    %7630 = vmatprep.mubr.bf16.mxu0 0
    %7631 = vmatmul.mubr.bf16.gmra.mxu0 %v7438
    %v7632 = vpop.f32.mrf.mxu0
    %v7633 = vadd.f32 0.0, %v7632
    %v7634 = vpop.f32.mrf.mxu0
    %v7635 = vpop.f32.mrf.mxu0
    %v7636 = vadd.f32 0.0, %v7635
    %v7637 = vpop.f32.mrf.mxu0
    %7638 = vmatprep.mubr.bf16.mxu0 0
    %7639 = vmatmul.mubr.bf16.gmra.mxu0 %v7439
    %v7640 = vpop.f32.mrf.mxu0
    %v7641 = vadd.f32 0.0, %v7640
    %v7642 = vpop.f32.mrf.mxu0
    %v7643 = vpop.f32.mrf.mxu0
    %v7644 = vadd.f32 0.0, %v7643
    %v7645 = vpop.f32.mrf.mxu0
    %7646 = vmatprep.mubr.bf16.mxu0 0
    %7647 = vmatmul.mubr.bf16.gmra.mxu0 %v7440
    %v7648 = vpop.f32.mrf.mxu0
    %v7649 = vadd.f32 0.0, %v7648
    %v7650 = vpop.f32.mrf.mxu0
    %v7651 = vpop.f32.mrf.mxu0
    %v7652 = vadd.f32 0.0, %v7651
    %v7653 = vpop.f32.mrf.mxu0
    %7654 = vmatprep.mubr.bf16.mxu0 0
    %7655 = vmatmul.mubr.bf16.gmra.mxu0 %v7441
    %v7656 = vpop.f32.mrf.mxu0
    %v7657 = vadd.f32 0.0, %v7656
    %v7658 = vpop.f32.mrf.mxu0
    %v7659 = vpop.f32.mrf.mxu0
    %v7660 = vadd.f32 0.0, %v7659
    %v7661 = vpop.f32.mrf.mxu0
    %7662 = vmatprep.mubr.bf16.mxu0 0
    %7663 = vmatmul.mubr.bf16.gmra.mxu0 %v7442
    %v7664 = vpop.f32.mrf.mxu0
    %v7665 = vadd.f32 0.0, %v7664
    %v7666 = vpop.f32.mrf.mxu0
    %v7667 = vpop.f32.mrf.mxu0
    %v7668 = vadd.f32 0.0, %v7667
    %v7669 = vpop.f32.mrf.mxu0
    %7670 = vmatprep.mubr.bf16.mxu0 0
    %7671 = vmatmul.mubr.bf16.gmra.mxu0 %v7443
    %v7672 = vpop.f32.mrf.mxu0
    %v7673 = vadd.f32 0.0, %v7672
    %v7674 = vpop.f32.mrf.mxu0
    %v7675 = vpop.f32.mrf.mxu0
    %v7676 = vadd.f32 0.0, %v7675
    %v7677 = vpop.f32.mrf.mxu0
    %7678 = vmatprep.mubr.bf16.mxu0 0
    %7679 = vmatmul.mubr.bf16.gmra.mxu0 %v7444
    %v7680 = vpop.f32.mrf.mxu0
    %v7681 = vadd.f32 0.0, %v7680
    %v7682 = vpop.f32.mrf.mxu0
    %v7683 = vpop.f32.mrf.mxu0
    %v7684 = vadd.f32 0.0, %v7683
    %v7685 = vpop.f32.mrf.mxu0
    %7686 = vmatprep.mubr.bf16.mxu0 0
    %7687 = vmatmul.mubr.bf16.gmra.mxu0 %v7445
    %v7688 = vpop.f32.mrf.mxu0
    %v7689 = vadd.f32 0.0, %v7688
    %v7690 = vpop.f32.mrf.mxu0
    %v7691 = vpop.f32.mrf.mxu0
    %v7692 = vadd.f32 0.0, %v7691
    %v7693 = vpop.f32.mrf.mxu0
    %7694 = vmatprep.mubr.bf16.mxu0 0
    %7695 = vmatmul.mubr.bf16.gmra.mxu0 %v7446
    %v7696 = vpop.f32.mrf.mxu0
    %v7697 = vadd.f32 0.0, %v7696
    %v7698 = vpop.f32.mrf.mxu0
    %v7699 = vpop.f32.mrf.mxu0
    %v7700 = vadd.f32 0.0, %v7699
    %v7701 = vpop.f32.mrf.mxu0
    %7702 = vmatprep.mubr.bf16.mxu0 0
    %7703 = vmatmul.mubr.bf16.gmra.mxu0 %v7447
    %v7704 = vpop.f32.mrf.mxu0
    %v7705 = vadd.f32 0.0, %v7704
    %v7706 = vpop.f32.mrf.mxu0
    %v7707 = vpop.f32.mrf.mxu0
    %v7708 = vadd.f32 0.0, %v7707
    %v7709 = vpop.f32.mrf.mxu0
    %7710 = vmatprep.mubr.bf16.mxu0 0
    %7711 = vmatmul.mubr.bf16.gmra.mxu0 %v7448
    %v7712 = vpop.f32.mrf.mxu0
    %v7713 = vadd.f32 0.0, %v7712
    %v7714 = vpop.f32.mrf.mxu0
    %v7715 = vpop.f32.mrf.mxu0
    %v7716 = vadd.f32 0.0, %v7715
    %v7717 = vpop.f32.mrf.mxu0
    %7718 = vmatprep.mubr.bf16.mxu0 0
    %7719 = vmatmul.mubr.bf16.gmra.mxu0 %v7449
    %v7720 = vpop.f32.mrf.mxu0
    %v7721 = vadd.f32 0.0, %v7720
    %v7722 = vpop.f32.mrf.mxu0
    %v7723 = vpop.f32.mrf.mxu0
    %v7724 = vadd.f32 0.0, %v7723
    %v7725 = vpop.f32.mrf.mxu0
    %7726 = vmatprep.mubr.bf16.mxu0 0
    %7727 = vmatmul.mubr.bf16.gmra.mxu0 %v7450
    %v7728 = vpop.f32.mrf.mxu0
    %v7729 = vadd.f32 0.0, %v7728
    %v7730 = vpop.f32.mrf.mxu0
    %v7731 = vpop.f32.mrf.mxu0
    %v7732 = vadd.f32 0.0, %v7731
    %v7733 = vpop.f32.mrf.mxu0
    %7734 = vmatprep.mubr.bf16.mxu0 0
    %7735 = vmatmul.mubr.bf16.gmra.mxu0 %v7451
    %v7736 = vpop.f32.mrf.mxu0
    %v7737 = vadd.f32 0.0, %v7736
    %v7738 = vpop.f32.mrf.mxu0
    %v7739 = vpop.f32.mrf.mxu0
    %v7740 = vadd.f32 0.0, %v7739
    %v7741 = vpop.f32.mrf.mxu0
    %7742 = vmatprep.mubr.bf16.mxu0 0
    %7743 = vmatmul.mubr.bf16.gmra.mxu0 %v7452
    %v7744 = vpop.f32.mrf.mxu0
    %v7745 = vadd.f32 0.0, %v7744
    %v7746 = vpop.f32.mrf.mxu0
    %v7747 = vpop.f32.mrf.mxu0
    %v7748 = vadd.f32 0.0, %v7747
    %v7749 = vpop.f32.mrf.mxu0
    %7750 = vmatprep.mubr.bf16.mxu0 0
    %7751 = vmatmul.mubr.bf16.gmra.mxu0 %v7453
    %v7752 = vpop.f32.mrf.mxu0
    %v7753 = vadd.f32 0.0, %v7752
    %v7754 = vpop.f32.mrf.mxu0
    %v7755 = vpop.f32.mrf.mxu0
    %v7756 = vadd.f32 0.0, %v7755
    %v7757 = vpop.f32.mrf.mxu0
    %7758 = vmatprep.mubr.bf16.mxu0 0
    %7759 = vmatmul.mubr.bf16.gmra.mxu0 %v7454
    %v7760 = vpop.f32.mrf.mxu0
    %v7761 = vadd.f32 0.0, %v7760
    %v7762 = vpop.f32.mrf.mxu0
    %v7763 = vpop.f32.mrf.mxu0
    %v7764 = vadd.f32 0.0, %v7763
    %v7765 = vpop.f32.mrf.mxu0
    %7766 = vmatprep.mubr.bf16.mxu0 0
    %7767 = vmatmul.mubr.bf16.gmra.mxu0 %v7455
    %v7768 = vpop.f32.mrf.mxu0
    %v7769 = vadd.f32 0.0, %v7768
    %v7770 = vpop.f32.mrf.mxu0
    %v7771 = vpop.f32.mrf.mxu0
    %v7772 = vadd.f32 0.0, %v7771
    %v7773 = vpop.f32.mrf.mxu0
    %7774 = vmatprep.mubr.bf16.mxu0 0
    %7775 = vmatmul.mubr.bf16.gmra.mxu0 %v7456
    %v7776 = vpop.f32.mrf.mxu0
    %v7777 = vadd.f32 0.0, %v7776
    %v7778 = vpop.f32.mrf.mxu0
    %v7779 = vpop.f32.mrf.mxu0
    %v7780 = vadd.f32 0.0, %v7779
    %v7781 = vpop.f32.mrf.mxu0
    %7782 = vmatprep.mubr.bf16.mxu0 0
    %7783 = vmatmul.mubr.bf16.gmra.mxu0 %v7457
    %v7784 = vpop.f32.mrf.mxu0
    %v7785 = vadd.f32 0.0, %v7784
    %v7786 = vpop.f32.mrf.mxu0
    %v7787 = vpop.f32.mrf.mxu0
    %v7788 = vadd.f32 0.0, %v7787
    %v7789 = vpop.f32.mrf.mxu0
    %7790 = vmatprep.mubr.bf16.mxu0 0
    %7791 = vmatmul.mubr.bf16.gmra.mxu0 %v7458
    %v7792 = vpop.f32.mrf.mxu0
    %v7793 = vadd.f32 0.0, %v7792
    %v7794 = vpop.f32.mrf.mxu0
    %v7795 = vpop.f32.mrf.mxu0
    %v7796 = vadd.f32 0.0, %v7795
    %v7797 = vpop.f32.mrf.mxu0
    %7798 = vmatprep.mubr.bf16.mxu0 0
    %7799 = vmatmul.mubr.bf16.gmra.mxu0 %v7459
    %v7800 = vpop.f32.mrf.mxu0
    %v7801 = vadd.f32 0.0, %v7800
    %v7802 = vpop.f32.mrf.mxu0
    %v7803 = vpop.f32.mrf.mxu0
    %v7804 = vadd.f32 0.0, %v7803
    %v7805 = vpop.f32.mrf.mxu0
    %7806 = vmatprep.mubr.bf16.mxu0 0
    %7807 = vmatmul.mubr.bf16.gmra.mxu0 %v7460
    %v7808 = vpop.f32.mrf.mxu0
    %v7809 = vadd.f32 0.0, %v7808
    %v7810 = vpop.f32.mrf.mxu0
    %v7811 = vpop.f32.mrf.mxu0
    %v7812 = vadd.f32 0.0, %v7811
    %v7813 = vpop.f32.mrf.mxu0
    %7814 = vdwg.mxu0
    %v7815 = vadd.f32 %v7301, %v7561
    %v7816 = vadd.f32 %v7302, %v7564
    %v7817 = vadd.f32 %v7303, %v7569
    %v7818 = vadd.f32 %v7304, %v7572
    %v7819 = vadd.f32 %v7305, %v7577
    %v7820 = vadd.f32 %v7306, %v7580
    %v7821 = vadd.f32 %v7307, %v7585
    %v7822 = vadd.f32 %v7308, %v7588
    %v7823 = vadd.f32 %v7309, %v7593
    %v7824 = vadd.f32 %v7310, %v7596
    %v7825 = vadd.f32 %v7311, %v7601
    %v7826 = vadd.f32 %v7312, %v7604
    %v7827 = vadd.f32 %v7313, %v7609
    %v7828 = vadd.f32 %v7314, %v7612
    %v7829 = vadd.f32 %v7315, %v7617
    %v7830 = vadd.f32 %v7316, %v7620
    %v7831 = vadd.f32 %v7317, %v7625
    %v7832 = vadd.f32 %v7318, %v7628
    %v7833 = vadd.f32 %v7319, %v7633
    %v7834 = vadd.f32 %v7320, %v7636
    %v7835 = vadd.f32 %v7321, %v7641
    %v7836 = vadd.f32 %v7322, %v7644
    %v7837 = vadd.f32 %v7323, %v7649
    %v7838 = vadd.f32 %v7324, %v7652
    %v7839 = vadd.f32 %v7325, %v7657
    %v7840 = vadd.f32 %v7326, %v7660
    %v7841 = vadd.f32 %v7327, %v7665
    %v7842 = vadd.f32 %v7328, %v7668
    %v7843 = vadd.f32 %v7329, %v7673
    %v7844 = vadd.f32 %v7330, %v7676
    %v7845 = vadd.f32 %v7331, %v7681
    %v7846 = vadd.f32 %v7332, %v7684
    %v7847 = vadd.f32 %v7333, %v7689
    %v7848 = vadd.f32 %v7334, %v7692
    %v7849 = vadd.f32 %v7335, %v7697
    %v7850 = vadd.f32 %v7336, %v7700
    %v7851 = vadd.f32 %v7337, %v7705
    %v7852 = vadd.f32 %v7338, %v7708
    %v7853 = vadd.f32 %v7339, %v7713
    %v7854 = vadd.f32 %v7340, %v7716
    %v7855 = vadd.f32 %v7341, %v7721
    %v7856 = vadd.f32 %v7342, %v7724
    %v7857 = vadd.f32 %v7343, %v7729
    %v7858 = vadd.f32 %v7344, %v7732
    %v7859 = vadd.f32 %v7345, %v7737
    %v7860 = vadd.f32 %v7346, %v7740
    %v7861 = vadd.f32 %v7347, %v7745
    %v7862 = vadd.f32 %v7348, %v7748
    %v7863 = vadd.f32 %v7349, %v7753
    %v7864 = vadd.f32 %v7350, %v7756
    %v7865 = vadd.f32 %v7351, %v7761
    %v7866 = vadd.f32 %v7352, %v7764
    %v7867 = vadd.f32 %v7353, %v7769
    %v7868 = vadd.f32 %v7354, %v7772
    %v7869 = vadd.f32 %v7355, %v7777
    %v7870 = vadd.f32 %v7356, %v7780
    %v7871 = vadd.f32 %v7357, %v7785
    %v7872 = vadd.f32 %v7358, %v7788
    %v7873 = vadd.f32 %v7359, %v7793
    %v7874 = vadd.f32 %v7360, %v7796
    %v7875 = vadd.f32 %v7361, %v7801
    %v7876 = vadd.f32 %v7362, %v7804
    %v7877 = vadd.f32 %v7363, %v7809
    %v7878 = vadd.f32 %v7364, %v7812
    %v7879 = vld [vmem:[%s5373 + $0x2] sm:$0xff]
    %v7880 = vld [vmem:[%s5373 + $0xa] sm:$0xff]
    %v7881 = vld [vmem:[%s5373 + $0x1a] sm:$0xff]
    %v7882 = vld [vmem:[%s5373 + $0x22] sm:$0xff]
    %v7883 = vld [vmem:[%s5373 + $0x32] sm:$0xff]
    %v7884 = vld [vmem:[%s5373 + $0x3a] sm:$0xff]
    %v7885 = vld [vmem:[%s5373 + $0x4a] sm:$0xff]
    %v7886 = vld [vmem:[%s5373 + $0x52] sm:$0xff]
    %v7887 = vld [vmem:[%s5373 + $0x62] sm:$0xff]
    %v7888 = vld [vmem:[%s5373 + $0x6a] sm:$0xff]
    %v7889 = vld [vmem:[%s5373 + $0x7a] sm:$0xff]
    %v7890 = vld [vmem:[%s5373 + $0x82] sm:$0xff]
    %v7891 = vld [vmem:[%s5373 + $0x92] sm:$0xff]
    %v7892 = vld [vmem:[%s5373 + $0x9a] sm:$0xff]
    %v7893 = vld [vmem:[%s5373 + $0xaa] sm:$0xff]
    %v7894 = vld [vmem:[%s5373 + $0xb2] sm:$0xff]
    %v7895 = vld [vmem:[%s5373 + $0xc2] sm:$0xff]
    %v7896 = vld [vmem:[%s5373 + $0xca] sm:$0xff]
    %v7897 = vld [vmem:[%s5373 + $0xda] sm:$0xff]
    %v7898 = vld [vmem:[%s5373 + $0xe2] sm:$0xff]
    %v7899 = vld [vmem:[%s5373 + $0xf2] sm:$0xff]
    %v7900 = vld [vmem:[%s5373 + $0xfa] sm:$0xff]
    %v7901 = vld [vmem:[%s5373 + $0x10a] sm:$0xff]
    %v7902 = vld [vmem:[%s5373 + $0x112] sm:$0xff]
    %v7903 = vld [vmem:[%s5373 + $0x122] sm:$0xff]
    %v7904 = vld [vmem:[%s5373 + $0x12a] sm:$0xff]
    %v7905 = vld [vmem:[%s5373 + $0x13a] sm:$0xff]
    %v7906 = vld [vmem:[%s5373 + $0x142] sm:$0xff]
    %v7907 = vld [vmem:[%s5373 + $0x152] sm:$0xff]
    %v7908 = vld [vmem:[%s5373 + $0x15a] sm:$0xff]
    %v7909 = vld [vmem:[%s5373 + $0x16a] sm:$0xff]
    %v7910 = vld [vmem:[%s5373 + $0x172] sm:$0xff]
    %v7911 = vld [vmem:[%s5373 + $0x1b2] sm:$0xff]
    %v7912 = vld [vmem:[%s5373 + $0x1ba] sm:$0xff]
    %v7913 = vld [vmem:[%s5373 + $0x1ca] sm:$0xff]
    %v7914 = vld [vmem:[%s5373 + $0x1d2] sm:$0xff]
    %v7915 = vld [vmem:[%s5373 + $0x1e2] sm:$0xff]
    %v7916 = vld [vmem:[%s5373 + $0x1ea] sm:$0xff]
    %v7917 = vld [vmem:[%s5373 + $0x1fa] sm:$0xff]
    %v7918 = vld [vmem:[%s5373 + $0x202] sm:$0xff]
    %v7919 = vld [vmem:[%s5373 + $0x212] sm:$0xff]
    %v7920 = vld [vmem:[%s5373 + $0x21a] sm:$0xff]
    %v7921 = vld [vmem:[%s5373 + $0x22a] sm:$0xff]
    %v7922 = vld [vmem:[%s5373 + $0x232] sm:$0xff]
    %v7923 = vld [vmem:[%s5373 + $0x242] sm:$0xff]
    %v7924 = vld [vmem:[%s5373 + $0x24a] sm:$0xff]
    %v7925 = vld [vmem:[%s5373 + $0x25a] sm:$0xff]
    %v7926 = vld [vmem:[%s5373 + $0x262] sm:$0xff]
    %v7927 = vld [vmem:[%s5373 + $0x272] sm:$0xff]
    %v7928 = vld [vmem:[%s5373 + $0x27a] sm:$0xff]
    %v7929 = vld [vmem:[%s5373 + $0x28a] sm:$0xff]
    %v7930 = vld [vmem:[%s5373 + $0x292] sm:$0xff]
    %v7931 = vld [vmem:[%s5373 + $0x2a2] sm:$0xff]
    %v7932 = vld [vmem:[%s5373 + $0x2aa] sm:$0xff]
    %v7933 = vld [vmem:[%s5373 + $0x2ba] sm:$0xff]
    %v7934 = vld [vmem:[%s5373 + $0x2c2] sm:$0xff]
    %v7935 = vld [vmem:[%s5373 + $0x2d2] sm:$0xff]
    %v7936 = vld [vmem:[%s5373 + $0x2da] sm:$0xff]
    %v7937 = vld [vmem:[%s5373 + $0x2ea] sm:$0xff]
    %v7938 = vld [vmem:[%s5373 + $0x2f2] sm:$0xff]
    %v7939 = vld [vmem:[%s5373 + $0x302] sm:$0xff]
    %v7940 = vld [vmem:[%s5373 + $0x30a] sm:$0xff]
    %v7941 = vld [vmem:[%s5373 + $0x31a] sm:$0xff]
    %v7942 = vld [vmem:[%s5373 + $0x322] sm:$0xff]
    %v7943 = vpack.c.bf16 %v7880, %v7879
    %v7944 = vpack.c.bf16 %v7882, %v7881
    %v7945 = vpack.c.bf16 %v7884, %v7883
    %v7946 = vpack.c.bf16 %v7886, %v7885
    %v7947 = vpack.c.bf16 %v7888, %v7887
    %v7948 = vpack.c.bf16 %v7890, %v7889
    %v7949 = vpack.c.bf16 %v7892, %v7891
    %v7950 = vpack.c.bf16 %v7894, %v7893
    %v7951 = vpack.c.bf16 %v7896, %v7895
    %v7952 = vpack.c.bf16 %v7898, %v7897
    %v7953 = vpack.c.bf16 %v7900, %v7899
    %v7954 = vpack.c.bf16 %v7902, %v7901
    %v7955 = vpack.c.bf16 %v7904, %v7903
    %v7956 = vpack.c.bf16 %v7906, %v7905
    %v7957 = vpack.c.bf16 %v7908, %v7907
    %v7958 = vpack.c.bf16 %v7910, %v7909
    %v7959 = vpack.c.bf16 %v7912, %v7911
    %v7960 = vpack.c.bf16 %v7914, %v7913
    %v7961 = vpack.c.bf16 %v7916, %v7915
    %v7962 = vpack.c.bf16 %v7918, %v7917
    %v7963 = vpack.c.bf16 %v7920, %v7919
    %v7964 = vpack.c.bf16 %v7922, %v7921
    %v7965 = vpack.c.bf16 %v7924, %v7923
    %v7966 = vpack.c.bf16 %v7926, %v7925
    %v7967 = vpack.c.bf16 %v7928, %v7927
    %v7968 = vpack.c.bf16 %v7930, %v7929
    %v7969 = vpack.c.bf16 %v7932, %v7931
    %v7970 = vpack.c.bf16 %v7934, %v7933
    %v7971 = vpack.c.bf16 %v7936, %v7935
    %v7972 = vpack.c.bf16 %v7938, %v7937
    %v7973 = vpack.c.bf16 %v7940, %v7939
    %v7974 = vpack.c.bf16 %v7942, %v7941
    %s7975 = scalar_lea.vmem %s6, 320
    %v7976 = vld [vmem:[%s7975] sm:$0xf]
    %v7977 = vld [vmem:[%s7975 + $0x4] sm:$0xf]
    %v7978 = vld [vmem:[%s7975 + $0x8] sm:$0xf]
    %v7979 = vld [vmem:[%s7975 + $0xc] sm:$0xf]
    %v7980 = vld [vmem:[%s7975 + $0x10] sm:$0xf]
    %v7981 = vld [vmem:[%s7975 + $0x14] sm:$0xf]
    %v7982 = vld [vmem:[%s7975 + $0x18] sm:$0xf]
    %v7983 = vld [vmem:[%s7975 + $0x1c] sm:$0xf]
    %v7984 = vld [vmem:[%s7975 + $0x20] sm:$0xf]
    %v7985 = vld [vmem:[%s7975 + $0x24] sm:$0xf]
    %v7986 = vld [vmem:[%s7975 + $0x28] sm:$0xf]
    %v7987 = vld [vmem:[%s7975 + $0x2c] sm:$0xf]
    %v7988 = vld [vmem:[%s7975 + $0x30] sm:$0xf]
    %v7989 = vld [vmem:[%s7975 + $0x34] sm:$0xf]
    %v7990 = vld [vmem:[%s7975 + $0x38] sm:$0xf]
    %v7991 = vld [vmem:[%s7975 + $0x3c] sm:$0xf]
    %v8008 = vunpack.c.l.b16 %v7976
    %v8009 = vunpack.c.l.b16 %v7977
    %v8010 = vunpack.c.l.b16 %v7978
    %v8011 = vunpack.c.l.b16 %v7979
    %v8012 = vunpack.c.l.b16 %v7980
    %v8013 = vunpack.c.l.b16 %v7981
    %v8014 = vunpack.c.l.b16 %v7982
    %v8015 = vunpack.c.l.b16 %v7983
    %v8016 = vunpack.c.l.b16 %v7984
    %v8017 = vunpack.c.l.b16 %v7985
    %v8018 = vunpack.c.l.b16 %v7986
    %v8019 = vunpack.c.l.b16 %v7987
    %v8020 = vunpack.c.l.b16 %v7988
    %v8021 = vunpack.c.l.b16 %v7989
    %v8022 = vunpack.c.l.b16 %v7990
    %v8023 = vunpack.c.l.b16 %v7991
    %v8024 = vpack.c.b16 %v8009, %v8008
    %v8025 = vpack.c.b16 %v8011, %v8010
    %v8026 = vpack.c.b16 %v8013, %v8012
    %v8027 = vpack.c.b16 %v8015, %v8014
    %v8028 = vpack.c.b16 %v8017, %v8016
    %v8029 = vpack.c.b16 %v8019, %v8018
    %v8030 = vpack.c.b16 %v8021, %v8020
    %v8031 = vpack.c.b16 %v8023, %v8022
    %8040 = vmatprep.subr.bf16.mxu0 0
    %8041 = vmatpush1.bf16.msra.mxu0 %v8031
    %8042 = vmatprep.subr.bf16.mxu0 0
    %8043 = vmatpush1.bf16.msra.mxu0 %v8030
    %8044 = vmatprep.subr.bf16.mxu0 0
    %8045 = vmatpush1.bf16.msra.mxu0 %v8029
    %8046 = vmatprep.subr.bf16.mxu0 0
    %8047 = vmatpush1.bf16.msra.mxu0 %v8028
    %8048 = vmatprep.subr.bf16.mxu0 0
    %8049 = vmatpush1.bf16.msra.mxu0 %v8027
    %8050 = vmatprep.subr.bf16.mxu0 0
    %8051 = vmatpush1.bf16.msra.mxu0 %v8026
    %8052 = vmatprep.subr.bf16.mxu0 0
    %8053 = vmatpush1.bf16.msra.mxu0 %v8025
    %8054 = vmatprep.subr.bf16.mxu0 0
    %8055 = vmatpush1.bf16.msra.mxu0 %v8024
    %8056 = vmatprep.subr.bf16.mxu0 0
    %8057 = vmatpush2.bf16.msra.mxu0 0
    %8058 = vmatprep.subr.bf16.mxu0 0
    %8059 = vmatpush2.bf16.msra.mxu0 0
    %8060 = vmatprep.subr.bf16.mxu0 0
    %8061 = vmatpush2.bf16.msra.mxu0 0
    %8062 = vmatprep.subr.bf16.mxu0 0
    %8063 = vmatpush2.bf16.msra.mxu0 0
    %8064 = vmatprep.subr.bf16.mxu0 0
    %8065 = vmatpush2.bf16.msra.mxu0 0
    %8066 = vmatprep.subr.bf16.mxu0 0
    %8067 = vmatpush2.bf16.msra.mxu0 0
    %8068 = vmatprep.subr.bf16.mxu0 0
    %8069 = vmatpush2.bf16.msra.mxu0 0
    %8070 = vmatprep.subr.bf16.mxu0 0
    %8071 = vmatpush2.bf16.msra.mxu0 0
    %8072 = vmatprep.mubr.bf16.mxu0 0
    %8073 = vmatmul.mubr.bf16.gmra.mxu0 %v7943
    %v8074 = vpop.f32.mrf.mxu0
    %v8075 = vadd.f32 0.0, %v8074
    %v8076 = vpop.f32.mrf.mxu0
    %v8077 = vpop.f32.mrf.mxu0
    %v8078 = vadd.f32 0.0, %v8077
    %v8079 = vpop.f32.mrf.mxu0
    %8080 = vmatprep.mubr.bf16.mxu0 0
    %8081 = vmatmul.mubr.bf16.gmra.mxu0 %v7944
    %v8082 = vpop.f32.mrf.mxu0
    %v8083 = vadd.f32 0.0, %v8082
    %v8084 = vpop.f32.mrf.mxu0
    %v8085 = vpop.f32.mrf.mxu0
    %v8086 = vadd.f32 0.0, %v8085
    %v8087 = vpop.f32.mrf.mxu0
    %8088 = vmatprep.mubr.bf16.mxu0 0
    %8089 = vmatmul.mubr.bf16.gmra.mxu0 %v7945
    %v8090 = vpop.f32.mrf.mxu0
    %v8091 = vadd.f32 0.0, %v8090
    %v8092 = vpop.f32.mrf.mxu0
    %v8093 = vpop.f32.mrf.mxu0
    %v8094 = vadd.f32 0.0, %v8093
    %v8095 = vpop.f32.mrf.mxu0
    %8096 = vmatprep.mubr.bf16.mxu0 0
    %8097 = vmatmul.mubr.bf16.gmra.mxu0 %v7946
    %v8098 = vpop.f32.mrf.mxu0
    %v8099 = vadd.f32 0.0, %v8098
    %v8100 = vpop.f32.mrf.mxu0
    %v8101 = vpop.f32.mrf.mxu0
    %v8102 = vadd.f32 0.0, %v8101
    %v8103 = vpop.f32.mrf.mxu0
    %8104 = vmatprep.mubr.bf16.mxu0 0
    %8105 = vmatmul.mubr.bf16.gmra.mxu0 %v7947
    %v8106 = vpop.f32.mrf.mxu0
    %v8107 = vadd.f32 0.0, %v8106
    %v8108 = vpop.f32.mrf.mxu0
    %v8109 = vpop.f32.mrf.mxu0
    %v8110 = vadd.f32 0.0, %v8109
    %v8111 = vpop.f32.mrf.mxu0
    %8112 = vmatprep.mubr.bf16.mxu0 0
    %8113 = vmatmul.mubr.bf16.gmra.mxu0 %v7948
    %v8114 = vpop.f32.mrf.mxu0
    %v8115 = vadd.f32 0.0, %v8114
    %v8116 = vpop.f32.mrf.mxu0
    %v8117 = vpop.f32.mrf.mxu0
    %v8118 = vadd.f32 0.0, %v8117
    %v8119 = vpop.f32.mrf.mxu0
    %8120 = vmatprep.mubr.bf16.mxu0 0
    %8121 = vmatmul.mubr.bf16.gmra.mxu0 %v7949
    %v8122 = vpop.f32.mrf.mxu0
    %v8123 = vadd.f32 0.0, %v8122
    %v8124 = vpop.f32.mrf.mxu0
    %v8125 = vpop.f32.mrf.mxu0
    %v8126 = vadd.f32 0.0, %v8125
    %v8127 = vpop.f32.mrf.mxu0
    %8128 = vmatprep.mubr.bf16.mxu0 0
    %8129 = vmatmul.mubr.bf16.gmra.mxu0 %v7950
    %v8130 = vpop.f32.mrf.mxu0
    %v8131 = vadd.f32 0.0, %v8130
    %v8132 = vpop.f32.mrf.mxu0
    %v8133 = vpop.f32.mrf.mxu0
    %v8134 = vadd.f32 0.0, %v8133
    %v8135 = vpop.f32.mrf.mxu0
    %8136 = vmatprep.mubr.bf16.mxu0 0
    %8137 = vmatmul.mubr.bf16.gmra.mxu0 %v7951
    %v8138 = vpop.f32.mrf.mxu0
    %v8139 = vadd.f32 0.0, %v8138
    %v8140 = vpop.f32.mrf.mxu0
    %v8141 = vpop.f32.mrf.mxu0
    %v8142 = vadd.f32 0.0, %v8141
    %v8143 = vpop.f32.mrf.mxu0
    %8144 = vmatprep.mubr.bf16.mxu0 0
    %8145 = vmatmul.mubr.bf16.gmra.mxu0 %v7952
    %v8146 = vpop.f32.mrf.mxu0
    %v8147 = vadd.f32 0.0, %v8146
    %v8148 = vpop.f32.mrf.mxu0
    %v8149 = vpop.f32.mrf.mxu0
    %v8150 = vadd.f32 0.0, %v8149
    %v8151 = vpop.f32.mrf.mxu0
    %8152 = vmatprep.mubr.bf16.mxu0 0
    %8153 = vmatmul.mubr.bf16.gmra.mxu0 %v7953
    %v8154 = vpop.f32.mrf.mxu0
    %v8155 = vadd.f32 0.0, %v8154
    %v8156 = vpop.f32.mrf.mxu0
    %v8157 = vpop.f32.mrf.mxu0
    %v8158 = vadd.f32 0.0, %v8157
    %v8159 = vpop.f32.mrf.mxu0
    %8160 = vmatprep.mubr.bf16.mxu0 0
    %8161 = vmatmul.mubr.bf16.gmra.mxu0 %v7954
    %v8162 = vpop.f32.mrf.mxu0
    %v8163 = vadd.f32 0.0, %v8162
    %v8164 = vpop.f32.mrf.mxu0
    %v8165 = vpop.f32.mrf.mxu0
    %v8166 = vadd.f32 0.0, %v8165
    %v8167 = vpop.f32.mrf.mxu0
    %8168 = vmatprep.mubr.bf16.mxu0 0
    %8169 = vmatmul.mubr.bf16.gmra.mxu0 %v7955
    %v8170 = vpop.f32.mrf.mxu0
    %v8171 = vadd.f32 0.0, %v8170
    %v8172 = vpop.f32.mrf.mxu0
    %v8173 = vpop.f32.mrf.mxu0
    %v8174 = vadd.f32 0.0, %v8173
    %v8175 = vpop.f32.mrf.mxu0
    %8176 = vmatprep.mubr.bf16.mxu0 0
    %8177 = vmatmul.mubr.bf16.gmra.mxu0 %v7956
    %v8178 = vpop.f32.mrf.mxu0
    %v8179 = vadd.f32 0.0, %v8178
    %v8180 = vpop.f32.mrf.mxu0
    %v8181 = vpop.f32.mrf.mxu0
    %v8182 = vadd.f32 0.0, %v8181
    %v8183 = vpop.f32.mrf.mxu0
    %8184 = vmatprep.mubr.bf16.mxu0 0
    %8185 = vmatmul.mubr.bf16.gmra.mxu0 %v7957
    %v8186 = vpop.f32.mrf.mxu0
    %v8187 = vadd.f32 0.0, %v8186
    %v8188 = vpop.f32.mrf.mxu0
    %v8189 = vpop.f32.mrf.mxu0
    %v8190 = vadd.f32 0.0, %v8189
    %v8191 = vpop.f32.mrf.mxu0
    %8192 = vmatprep.mubr.bf16.mxu0 0
    %8193 = vmatmul.mubr.bf16.gmra.mxu0 %v7958
    %v8194 = vpop.f32.mrf.mxu0
    %v8195 = vadd.f32 0.0, %v8194
    %v8196 = vpop.f32.mrf.mxu0
    %v8197 = vpop.f32.mrf.mxu0
    %v8198 = vadd.f32 0.0, %v8197
    %v8199 = vpop.f32.mrf.mxu0
    %8200 = vmatprep.mubr.bf16.mxu0 0
    %8201 = vmatmul.mubr.bf16.gmra.mxu0 %v7959
    %v8202 = vpop.f32.mrf.mxu0
    %v8203 = vadd.f32 0.0, %v8202
    %v8204 = vpop.f32.mrf.mxu0
    %v8205 = vpop.f32.mrf.mxu0
    %v8206 = vadd.f32 0.0, %v8205
    %v8207 = vpop.f32.mrf.mxu0
    %8208 = vmatprep.mubr.bf16.mxu0 0
    %8209 = vmatmul.mubr.bf16.gmra.mxu0 %v7960
    %v8210 = vpop.f32.mrf.mxu0
    %v8211 = vadd.f32 0.0, %v8210
    %v8212 = vpop.f32.mrf.mxu0
    %v8213 = vpop.f32.mrf.mxu0
    %v8214 = vadd.f32 0.0, %v8213
    %v8215 = vpop.f32.mrf.mxu0
    %8216 = vmatprep.mubr.bf16.mxu0 0
    %8217 = vmatmul.mubr.bf16.gmra.mxu0 %v7961
    %v8218 = vpop.f32.mrf.mxu0
    %v8219 = vadd.f32 0.0, %v8218
    %v8220 = vpop.f32.mrf.mxu0
    %v8221 = vpop.f32.mrf.mxu0
    %v8222 = vadd.f32 0.0, %v8221
    %v8223 = vpop.f32.mrf.mxu0
    %8224 = vmatprep.mubr.bf16.mxu0 0
    %8225 = vmatmul.mubr.bf16.gmra.mxu0 %v7962
    %v8226 = vpop.f32.mrf.mxu0
    %v8227 = vadd.f32 0.0, %v8226
    %v8228 = vpop.f32.mrf.mxu0
    %v8229 = vpop.f32.mrf.mxu0
    %v8230 = vadd.f32 0.0, %v8229
    %v8231 = vpop.f32.mrf.mxu0
    %8232 = vmatprep.mubr.bf16.mxu0 0
    %8233 = vmatmul.mubr.bf16.gmra.mxu0 %v7963
    %v8234 = vpop.f32.mrf.mxu0
    %v8235 = vadd.f32 0.0, %v8234
    %v8236 = vpop.f32.mrf.mxu0
    %v8237 = vpop.f32.mrf.mxu0
    %v8238 = vadd.f32 0.0, %v8237
    %v8239 = vpop.f32.mrf.mxu0
    %8240 = vmatprep.mubr.bf16.mxu0 0
    %8241 = vmatmul.mubr.bf16.gmra.mxu0 %v7964
    %v8242 = vpop.f32.mrf.mxu0
    %v8243 = vadd.f32 0.0, %v8242
    %v8244 = vpop.f32.mrf.mxu0
    %v8245 = vpop.f32.mrf.mxu0
    %v8246 = vadd.f32 0.0, %v8245
    %v8247 = vpop.f32.mrf.mxu0
    %8248 = vmatprep.mubr.bf16.mxu0 0
    %8249 = vmatmul.mubr.bf16.gmra.mxu0 %v7965
    %v8250 = vpop.f32.mrf.mxu0
    %v8251 = vadd.f32 0.0, %v8250
    %v8252 = vpop.f32.mrf.mxu0
    %v8253 = vpop.f32.mrf.mxu0
    %v8254 = vadd.f32 0.0, %v8253
    %v8255 = vpop.f32.mrf.mxu0
    %8256 = vmatprep.mubr.bf16.mxu0 0
    %8257 = vmatmul.mubr.bf16.gmra.mxu0 %v7966
    %v8258 = vpop.f32.mrf.mxu0
    %v8259 = vadd.f32 0.0, %v8258
    %v8260 = vpop.f32.mrf.mxu0
    %v8261 = vpop.f32.mrf.mxu0
    %v8262 = vadd.f32 0.0, %v8261
    %v8263 = vpop.f32.mrf.mxu0
    %8264 = vmatprep.mubr.bf16.mxu0 0
    %8265 = vmatmul.mubr.bf16.gmra.mxu0 %v7967
    %v8266 = vpop.f32.mrf.mxu0
    %v8267 = vadd.f32 0.0, %v8266
    %v8268 = vpop.f32.mrf.mxu0
    %v8269 = vpop.f32.mrf.mxu0
    %v8270 = vadd.f32 0.0, %v8269
    %v8271 = vpop.f32.mrf.mxu0
    %8272 = vmatprep.mubr.bf16.mxu0 0
    %8273 = vmatmul.mubr.bf16.gmra.mxu0 %v7968
    %v8274 = vpop.f32.mrf.mxu0
    %v8275 = vadd.f32 0.0, %v8274
    %v8276 = vpop.f32.mrf.mxu0
    %v8277 = vpop.f32.mrf.mxu0
    %v8278 = vadd.f32 0.0, %v8277
    %v8279 = vpop.f32.mrf.mxu0
    %8280 = vmatprep.mubr.bf16.mxu0 0
    %8281 = vmatmul.mubr.bf16.gmra.mxu0 %v7969
    %v8282 = vpop.f32.mrf.mxu0
    %v8283 = vadd.f32 0.0, %v8282
    %v8284 = vpop.f32.mrf.mxu0
    %v8285 = vpop.f32.mrf.mxu0
    %v8286 = vadd.f32 0.0, %v8285
    %v8287 = vpop.f32.mrf.mxu0
    %8288 = vmatprep.mubr.bf16.mxu0 0
    %8289 = vmatmul.mubr.bf16.gmra.mxu0 %v7970
    %v8290 = vpop.f32.mrf.mxu0
    %v8291 = vadd.f32 0.0, %v8290
    %v8292 = vpop.f32.mrf.mxu0
    %v8293 = vpop.f32.mrf.mxu0
    %v8294 = vadd.f32 0.0, %v8293
    %v8295 = vpop.f32.mrf.mxu0
    %8296 = vmatprep.mubr.bf16.mxu0 0
    %8297 = vmatmul.mubr.bf16.gmra.mxu0 %v7971
    %v8298 = vpop.f32.mrf.mxu0
    %v8299 = vadd.f32 0.0, %v8298
    %v8300 = vpop.f32.mrf.mxu0
    %v8301 = vpop.f32.mrf.mxu0
    %v8302 = vadd.f32 0.0, %v8301
    %v8303 = vpop.f32.mrf.mxu0
    %8304 = vmatprep.mubr.bf16.mxu0 0
    %8305 = vmatmul.mubr.bf16.gmra.mxu0 %v7972
    %v8306 = vpop.f32.mrf.mxu0
    %v8307 = vadd.f32 0.0, %v8306
    %v8308 = vpop.f32.mrf.mxu0
    %v8309 = vpop.f32.mrf.mxu0
    %v8310 = vadd.f32 0.0, %v8309
    %v8311 = vpop.f32.mrf.mxu0
    %8312 = vmatprep.mubr.bf16.mxu0 0
    %8313 = vmatmul.mubr.bf16.gmra.mxu0 %v7973
    %v8314 = vpop.f32.mrf.mxu0
    %v8315 = vadd.f32 0.0, %v8314
    %v8316 = vpop.f32.mrf.mxu0
    %v8317 = vpop.f32.mrf.mxu0
    %v8318 = vadd.f32 0.0, %v8317
    %v8319 = vpop.f32.mrf.mxu0
    %8320 = vmatprep.mubr.bf16.mxu0 0
    %8321 = vmatmul.mubr.bf16.gmra.mxu0 %v7974
    %v8322 = vpop.f32.mrf.mxu0
    %v8323 = vadd.f32 0.0, %v8322
    %v8324 = vpop.f32.mrf.mxu0
    %v8325 = vpop.f32.mrf.mxu0
    %v8326 = vadd.f32 0.0, %v8325
    %v8327 = vpop.f32.mrf.mxu0
    %8328 = vdwg.mxu0
    %v8329 = vadd.f32 %v7815, %v8075
    %v8330 = vadd.f32 %v7816, %v8078
    %v8331 = vadd.f32 %v7817, %v8083
    %v8332 = vadd.f32 %v7818, %v8086
    %v8333 = vadd.f32 %v7819, %v8091
    %v8334 = vadd.f32 %v7820, %v8094
    %v8335 = vadd.f32 %v7821, %v8099
    %v8336 = vadd.f32 %v7822, %v8102
    %v8337 = vadd.f32 %v7823, %v8107
    %v8338 = vadd.f32 %v7824, %v8110
    %v8339 = vadd.f32 %v7825, %v8115
    %v8340 = vadd.f32 %v7826, %v8118
    %v8341 = vadd.f32 %v7827, %v8123
    %v8342 = vadd.f32 %v7828, %v8126
    %v8343 = vadd.f32 %v7829, %v8131
    %v8344 = vadd.f32 %v7830, %v8134
    %v8345 = vadd.f32 %v7831, %v8139
    %v8346 = vadd.f32 %v7832, %v8142
    %v8347 = vadd.f32 %v7833, %v8147
    %v8348 = vadd.f32 %v7834, %v8150
    %v8349 = vadd.f32 %v7835, %v8155
    %v8350 = vadd.f32 %v7836, %v8158
    %v8351 = vadd.f32 %v7837, %v8163
    %v8352 = vadd.f32 %v7838, %v8166
    %v8353 = vadd.f32 %v7839, %v8171
    %v8354 = vadd.f32 %v7840, %v8174
    %v8355 = vadd.f32 %v7841, %v8179
    %v8356 = vadd.f32 %v7842, %v8182
    %v8357 = vadd.f32 %v7843, %v8187
    %v8358 = vadd.f32 %v7844, %v8190
    %v8359 = vadd.f32 %v7845, %v8195
    %v8360 = vadd.f32 %v7846, %v8198
    %v8361 = vadd.f32 %v7847, %v8203
    %v8362 = vadd.f32 %v7848, %v8206
    %v8363 = vadd.f32 %v7849, %v8211
    %v8364 = vadd.f32 %v7850, %v8214
    %v8365 = vadd.f32 %v7851, %v8219
    %v8366 = vadd.f32 %v7852, %v8222
    %v8367 = vadd.f32 %v7853, %v8227
    %v8368 = vadd.f32 %v7854, %v8230
    %v8369 = vadd.f32 %v7855, %v8235
    %v8370 = vadd.f32 %v7856, %v8238
    %v8371 = vadd.f32 %v7857, %v8243
    %v8372 = vadd.f32 %v7858, %v8246
    %v8373 = vadd.f32 %v7859, %v8251
    %v8374 = vadd.f32 %v7860, %v8254
    %v8375 = vadd.f32 %v7861, %v8259
    %v8376 = vadd.f32 %v7862, %v8262
    %v8377 = vadd.f32 %v7863, %v8267
    %v8378 = vadd.f32 %v7864, %v8270
    %v8379 = vadd.f32 %v7865, %v8275
    %v8380 = vadd.f32 %v7866, %v8278
    %v8381 = vadd.f32 %v7867, %v8283
    %v8382 = vadd.f32 %v7868, %v8286
    %v8383 = vadd.f32 %v7869, %v8291
    %v8384 = vadd.f32 %v7870, %v8294
    %v8385 = vadd.f32 %v7871, %v8299
    %v8386 = vadd.f32 %v7872, %v8302
    %v8387 = vadd.f32 %v7873, %v8307
    %v8388 = vadd.f32 %v7874, %v8310
    %v8389 = vadd.f32 %v7875, %v8315
    %v8390 = vadd.f32 %v7876, %v8318
    %v8391 = vadd.f32 %v7877, %v8323
    %v8392 = vadd.f32 %v7878, %v8326
    %s8393 = scalar_lea.vmem [#allocation2], 48
    %v8394 = vld [vmem:[%s8393] sm:$0xff]
    %v8395 = vld [vmem:[%s8393 + $0x8] sm:$0xff]
    %v8396 = vld [vmem:[%s8393 + $0x18] sm:$0xff]
    %v8397 = vld [vmem:[%s8393 + $0x20] sm:$0xff]
    %v8398 = vld [vmem:[%s8393 + $0x30] sm:$0xff]
    %v8399 = vld [vmem:[%s8393 + $0x38] sm:$0xff]
    %v8400 = vld [vmem:[%s8393 + $0x48] sm:$0xff]
    %v8401 = vld [vmem:[%s8393 + $0x50] sm:$0xff]
    %v8402 = vld [vmem:[%s8393 + $0x60] sm:$0xff]
    %v8403 = vld [vmem:[%s8393 + $0x68] sm:$0xff]
    %v8404 = vld [vmem:[%s8393 + $0x78] sm:$0xff]
    %v8405 = vld [vmem:[%s8393 + $0x80] sm:$0xff]
    %v8406 = vld [vmem:[%s8393 + $0x90] sm:$0xff]
    %v8407 = vld [vmem:[%s8393 + $0x98] sm:$0xff]
    %v8408 = vld [vmem:[%s8393 + $0xa8] sm:$0xff]
    %v8409 = vld [vmem:[%s8393 + $0xb0] sm:$0xff]
    %v8410 = vld [vmem:[%s8393 + $0xc0] sm:$0xff]
    %v8411 = vld [vmem:[%s8393 + $0xc8] sm:$0xff]
    %v8412 = vld [vmem:[%s8393 + $0xd8] sm:$0xff]
    %v8413 = vld [vmem:[%s8393 + $0xe0] sm:$0xff]
    %v8414 = vld [vmem:[%s8393 + $0xf0] sm:$0xff]
    %v8415 = vld [vmem:[%s8393 + $0xf8] sm:$0xff]
    %v8416 = vld [vmem:[%s8393 + $0x108] sm:$0xff]
    %v8417 = vld [vmem:[%s8393 + $0x110] sm:$0xff]
    %v8418 = vld [vmem:[%s8393 + $0x120] sm:$0xff]
    %v8419 = vld [vmem:[%s8393 + $0x128] sm:$0xff]
    %v8420 = vld [vmem:[%s8393 + $0x138] sm:$0xff]
    %v8421 = vld [vmem:[%s8393 + $0x140] sm:$0xff]
    %v8422 = vld [vmem:[%s8393 + $0x150] sm:$0xff]
    %v8423 = vld [vmem:[%s8393 + $0x158] sm:$0xff]
    %v8424 = vld [vmem:[%s8393 + $0x168] sm:$0xff]
    %v8425 = vld [vmem:[%s8393 + $0x170] sm:$0xff]
    %v8426 = vld [vmem:[%s8393 + $0x1b0] sm:$0xff]
    %v8427 = vld [vmem:[%s8393 + $0x1b8] sm:$0xff]
    %v8428 = vld [vmem:[%s8393 + $0x1c8] sm:$0xff]
    %v8429 = vld [vmem:[%s8393 + $0x1d0] sm:$0xff]
    %v8430 = vld [vmem:[%s8393 + $0x1e0] sm:$0xff]
    %v8431 = vld [vmem:[%s8393 + $0x1e8] sm:$0xff]
    %v8432 = vld [vmem:[%s8393 + $0x1f8] sm:$0xff]
    %v8433 = vld [vmem:[%s8393 + $0x200] sm:$0xff]
    %v8434 = vld [vmem:[%s8393 + $0x210] sm:$0xff]
    %v8435 = vld [vmem:[%s8393 + $0x218] sm:$0xff]
    %v8436 = vld [vmem:[%s8393 + $0x228] sm:$0xff]
    %v8437 = vld [vmem:[%s8393 + $0x230] sm:$0xff]
    %v8438 = vld [vmem:[%s8393 + $0x240] sm:$0xff]
    %v8439 = vld [vmem:[%s8393 + $0x248] sm:$0xff]
    %v8440 = vld [vmem:[%s8393 + $0x258] sm:$0xff]
    %v8441 = vld [vmem:[%s8393 + $0x260] sm:$0xff]
    %v8442 = vld [vmem:[%s8393 + $0x270] sm:$0xff]
    %v8443 = vld [vmem:[%s8393 + $0x278] sm:$0xff]
    %v8444 = vld [vmem:[%s8393 + $0x288] sm:$0xff]
    %v8445 = vld [vmem:[%s8393 + $0x290] sm:$0xff]
    %v8446 = vld [vmem:[%s8393 + $0x2a0] sm:$0xff]
    %v8447 = vld [vmem:[%s8393 + $0x2a8] sm:$0xff]
    %v8448 = vld [vmem:[%s8393 + $0x2b8] sm:$0xff]
    %v8449 = vld [vmem:[%s8393 + $0x2c0] sm:$0xff]
    %v8450 = vld [vmem:[%s8393 + $0x2d0] sm:$0xff]
    %v8451 = vld [vmem:[%s8393 + $0x2d8] sm:$0xff]
    %v8452 = vld [vmem:[%s8393 + $0x2e8] sm:$0xff]
    %v8453 = vld [vmem:[%s8393 + $0x2f0] sm:$0xff]
    %v8454 = vld [vmem:[%s8393 + $0x300] sm:$0xff]
    %v8455 = vld [vmem:[%s8393 + $0x308] sm:$0xff]
    %v8456 = vld [vmem:[%s8393 + $0x318] sm:$0xff]
    %v8457 = vld [vmem:[%s8393 + $0x320] sm:$0xff]
    %v8458 = vpack.c.bf16 %v8395, %v8394
    %v8459 = vpack.c.bf16 %v8397, %v8396
    %v8460 = vpack.c.bf16 %v8399, %v8398
    %v8461 = vpack.c.bf16 %v8401, %v8400
    %v8462 = vpack.c.bf16 %v8403, %v8402
    %v8463 = vpack.c.bf16 %v8405, %v8404
    %v8464 = vpack.c.bf16 %v8407, %v8406
    %v8465 = vpack.c.bf16 %v8409, %v8408
    %v8466 = vpack.c.bf16 %v8411, %v8410
    %v8467 = vpack.c.bf16 %v8413, %v8412
    %v8468 = vpack.c.bf16 %v8415, %v8414
    %v8469 = vpack.c.bf16 %v8417, %v8416
    %v8470 = vpack.c.bf16 %v8419, %v8418
    %v8471 = vpack.c.bf16 %v8421, %v8420
    %v8472 = vpack.c.bf16 %v8423, %v8422
    %v8473 = vpack.c.bf16 %v8425, %v8424
    %v8474 = vpack.c.bf16 %v8427, %v8426
    %v8475 = vpack.c.bf16 %v8429, %v8428
    %v8476 = vpack.c.bf16 %v8431, %v8430
    %v8477 = vpack.c.bf16 %v8433, %v8432
    %v8478 = vpack.c.bf16 %v8435, %v8434
    %v8479 = vpack.c.bf16 %v8437, %v8436
    %v8480 = vpack.c.bf16 %v8439, %v8438
    %v8481 = vpack.c.bf16 %v8441, %v8440
    %v8482 = vpack.c.bf16 %v8443, %v8442
    %v8483 = vpack.c.bf16 %v8445, %v8444
    %v8484 = vpack.c.bf16 %v8447, %v8446
    %v8485 = vpack.c.bf16 %v8449, %v8448
    %v8486 = vpack.c.bf16 %v8451, %v8450
    %v8487 = vpack.c.bf16 %v8453, %v8452
    %v8488 = vpack.c.bf16 %v8455, %v8454
    %v8489 = vpack.c.bf16 %v8457, %v8456
    %s8490 = scalar_lea.vmem %s6, 384
    %v8491 = vld [vmem:[%s8490] sm:$0xf]
    %v8492 = vld [vmem:[%s8490 + $0x4] sm:$0xf]
    %v8493 = vld [vmem:[%s8490 + $0x8] sm:$0xf]
    %v8494 = vld [vmem:[%s8490 + $0xc] sm:$0xf]
    %v8495 = vld [vmem:[%s8490 + $0x10] sm:$0xf]
    %v8496 = vld [vmem:[%s8490 + $0x14] sm:$0xf]
    %v8497 = vld [vmem:[%s8490 + $0x18] sm:$0xf]
    %v8498 = vld [vmem:[%s8490 + $0x1c] sm:$0xf]
    %v8499 = vld [vmem:[%s8490 + $0x20] sm:$0xf]
    %v8500 = vld [vmem:[%s8490 + $0x24] sm:$0xf]
    %v8501 = vld [vmem:[%s8490 + $0x28] sm:$0xf]
    %v8502 = vld [vmem:[%s8490 + $0x2c] sm:$0xf]
    %v8503 = vld [vmem:[%s8490 + $0x30] sm:$0xf]
    %v8504 = vld [vmem:[%s8490 + $0x34] sm:$0xf]
    %v8505 = vld [vmem:[%s8490 + $0x38] sm:$0xf]
    %v8506 = vld [vmem:[%s8490 + $0x3c] sm:$0xf]
    %v8523 = vunpack.c.l.b16 %v8491
    %v8524 = vunpack.c.l.b16 %v8492
    %v8525 = vunpack.c.l.b16 %v8493
    %v8526 = vunpack.c.l.b16 %v8494
    %v8527 = vunpack.c.l.b16 %v8495
    %v8528 = vunpack.c.l.b16 %v8496
    %v8529 = vunpack.c.l.b16 %v8497
    %v8530 = vunpack.c.l.b16 %v8498
    %v8531 = vunpack.c.l.b16 %v8499
    %v8532 = vunpack.c.l.b16 %v8500
    %v8533 = vunpack.c.l.b16 %v8501
    %v8534 = vunpack.c.l.b16 %v8502
    %v8535 = vunpack.c.l.b16 %v8503
    %v8536 = vunpack.c.l.b16 %v8504
    %v8537 = vunpack.c.l.b16 %v8505
    %v8538 = vunpack.c.l.b16 %v8506
    %v8539 = vpack.c.b16 %v8524, %v8523
    %v8540 = vpack.c.b16 %v8526, %v8525
    %v8541 = vpack.c.b16 %v8528, %v8527
    %v8542 = vpack.c.b16 %v8530, %v8529
    %v8543 = vpack.c.b16 %v8532, %v8531
    %v8544 = vpack.c.b16 %v8534, %v8533
    %v8545 = vpack.c.b16 %v8536, %v8535
    %v8546 = vpack.c.b16 %v8538, %v8537
    %8555 = vmatprep.subr.bf16.mxu0 0
    %8556 = vmatpush1.bf16.msra.mxu0 %v8546
    %8557 = vmatprep.subr.bf16.mxu0 0
    %8558 = vmatpush1.bf16.msra.mxu0 %v8545
    %8559 = vmatprep.subr.bf16.mxu0 0
    %8560 = vmatpush1.bf16.msra.mxu0 %v8544
    %8561 = vmatprep.subr.bf16.mxu0 0
    %8562 = vmatpush1.bf16.msra.mxu0 %v8543
    %8563 = vmatprep.subr.bf16.mxu0 0
    %8564 = vmatpush1.bf16.msra.mxu0 %v8542
    %8565 = vmatprep.subr.bf16.mxu0 0
    %8566 = vmatpush1.bf16.msra.mxu0 %v8541
    %8567 = vmatprep.subr.bf16.mxu0 0
    %8568 = vmatpush1.bf16.msra.mxu0 %v8540
    %8569 = vmatprep.subr.bf16.mxu0 0
    %8570 = vmatpush1.bf16.msra.mxu0 %v8539
    %8571 = vmatprep.subr.bf16.mxu0 0
    %8572 = vmatpush2.bf16.msra.mxu0 0
    %8573 = vmatprep.subr.bf16.mxu0 0
    %8574 = vmatpush2.bf16.msra.mxu0 0
    %8575 = vmatprep.subr.bf16.mxu0 0
    %8576 = vmatpush2.bf16.msra.mxu0 0
    %8577 = vmatprep.subr.bf16.mxu0 0
    %8578 = vmatpush2.bf16.msra.mxu0 0
    %8579 = vmatprep.subr.bf16.mxu0 0
    %8580 = vmatpush2.bf16.msra.mxu0 0
    %8581 = vmatprep.subr.bf16.mxu0 0
    %8582 = vmatpush2.bf16.msra.mxu0 0
    %8583 = vmatprep.subr.bf16.mxu0 0
    %8584 = vmatpush2.bf16.msra.mxu0 0
    %8585 = vmatprep.subr.bf16.mxu0 0
    %8586 = vmatpush2.bf16.msra.mxu0 0
    %8587 = vmatprep.mubr.bf16.mxu0 0
    %8588 = vmatmul.mubr.bf16.gmra.mxu0 %v8458
    %v8589 = vpop.f32.mrf.mxu0
    %v8590 = vadd.f32 0.0, %v8589
    %v8591 = vpop.f32.mrf.mxu0
    %v8592 = vpop.f32.mrf.mxu0
    %v8593 = vadd.f32 0.0, %v8592
    %v8594 = vpop.f32.mrf.mxu0
    %8595 = vmatprep.mubr.bf16.mxu0 0
    %8596 = vmatmul.mubr.bf16.gmra.mxu0 %v8459
    %v8597 = vpop.f32.mrf.mxu0
    %v8598 = vadd.f32 0.0, %v8597
    %v8599 = vpop.f32.mrf.mxu0
    %v8600 = vpop.f32.mrf.mxu0
    %v8601 = vadd.f32 0.0, %v8600
    %v8602 = vpop.f32.mrf.mxu0
    %8603 = vmatprep.mubr.bf16.mxu0 0
    %8604 = vmatmul.mubr.bf16.gmra.mxu0 %v8460
    %v8605 = vpop.f32.mrf.mxu0
    %v8606 = vadd.f32 0.0, %v8605
    %v8607 = vpop.f32.mrf.mxu0
    %v8608 = vpop.f32.mrf.mxu0
    %v8609 = vadd.f32 0.0, %v8608
    %v8610 = vpop.f32.mrf.mxu0
    %8611 = vmatprep.mubr.bf16.mxu0 0
    %8612 = vmatmul.mubr.bf16.gmra.mxu0 %v8461
    %v8613 = vpop.f32.mrf.mxu0
    %v8614 = vadd.f32 0.0, %v8613
    %v8615 = vpop.f32.mrf.mxu0
    %v8616 = vpop.f32.mrf.mxu0
    %v8617 = vadd.f32 0.0, %v8616
    %v8618 = vpop.f32.mrf.mxu0
    %8619 = vmatprep.mubr.bf16.mxu0 0
    %8620 = vmatmul.mubr.bf16.gmra.mxu0 %v8462
    %v8621 = vpop.f32.mrf.mxu0
    %v8622 = vadd.f32 0.0, %v8621
    %v8623 = vpop.f32.mrf.mxu0
    %v8624 = vpop.f32.mrf.mxu0
    %v8625 = vadd.f32 0.0, %v8624
    %v8626 = vpop.f32.mrf.mxu0
    %8627 = vmatprep.mubr.bf16.mxu0 0
    %8628 = vmatmul.mubr.bf16.gmra.mxu0 %v8463
    %v8629 = vpop.f32.mrf.mxu0
    %v8630 = vadd.f32 0.0, %v8629
    %v8631 = vpop.f32.mrf.mxu0
    %v8632 = vpop.f32.mrf.mxu0
    %v8633 = vadd.f32 0.0, %v8632
    %v8634 = vpop.f32.mrf.mxu0
    %8635 = vmatprep.mubr.bf16.mxu0 0
    %8636 = vmatmul.mubr.bf16.gmra.mxu0 %v8464
    %v8637 = vpop.f32.mrf.mxu0
    %v8638 = vadd.f32 0.0, %v8637
    %v8639 = vpop.f32.mrf.mxu0
    %v8640 = vpop.f32.mrf.mxu0
    %v8641 = vadd.f32 0.0, %v8640
    %v8642 = vpop.f32.mrf.mxu0
    %8643 = vmatprep.mubr.bf16.mxu0 0
    %8644 = vmatmul.mubr.bf16.gmra.mxu0 %v8465
    %v8645 = vpop.f32.mrf.mxu0
    %v8646 = vadd.f32 0.0, %v8645
    %v8647 = vpop.f32.mrf.mxu0
    %v8648 = vpop.f32.mrf.mxu0
    %v8649 = vadd.f32 0.0, %v8648
    %v8650 = vpop.f32.mrf.mxu0
    %8651 = vmatprep.mubr.bf16.mxu0 0
    %8652 = vmatmul.mubr.bf16.gmra.mxu0 %v8466
    %v8653 = vpop.f32.mrf.mxu0
    %v8654 = vadd.f32 0.0, %v8653
    %v8655 = vpop.f32.mrf.mxu0
    %v8656 = vpop.f32.mrf.mxu0
    %v8657 = vadd.f32 0.0, %v8656
    %v8658 = vpop.f32.mrf.mxu0
    %8659 = vmatprep.mubr.bf16.mxu0 0
    %8660 = vmatmul.mubr.bf16.gmra.mxu0 %v8467
    %v8661 = vpop.f32.mrf.mxu0
    %v8662 = vadd.f32 0.0, %v8661
    %v8663 = vpop.f32.mrf.mxu0
    %v8664 = vpop.f32.mrf.mxu0
    %v8665 = vadd.f32 0.0, %v8664
    %v8666 = vpop.f32.mrf.mxu0
    %8667 = vmatprep.mubr.bf16.mxu0 0
    %8668 = vmatmul.mubr.bf16.gmra.mxu0 %v8468
    %v8669 = vpop.f32.mrf.mxu0
    %v8670 = vadd.f32 0.0, %v8669
    %v8671 = vpop.f32.mrf.mxu0
    %v8672 = vpop.f32.mrf.mxu0
    %v8673 = vadd.f32 0.0, %v8672
    %v8674 = vpop.f32.mrf.mxu0
    %8675 = vmatprep.mubr.bf16.mxu0 0
    %8676 = vmatmul.mubr.bf16.gmra.mxu0 %v8469
    %v8677 = vpop.f32.mrf.mxu0
    %v8678 = vadd.f32 0.0, %v8677
    %v8679 = vpop.f32.mrf.mxu0
    %v8680 = vpop.f32.mrf.mxu0
    %v8681 = vadd.f32 0.0, %v8680
    %v8682 = vpop.f32.mrf.mxu0
    %8683 = vmatprep.mubr.bf16.mxu0 0
    %8684 = vmatmul.mubr.bf16.gmra.mxu0 %v8470
    %v8685 = vpop.f32.mrf.mxu0
    %v8686 = vadd.f32 0.0, %v8685
    %v8687 = vpop.f32.mrf.mxu0
    %v8688 = vpop.f32.mrf.mxu0
    %v8689 = vadd.f32 0.0, %v8688
    %v8690 = vpop.f32.mrf.mxu0
    %8691 = vmatprep.mubr.bf16.mxu0 0
    %8692 = vmatmul.mubr.bf16.gmra.mxu0 %v8471
    %v8693 = vpop.f32.mrf.mxu0
    %v8694 = vadd.f32 0.0, %v8693
    %v8695 = vpop.f32.mrf.mxu0
    %v8696 = vpop.f32.mrf.mxu0
    %v8697 = vadd.f32 0.0, %v8696
    %v8698 = vpop.f32.mrf.mxu0
    %8699 = vmatprep.mubr.bf16.mxu0 0
    %8700 = vmatmul.mubr.bf16.gmra.mxu0 %v8472
    %v8701 = vpop.f32.mrf.mxu0
    %v8702 = vadd.f32 0.0, %v8701
    %v8703 = vpop.f32.mrf.mxu0
    %v8704 = vpop.f32.mrf.mxu0
    %v8705 = vadd.f32 0.0, %v8704
    %v8706 = vpop.f32.mrf.mxu0
    %8707 = vmatprep.mubr.bf16.mxu0 0
    %8708 = vmatmul.mubr.bf16.gmra.mxu0 %v8473
    %v8709 = vpop.f32.mrf.mxu0
    %v8710 = vadd.f32 0.0, %v8709
    %v8711 = vpop.f32.mrf.mxu0
    %v8712 = vpop.f32.mrf.mxu0
    %v8713 = vadd.f32 0.0, %v8712
    %v8714 = vpop.f32.mrf.mxu0
    %8715 = vmatprep.mubr.bf16.mxu0 0
    %8716 = vmatmul.mubr.bf16.gmra.mxu0 %v8474
    %v8717 = vpop.f32.mrf.mxu0
    %v8718 = vadd.f32 0.0, %v8717
    %v8719 = vpop.f32.mrf.mxu0
    %v8720 = vpop.f32.mrf.mxu0
    %v8721 = vadd.f32 0.0, %v8720
    %v8722 = vpop.f32.mrf.mxu0
    %8723 = vmatprep.mubr.bf16.mxu0 0
    %8724 = vmatmul.mubr.bf16.gmra.mxu0 %v8475
    %v8725 = vpop.f32.mrf.mxu0
    %v8726 = vadd.f32 0.0, %v8725
    %v8727 = vpop.f32.mrf.mxu0
    %v8728 = vpop.f32.mrf.mxu0
    %v8729 = vadd.f32 0.0, %v8728
    %v8730 = vpop.f32.mrf.mxu0
    %8731 = vmatprep.mubr.bf16.mxu0 0
    %8732 = vmatmul.mubr.bf16.gmra.mxu0 %v8476
    %v8733 = vpop.f32.mrf.mxu0
    %v8734 = vadd.f32 0.0, %v8733
    %v8735 = vpop.f32.mrf.mxu0
    %v8736 = vpop.f32.mrf.mxu0
    %v8737 = vadd.f32 0.0, %v8736
    %v8738 = vpop.f32.mrf.mxu0
    %8739 = vmatprep.mubr.bf16.mxu0 0
    %8740 = vmatmul.mubr.bf16.gmra.mxu0 %v8477
    %v8741 = vpop.f32.mrf.mxu0
    %v8742 = vadd.f32 0.0, %v8741
    %v8743 = vpop.f32.mrf.mxu0
    %v8744 = vpop.f32.mrf.mxu0
    %v8745 = vadd.f32 0.0, %v8744
    %v8746 = vpop.f32.mrf.mxu0
    %8747 = vmatprep.mubr.bf16.mxu0 0
    %8748 = vmatmul.mubr.bf16.gmra.mxu0 %v8478
    %v8749 = vpop.f32.mrf.mxu0
    %v8750 = vadd.f32 0.0, %v8749
    %v8751 = vpop.f32.mrf.mxu0
    %v8752 = vpop.f32.mrf.mxu0
    %v8753 = vadd.f32 0.0, %v8752
    %v8754 = vpop.f32.mrf.mxu0
    %8755 = vmatprep.mubr.bf16.mxu0 0
    %8756 = vmatmul.mubr.bf16.gmra.mxu0 %v8479
    %v8757 = vpop.f32.mrf.mxu0
    %v8758 = vadd.f32 0.0, %v8757
    %v8759 = vpop.f32.mrf.mxu0
    %v8760 = vpop.f32.mrf.mxu0
    %v8761 = vadd.f32 0.0, %v8760
    %v8762 = vpop.f32.mrf.mxu0
    %8763 = vmatprep.mubr.bf16.mxu0 0
    %8764 = vmatmul.mubr.bf16.gmra.mxu0 %v8480
    %v8765 = vpop.f32.mrf.mxu0
    %v8766 = vadd.f32 0.0, %v8765
    %v8767 = vpop.f32.mrf.mxu0
    %v8768 = vpop.f32.mrf.mxu0
    %v8769 = vadd.f32 0.0, %v8768
    %v8770 = vpop.f32.mrf.mxu0
    %8771 = vmatprep.mubr.bf16.mxu0 0
    %8772 = vmatmul.mubr.bf16.gmra.mxu0 %v8481
    %v8773 = vpop.f32.mrf.mxu0
    %v8774 = vadd.f32 0.0, %v8773
    %v8775 = vpop.f32.mrf.mxu0
    %v8776 = vpop.f32.mrf.mxu0
    %v8777 = vadd.f32 0.0, %v8776
    %v8778 = vpop.f32.mrf.mxu0
    %8779 = vmatprep.mubr.bf16.mxu0 0
    %8780 = vmatmul.mubr.bf16.gmra.mxu0 %v8482
    %v8781 = vpop.f32.mrf.mxu0
    %v8782 = vadd.f32 0.0, %v8781
    %v8783 = vpop.f32.mrf.mxu0
    %v8784 = vpop.f32.mrf.mxu0
    %v8785 = vadd.f32 0.0, %v8784
    %v8786 = vpop.f32.mrf.mxu0
    %8787 = vmatprep.mubr.bf16.mxu0 0
    %8788 = vmatmul.mubr.bf16.gmra.mxu0 %v8483
    %v8789 = vpop.f32.mrf.mxu0
    %v8790 = vadd.f32 0.0, %v8789
    %v8791 = vpop.f32.mrf.mxu0
    %v8792 = vpop.f32.mrf.mxu0
    %v8793 = vadd.f32 0.0, %v8792
    %v8794 = vpop.f32.mrf.mxu0
    %8795 = vmatprep.mubr.bf16.mxu0 0
    %8796 = vmatmul.mubr.bf16.gmra.mxu0 %v8484
    %v8797 = vpop.f32.mrf.mxu0
    %v8798 = vadd.f32 0.0, %v8797
    %v8799 = vpop.f32.mrf.mxu0
    %v8800 = vpop.f32.mrf.mxu0
    %v8801 = vadd.f32 0.0, %v8800
    %v8802 = vpop.f32.mrf.mxu0
    %8803 = vmatprep.mubr.bf16.mxu0 0
    %8804 = vmatmul.mubr.bf16.gmra.mxu0 %v8485
    %v8805 = vpop.f32.mrf.mxu0
    %v8806 = vadd.f32 0.0, %v8805
    %v8807 = vpop.f32.mrf.mxu0
    %v8808 = vpop.f32.mrf.mxu0
    %v8809 = vadd.f32 0.0, %v8808
    %v8810 = vpop.f32.mrf.mxu0
    %8811 = vmatprep.mubr.bf16.mxu0 0
    %8812 = vmatmul.mubr.bf16.gmra.mxu0 %v8486
    %v8813 = vpop.f32.mrf.mxu0
    %v8814 = vadd.f32 0.0, %v8813
    %v8815 = vpop.f32.mrf.mxu0
    %v8816 = vpop.f32.mrf.mxu0
    %v8817 = vadd.f32 0.0, %v8816
    %v8818 = vpop.f32.mrf.mxu0
    %8819 = vmatprep.mubr.bf16.mxu0 0
    %8820 = vmatmul.mubr.bf16.gmra.mxu0 %v8487
    %v8821 = vpop.f32.mrf.mxu0
    %v8822 = vadd.f32 0.0, %v8821
    %v8823 = vpop.f32.mrf.mxu0
    %v8824 = vpop.f32.mrf.mxu0
    %v8825 = vadd.f32 0.0, %v8824
    %v8826 = vpop.f32.mrf.mxu0
    %8827 = vmatprep.mubr.bf16.mxu0 0
    %8828 = vmatmul.mubr.bf16.gmra.mxu0 %v8488
    %v8829 = vpop.f32.mrf.mxu0
    %v8830 = vadd.f32 0.0, %v8829
    %v8831 = vpop.f32.mrf.mxu0
    %v8832 = vpop.f32.mrf.mxu0
    %v8833 = vadd.f32 0.0, %v8832
    %v8834 = vpop.f32.mrf.mxu0
    %8835 = vmatprep.mubr.bf16.mxu0 0
    %8836 = vmatmul.mubr.bf16.gmra.mxu0 %v8489
    %v8837 = vpop.f32.mrf.mxu0
    %v8838 = vadd.f32 0.0, %v8837
    %v8839 = vpop.f32.mrf.mxu0
    %v8840 = vpop.f32.mrf.mxu0
    %v8841 = vadd.f32 0.0, %v8840
    %v8842 = vpop.f32.mrf.mxu0
    %8843 = vdwg.mxu0
    %v8844 = vadd.f32 %v8329, %v8590
    %v8845 = vadd.f32 %v8330, %v8593
    %v8846 = vadd.f32 %v8331, %v8598
    %v8847 = vadd.f32 %v8332, %v8601
    %v8848 = vadd.f32 %v8333, %v8606
    %v8849 = vadd.f32 %v8334, %v8609
    %v8850 = vadd.f32 %v8335, %v8614
    %v8851 = vadd.f32 %v8336, %v8617
    %v8852 = vadd.f32 %v8337, %v8622
    %v8853 = vadd.f32 %v8338, %v8625
    %v8854 = vadd.f32 %v8339, %v8630
    %v8855 = vadd.f32 %v8340, %v8633
    %v8856 = vadd.f32 %v8341, %v8638
    %v8857 = vadd.f32 %v8342, %v8641
    %v8858 = vadd.f32 %v8343, %v8646
    %v8859 = vadd.f32 %v8344, %v8649
    %v8860 = vadd.f32 %v8345, %v8654
    %v8861 = vadd.f32 %v8346, %v8657
    %v8862 = vadd.f32 %v8347, %v8662
    %v8863 = vadd.f32 %v8348, %v8665
    %v8864 = vadd.f32 %v8349, %v8670
    %v8865 = vadd.f32 %v8350, %v8673
    %v8866 = vadd.f32 %v8351, %v8678
    %v8867 = vadd.f32 %v8352, %v8681
    %v8868 = vadd.f32 %v8353, %v8686
    %v8869 = vadd.f32 %v8354, %v8689
    %v8870 = vadd.f32 %v8355, %v8694
    %v8871 = vadd.f32 %v8356, %v8697
    %v8872 = vadd.f32 %v8357, %v8702
    %v8873 = vadd.f32 %v8358, %v8705
    %v8874 = vadd.f32 %v8359, %v8710
    %v8875 = vadd.f32 %v8360, %v8713
    %v8876 = vadd.f32 %v8361, %v8718
    %v8877 = vadd.f32 %v8362, %v8721
    %v8878 = vadd.f32 %v8363, %v8726
    %v8879 = vadd.f32 %v8364, %v8729
    %v8880 = vadd.f32 %v8365, %v8734
    %v8881 = vadd.f32 %v8366, %v8737
    %v8882 = vadd.f32 %v8367, %v8742
    %v8883 = vadd.f32 %v8368, %v8745
    %v8884 = vadd.f32 %v8369, %v8750
    %v8885 = vadd.f32 %v8370, %v8753
    %v8886 = vadd.f32 %v8371, %v8758
    %v8887 = vadd.f32 %v8372, %v8761
    %v8888 = vadd.f32 %v8373, %v8766
    %v8889 = vadd.f32 %v8374, %v8769
    %v8890 = vadd.f32 %v8375, %v8774
    %v8891 = vadd.f32 %v8376, %v8777
    %v8892 = vadd.f32 %v8377, %v8782
    %v8893 = vadd.f32 %v8378, %v8785
    %v8894 = vadd.f32 %v8379, %v8790
    %v8895 = vadd.f32 %v8380, %v8793
    %v8896 = vadd.f32 %v8381, %v8798
    %v8897 = vadd.f32 %v8382, %v8801
    %v8898 = vadd.f32 %v8383, %v8806
    %v8899 = vadd.f32 %v8384, %v8809
    %v8900 = vadd.f32 %v8385, %v8814
    %v8901 = vadd.f32 %v8386, %v8817
    %v8902 = vadd.f32 %v8387, %v8822
    %v8903 = vadd.f32 %v8388, %v8825
    %v8904 = vadd.f32 %v8389, %v8830
    %v8905 = vadd.f32 %v8390, %v8833
    %v8906 = vadd.f32 %v8391, %v8838
    %v8907 = vadd.f32 %v8392, %v8841
    %v8908 = vld [vmem:[%s8393 + $0x1] sm:$0xff]
    %v8909 = vld [vmem:[%s8393 + $0x9] sm:$0xff]
    %v8910 = vld [vmem:[%s8393 + $0x19] sm:$0xff]
    %v8911 = vld [vmem:[%s8393 + $0x21] sm:$0xff]
    %v8912 = vld [vmem:[%s8393 + $0x31] sm:$0xff]
    %v8913 = vld [vmem:[%s8393 + $0x39] sm:$0xff]
    %v8914 = vld [vmem:[%s8393 + $0x49] sm:$0xff]
    %v8915 = vld [vmem:[%s8393 + $0x51] sm:$0xff]
    %v8916 = vld [vmem:[%s8393 + $0x61] sm:$0xff]
    %v8917 = vld [vmem:[%s8393 + $0x69] sm:$0xff]
    %v8918 = vld [vmem:[%s8393 + $0x79] sm:$0xff]
    %v8919 = vld [vmem:[%s8393 + $0x81] sm:$0xff]
    %v8920 = vld [vmem:[%s8393 + $0x91] sm:$0xff]
    %v8921 = vld [vmem:[%s8393 + $0x99] sm:$0xff]
    %v8922 = vld [vmem:[%s8393 + $0xa9] sm:$0xff]
    %v8923 = vld [vmem:[%s8393 + $0xb1] sm:$0xff]
    %v8924 = vld [vmem:[%s8393 + $0xc1] sm:$0xff]
    %v8925 = vld [vmem:[%s8393 + $0xc9] sm:$0xff]
    %v8926 = vld [vmem:[%s8393 + $0xd9] sm:$0xff]
    %v8927 = vld [vmem:[%s8393 + $0xe1] sm:$0xff]
    %v8928 = vld [vmem:[%s8393 + $0xf1] sm:$0xff]
    %v8929 = vld [vmem:[%s8393 + $0xf9] sm:$0xff]
    %v8930 = vld [vmem:[%s8393 + $0x109] sm:$0xff]
    %v8931 = vld [vmem:[%s8393 + $0x111] sm:$0xff]
    %v8932 = vld [vmem:[%s8393 + $0x121] sm:$0xff]
    %v8933 = vld [vmem:[%s8393 + $0x129] sm:$0xff]
    %v8934 = vld [vmem:[%s8393 + $0x139] sm:$0xff]
    %v8935 = vld [vmem:[%s8393 + $0x141] sm:$0xff]
    %v8936 = vld [vmem:[%s8393 + $0x151] sm:$0xff]
    %v8937 = vld [vmem:[%s8393 + $0x159] sm:$0xff]
    %v8938 = vld [vmem:[%s8393 + $0x169] sm:$0xff]
    %v8939 = vld [vmem:[%s8393 + $0x171] sm:$0xff]
    %v8940 = vld [vmem:[%s8393 + $0x1b1] sm:$0xff]
    %v8941 = vld [vmem:[%s8393 + $0x1b9] sm:$0xff]
    %v8942 = vld [vmem:[%s8393 + $0x1c9] sm:$0xff]
    %v8943 = vld [vmem:[%s8393 + $0x1d1] sm:$0xff]
    %v8944 = vld [vmem:[%s8393 + $0x1e1] sm:$0xff]
    %v8945 = vld [vmem:[%s8393 + $0x1e9] sm:$0xff]
    %v8946 = vld [vmem:[%s8393 + $0x1f9] sm:$0xff]
    %v8947 = vld [vmem:[%s8393 + $0x201] sm:$0xff]
    %v8948 = vld [vmem:[%s8393 + $0x211] sm:$0xff]
    %v8949 = vld [vmem:[%s8393 + $0x219] sm:$0xff]
    %v8950 = vld [vmem:[%s8393 + $0x229] sm:$0xff]
    %v8951 = vld [vmem:[%s8393 + $0x231] sm:$0xff]
    %v8952 = vld [vmem:[%s8393 + $0x241] sm:$0xff]
    %v8953 = vld [vmem:[%s8393 + $0x249] sm:$0xff]
    %v8954 = vld [vmem:[%s8393 + $0x259] sm:$0xff]
    %v8955 = vld [vmem:[%s8393 + $0x261] sm:$0xff]
    %v8956 = vld [vmem:[%s8393 + $0x271] sm:$0xff]
    %v8957 = vld [vmem:[%s8393 + $0x279] sm:$0xff]
    %v8958 = vld [vmem:[%s8393 + $0x289] sm:$0xff]
    %v8959 = vld [vmem:[%s8393 + $0x291] sm:$0xff]
    %v8960 = vld [vmem:[%s8393 + $0x2a1] sm:$0xff]
    %v8961 = vld [vmem:[%s8393 + $0x2a9] sm:$0xff]
    %v8962 = vld [vmem:[%s8393 + $0x2b9] sm:$0xff]
    %v8963 = vld [vmem:[%s8393 + $0x2c1] sm:$0xff]
    %v8964 = vld [vmem:[%s8393 + $0x2d1] sm:$0xff]
    %v8965 = vld [vmem:[%s8393 + $0x2d9] sm:$0xff]
    %v8966 = vld [vmem:[%s8393 + $0x2e9] sm:$0xff]
    %v8967 = vld [vmem:[%s8393 + $0x2f1] sm:$0xff]
    %v8968 = vld [vmem:[%s8393 + $0x301] sm:$0xff]
    %v8969 = vld [vmem:[%s8393 + $0x309] sm:$0xff]
    %v8970 = vld [vmem:[%s8393 + $0x319] sm:$0xff]
    %v8971 = vld [vmem:[%s8393 + $0x321] sm:$0xff]
    %v8972 = vpack.c.bf16 %v8909, %v8908
    %v8973 = vpack.c.bf16 %v8911, %v8910
    %v8974 = vpack.c.bf16 %v8913, %v8912
    %v8975 = vpack.c.bf16 %v8915, %v8914
    %v8976 = vpack.c.bf16 %v8917, %v8916
    %v8977 = vpack.c.bf16 %v8919, %v8918
    %v8978 = vpack.c.bf16 %v8921, %v8920
    %v8979 = vpack.c.bf16 %v8923, %v8922
    %v8980 = vpack.c.bf16 %v8925, %v8924
    %v8981 = vpack.c.bf16 %v8927, %v8926
    %v8982 = vpack.c.bf16 %v8929, %v8928
    %v8983 = vpack.c.bf16 %v8931, %v8930
    %v8984 = vpack.c.bf16 %v8933, %v8932
    %v8985 = vpack.c.bf16 %v8935, %v8934
    %v8986 = vpack.c.bf16 %v8937, %v8936
    %v8987 = vpack.c.bf16 %v8939, %v8938
    %v8988 = vpack.c.bf16 %v8941, %v8940
    %v8989 = vpack.c.bf16 %v8943, %v8942
    %v8990 = vpack.c.bf16 %v8945, %v8944
    %v8991 = vpack.c.bf16 %v8947, %v8946
    %v8992 = vpack.c.bf16 %v8949, %v8948
    %v8993 = vpack.c.bf16 %v8951, %v8950
    %v8994 = vpack.c.bf16 %v8953, %v8952
    %v8995 = vpack.c.bf16 %v8955, %v8954
    %v8996 = vpack.c.bf16 %v8957, %v8956
    %v8997 = vpack.c.bf16 %v8959, %v8958
    %v8998 = vpack.c.bf16 %v8961, %v8960
    %v8999 = vpack.c.bf16 %v8963, %v8962
    %v9000 = vpack.c.bf16 %v8965, %v8964
    %v9001 = vpack.c.bf16 %v8967, %v8966
    %v9002 = vpack.c.bf16 %v8969, %v8968
    %v9003 = vpack.c.bf16 %v8971, %v8970
    %s9004 = scalar_lea.vmem %s6, 448
    %v9005 = vld [vmem:[%s9004] sm:$0xf]
    %v9006 = vld [vmem:[%s9004 + $0x4] sm:$0xf]
    %v9007 = vld [vmem:[%s9004 + $0x8] sm:$0xf]
    %v9008 = vld [vmem:[%s9004 + $0xc] sm:$0xf]
    %v9009 = vld [vmem:[%s9004 + $0x10] sm:$0xf]
    %v9010 = vld [vmem:[%s9004 + $0x14] sm:$0xf]
    %v9011 = vld [vmem:[%s9004 + $0x18] sm:$0xf]
    %v9012 = vld [vmem:[%s9004 + $0x1c] sm:$0xf]
    %v9013 = vld [vmem:[%s9004 + $0x20] sm:$0xf]
    %v9014 = vld [vmem:[%s9004 + $0x24] sm:$0xf]
    %v9015 = vld [vmem:[%s9004 + $0x28] sm:$0xf]
    %v9016 = vld [vmem:[%s9004 + $0x2c] sm:$0xf]
    %v9017 = vld [vmem:[%s9004 + $0x30] sm:$0xf]
    %v9018 = vld [vmem:[%s9004 + $0x34] sm:$0xf]
    %v9019 = vld [vmem:[%s9004 + $0x38] sm:$0xf]
    %v9020 = vld [vmem:[%s9004 + $0x3c] sm:$0xf]
    %v9037 = vunpack.c.l.b16 %v9005
    %v9038 = vunpack.c.l.b16 %v9006
    %v9039 = vunpack.c.l.b16 %v9007
    %v9040 = vunpack.c.l.b16 %v9008
    %v9041 = vunpack.c.l.b16 %v9009
    %v9042 = vunpack.c.l.b16 %v9010
    %v9043 = vunpack.c.l.b16 %v9011
    %v9044 = vunpack.c.l.b16 %v9012
    %v9045 = vunpack.c.l.b16 %v9013
    %v9046 = vunpack.c.l.b16 %v9014
    %v9047 = vunpack.c.l.b16 %v9015
    %v9048 = vunpack.c.l.b16 %v9016
    %v9049 = vunpack.c.l.b16 %v9017
    %v9050 = vunpack.c.l.b16 %v9018
    %v9051 = vunpack.c.l.b16 %v9019
    %v9052 = vunpack.c.l.b16 %v9020
    %v9053 = vpack.c.b16 %v9038, %v9037
    %v9054 = vpack.c.b16 %v9040, %v9039
    %v9055 = vpack.c.b16 %v9042, %v9041
    %v9056 = vpack.c.b16 %v9044, %v9043
    %v9057 = vpack.c.b16 %v9046, %v9045
    %v9058 = vpack.c.b16 %v9048, %v9047
    %v9059 = vpack.c.b16 %v9050, %v9049
    %v9060 = vpack.c.b16 %v9052, %v9051
    %9069 = vmatprep.subr.bf16.mxu0 0
    %9070 = vmatpush1.bf16.msra.mxu0 %v9060
    %9071 = vmatprep.subr.bf16.mxu0 0
    %9072 = vmatpush1.bf16.msra.mxu0 %v9059
    %9073 = vmatprep.subr.bf16.mxu0 0
    %9074 = vmatpush1.bf16.msra.mxu0 %v9058
    %9075 = vmatprep.subr.bf16.mxu0 0
    %9076 = vmatpush1.bf16.msra.mxu0 %v9057
    %9077 = vmatprep.subr.bf16.mxu0 0
    %9078 = vmatpush1.bf16.msra.mxu0 %v9056
    %9079 = vmatprep.subr.bf16.mxu0 0
    %9080 = vmatpush1.bf16.msra.mxu0 %v9055
    %9081 = vmatprep.subr.bf16.mxu0 0
    %9082 = vmatpush1.bf16.msra.mxu0 %v9054
    %9083 = vmatprep.subr.bf16.mxu0 0
    %9084 = vmatpush1.bf16.msra.mxu0 %v9053
    %9085 = vmatprep.subr.bf16.mxu0 0
    %9086 = vmatpush2.bf16.msra.mxu0 0
    %9087 = vmatprep.subr.bf16.mxu0 0
    %9088 = vmatpush2.bf16.msra.mxu0 0
    %9089 = vmatprep.subr.bf16.mxu0 0
    %9090 = vmatpush2.bf16.msra.mxu0 0
    %9091 = vmatprep.subr.bf16.mxu0 0
    %9092 = vmatpush2.bf16.msra.mxu0 0
    %9093 = vmatprep.subr.bf16.mxu0 0
    %9094 = vmatpush2.bf16.msra.mxu0 0
    %9095 = vmatprep.subr.bf16.mxu0 0
    %9096 = vmatpush2.bf16.msra.mxu0 0
    %9097 = vmatprep.subr.bf16.mxu0 0
    %9098 = vmatpush2.bf16.msra.mxu0 0
    %9099 = vmatprep.subr.bf16.mxu0 0
    %9100 = vmatpush2.bf16.msra.mxu0 0
    %9101 = vmatprep.mubr.bf16.mxu0 0
    %9102 = vmatmul.mubr.bf16.gmra.mxu0 %v8972
    %v9103 = vpop.f32.mrf.mxu0
    %v9104 = vadd.f32 0.0, %v9103
    %v9105 = vpop.f32.mrf.mxu0
    %v9106 = vpop.f32.mrf.mxu0
    %v9107 = vadd.f32 0.0, %v9106
    %v9108 = vpop.f32.mrf.mxu0
    %9109 = vmatprep.mubr.bf16.mxu0 0
    %9110 = vmatmul.mubr.bf16.gmra.mxu0 %v8973
    %v9111 = vpop.f32.mrf.mxu0
    %v9112 = vadd.f32 0.0, %v9111
    %v9113 = vpop.f32.mrf.mxu0
    %v9114 = vpop.f32.mrf.mxu0
    %v9115 = vadd.f32 0.0, %v9114
    %v9116 = vpop.f32.mrf.mxu0
    %9117 = vmatprep.mubr.bf16.mxu0 0
    %9118 = vmatmul.mubr.bf16.gmra.mxu0 %v8974
    %v9119 = vpop.f32.mrf.mxu0
    %v9120 = vadd.f32 0.0, %v9119
    %v9121 = vpop.f32.mrf.mxu0
    %v9122 = vpop.f32.mrf.mxu0
    %v9123 = vadd.f32 0.0, %v9122
    %v9124 = vpop.f32.mrf.mxu0
    %9125 = vmatprep.mubr.bf16.mxu0 0
    %9126 = vmatmul.mubr.bf16.gmra.mxu0 %v8975
    %v9127 = vpop.f32.mrf.mxu0
    %v9128 = vadd.f32 0.0, %v9127
    %v9129 = vpop.f32.mrf.mxu0
    %v9130 = vpop.f32.mrf.mxu0
    %v9131 = vadd.f32 0.0, %v9130
    %v9132 = vpop.f32.mrf.mxu0
    %9133 = vmatprep.mubr.bf16.mxu0 0
    %9134 = vmatmul.mubr.bf16.gmra.mxu0 %v8976
    %v9135 = vpop.f32.mrf.mxu0
    %v9136 = vadd.f32 0.0, %v9135
    %v9137 = vpop.f32.mrf.mxu0
    %v9138 = vpop.f32.mrf.mxu0
    %v9139 = vadd.f32 0.0, %v9138
    %v9140 = vpop.f32.mrf.mxu0
    %9141 = vmatprep.mubr.bf16.mxu0 0
    %9142 = vmatmul.mubr.bf16.gmra.mxu0 %v8977
    %v9143 = vpop.f32.mrf.mxu0
    %v9144 = vadd.f32 0.0, %v9143
    %v9145 = vpop.f32.mrf.mxu0
    %v9146 = vpop.f32.mrf.mxu0
    %v9147 = vadd.f32 0.0, %v9146
    %v9148 = vpop.f32.mrf.mxu0
    %9149 = vmatprep.mubr.bf16.mxu0 0
    %9150 = vmatmul.mubr.bf16.gmra.mxu0 %v8978
    %v9151 = vpop.f32.mrf.mxu0
    %v9152 = vadd.f32 0.0, %v9151
    %v9153 = vpop.f32.mrf.mxu0
    %v9154 = vpop.f32.mrf.mxu0
    %v9155 = vadd.f32 0.0, %v9154
    %v9156 = vpop.f32.mrf.mxu0
    %9157 = vmatprep.mubr.bf16.mxu0 0
    %9158 = vmatmul.mubr.bf16.gmra.mxu0 %v8979
    %v9159 = vpop.f32.mrf.mxu0
    %v9160 = vadd.f32 0.0, %v9159
    %v9161 = vpop.f32.mrf.mxu0
    %v9162 = vpop.f32.mrf.mxu0
    %v9163 = vadd.f32 0.0, %v9162
    %v9164 = vpop.f32.mrf.mxu0
    %9165 = vmatprep.mubr.bf16.mxu0 0
    %9166 = vmatmul.mubr.bf16.gmra.mxu0 %v8980
    %v9167 = vpop.f32.mrf.mxu0
    %v9168 = vadd.f32 0.0, %v9167
    %v9169 = vpop.f32.mrf.mxu0
    %v9170 = vpop.f32.mrf.mxu0
    %v9171 = vadd.f32 0.0, %v9170
    %v9172 = vpop.f32.mrf.mxu0
    %9173 = vmatprep.mubr.bf16.mxu0 0
    %9174 = vmatmul.mubr.bf16.gmra.mxu0 %v8981
    %v9175 = vpop.f32.mrf.mxu0
    %v9176 = vadd.f32 0.0, %v9175
    %v9177 = vpop.f32.mrf.mxu0
    %v9178 = vpop.f32.mrf.mxu0
    %v9179 = vadd.f32 0.0, %v9178
    %v9180 = vpop.f32.mrf.mxu0
    %9181 = vmatprep.mubr.bf16.mxu0 0
    %9182 = vmatmul.mubr.bf16.gmra.mxu0 %v8982
    %v9183 = vpop.f32.mrf.mxu0
    %v9184 = vadd.f32 0.0, %v9183
    %v9185 = vpop.f32.mrf.mxu0
    %v9186 = vpop.f32.mrf.mxu0
    %v9187 = vadd.f32 0.0, %v9186
    %v9188 = vpop.f32.mrf.mxu0
    %9189 = vmatprep.mubr.bf16.mxu0 0
    %9190 = vmatmul.mubr.bf16.gmra.mxu0 %v8983
    %v9191 = vpop.f32.mrf.mxu0
    %v9192 = vadd.f32 0.0, %v9191
    %v9193 = vpop.f32.mrf.mxu0
    %v9194 = vpop.f32.mrf.mxu0
    %v9195 = vadd.f32 0.0, %v9194
    %v9196 = vpop.f32.mrf.mxu0
    %9197 = vmatprep.mubr.bf16.mxu0 0
    %9198 = vmatmul.mubr.bf16.gmra.mxu0 %v8984
    %v9199 = vpop.f32.mrf.mxu0
    %v9200 = vadd.f32 0.0, %v9199
    %v9201 = vpop.f32.mrf.mxu0
    %v9202 = vpop.f32.mrf.mxu0
    %v9203 = vadd.f32 0.0, %v9202
    %v9204 = vpop.f32.mrf.mxu0
    %9205 = vmatprep.mubr.bf16.mxu0 0
    %9206 = vmatmul.mubr.bf16.gmra.mxu0 %v8985
    %v9207 = vpop.f32.mrf.mxu0
    %v9208 = vadd.f32 0.0, %v9207
    %v9209 = vpop.f32.mrf.mxu0
    %v9210 = vpop.f32.mrf.mxu0
    %v9211 = vadd.f32 0.0, %v9210
    %v9212 = vpop.f32.mrf.mxu0
    %9213 = vmatprep.mubr.bf16.mxu0 0
    %9214 = vmatmul.mubr.bf16.gmra.mxu0 %v8986
    %v9215 = vpop.f32.mrf.mxu0
    %v9216 = vadd.f32 0.0, %v9215
    %v9217 = vpop.f32.mrf.mxu0
    %v9218 = vpop.f32.mrf.mxu0
    %v9219 = vadd.f32 0.0, %v9218
    %v9220 = vpop.f32.mrf.mxu0
    %9221 = vmatprep.mubr.bf16.mxu0 0
    %9222 = vmatmul.mubr.bf16.gmra.mxu0 %v8987
    %v9223 = vpop.f32.mrf.mxu0
    %v9224 = vadd.f32 0.0, %v9223
    %v9225 = vpop.f32.mrf.mxu0
    %v9226 = vpop.f32.mrf.mxu0
    %v9227 = vadd.f32 0.0, %v9226
    %v9228 = vpop.f32.mrf.mxu0
    %9229 = vmatprep.mubr.bf16.mxu0 0
    %9230 = vmatmul.mubr.bf16.gmra.mxu0 %v8988
    %v9231 = vpop.f32.mrf.mxu0
    %v9232 = vadd.f32 0.0, %v9231
    %v9233 = vpop.f32.mrf.mxu0
    %v9234 = vpop.f32.mrf.mxu0
    %v9235 = vadd.f32 0.0, %v9234
    %v9236 = vpop.f32.mrf.mxu0
    %9237 = vmatprep.mubr.bf16.mxu0 0
    %9238 = vmatmul.mubr.bf16.gmra.mxu0 %v8989
    %v9239 = vpop.f32.mrf.mxu0
    %v9240 = vadd.f32 0.0, %v9239
    %v9241 = vpop.f32.mrf.mxu0
    %v9242 = vpop.f32.mrf.mxu0
    %v9243 = vadd.f32 0.0, %v9242
    %v9244 = vpop.f32.mrf.mxu0
    %9245 = vmatprep.mubr.bf16.mxu0 0
    %9246 = vmatmul.mubr.bf16.gmra.mxu0 %v8990
    %v9247 = vpop.f32.mrf.mxu0
    %v9248 = vadd.f32 0.0, %v9247
    %v9249 = vpop.f32.mrf.mxu0
    %v9250 = vpop.f32.mrf.mxu0
    %v9251 = vadd.f32 0.0, %v9250
    %v9252 = vpop.f32.mrf.mxu0
    %9253 = vmatprep.mubr.bf16.mxu0 0
    %9254 = vmatmul.mubr.bf16.gmra.mxu0 %v8991
    %v9255 = vpop.f32.mrf.mxu0
    %v9256 = vadd.f32 0.0, %v9255
    %v9257 = vpop.f32.mrf.mxu0
    %v9258 = vpop.f32.mrf.mxu0
    %v9259 = vadd.f32 0.0, %v9258
    %v9260 = vpop.f32.mrf.mxu0
    %9261 = vmatprep.mubr.bf16.mxu0 0
    %9262 = vmatmul.mubr.bf16.gmra.mxu0 %v8992
    %v9263 = vpop.f32.mrf.mxu0
    %v9264 = vadd.f32 0.0, %v9263
    %v9265 = vpop.f32.mrf.mxu0
    %v9266 = vpop.f32.mrf.mxu0
    %v9267 = vadd.f32 0.0, %v9266
    %v9268 = vpop.f32.mrf.mxu0
    %9269 = vmatprep.mubr.bf16.mxu0 0
    %9270 = vmatmul.mubr.bf16.gmra.mxu0 %v8993
    %v9271 = vpop.f32.mrf.mxu0
    %v9272 = vadd.f32 0.0, %v9271
    %v9273 = vpop.f32.mrf.mxu0
    %v9274 = vpop.f32.mrf.mxu0
    %v9275 = vadd.f32 0.0, %v9274
    %v9276 = vpop.f32.mrf.mxu0
    %9277 = vmatprep.mubr.bf16.mxu0 0
    %9278 = vmatmul.mubr.bf16.gmra.mxu0 %v8994
    %v9279 = vpop.f32.mrf.mxu0
    %v9280 = vadd.f32 0.0, %v9279
    %v9281 = vpop.f32.mrf.mxu0
    %v9282 = vpop.f32.mrf.mxu0
    %v9283 = vadd.f32 0.0, %v9282
    %v9284 = vpop.f32.mrf.mxu0
    %9285 = vmatprep.mubr.bf16.mxu0 0
    %9286 = vmatmul.mubr.bf16.gmra.mxu0 %v8995
    %v9287 = vpop.f32.mrf.mxu0
    %v9288 = vadd.f32 0.0, %v9287
    %v9289 = vpop.f32.mrf.mxu0
    %v9290 = vpop.f32.mrf.mxu0
    %v9291 = vadd.f32 0.0, %v9290
    %v9292 = vpop.f32.mrf.mxu0
    %9293 = vmatprep.mubr.bf16.mxu0 0
    %9294 = vmatmul.mubr.bf16.gmra.mxu0 %v8996
    %v9295 = vpop.f32.mrf.mxu0
    %v9296 = vadd.f32 0.0, %v9295
    %v9297 = vpop.f32.mrf.mxu0
    %v9298 = vpop.f32.mrf.mxu0
    %v9299 = vadd.f32 0.0, %v9298
    %v9300 = vpop.f32.mrf.mxu0
    %9301 = vmatprep.mubr.bf16.mxu0 0
    %9302 = vmatmul.mubr.bf16.gmra.mxu0 %v8997
    %v9303 = vpop.f32.mrf.mxu0
    %v9304 = vadd.f32 0.0, %v9303
    %v9305 = vpop.f32.mrf.mxu0
    %v9306 = vpop.f32.mrf.mxu0
    %v9307 = vadd.f32 0.0, %v9306
    %v9308 = vpop.f32.mrf.mxu0
    %9309 = vmatprep.mubr.bf16.mxu0 0
    %9310 = vmatmul.mubr.bf16.gmra.mxu0 %v8998
    %v9311 = vpop.f32.mrf.mxu0
    %v9312 = vadd.f32 0.0, %v9311
    %v9313 = vpop.f32.mrf.mxu0
    %v9314 = vpop.f32.mrf.mxu0
    %v9315 = vadd.f32 0.0, %v9314
    %v9316 = vpop.f32.mrf.mxu0
    %9317 = vmatprep.mubr.bf16.mxu0 0
    %9318 = vmatmul.mubr.bf16.gmra.mxu0 %v8999
    %v9319 = vpop.f32.mrf.mxu0
    %v9320 = vadd.f32 0.0, %v9319
    %v9321 = vpop.f32.mrf.mxu0
    %v9322 = vpop.f32.mrf.mxu0
    %v9323 = vadd.f32 0.0, %v9322
    %v9324 = vpop.f32.mrf.mxu0
    %9325 = vmatprep.mubr.bf16.mxu0 0
    %9326 = vmatmul.mubr.bf16.gmra.mxu0 %v9000
    %v9327 = vpop.f32.mrf.mxu0
    %v9328 = vadd.f32 0.0, %v9327
    %v9329 = vpop.f32.mrf.mxu0
    %v9330 = vpop.f32.mrf.mxu0
    %v9331 = vadd.f32 0.0, %v9330
    %v9332 = vpop.f32.mrf.mxu0
    %9333 = vmatprep.mubr.bf16.mxu0 0
    %9334 = vmatmul.mubr.bf16.gmra.mxu0 %v9001
    %v9335 = vpop.f32.mrf.mxu0
    %v9336 = vadd.f32 0.0, %v9335
    %v9337 = vpop.f32.mrf.mxu0
    %v9338 = vpop.f32.mrf.mxu0
    %v9339 = vadd.f32 0.0, %v9338
    %v9340 = vpop.f32.mrf.mxu0
    %9341 = vmatprep.mubr.bf16.mxu0 0
    %9342 = vmatmul.mubr.bf16.gmra.mxu0 %v9002
    %v9343 = vpop.f32.mrf.mxu0
    %v9344 = vadd.f32 0.0, %v9343
    %v9345 = vpop.f32.mrf.mxu0
    %v9346 = vpop.f32.mrf.mxu0
    %v9347 = vadd.f32 0.0, %v9346
    %v9348 = vpop.f32.mrf.mxu0
    %9349 = vmatprep.mubr.bf16.mxu0 0
    %9350 = vmatmul.mubr.bf16.gmra.mxu0 %v9003
    %v9351 = vpop.f32.mrf.mxu0
    %v9352 = vadd.f32 0.0, %v9351
    %v9353 = vpop.f32.mrf.mxu0
    %v9354 = vpop.f32.mrf.mxu0
    %v9355 = vadd.f32 0.0, %v9354
    %v9356 = vpop.f32.mrf.mxu0
    %9357 = vdwg.mxu0
    %v9358 = vadd.f32 %v8844, %v9104
    %v9359 = vadd.f32 %v8845, %v9107
    %v9360 = vadd.f32 %v8846, %v9112
    %v9361 = vadd.f32 %v8847, %v9115
    %v9362 = vadd.f32 %v8848, %v9120
    %v9363 = vadd.f32 %v8849, %v9123
    %v9364 = vadd.f32 %v8850, %v9128
    %v9365 = vadd.f32 %v8851, %v9131
    %v9366 = vadd.f32 %v8852, %v9136
    %v9367 = vadd.f32 %v8853, %v9139
    %v9368 = vadd.f32 %v8854, %v9144
    %v9369 = vadd.f32 %v8855, %v9147
    %v9370 = vadd.f32 %v8856, %v9152
    %v9371 = vadd.f32 %v8857, %v9155
    %v9372 = vadd.f32 %v8858, %v9160
    %v9373 = vadd.f32 %v8859, %v9163
    %v9374 = vadd.f32 %v8860, %v9168
    %v9375 = vadd.f32 %v8861, %v9171
    %v9376 = vadd.f32 %v8862, %v9176
    %v9377 = vadd.f32 %v8863, %v9179
    %v9378 = vadd.f32 %v8864, %v9184
    %v9379 = vadd.f32 %v8865, %v9187
    %v9380 = vadd.f32 %v8866, %v9192
    %v9381 = vadd.f32 %v8867, %v9195
    %v9382 = vadd.f32 %v8868, %v9200
    %v9383 = vadd.f32 %v8869, %v9203
    %v9384 = vadd.f32 %v8870, %v9208
    %v9385 = vadd.f32 %v8871, %v9211
    %v9386 = vadd.f32 %v8872, %v9216
    %v9387 = vadd.f32 %v8873, %v9219
    %v9388 = vadd.f32 %v8874, %v9224
    %v9389 = vadd.f32 %v8875, %v9227
    %v9390 = vadd.f32 %v8876, %v9232
    %v9391 = vadd.f32 %v8877, %v9235
    %v9392 = vadd.f32 %v8878, %v9240
    %v9393 = vadd.f32 %v8879, %v9243
    %v9394 = vadd.f32 %v8880, %v9248
    %v9395 = vadd.f32 %v8881, %v9251
    %v9396 = vadd.f32 %v8882, %v9256
    %v9397 = vadd.f32 %v8883, %v9259
    %v9398 = vadd.f32 %v8884, %v9264
    %v9399 = vadd.f32 %v8885, %v9267
    %v9400 = vadd.f32 %v8886, %v9272
    %v9401 = vadd.f32 %v8887, %v9275
    %v9402 = vadd.f32 %v8888, %v9280
    %v9403 = vadd.f32 %v8889, %v9283
    %v9404 = vadd.f32 %v8890, %v9288
    %v9405 = vadd.f32 %v8891, %v9291
    %v9406 = vadd.f32 %v8892, %v9296
    %v9407 = vadd.f32 %v8893, %v9299
    %v9408 = vadd.f32 %v8894, %v9304
    %v9409 = vadd.f32 %v8895, %v9307
    %v9410 = vadd.f32 %v8896, %v9312
    %v9411 = vadd.f32 %v8897, %v9315
    %v9412 = vadd.f32 %v8898, %v9320
    %v9413 = vadd.f32 %v8899, %v9323
    %v9414 = vadd.f32 %v8900, %v9328
    %v9415 = vadd.f32 %v8901, %v9331
    %v9416 = vadd.f32 %v8902, %v9336
    %v9417 = vadd.f32 %v8903, %v9339
    %v9418 = vadd.f32 %v8904, %v9344
    %v9419 = vadd.f32 %v8905, %v9347
    %v9420 = vadd.f32 %v8906, %v9352
    %v9421 = vadd.f32 %v8907, %v9355
    %v9422 = vld [vmem:[%s8393 + $0x2] sm:$0xff]
    %v9423 = vld [vmem:[%s8393 + $0xa] sm:$0xff]
    %v9424 = vld [vmem:[%s8393 + $0x1a] sm:$0xff]
    %v9425 = vld [vmem:[%s8393 + $0x22] sm:$0xff]
    %v9426 = vld [vmem:[%s8393 + $0x32] sm:$0xff]
    %v9427 = vld [vmem:[%s8393 + $0x3a] sm:$0xff]
    %v9428 = vld [vmem:[%s8393 + $0x4a] sm:$0xff]
    %v9429 = vld [vmem:[%s8393 + $0x52] sm:$0xff]
    %v9430 = vld [vmem:[%s8393 + $0x62] sm:$0xff]
    %v9431 = vld [vmem:[%s8393 + $0x6a] sm:$0xff]
    %v9432 = vld [vmem:[%s8393 + $0x7a] sm:$0xff]
    %v9433 = vld [vmem:[%s8393 + $0x82] sm:$0xff]
    %v9434 = vld [vmem:[%s8393 + $0x92] sm:$0xff]
    %v9435 = vld [vmem:[%s8393 + $0x9a] sm:$0xff]
    %v9436 = vld [vmem:[%s8393 + $0xaa] sm:$0xff]
    %v9437 = vld [vmem:[%s8393 + $0xb2] sm:$0xff]
    %v9438 = vld [vmem:[%s8393 + $0xc2] sm:$0xff]
    %v9439 = vld [vmem:[%s8393 + $0xca] sm:$0xff]
    %v9440 = vld [vmem:[%s8393 + $0xda] sm:$0xff]
    %v9441 = vld [vmem:[%s8393 + $0xe2] sm:$0xff]
    %v9442 = vld [vmem:[%s8393 + $0xf2] sm:$0xff]
    %v9443 = vld [vmem:[%s8393 + $0xfa] sm:$0xff]
    %v9444 = vld [vmem:[%s8393 + $0x10a] sm:$0xff]
    %v9445 = vld [vmem:[%s8393 + $0x112] sm:$0xff]
    %v9446 = vld [vmem:[%s8393 + $0x122] sm:$0xff]
    %v9447 = vld [vmem:[%s8393 + $0x12a] sm:$0xff]
    %v9448 = vld [vmem:[%s8393 + $0x13a] sm:$0xff]
    %v9449 = vld [vmem:[%s8393 + $0x142] sm:$0xff]
    %v9450 = vld [vmem:[%s8393 + $0x152] sm:$0xff]
    %v9451 = vld [vmem:[%s8393 + $0x15a] sm:$0xff]
    %v9452 = vld [vmem:[%s8393 + $0x16a] sm:$0xff]
    %v9453 = vld [vmem:[%s8393 + $0x172] sm:$0xff]
    %v9454 = vld [vmem:[%s8393 + $0x1b2] sm:$0xff]
    %v9455 = vld [vmem:[%s8393 + $0x1ba] sm:$0xff]
    %v9456 = vld [vmem:[%s8393 + $0x1ca] sm:$0xff]
    %v9457 = vld [vmem:[%s8393 + $0x1d2] sm:$0xff]
    %v9458 = vld [vmem:[%s8393 + $0x1e2] sm:$0xff]
    %v9459 = vld [vmem:[%s8393 + $0x1ea] sm:$0xff]
    %v9460 = vld [vmem:[%s8393 + $0x1fa] sm:$0xff]
    %v9461 = vld [vmem:[%s8393 + $0x202] sm:$0xff]
    %v9462 = vld [vmem:[%s8393 + $0x212] sm:$0xff]
    %v9463 = vld [vmem:[%s8393 + $0x21a] sm:$0xff]
    %v9464 = vld [vmem:[%s8393 + $0x22a] sm:$0xff]
    %v9465 = vld [vmem:[%s8393 + $0x232] sm:$0xff]
    %v9466 = vld [vmem:[%s8393 + $0x242] sm:$0xff]
    %v9467 = vld [vmem:[%s8393 + $0x24a] sm:$0xff]
    %v9468 = vld [vmem:[%s8393 + $0x25a] sm:$0xff]
    %v9469 = vld [vmem:[%s8393 + $0x262] sm:$0xff]
    %v9470 = vld [vmem:[%s8393 + $0x272] sm:$0xff]
    %v9471 = vld [vmem:[%s8393 + $0x27a] sm:$0xff]
    %v9472 = vld [vmem:[%s8393 + $0x28a] sm:$0xff]
    %v9473 = vld [vmem:[%s8393 + $0x292] sm:$0xff]
    %v9474 = vld [vmem:[%s8393 + $0x2a2] sm:$0xff]
    %v9475 = vld [vmem:[%s8393 + $0x2aa] sm:$0xff]
    %v9476 = vld [vmem:[%s8393 + $0x2ba] sm:$0xff]
    %v9477 = vld [vmem:[%s8393 + $0x2c2] sm:$0xff]
    %v9478 = vld [vmem:[%s8393 + $0x2d2] sm:$0xff]
    %v9479 = vld [vmem:[%s8393 + $0x2da] sm:$0xff]
    %v9480 = vld [vmem:[%s8393 + $0x2ea] sm:$0xff]
    %v9481 = vld [vmem:[%s8393 + $0x2f2] sm:$0xff]
    %v9482 = vld [vmem:[%s8393 + $0x302] sm:$0xff]
    %v9483 = vld [vmem:[%s8393 + $0x30a] sm:$0xff]
    %v9484 = vld [vmem:[%s8393 + $0x31a] sm:$0xff]
    %v9485 = vld [vmem:[%s8393 + $0x322] sm:$0xff]
    %v9486 = vpack.c.bf16 %v9423, %v9422
    %v9487 = vpack.c.bf16 %v9425, %v9424
    %v9488 = vpack.c.bf16 %v9427, %v9426
    %v9489 = vpack.c.bf16 %v9429, %v9428
    %v9490 = vpack.c.bf16 %v9431, %v9430
    %v9491 = vpack.c.bf16 %v9433, %v9432
    %v9492 = vpack.c.bf16 %v9435, %v9434
    %v9493 = vpack.c.bf16 %v9437, %v9436
    %v9494 = vpack.c.bf16 %v9439, %v9438
    %v9495 = vpack.c.bf16 %v9441, %v9440
    %v9496 = vpack.c.bf16 %v9443, %v9442
    %v9497 = vpack.c.bf16 %v9445, %v9444
    %v9498 = vpack.c.bf16 %v9447, %v9446
    %v9499 = vpack.c.bf16 %v9449, %v9448
    %v9500 = vpack.c.bf16 %v9451, %v9450
    %v9501 = vpack.c.bf16 %v9453, %v9452
    %v9502 = vpack.c.bf16 %v9455, %v9454
    %v9503 = vpack.c.bf16 %v9457, %v9456
    %v9504 = vpack.c.bf16 %v9459, %v9458
    %v9505 = vpack.c.bf16 %v9461, %v9460
    %v9506 = vpack.c.bf16 %v9463, %v9462
    %v9507 = vpack.c.bf16 %v9465, %v9464
    %v9508 = vpack.c.bf16 %v9467, %v9466
    %v9509 = vpack.c.bf16 %v9469, %v9468
    %v9510 = vpack.c.bf16 %v9471, %v9470
    %v9511 = vpack.c.bf16 %v9473, %v9472
    %v9512 = vpack.c.bf16 %v9475, %v9474
    %v9513 = vpack.c.bf16 %v9477, %v9476
    %v9514 = vpack.c.bf16 %v9479, %v9478
    %v9515 = vpack.c.bf16 %v9481, %v9480
    %v9516 = vpack.c.bf16 %v9483, %v9482
    %v9517 = vpack.c.bf16 %v9485, %v9484
    %s9518 = scalar_lea.vmem %s6, 512
    %v9519 = vld [vmem:[%s9518] sm:$0xf]
    %v9520 = vld [vmem:[%s9518 + $0x4] sm:$0xf]
    %v9521 = vld [vmem:[%s9518 + $0x8] sm:$0xf]
    %v9522 = vld [vmem:[%s9518 + $0xc] sm:$0xf]
    %v9523 = vld [vmem:[%s9518 + $0x10] sm:$0xf]
    %v9524 = vld [vmem:[%s9518 + $0x14] sm:$0xf]
    %v9525 = vld [vmem:[%s9518 + $0x18] sm:$0xf]
    %v9526 = vld [vmem:[%s9518 + $0x1c] sm:$0xf]
    %v9527 = vld [vmem:[%s9518 + $0x20] sm:$0xf]
    %v9528 = vld [vmem:[%s9518 + $0x24] sm:$0xf]
    %v9529 = vld [vmem:[%s9518 + $0x28] sm:$0xf]
    %v9530 = vld [vmem:[%s9518 + $0x2c] sm:$0xf]
    %v9531 = vld [vmem:[%s9518 + $0x30] sm:$0xf]
    %v9532 = vld [vmem:[%s9518 + $0x34] sm:$0xf]
    %v9533 = vld [vmem:[%s9518 + $0x38] sm:$0xf]
    %v9534 = vld [vmem:[%s9518 + $0x3c] sm:$0xf]
    %v9551 = vunpack.c.l.b16 %v9519
    %v9552 = vunpack.c.l.b16 %v9520
    %v9553 = vunpack.c.l.b16 %v9521
    %v9554 = vunpack.c.l.b16 %v9522
    %v9555 = vunpack.c.l.b16 %v9523
    %v9556 = vunpack.c.l.b16 %v9524
    %v9557 = vunpack.c.l.b16 %v9525
    %v9558 = vunpack.c.l.b16 %v9526
    %v9559 = vunpack.c.l.b16 %v9527
    %v9560 = vunpack.c.l.b16 %v9528
    %v9561 = vunpack.c.l.b16 %v9529
    %v9562 = vunpack.c.l.b16 %v9530
    %v9563 = vunpack.c.l.b16 %v9531
    %v9564 = vunpack.c.l.b16 %v9532
    %v9565 = vunpack.c.l.b16 %v9533
    %v9566 = vunpack.c.l.b16 %v9534
    %v9567 = vpack.c.b16 %v9552, %v9551
    %v9568 = vpack.c.b16 %v9554, %v9553
    %v9569 = vpack.c.b16 %v9556, %v9555
    %v9570 = vpack.c.b16 %v9558, %v9557
    %v9571 = vpack.c.b16 %v9560, %v9559
    %v9572 = vpack.c.b16 %v9562, %v9561
    %v9573 = vpack.c.b16 %v9564, %v9563
    %v9574 = vpack.c.b16 %v9566, %v9565
    %9583 = vmatprep.subr.bf16.mxu0 0
    %9584 = vmatpush1.bf16.msra.mxu0 %v9574
    %9585 = vmatprep.subr.bf16.mxu0 0
    %9586 = vmatpush1.bf16.msra.mxu0 %v9573
    %9587 = vmatprep.subr.bf16.mxu0 0
    %9588 = vmatpush1.bf16.msra.mxu0 %v9572
    %9589 = vmatprep.subr.bf16.mxu0 0
    %9590 = vmatpush1.bf16.msra.mxu0 %v9571
    %9591 = vmatprep.subr.bf16.mxu0 0
    %9592 = vmatpush1.bf16.msra.mxu0 %v9570
    %9593 = vmatprep.subr.bf16.mxu0 0
    %9594 = vmatpush1.bf16.msra.mxu0 %v9569
    %9595 = vmatprep.subr.bf16.mxu0 0
    %9596 = vmatpush1.bf16.msra.mxu0 %v9568
    %9597 = vmatprep.subr.bf16.mxu0 0
    %9598 = vmatpush1.bf16.msra.mxu0 %v9567
    %9599 = vmatprep.subr.bf16.mxu0 0
    %9600 = vmatpush2.bf16.msra.mxu0 0
    %9601 = vmatprep.subr.bf16.mxu0 0
    %9602 = vmatpush2.bf16.msra.mxu0 0
    %9603 = vmatprep.subr.bf16.mxu0 0
    %9604 = vmatpush2.bf16.msra.mxu0 0
    %9605 = vmatprep.subr.bf16.mxu0 0
    %9606 = vmatpush2.bf16.msra.mxu0 0
    %9607 = vmatprep.subr.bf16.mxu0 0
    %9608 = vmatpush2.bf16.msra.mxu0 0
    %9609 = vmatprep.subr.bf16.mxu0 0
    %9610 = vmatpush2.bf16.msra.mxu0 0
    %9611 = vmatprep.subr.bf16.mxu0 0
    %9612 = vmatpush2.bf16.msra.mxu0 0
    %9613 = vmatprep.subr.bf16.mxu0 0
    %9614 = vmatpush2.bf16.msra.mxu0 0
    %9615 = vmatprep.mubr.bf16.mxu0 0
    %9616 = vmatmul.mubr.bf16.gmra.mxu0 %v9486
    %v9617 = vpop.f32.mrf.mxu0
    %v9618 = vadd.f32 0.0, %v9617
    %v9619 = vpop.f32.mrf.mxu0
    %v9620 = vpop.f32.mrf.mxu0
    %v9621 = vadd.f32 0.0, %v9620
    %v9622 = vpop.f32.mrf.mxu0
    %9623 = vmatprep.mubr.bf16.mxu0 0
    %9624 = vmatmul.mubr.bf16.gmra.mxu0 %v9487
    %v9625 = vpop.f32.mrf.mxu0
    %v9626 = vadd.f32 0.0, %v9625
    %v9627 = vpop.f32.mrf.mxu0
    %v9628 = vpop.f32.mrf.mxu0
    %v9629 = vadd.f32 0.0, %v9628
    %v9630 = vpop.f32.mrf.mxu0
    %9631 = vmatprep.mubr.bf16.mxu0 0
    %9632 = vmatmul.mubr.bf16.gmra.mxu0 %v9488
    %v9633 = vpop.f32.mrf.mxu0
    %v9634 = vadd.f32 0.0, %v9633
    %v9635 = vpop.f32.mrf.mxu0
    %v9636 = vpop.f32.mrf.mxu0
    %v9637 = vadd.f32 0.0, %v9636
    %v9638 = vpop.f32.mrf.mxu0
    %9639 = vmatprep.mubr.bf16.mxu0 0
    %9640 = vmatmul.mubr.bf16.gmra.mxu0 %v9489
    %v9641 = vpop.f32.mrf.mxu0
    %v9642 = vadd.f32 0.0, %v9641
    %v9643 = vpop.f32.mrf.mxu0
    %v9644 = vpop.f32.mrf.mxu0
    %v9645 = vadd.f32 0.0, %v9644
    %v9646 = vpop.f32.mrf.mxu0
    %9647 = vmatprep.mubr.bf16.mxu0 0
    %9648 = vmatmul.mubr.bf16.gmra.mxu0 %v9490
    %v9649 = vpop.f32.mrf.mxu0
    %v9650 = vadd.f32 0.0, %v9649
    %v9651 = vpop.f32.mrf.mxu0
    %v9652 = vpop.f32.mrf.mxu0
    %v9653 = vadd.f32 0.0, %v9652
    %v9654 = vpop.f32.mrf.mxu0
    %9655 = vmatprep.mubr.bf16.mxu0 0
    %9656 = vmatmul.mubr.bf16.gmra.mxu0 %v9491
    %v9657 = vpop.f32.mrf.mxu0
    %v9658 = vadd.f32 0.0, %v9657
    %v9659 = vpop.f32.mrf.mxu0
    %v9660 = vpop.f32.mrf.mxu0
    %v9661 = vadd.f32 0.0, %v9660
    %v9662 = vpop.f32.mrf.mxu0
    %9663 = vmatprep.mubr.bf16.mxu0 0
    %9664 = vmatmul.mubr.bf16.gmra.mxu0 %v9492
    %v9665 = vpop.f32.mrf.mxu0
    %v9666 = vadd.f32 0.0, %v9665
    %v9667 = vpop.f32.mrf.mxu0
    %v9668 = vpop.f32.mrf.mxu0
    %v9669 = vadd.f32 0.0, %v9668
    %v9670 = vpop.f32.mrf.mxu0
    %9671 = vmatprep.mubr.bf16.mxu0 0
    %9672 = vmatmul.mubr.bf16.gmra.mxu0 %v9493
    %v9673 = vpop.f32.mrf.mxu0
    %v9674 = vadd.f32 0.0, %v9673
    %v9675 = vpop.f32.mrf.mxu0
    %v9676 = vpop.f32.mrf.mxu0
    %v9677 = vadd.f32 0.0, %v9676
    %v9678 = vpop.f32.mrf.mxu0
    %9679 = vmatprep.mubr.bf16.mxu0 0
    %9680 = vmatmul.mubr.bf16.gmra.mxu0 %v9494
    %v9681 = vpop.f32.mrf.mxu0
    %v9682 = vadd.f32 0.0, %v9681
    %v9683 = vpop.f32.mrf.mxu0
    %v9684 = vpop.f32.mrf.mxu0
    %v9685 = vadd.f32 0.0, %v9684
    %v9686 = vpop.f32.mrf.mxu0
    %9687 = vmatprep.mubr.bf16.mxu0 0
    %9688 = vmatmul.mubr.bf16.gmra.mxu0 %v9495
    %v9689 = vpop.f32.mrf.mxu0
    %v9690 = vadd.f32 0.0, %v9689
    %v9691 = vpop.f32.mrf.mxu0
    %v9692 = vpop.f32.mrf.mxu0
    %v9693 = vadd.f32 0.0, %v9692
    %v9694 = vpop.f32.mrf.mxu0
    %9695 = vmatprep.mubr.bf16.mxu0 0
    %9696 = vmatmul.mubr.bf16.gmra.mxu0 %v9496
    %v9697 = vpop.f32.mrf.mxu0
    %v9698 = vadd.f32 0.0, %v9697
    %v9699 = vpop.f32.mrf.mxu0
    %v9700 = vpop.f32.mrf.mxu0
    %v9701 = vadd.f32 0.0, %v9700
    %v9702 = vpop.f32.mrf.mxu0
    %9703 = vmatprep.mubr.bf16.mxu0 0
    %9704 = vmatmul.mubr.bf16.gmra.mxu0 %v9497
    %v9705 = vpop.f32.mrf.mxu0
    %v9706 = vadd.f32 0.0, %v9705
    %v9707 = vpop.f32.mrf.mxu0
    %v9708 = vpop.f32.mrf.mxu0
    %v9709 = vadd.f32 0.0, %v9708
    %v9710 = vpop.f32.mrf.mxu0
    %9711 = vmatprep.mubr.bf16.mxu0 0
    %9712 = vmatmul.mubr.bf16.gmra.mxu0 %v9498
    %v9713 = vpop.f32.mrf.mxu0
    %v9714 = vadd.f32 0.0, %v9713
    %v9715 = vpop.f32.mrf.mxu0
    %v9716 = vpop.f32.mrf.mxu0
    %v9717 = vadd.f32 0.0, %v9716
    %v9718 = vpop.f32.mrf.mxu0
    %9719 = vmatprep.mubr.bf16.mxu0 0
    %9720 = vmatmul.mubr.bf16.gmra.mxu0 %v9499
    %v9721 = vpop.f32.mrf.mxu0
    %v9722 = vadd.f32 0.0, %v9721
    %v9723 = vpop.f32.mrf.mxu0
    %v9724 = vpop.f32.mrf.mxu0
    %v9725 = vadd.f32 0.0, %v9724
    %v9726 = vpop.f32.mrf.mxu0
    %9727 = vmatprep.mubr.bf16.mxu0 0
    %9728 = vmatmul.mubr.bf16.gmra.mxu0 %v9500
    %v9729 = vpop.f32.mrf.mxu0
    %v9730 = vadd.f32 0.0, %v9729
    %v9731 = vpop.f32.mrf.mxu0
    %v9732 = vpop.f32.mrf.mxu0
    %v9733 = vadd.f32 0.0, %v9732
    %v9734 = vpop.f32.mrf.mxu0
    %9735 = vmatprep.mubr.bf16.mxu0 0
    %9736 = vmatmul.mubr.bf16.gmra.mxu0 %v9501
    %v9737 = vpop.f32.mrf.mxu0
    %v9738 = vadd.f32 0.0, %v9737
    %v9739 = vpop.f32.mrf.mxu0
    %v9740 = vpop.f32.mrf.mxu0
    %v9741 = vadd.f32 0.0, %v9740
    %v9742 = vpop.f32.mrf.mxu0
    %9743 = vmatprep.mubr.bf16.mxu0 0
    %9744 = vmatmul.mubr.bf16.gmra.mxu0 %v9502
    %v9745 = vpop.f32.mrf.mxu0
    %v9746 = vadd.f32 0.0, %v9745
    %v9747 = vpop.f32.mrf.mxu0
    %v9748 = vpop.f32.mrf.mxu0
    %v9749 = vadd.f32 0.0, %v9748
    %v9750 = vpop.f32.mrf.mxu0
    %9751 = vmatprep.mubr.bf16.mxu0 0
    %9752 = vmatmul.mubr.bf16.gmra.mxu0 %v9503
    %v9753 = vpop.f32.mrf.mxu0
    %v9754 = vadd.f32 0.0, %v9753
    %v9755 = vpop.f32.mrf.mxu0
    %v9756 = vpop.f32.mrf.mxu0
    %v9757 = vadd.f32 0.0, %v9756
    %v9758 = vpop.f32.mrf.mxu0
    %9759 = vmatprep.mubr.bf16.mxu0 0
    %9760 = vmatmul.mubr.bf16.gmra.mxu0 %v9504
    %v9761 = vpop.f32.mrf.mxu0
    %v9762 = vadd.f32 0.0, %v9761
    %v9763 = vpop.f32.mrf.mxu0
    %v9764 = vpop.f32.mrf.mxu0
    %v9765 = vadd.f32 0.0, %v9764
    %v9766 = vpop.f32.mrf.mxu0
    %9767 = vmatprep.mubr.bf16.mxu0 0
    %9768 = vmatmul.mubr.bf16.gmra.mxu0 %v9505
    %v9769 = vpop.f32.mrf.mxu0
    %v9770 = vadd.f32 0.0, %v9769
    %v9771 = vpop.f32.mrf.mxu0
    %v9772 = vpop.f32.mrf.mxu0
    %v9773 = vadd.f32 0.0, %v9772
    %v9774 = vpop.f32.mrf.mxu0
    %9775 = vmatprep.mubr.bf16.mxu0 0
    %9776 = vmatmul.mubr.bf16.gmra.mxu0 %v9506
    %v9777 = vpop.f32.mrf.mxu0
    %v9778 = vadd.f32 0.0, %v9777
    %v9779 = vpop.f32.mrf.mxu0
    %v9780 = vpop.f32.mrf.mxu0
    %v9781 = vadd.f32 0.0, %v9780
    %v9782 = vpop.f32.mrf.mxu0
    %9783 = vmatprep.mubr.bf16.mxu0 0
    %9784 = vmatmul.mubr.bf16.gmra.mxu0 %v9507
    %v9785 = vpop.f32.mrf.mxu0
    %v9786 = vadd.f32 0.0, %v9785
    %v9787 = vpop.f32.mrf.mxu0
    %v9788 = vpop.f32.mrf.mxu0
    %v9789 = vadd.f32 0.0, %v9788
    %v9790 = vpop.f32.mrf.mxu0
    %9791 = vmatprep.mubr.bf16.mxu0 0
    %9792 = vmatmul.mubr.bf16.gmra.mxu0 %v9508
    %v9793 = vpop.f32.mrf.mxu0
    %v9794 = vadd.f32 0.0, %v9793
    %v9795 = vpop.f32.mrf.mxu0
    %v9796 = vpop.f32.mrf.mxu0
    %v9797 = vadd.f32 0.0, %v9796
    %v9798 = vpop.f32.mrf.mxu0
    %9799 = vmatprep.mubr.bf16.mxu0 0
    %9800 = vmatmul.mubr.bf16.gmra.mxu0 %v9509
    %v9801 = vpop.f32.mrf.mxu0
    %v9802 = vadd.f32 0.0, %v9801
    %v9803 = vpop.f32.mrf.mxu0
    %v9804 = vpop.f32.mrf.mxu0
    %v9805 = vadd.f32 0.0, %v9804
    %v9806 = vpop.f32.mrf.mxu0
    %9807 = vmatprep.mubr.bf16.mxu0 0
    %9808 = vmatmul.mubr.bf16.gmra.mxu0 %v9510
    %v9809 = vpop.f32.mrf.mxu0
    %v9810 = vadd.f32 0.0, %v9809
    %v9811 = vpop.f32.mrf.mxu0
    %v9812 = vpop.f32.mrf.mxu0
    %v9813 = vadd.f32 0.0, %v9812
    %v9814 = vpop.f32.mrf.mxu0
    %9815 = vmatprep.mubr.bf16.mxu0 0
    %9816 = vmatmul.mubr.bf16.gmra.mxu0 %v9511
    %v9817 = vpop.f32.mrf.mxu0
    %v9818 = vadd.f32 0.0, %v9817
    %v9819 = vpop.f32.mrf.mxu0
    %v9820 = vpop.f32.mrf.mxu0
    %v9821 = vadd.f32 0.0, %v9820
    %v9822 = vpop.f32.mrf.mxu0
    %9823 = vmatprep.mubr.bf16.mxu0 0
    %9824 = vmatmul.mubr.bf16.gmra.mxu0 %v9512
    %v9825 = vpop.f32.mrf.mxu0
    %v9826 = vadd.f32 0.0, %v9825
    %v9827 = vpop.f32.mrf.mxu0
    %v9828 = vpop.f32.mrf.mxu0
    %v9829 = vadd.f32 0.0, %v9828
    %v9830 = vpop.f32.mrf.mxu0
    %9831 = vmatprep.mubr.bf16.mxu0 0
    %9832 = vmatmul.mubr.bf16.gmra.mxu0 %v9513
    %v9833 = vpop.f32.mrf.mxu0
    %v9834 = vadd.f32 0.0, %v9833
    %v9835 = vpop.f32.mrf.mxu0
    %v9836 = vpop.f32.mrf.mxu0
    %v9837 = vadd.f32 0.0, %v9836
    %v9838 = vpop.f32.mrf.mxu0
    %9839 = vmatprep.mubr.bf16.mxu0 0
    %9840 = vmatmul.mubr.bf16.gmra.mxu0 %v9514
    %v9841 = vpop.f32.mrf.mxu0
    %v9842 = vadd.f32 0.0, %v9841
    %v9843 = vpop.f32.mrf.mxu0
    %v9844 = vpop.f32.mrf.mxu0
    %v9845 = vadd.f32 0.0, %v9844
    %v9846 = vpop.f32.mrf.mxu0
    %9847 = vmatprep.mubr.bf16.mxu0 0
    %9848 = vmatmul.mubr.bf16.gmra.mxu0 %v9515
    %v9849 = vpop.f32.mrf.mxu0
    %v9850 = vadd.f32 0.0, %v9849
    %v9851 = vpop.f32.mrf.mxu0
    %v9852 = vpop.f32.mrf.mxu0
    %v9853 = vadd.f32 0.0, %v9852
    %v9854 = vpop.f32.mrf.mxu0
    %9855 = vmatprep.mubr.bf16.mxu0 0
    %9856 = vmatmul.mubr.bf16.gmra.mxu0 %v9516
    %v9857 = vpop.f32.mrf.mxu0
    %v9858 = vadd.f32 0.0, %v9857
    %v9859 = vpop.f32.mrf.mxu0
    %v9860 = vpop.f32.mrf.mxu0
    %v9861 = vadd.f32 0.0, %v9860
    %v9862 = vpop.f32.mrf.mxu0
    %9863 = vmatprep.mubr.bf16.mxu0 0
    %9864 = vmatmul.mubr.bf16.gmra.mxu0 %v9517
    %v9865 = vpop.f32.mrf.mxu0
    %v9866 = vadd.f32 0.0, %v9865
    %v9867 = vpop.f32.mrf.mxu0
    %v9868 = vpop.f32.mrf.mxu0
    %v9869 = vadd.f32 0.0, %v9868
    %v9870 = vpop.f32.mrf.mxu0
    %9871 = vdwg.mxu0
    %v9872 = vadd.f32 %v9358, %v9618
    %v9873 = vadd.f32 %v9359, %v9621
    %v9874 = vadd.f32 %v9360, %v9626
    %v9875 = vadd.f32 %v9361, %v9629
    %v9876 = vadd.f32 %v9362, %v9634
    %v9877 = vadd.f32 %v9363, %v9637
    %v9878 = vadd.f32 %v9364, %v9642
    %v9879 = vadd.f32 %v9365, %v9645
    %v9880 = vadd.f32 %v9366, %v9650
    %v9881 = vadd.f32 %v9367, %v9653
    %v9882 = vadd.f32 %v9368, %v9658
    %v9883 = vadd.f32 %v9369, %v9661
    %v9884 = vadd.f32 %v9370, %v9666
    %v9885 = vadd.f32 %v9371, %v9669
    %v9886 = vadd.f32 %v9372, %v9674
    %v9887 = vadd.f32 %v9373, %v9677
    %v9888 = vadd.f32 %v9374, %v9682
    %v9889 = vadd.f32 %v9375, %v9685
    %v9890 = vadd.f32 %v9376, %v9690
    %v9891 = vadd.f32 %v9377, %v9693
    %v9892 = vadd.f32 %v9378, %v9698
    %v9893 = vadd.f32 %v9379, %v9701
    %v9894 = vadd.f32 %v9380, %v9706
    %v9895 = vadd.f32 %v9381, %v9709
    %v9896 = vadd.f32 %v9382, %v9714
    %v9897 = vadd.f32 %v9383, %v9717
    %v9898 = vadd.f32 %v9384, %v9722
    %v9899 = vadd.f32 %v9385, %v9725
    %v9900 = vadd.f32 %v9386, %v9730
    %v9901 = vadd.f32 %v9387, %v9733
    %v9902 = vadd.f32 %v9388, %v9738
    %v9903 = vadd.f32 %v9389, %v9741
    %v9904 = vadd.f32 %v9390, %v9746
    %v9905 = vadd.f32 %v9391, %v9749
    %v9906 = vadd.f32 %v9392, %v9754
    %v9907 = vadd.f32 %v9393, %v9757
    %v9908 = vadd.f32 %v9394, %v9762
    %v9909 = vadd.f32 %v9395, %v9765
    %v9910 = vadd.f32 %v9396, %v9770
    %v9911 = vadd.f32 %v9397, %v9773
    %v9912 = vadd.f32 %v9398, %v9778
    %v9913 = vadd.f32 %v9399, %v9781
    %v9914 = vadd.f32 %v9400, %v9786
    %v9915 = vadd.f32 %v9401, %v9789
    %v9916 = vadd.f32 %v9402, %v9794
    %v9917 = vadd.f32 %v9403, %v9797
    %v9918 = vadd.f32 %v9404, %v9802
    %v9919 = vadd.f32 %v9405, %v9805
    %v9920 = vadd.f32 %v9406, %v9810
    %v9921 = vadd.f32 %v9407, %v9813
    %v9922 = vadd.f32 %v9408, %v9818
    %v9923 = vadd.f32 %v9409, %v9821
    %v9924 = vadd.f32 %v9410, %v9826
    %v9925 = vadd.f32 %v9411, %v9829
    %v9926 = vadd.f32 %v9412, %v9834
    %v9927 = vadd.f32 %v9413, %v9837
    %v9928 = vadd.f32 %v9414, %v9842
    %v9929 = vadd.f32 %v9415, %v9845
    %v9930 = vadd.f32 %v9416, %v9850
    %v9931 = vadd.f32 %v9417, %v9853
    %v9932 = vadd.f32 %v9418, %v9858
    %v9933 = vadd.f32 %v9419, %v9861
    %v9934 = vadd.f32 %v9420, %v9866
    %v9935 = vadd.f32 %v9421, %v9869
    %v9936 = vld [vmem:[%s7] sm:$0x1]
    %v9938 = vlaneseq
    %v9939 = vshrl.u32 %v9938, 7
    %v9940 = vsub.s32 0, %v9939
    %v9941 = vrot.slane %v9936, %v9940
    %v9943 = vadd.f32 %v9872, %v9941
    %v9944 = vadd.f32 %v9873, %v9941
    %v9945 = vadd.f32 %v9874, %v9941
    %v9946 = vadd.f32 %v9875, %v9941
    %v9947 = vadd.f32 %v9876, %v9941
    %v9948 = vadd.f32 %v9877, %v9941
    %v9949 = vadd.f32 %v9878, %v9941
    %v9950 = vadd.f32 %v9879, %v9941
    %v9951 = vadd.f32 %v9880, %v9941
    %v9952 = vadd.f32 %v9881, %v9941
    %v9953 = vadd.f32 %v9882, %v9941
    %v9954 = vadd.f32 %v9883, %v9941
    %v9955 = vadd.f32 %v9884, %v9941
    %v9956 = vadd.f32 %v9885, %v9941
    %v9957 = vadd.f32 %v9886, %v9941
    %v9958 = vadd.f32 %v9887, %v9941
    %v9959 = vadd.f32 %v9888, %v9941
    %v9960 = vadd.f32 %v9889, %v9941
    %v9961 = vadd.f32 %v9890, %v9941
    %v9962 = vadd.f32 %v9891, %v9941
    %v9963 = vadd.f32 %v9892, %v9941
    %v9964 = vadd.f32 %v9893, %v9941
    %v9965 = vadd.f32 %v9894, %v9941
    %v9966 = vadd.f32 %v9895, %v9941
    %v9967 = vadd.f32 %v9896, %v9941
    %v9968 = vadd.f32 %v9897, %v9941
    %v9969 = vadd.f32 %v9898, %v9941
    %v9970 = vadd.f32 %v9899, %v9941
    %v9971 = vadd.f32 %v9900, %v9941
    %v9972 = vadd.f32 %v9901, %v9941
    %v9973 = vadd.f32 %v9902, %v9941
    %v9974 = vadd.f32 %v9903, %v9941
    %v9975 = vadd.f32 %v9904, %v9941
    %v9976 = vadd.f32 %v9905, %v9941
    %v9977 = vadd.f32 %v9906, %v9941
    %v9978 = vadd.f32 %v9907, %v9941
    %v9979 = vadd.f32 %v9908, %v9941
    %v9980 = vadd.f32 %v9909, %v9941
    %v9981 = vadd.f32 %v9910, %v9941
    %v9982 = vadd.f32 %v9911, %v9941
    %v9983 = vadd.f32 %v9912, %v9941
    %v9984 = vadd.f32 %v9913, %v9941
    %v9985 = vadd.f32 %v9914, %v9941
    %v9986 = vadd.f32 %v9915, %v9941
    %v9987 = vadd.f32 %v9916, %v9941
    %v9988 = vadd.f32 %v9917, %v9941
    %v9989 = vadd.f32 %v9918, %v9941
    %v9990 = vadd.f32 %v9919, %v9941
    %v9991 = vadd.f32 %v9920, %v9941
    %v9992 = vadd.f32 %v9921, %v9941
    %v9993 = vadd.f32 %v9922, %v9941
    %v9994 = vadd.f32 %v9923, %v9941
    %v9995 = vadd.f32 %v9924, %v9941
    %v9996 = vadd.f32 %v9925, %v9941
    %v9997 = vadd.f32 %v9926, %v9941
    %v9998 = vadd.f32 %v9927, %v9941
    %v9999 = vadd.f32 %v9928, %v9941
    %v10000 = vadd.f32 %v9929, %v9941
    %v10001 = vadd.f32 %v9930, %v9941
    %v10002 = vadd.f32 %v9931, %v9941
    %v10003 = vadd.f32 %v9932, %v9941
    %v10004 = vadd.f32 %v9933, %v9941
    %v10005 = vadd.f32 %v9934, %v9941
    %v10006 = vadd.f32 %v9935, %v9941
    %v10007 = vmax.f32 %v9943, 0.0
    %v10008 = vmax.f32 %v9944, 0.0
    %v10009 = vmax.f32 %v9945, 0.0
    %v10010 = vmax.f32 %v9946, 0.0
    %v10011 = vmax.f32 %v9947, 0.0
    %v10012 = vmax.f32 %v9948, 0.0
    %v10013 = vmax.f32 %v9949, 0.0
    %v10014 = vmax.f32 %v9950, 0.0
    %v10015 = vmax.f32 %v9951, 0.0
    %v10016 = vmax.f32 %v9952, 0.0
    %v10017 = vmax.f32 %v9953, 0.0
    %v10018 = vmax.f32 %v9954, 0.0
    %v10019 = vmax.f32 %v9955, 0.0
    %v10020 = vmax.f32 %v9956, 0.0
    %v10021 = vmax.f32 %v9957, 0.0
    %v10022 = vmax.f32 %v9958, 0.0
    %v10023 = vmax.f32 %v9959, 0.0
    %v10024 = vmax.f32 %v9960, 0.0
    %v10025 = vmax.f32 %v9961, 0.0
    %v10026 = vmax.f32 %v9962, 0.0
    %v10027 = vmax.f32 %v9963, 0.0
    %v10028 = vmax.f32 %v9964, 0.0
    %v10029 = vmax.f32 %v9965, 0.0
    %v10030 = vmax.f32 %v9966, 0.0
    %v10031 = vmax.f32 %v9967, 0.0
    %v10032 = vmax.f32 %v9968, 0.0
    %v10033 = vmax.f32 %v9969, 0.0
    %v10034 = vmax.f32 %v9970, 0.0
    %v10035 = vmax.f32 %v9971, 0.0
    %v10036 = vmax.f32 %v9972, 0.0
    %v10037 = vmax.f32 %v9973, 0.0
    %v10038 = vmax.f32 %v9974, 0.0
    %v10039 = vmax.f32 %v9975, 0.0
    %v10040 = vmax.f32 %v9976, 0.0
    %v10041 = vmax.f32 %v9977, 0.0
    %v10042 = vmax.f32 %v9978, 0.0
    %v10043 = vmax.f32 %v9979, 0.0
    %v10044 = vmax.f32 %v9980, 0.0
    %v10045 = vmax.f32 %v9981, 0.0
    %v10046 = vmax.f32 %v9982, 0.0
    %v10047 = vmax.f32 %v9983, 0.0
    %v10048 = vmax.f32 %v9984, 0.0
    %v10049 = vmax.f32 %v9985, 0.0
    %v10050 = vmax.f32 %v9986, 0.0
    %v10051 = vmax.f32 %v9987, 0.0
    %v10052 = vmax.f32 %v9988, 0.0
    %v10053 = vmax.f32 %v9989, 0.0
    %v10054 = vmax.f32 %v9990, 0.0
    %v10055 = vmax.f32 %v9991, 0.0
    %v10056 = vmax.f32 %v9992, 0.0
    %v10057 = vmax.f32 %v9993, 0.0
    %v10058 = vmax.f32 %v9994, 0.0
    %v10059 = vmax.f32 %v9995, 0.0
    %v10060 = vmax.f32 %v9996, 0.0
    %v10061 = vmax.f32 %v9997, 0.0
    %v10062 = vmax.f32 %v9998, 0.0
    %v10063 = vmax.f32 %v9999, 0.0
    %v10064 = vmax.f32 %v10000, 0.0
    %v10065 = vmax.f32 %v10001, 0.0
    %v10066 = vmax.f32 %v10002, 0.0
    %v10067 = vmax.f32 %v10003, 0.0
    %v10068 = vmax.f32 %v10004, 0.0
    %v10069 = vmax.f32 %v10005, 0.0
    %v10070 = vmax.f32 %v10006, 0.0
    %v10071 = vpack.c.bf16 %v10008, %v10007
    %v10072 = vpack.c.bf16 %v10010, %v10009
    %v10073 = vpack.c.bf16 %v10012, %v10011
    %v10074 = vpack.c.bf16 %v10014, %v10013
    %v10075 = vpack.c.bf16 %v10016, %v10015
    %v10076 = vpack.c.bf16 %v10018, %v10017
    %v10077 = vpack.c.bf16 %v10020, %v10019
    %v10078 = vpack.c.bf16 %v10022, %v10021
    %v10079 = vpack.c.bf16 %v10024, %v10023
    %v10080 = vpack.c.bf16 %v10026, %v10025
    %v10081 = vpack.c.bf16 %v10028, %v10027
    %v10082 = vpack.c.bf16 %v10030, %v10029
    %v10083 = vpack.c.bf16 %v10032, %v10031
    %v10084 = vpack.c.bf16 %v10034, %v10033
    %v10085 = vpack.c.bf16 %v10036, %v10035
    %v10086 = vpack.c.bf16 %v10038, %v10037
    %v10087 = vpack.c.bf16 %v10040, %v10039
    %v10088 = vpack.c.bf16 %v10042, %v10041
    %v10089 = vpack.c.bf16 %v10044, %v10043
    %v10090 = vpack.c.bf16 %v10046, %v10045
    %v10091 = vpack.c.bf16 %v10048, %v10047
    %v10092 = vpack.c.bf16 %v10050, %v10049
    %v10093 = vpack.c.bf16 %v10052, %v10051
    %v10094 = vpack.c.bf16 %v10054, %v10053
    %v10095 = vpack.c.bf16 %v10056, %v10055
    %v10096 = vpack.c.bf16 %v10058, %v10057
    %v10097 = vpack.c.bf16 %v10060, %v10059
    %v10098 = vpack.c.bf16 %v10062, %v10061
    %v10099 = vpack.c.bf16 %v10064, %v10063
    %v10100 = vpack.c.bf16 %v10066, %v10065
    %v10101 = vpack.c.bf16 %v10068, %v10067
    %v10102 = vpack.c.bf16 %v10070, %v10069
    %v10103 = vld [vmem:[%s8] sm:$0xf]
    %v10104 = vld [vmem:[%s8 + $0x4] sm:$0xf]
    %v10105 = vld [vmem:[%s8 + $0x8] sm:$0xf]
    %v10106 = vld [vmem:[%s8 + $0xc] sm:$0xf]
    %v10107 = vld [vmem:[%s8 + $0x10] sm:$0xf]
    %v10108 = vld [vmem:[%s8 + $0x14] sm:$0xf]
    %v10109 = vld [vmem:[%s8 + $0x18] sm:$0xf]
    %v10110 = vld [vmem:[%s8 + $0x1c] sm:$0xf]
    %v10111 = vld [vmem:[%s8 + $0x20] sm:$0xf]
    %v10112 = vld [vmem:[%s8 + $0x24] sm:$0xf]
    %v10113 = vld [vmem:[%s8 + $0x28] sm:$0xf]
    %v10114 = vld [vmem:[%s8 + $0x2c] sm:$0xf]
    %v10115 = vld [vmem:[%s8 + $0x30] sm:$0xf]
    %v10116 = vld [vmem:[%s8 + $0x34] sm:$0xf]
    %v10117 = vld [vmem:[%s8 + $0x38] sm:$0xf]
    %v10118 = vld [vmem:[%s8 + $0x3c] sm:$0xf]
    %v10119 = vld [vmem:[%s9] sm:$0x1]
    %v10121 = vlaneseq
    %v10122 = vshrl.u32 %v10121, 7
    %v10123 = vsub.s32 0, %v10122
    %v10124 = vrot.slane %v10119, %v10123
    %v10142 = vunpack.c.l.b16 %v10103
    %v10143 = vunpack.c.l.b16 %v10104
    %v10144 = vunpack.c.l.b16 %v10105
    %v10145 = vunpack.c.l.b16 %v10106
    %v10146 = vunpack.c.l.b16 %v10107
    %v10147 = vunpack.c.l.b16 %v10108
    %v10148 = vunpack.c.l.b16 %v10109
    %v10149 = vunpack.c.l.b16 %v10110
    %v10150 = vunpack.c.l.b16 %v10111
    %v10151 = vunpack.c.l.b16 %v10112
    %v10152 = vunpack.c.l.b16 %v10113
    %v10153 = vunpack.c.l.b16 %v10114
    %v10154 = vunpack.c.l.b16 %v10115
    %v10155 = vunpack.c.l.b16 %v10116
    %v10156 = vunpack.c.l.b16 %v10117
    %v10157 = vunpack.c.l.b16 %v10118
    %v10158 = vpack.c.b16 %v10143, %v10142
    %v10159 = vpack.c.b16 %v10145, %v10144
    %v10160 = vpack.c.b16 %v10147, %v10146
    %v10161 = vpack.c.b16 %v10149, %v10148
    %v10162 = vpack.c.b16 %v10151, %v10150
    %v10163 = vpack.c.b16 %v10153, %v10152
    %v10164 = vpack.c.b16 %v10155, %v10154
    %v10165 = vpack.c.b16 %v10157, %v10156
    %10174 = vmatprep.subr.bf16.mxu0 0
    %10175 = vmatpush1.bf16.msra.mxu0 %v10165
    %10176 = vmatprep.subr.bf16.mxu0 0
    %10177 = vmatpush1.bf16.msra.mxu0 %v10164
    %10178 = vmatprep.subr.bf16.mxu0 0
    %10179 = vmatpush1.bf16.msra.mxu0 %v10163
    %10180 = vmatprep.subr.bf16.mxu0 0
    %10181 = vmatpush1.bf16.msra.mxu0 %v10162
    %10182 = vmatprep.subr.bf16.mxu0 0
    %10183 = vmatpush1.bf16.msra.mxu0 %v10161
    %10184 = vmatprep.subr.bf16.mxu0 0
    %10185 = vmatpush1.bf16.msra.mxu0 %v10160
    %10186 = vmatprep.subr.bf16.mxu0 0
    %10187 = vmatpush1.bf16.msra.mxu0 %v10159
    %10188 = vmatprep.subr.bf16.mxu0 0
    %10189 = vmatpush1.bf16.msra.mxu0 %v10158
    %10190 = vmatprep.subr.bf16.mxu0 0
    %10191 = vmatpush2.bf16.msra.mxu0 0
    %10192 = vmatprep.subr.bf16.mxu0 0
    %10193 = vmatpush2.bf16.msra.mxu0 0
    %10194 = vmatprep.subr.bf16.mxu0 0
    %10195 = vmatpush2.bf16.msra.mxu0 0
    %10196 = vmatprep.subr.bf16.mxu0 0
    %10197 = vmatpush2.bf16.msra.mxu0 0
    %10198 = vmatprep.subr.bf16.mxu0 0
    %10199 = vmatpush2.bf16.msra.mxu0 0
    %10200 = vmatprep.subr.bf16.mxu0 0
    %10201 = vmatpush2.bf16.msra.mxu0 0
    %10202 = vmatprep.subr.bf16.mxu0 0
    %10203 = vmatpush2.bf16.msra.mxu0 0
    %10204 = vmatprep.subr.bf16.mxu0 0
    %10205 = vmatpush2.bf16.msra.mxu0 0
    %10206 = vmatprep.mubr.bf16.mxu0 0
    %10207 = vmatmul.mubr.bf16.gmra.mxu0 %v10071
    %v10208 = vpop.f32.mrf.mxu0
    %v10209 = vadd.f32 %v10124, %v10208
    %v10210 = vpop.f32.mrf.mxu0
    %v10211 = vpop.f32.mrf.mxu0
    %v10212 = vadd.f32 %v10124, %v10211
    %v10213 = vpop.f32.mrf.mxu0
    %10214 = vmatprep.mubr.bf16.mxu0 0
    %10215 = vmatmul.mubr.bf16.gmra.mxu0 %v10072
    %v10216 = vpop.f32.mrf.mxu0
    %v10217 = vadd.f32 %v10124, %v10216
    %v10218 = vpop.f32.mrf.mxu0
    %v10219 = vpop.f32.mrf.mxu0
    %v10220 = vadd.f32 %v10124, %v10219
    %v10221 = vpop.f32.mrf.mxu0
    %10222 = vmatprep.mubr.bf16.mxu0 0
    %10223 = vmatmul.mubr.bf16.gmra.mxu0 %v10073
    %v10224 = vpop.f32.mrf.mxu0
    %v10225 = vadd.f32 %v10124, %v10224
    %v10226 = vpop.f32.mrf.mxu0
    %v10227 = vpop.f32.mrf.mxu0
    %v10228 = vadd.f32 %v10124, %v10227
    %v10229 = vpop.f32.mrf.mxu0
    %10230 = vmatprep.mubr.bf16.mxu0 0
    %10231 = vmatmul.mubr.bf16.gmra.mxu0 %v10074
    %v10232 = vpop.f32.mrf.mxu0
    %v10233 = vadd.f32 %v10124, %v10232
    %v10234 = vpop.f32.mrf.mxu0
    %v10235 = vpop.f32.mrf.mxu0
    %v10236 = vadd.f32 %v10124, %v10235
    %v10237 = vpop.f32.mrf.mxu0
    %10238 = vmatprep.mubr.bf16.mxu0 0
    %10239 = vmatmul.mubr.bf16.gmra.mxu0 %v10075
    %v10240 = vpop.f32.mrf.mxu0
    %v10241 = vadd.f32 %v10124, %v10240
    %v10242 = vpop.f32.mrf.mxu0
    %v10243 = vpop.f32.mrf.mxu0
    %v10244 = vadd.f32 %v10124, %v10243
    %v10245 = vpop.f32.mrf.mxu0
    %10246 = vmatprep.mubr.bf16.mxu0 0
    %10247 = vmatmul.mubr.bf16.gmra.mxu0 %v10076
    %v10248 = vpop.f32.mrf.mxu0
    %v10249 = vadd.f32 %v10124, %v10248
    %v10250 = vpop.f32.mrf.mxu0
    %v10251 = vpop.f32.mrf.mxu0
    %v10252 = vadd.f32 %v10124, %v10251
    %v10253 = vpop.f32.mrf.mxu0
    %10254 = vmatprep.mubr.bf16.mxu0 0
    %10255 = vmatmul.mubr.bf16.gmra.mxu0 %v10077
    %v10256 = vpop.f32.mrf.mxu0
    %v10257 = vadd.f32 %v10124, %v10256
    %v10258 = vpop.f32.mrf.mxu0
    %v10259 = vpop.f32.mrf.mxu0
    %v10260 = vadd.f32 %v10124, %v10259
    %v10261 = vpop.f32.mrf.mxu0
    %10262 = vmatprep.mubr.bf16.mxu0 0
    %10263 = vmatmul.mubr.bf16.gmra.mxu0 %v10078
    %v10264 = vpop.f32.mrf.mxu0
    %v10265 = vadd.f32 %v10124, %v10264
    %v10266 = vpop.f32.mrf.mxu0
    %v10267 = vpop.f32.mrf.mxu0
    %v10268 = vadd.f32 %v10124, %v10267
    %v10269 = vpop.f32.mrf.mxu0
    %10270 = vmatprep.mubr.bf16.mxu0 0
    %10271 = vmatmul.mubr.bf16.gmra.mxu0 %v10079
    %v10272 = vpop.f32.mrf.mxu0
    %v10273 = vadd.f32 %v10124, %v10272
    %v10274 = vpop.f32.mrf.mxu0
    %v10275 = vpop.f32.mrf.mxu0
    %v10276 = vadd.f32 %v10124, %v10275
    %v10277 = vpop.f32.mrf.mxu0
    %10278 = vmatprep.mubr.bf16.mxu0 0
    %10279 = vmatmul.mubr.bf16.gmra.mxu0 %v10080
    %v10280 = vpop.f32.mrf.mxu0
    %v10281 = vadd.f32 %v10124, %v10280
    %v10282 = vpop.f32.mrf.mxu0
    %v10283 = vpop.f32.mrf.mxu0
    %v10284 = vadd.f32 %v10124, %v10283
    %v10285 = vpop.f32.mrf.mxu0
    %10286 = vmatprep.mubr.bf16.mxu0 0
    %10287 = vmatmul.mubr.bf16.gmra.mxu0 %v10081
    %v10288 = vpop.f32.mrf.mxu0
    %v10289 = vadd.f32 %v10124, %v10288
    %v10290 = vpop.f32.mrf.mxu0
    %v10291 = vpop.f32.mrf.mxu0
    %v10292 = vadd.f32 %v10124, %v10291
    %v10293 = vpop.f32.mrf.mxu0
    %10294 = vmatprep.mubr.bf16.mxu0 0
    %10295 = vmatmul.mubr.bf16.gmra.mxu0 %v10082
    %v10296 = vpop.f32.mrf.mxu0
    %v10297 = vadd.f32 %v10124, %v10296
    %v10298 = vpop.f32.mrf.mxu0
    %v10299 = vpop.f32.mrf.mxu0
    %v10300 = vadd.f32 %v10124, %v10299
    %v10301 = vpop.f32.mrf.mxu0
    %10302 = vmatprep.mubr.bf16.mxu0 0
    %10303 = vmatmul.mubr.bf16.gmra.mxu0 %v10083
    %v10304 = vpop.f32.mrf.mxu0
    %v10305 = vadd.f32 %v10124, %v10304
    %v10306 = vpop.f32.mrf.mxu0
    %v10307 = vpop.f32.mrf.mxu0
    %v10308 = vadd.f32 %v10124, %v10307
    %v10309 = vpop.f32.mrf.mxu0
    %10310 = vmatprep.mubr.bf16.mxu0 0
    %10311 = vmatmul.mubr.bf16.gmra.mxu0 %v10084
    %v10312 = vpop.f32.mrf.mxu0
    %v10313 = vadd.f32 %v10124, %v10312
    %v10314 = vpop.f32.mrf.mxu0
    %v10315 = vpop.f32.mrf.mxu0
    %v10316 = vadd.f32 %v10124, %v10315
    %v10317 = vpop.f32.mrf.mxu0
    %10318 = vmatprep.mubr.bf16.mxu0 0
    %10319 = vmatmul.mubr.bf16.gmra.mxu0 %v10085
    %v10320 = vpop.f32.mrf.mxu0
    %v10321 = vadd.f32 %v10124, %v10320
    %v10322 = vpop.f32.mrf.mxu0
    %v10323 = vpop.f32.mrf.mxu0
    %v10324 = vadd.f32 %v10124, %v10323
    %v10325 = vpop.f32.mrf.mxu0
    %10326 = vmatprep.mubr.bf16.mxu0 0
    %10327 = vmatmul.mubr.bf16.gmra.mxu0 %v10086
    %v10328 = vpop.f32.mrf.mxu0
    %v10329 = vadd.f32 %v10124, %v10328
    %v10330 = vpop.f32.mrf.mxu0
    %v10331 = vpop.f32.mrf.mxu0
    %v10332 = vadd.f32 %v10124, %v10331
    %v10333 = vpop.f32.mrf.mxu0
    %10334 = vmatprep.mubr.bf16.mxu0 0
    %10335 = vmatmul.mubr.bf16.gmra.mxu0 %v10087
    %v10336 = vpop.f32.mrf.mxu0
    %v10337 = vadd.f32 %v10124, %v10336
    %v10338 = vpop.f32.mrf.mxu0
    %v10339 = vpop.f32.mrf.mxu0
    %v10340 = vadd.f32 %v10124, %v10339
    %v10341 = vpop.f32.mrf.mxu0
    %10342 = vmatprep.mubr.bf16.mxu0 0
    %10343 = vmatmul.mubr.bf16.gmra.mxu0 %v10088
    %v10344 = vpop.f32.mrf.mxu0
    %v10345 = vadd.f32 %v10124, %v10344
    %v10346 = vpop.f32.mrf.mxu0
    %v10347 = vpop.f32.mrf.mxu0
    %v10348 = vadd.f32 %v10124, %v10347
    %v10349 = vpop.f32.mrf.mxu0
    %10350 = vmatprep.mubr.bf16.mxu0 0
    %10351 = vmatmul.mubr.bf16.gmra.mxu0 %v10089
    %v10352 = vpop.f32.mrf.mxu0
    %v10353 = vadd.f32 %v10124, %v10352
    %v10354 = vpop.f32.mrf.mxu0
    %v10355 = vpop.f32.mrf.mxu0
    %v10356 = vadd.f32 %v10124, %v10355
    %v10357 = vpop.f32.mrf.mxu0
    %10358 = vmatprep.mubr.bf16.mxu0 0
    %10359 = vmatmul.mubr.bf16.gmra.mxu0 %v10090
    %v10360 = vpop.f32.mrf.mxu0
    %v10361 = vadd.f32 %v10124, %v10360
    %v10362 = vpop.f32.mrf.mxu0
    %v10363 = vpop.f32.mrf.mxu0
    %v10364 = vadd.f32 %v10124, %v10363
    %v10365 = vpop.f32.mrf.mxu0
    %10366 = vmatprep.mubr.bf16.mxu0 0
    %10367 = vmatmul.mubr.bf16.gmra.mxu0 %v10091
    %v10368 = vpop.f32.mrf.mxu0
    %v10369 = vadd.f32 %v10124, %v10368
    %v10370 = vpop.f32.mrf.mxu0
    %v10371 = vpop.f32.mrf.mxu0
    %v10372 = vadd.f32 %v10124, %v10371
    %v10373 = vpop.f32.mrf.mxu0
    %10374 = vmatprep.mubr.bf16.mxu0 0
    %10375 = vmatmul.mubr.bf16.gmra.mxu0 %v10092
    %v10376 = vpop.f32.mrf.mxu0
    %v10377 = vadd.f32 %v10124, %v10376
    %v10378 = vpop.f32.mrf.mxu0
    %v10379 = vpop.f32.mrf.mxu0
    %v10380 = vadd.f32 %v10124, %v10379
    %v10381 = vpop.f32.mrf.mxu0
    %10382 = vmatprep.mubr.bf16.mxu0 0
    %10383 = vmatmul.mubr.bf16.gmra.mxu0 %v10093
    %v10384 = vpop.f32.mrf.mxu0
    %v10385 = vadd.f32 %v10124, %v10384
    %v10386 = vpop.f32.mrf.mxu0
    %v10387 = vpop.f32.mrf.mxu0
    %v10388 = vadd.f32 %v10124, %v10387
    %v10389 = vpop.f32.mrf.mxu0
    %10390 = vmatprep.mubr.bf16.mxu0 0
    %10391 = vmatmul.mubr.bf16.gmra.mxu0 %v10094
    %v10392 = vpop.f32.mrf.mxu0
    %v10393 = vadd.f32 %v10124, %v10392
    %v10394 = vpop.f32.mrf.mxu0
    %v10395 = vpop.f32.mrf.mxu0
    %v10396 = vadd.f32 %v10124, %v10395
    %v10397 = vpop.f32.mrf.mxu0
    %10398 = vmatprep.mubr.bf16.mxu0 0
    %10399 = vmatmul.mubr.bf16.gmra.mxu0 %v10095
    %v10400 = vpop.f32.mrf.mxu0
    %v10401 = vadd.f32 %v10124, %v10400
    %v10402 = vpop.f32.mrf.mxu0
    %v10403 = vpop.f32.mrf.mxu0
    %v10404 = vadd.f32 %v10124, %v10403
    %v10405 = vpop.f32.mrf.mxu0
    %10406 = vmatprep.mubr.bf16.mxu0 0
    %10407 = vmatmul.mubr.bf16.gmra.mxu0 %v10096
    %v10408 = vpop.f32.mrf.mxu0
    %v10409 = vadd.f32 %v10124, %v10408
    %v10410 = vpop.f32.mrf.mxu0
    %v10411 = vpop.f32.mrf.mxu0
    %v10412 = vadd.f32 %v10124, %v10411
    %v10413 = vpop.f32.mrf.mxu0
    %10414 = vmatprep.mubr.bf16.mxu0 0
    %10415 = vmatmul.mubr.bf16.gmra.mxu0 %v10097
    %v10416 = vpop.f32.mrf.mxu0
    %v10417 = vadd.f32 %v10124, %v10416
    %v10418 = vpop.f32.mrf.mxu0
    %v10419 = vpop.f32.mrf.mxu0
    %v10420 = vadd.f32 %v10124, %v10419
    %v10421 = vpop.f32.mrf.mxu0
    %10422 = vmatprep.mubr.bf16.mxu0 0
    %10423 = vmatmul.mubr.bf16.gmra.mxu0 %v10098
    %v10424 = vpop.f32.mrf.mxu0
    %v10425 = vadd.f32 %v10124, %v10424
    %v10426 = vpop.f32.mrf.mxu0
    %v10427 = vpop.f32.mrf.mxu0
    %v10428 = vadd.f32 %v10124, %v10427
    %v10429 = vpop.f32.mrf.mxu0
    %10430 = vmatprep.mubr.bf16.mxu0 0
    %10431 = vmatmul.mubr.bf16.gmra.mxu0 %v10099
    %v10432 = vpop.f32.mrf.mxu0
    %v10433 = vadd.f32 %v10124, %v10432
    %v10434 = vpop.f32.mrf.mxu0
    %v10435 = vpop.f32.mrf.mxu0
    %v10436 = vadd.f32 %v10124, %v10435
    %v10437 = vpop.f32.mrf.mxu0
    %10438 = vmatprep.mubr.bf16.mxu0 0
    %10439 = vmatmul.mubr.bf16.gmra.mxu0 %v10100
    %v10440 = vpop.f32.mrf.mxu0
    %v10441 = vadd.f32 %v10124, %v10440
    %v10442 = vpop.f32.mrf.mxu0
    %v10443 = vpop.f32.mrf.mxu0
    %v10444 = vadd.f32 %v10124, %v10443
    %v10445 = vpop.f32.mrf.mxu0
    %10446 = vmatprep.mubr.bf16.mxu0 0
    %10447 = vmatmul.mubr.bf16.gmra.mxu0 %v10101
    %v10448 = vpop.f32.mrf.mxu0
    %v10449 = vadd.f32 %v10124, %v10448
    %v10450 = vpop.f32.mrf.mxu0
    %v10451 = vpop.f32.mrf.mxu0
    %v10452 = vadd.f32 %v10124, %v10451
    %v10453 = vpop.f32.mrf.mxu0
    %10454 = vmatprep.mubr.bf16.mxu0 0
    %10455 = vmatmul.mubr.bf16.gmra.mxu0 %v10102
    %v10456 = vpop.f32.mrf.mxu0
    %v10457 = vadd.f32 %v10124, %v10456
    %v10458 = vpop.f32.mrf.mxu0
    %v10459 = vpop.f32.mrf.mxu0
    %v10460 = vadd.f32 %v10124, %v10459
    %v10461 = vpop.f32.mrf.mxu0
    %10462 = vdwg.mxu0
    %v10463 = vld [vmem:[#allocation3] sm:$0xff]
    %v10464 = vld [vmem:[#allocation3 + $0x8] sm:$0xff]
    %v10465 = vld [vmem:[#allocation3 + $0x10] sm:$0xff]
    %v10466 = vld [vmem:[#allocation3 + $0x18] sm:$0xff]
    %v10467 = vld [vmem:[#allocation3 + $0x20] sm:$0xff]
    %v10468 = vld [vmem:[#allocation3 + $0x28] sm:$0xff]
    %v10469 = vld [vmem:[#allocation3 + $0x30] sm:$0xff]
    %v10470 = vld [vmem:[#allocation3 + $0x38] sm:$0xff]
    %v10471 = vld [vmem:[#allocation3 + $0x40] sm:$0xff]
    %v10472 = vld [vmem:[#allocation3 + $0x48] sm:$0xff]
    %v10473 = vld [vmem:[#allocation3 + $0x50] sm:$0xff]
    %v10474 = vld [vmem:[#allocation3 + $0x58] sm:$0xff]
    %v10475 = vld [vmem:[#allocation3 + $0x60] sm:$0xff]
    %v10476 = vld [vmem:[#allocation3 + $0x68] sm:$0xff]
    %v10477 = vld [vmem:[#allocation3 + $0x70] sm:$0xff]
    %v10478 = vld [vmem:[#allocation3 + $0x78] sm:$0xff]
    %v10479 = vld [vmem:[#allocation3 + $0x80] sm:$0xff]
    %v10480 = vld [vmem:[#allocation3 + $0x88] sm:$0xff]
    %v10481 = vld [vmem:[#allocation3 + $0x90] sm:$0xff]
    %v10482 = vld [vmem:[#allocation3 + $0x98] sm:$0xff]
    %v10483 = vld [vmem:[#allocation3 + $0xa0] sm:$0xff]
    %v10484 = vld [vmem:[#allocation3 + $0xa8] sm:$0xff]
    %v10485 = vld [vmem:[#allocation3 + $0xb0] sm:$0xff]
    %v10486 = vld [vmem:[#allocation3 + $0xb8] sm:$0xff]
    %v10487 = vld [vmem:[#allocation3 + $0xc0] sm:$0xff]
    %v10488 = vld [vmem:[#allocation3 + $0xc8] sm:$0xff]
    %v10489 = vld [vmem:[#allocation3 + $0xd0] sm:$0xff]
    %v10490 = vld [vmem:[#allocation3 + $0xd8] sm:$0xff]
    %v10491 = vld [vmem:[#allocation3 + $0xe0] sm:$0xff]
    %v10492 = vld [vmem:[#allocation3 + $0xe8] sm:$0xff]
    %v10493 = vld [vmem:[#allocation3 + $0xf0] sm:$0xff]
    %v10494 = vld [vmem:[#allocation3 + $0xf8] sm:$0xff]
    %v10495 = vld [vmem:[#allocation3 + $0x100] sm:$0xff]
    %v10496 = vld [vmem:[#allocation3 + $0x108] sm:$0xff]
    %v10497 = vld [vmem:[#allocation3 + $0x110] sm:$0xff]
    %v10498 = vld [vmem:[#allocation3 + $0x118] sm:$0xff]
    %v10499 = vld [vmem:[#allocation3 + $0x120] sm:$0xff]
    %v10500 = vld [vmem:[#allocation3 + $0x128] sm:$0xff]
    %v10501 = vld [vmem:[#allocation3 + $0x130] sm:$0xff]
    %v10502 = vld [vmem:[#allocation3 + $0x138] sm:$0xff]
    %v10503 = vld [vmem:[#allocation3 + $0x140] sm:$0xff]
    %v10504 = vld [vmem:[#allocation3 + $0x148] sm:$0xff]
    %v10505 = vld [vmem:[#allocation3 + $0x150] sm:$0xff]
    %v10506 = vld [vmem:[#allocation3 + $0x158] sm:$0xff]
    %v10507 = vld [vmem:[#allocation3 + $0x160] sm:$0xff]
    %v10508 = vld [vmem:[#allocation3 + $0x168] sm:$0xff]
    %v10509 = vld [vmem:[#allocation3 + $0x170] sm:$0xff]
    %v10510 = vld [vmem:[#allocation3 + $0x178] sm:$0xff]
    %v10511 = vld [vmem:[#allocation3 + $0x180] sm:$0xff]
    %v10512 = vld [vmem:[#allocation3 + $0x188] sm:$0xff]
    %v10513 = vld [vmem:[#allocation3 + $0x190] sm:$0xff]
    %v10514 = vld [vmem:[#allocation3 + $0x198] sm:$0xff]
    %v10515 = vld [vmem:[#allocation3 + $0x1a0] sm:$0xff]
    %v10516 = vld [vmem:[#allocation3 + $0x1a8] sm:$0xff]
    %v10517 = vld [vmem:[#allocation3 + $0x1b0] sm:$0xff]
    %v10518 = vld [vmem:[#allocation3 + $0x1b8] sm:$0xff]
    %v10519 = vld [vmem:[#allocation3 + $0x1c0] sm:$0xff]
    %v10520 = vld [vmem:[#allocation3 + $0x1c8] sm:$0xff]
    %v10521 = vld [vmem:[#allocation3 + $0x1d0] sm:$0xff]
    %v10522 = vld [vmem:[#allocation3 + $0x1d8] sm:$0xff]
    %v10523 = vld [vmem:[#allocation3 + $0x1e0] sm:$0xff]
    %v10524 = vld [vmem:[#allocation3 + $0x1e8] sm:$0xff]
    %v10525 = vld [vmem:[#allocation3 + $0x1f0] sm:$0xff]
    %v10526 = vld [vmem:[#allocation3 + $0x1f8] sm:$0xff]
    %v10527 = vadd.f32 %v10209, %v10463
    %v10528 = vadd.f32 %v10212, %v10464
    %v10529 = vadd.f32 %v10217, %v10465
    %v10530 = vadd.f32 %v10220, %v10466
    %v10531 = vadd.f32 %v10225, %v10467
    %v10532 = vadd.f32 %v10228, %v10468
    %v10533 = vadd.f32 %v10233, %v10469
    %v10534 = vadd.f32 %v10236, %v10470
    %v10535 = vadd.f32 %v10241, %v10471
    %v10536 = vadd.f32 %v10244, %v10472
    %v10537 = vadd.f32 %v10249, %v10473
    %v10538 = vadd.f32 %v10252, %v10474
    %v10539 = vadd.f32 %v10257, %v10475
    %v10540 = vadd.f32 %v10260, %v10476
    %v10541 = vadd.f32 %v10265, %v10477
    %v10542 = vadd.f32 %v10268, %v10478
    %v10543 = vadd.f32 %v10273, %v10479
    %v10544 = vadd.f32 %v10276, %v10480
    %v10545 = vadd.f32 %v10281, %v10481
    %v10546 = vadd.f32 %v10284, %v10482
    %v10547 = vadd.f32 %v10289, %v10483
    %v10548 = vadd.f32 %v10292, %v10484
    %v10549 = vadd.f32 %v10297, %v10485
    %v10550 = vadd.f32 %v10300, %v10486
    %v10551 = vadd.f32 %v10305, %v10487
    %v10552 = vadd.f32 %v10308, %v10488
    %v10553 = vadd.f32 %v10313, %v10489
    %v10554 = vadd.f32 %v10316, %v10490
    %v10555 = vadd.f32 %v10321, %v10491
    %v10556 = vadd.f32 %v10324, %v10492
    %v10557 = vadd.f32 %v10329, %v10493
    %v10558 = vadd.f32 %v10332, %v10494
    %v10559 = vadd.f32 %v10337, %v10495
    %v10560 = vadd.f32 %v10340, %v10496
    %v10561 = vadd.f32 %v10345, %v10497
    %v10562 = vadd.f32 %v10348, %v10498
    %v10563 = vadd.f32 %v10353, %v10499
    %v10564 = vadd.f32 %v10356, %v10500
    %v10565 = vadd.f32 %v10361, %v10501
    %v10566 = vadd.f32 %v10364, %v10502
    %v10567 = vadd.f32 %v10369, %v10503
    %v10568 = vadd.f32 %v10372, %v10504
    %v10569 = vadd.f32 %v10377, %v10505
    %v10570 = vadd.f32 %v10380, %v10506
    %v10571 = vadd.f32 %v10385, %v10507
    %v10572 = vadd.f32 %v10388, %v10508
    %v10573 = vadd.f32 %v10393, %v10509
    %v10574 = vadd.f32 %v10396, %v10510
    %v10575 = vadd.f32 %v10401, %v10511
    %v10576 = vadd.f32 %v10404, %v10512
    %v10577 = vadd.f32 %v10409, %v10513
    %v10578 = vadd.f32 %v10412, %v10514
    %v10579 = vadd.f32 %v10417, %v10515
    %v10580 = vadd.f32 %v10420, %v10516
    %v10581 = vadd.f32 %v10425, %v10517
    %v10582 = vadd.f32 %v10428, %v10518
    %v10583 = vadd.f32 %v10433, %v10519
    %v10584 = vadd.f32 %v10436, %v10520
    %v10585 = vadd.f32 %v10441, %v10521
    %v10586 = vadd.f32 %v10444, %v10522
    %v10587 = vadd.f32 %v10449, %v10523
    %v10588 = vadd.f32 %v10452, %v10524
    %v10589 = vadd.f32 %v10457, %v10525
    %v10590 = vadd.f32 %v10460, %v10526
    %v10591 = vmax.f32 %v10527, 0.0
    %v10592 = vmax.f32 %v10528, 0.0
    %v10593 = vmax.f32 %v10529, 0.0
    %v10594 = vmax.f32 %v10530, 0.0
    %v10595 = vmax.f32 %v10531, 0.0
    %v10596 = vmax.f32 %v10532, 0.0
    %v10597 = vmax.f32 %v10533, 0.0
    %v10598 = vmax.f32 %v10534, 0.0
    %v10599 = vmax.f32 %v10535, 0.0
    %v10600 = vmax.f32 %v10536, 0.0
    %v10601 = vmax.f32 %v10537, 0.0
    %v10602 = vmax.f32 %v10538, 0.0
    %v10603 = vmax.f32 %v10539, 0.0
    %v10604 = vmax.f32 %v10540, 0.0
    %v10605 = vmax.f32 %v10541, 0.0
    %v10606 = vmax.f32 %v10542, 0.0
    %v10607 = vmax.f32 %v10543, 0.0
    %v10608 = vmax.f32 %v10544, 0.0
    %v10609 = vmax.f32 %v10545, 0.0
    %v10610 = vmax.f32 %v10546, 0.0
    %v10611 = vmax.f32 %v10547, 0.0
    %v10612 = vmax.f32 %v10548, 0.0
    %v10613 = vmax.f32 %v10549, 0.0
    %v10614 = vmax.f32 %v10550, 0.0
    %v10615 = vmax.f32 %v10551, 0.0
    %v10616 = vmax.f32 %v10552, 0.0
    %v10617 = vmax.f32 %v10553, 0.0
    %v10618 = vmax.f32 %v10554, 0.0
    %v10619 = vmax.f32 %v10555, 0.0
    %v10620 = vmax.f32 %v10556, 0.0
    %v10621 = vmax.f32 %v10557, 0.0
    %v10622 = vmax.f32 %v10558, 0.0
    %v10623 = vmax.f32 %v10559, 0.0
    %v10624 = vmax.f32 %v10560, 0.0
    %v10625 = vmax.f32 %v10561, 0.0
    %v10626 = vmax.f32 %v10562, 0.0
    %v10627 = vmax.f32 %v10563, 0.0
    %v10628 = vmax.f32 %v10564, 0.0
    %v10629 = vmax.f32 %v10565, 0.0
    %v10630 = vmax.f32 %v10566, 0.0
    %v10631 = vmax.f32 %v10567, 0.0
    %v10632 = vmax.f32 %v10568, 0.0
    %v10633 = vmax.f32 %v10569, 0.0
    %v10634 = vmax.f32 %v10570, 0.0
    %v10635 = vmax.f32 %v10571, 0.0
    %v10636 = vmax.f32 %v10572, 0.0
    %v10637 = vmax.f32 %v10573, 0.0
    %v10638 = vmax.f32 %v10574, 0.0
    %v10639 = vmax.f32 %v10575, 0.0
    %v10640 = vmax.f32 %v10576, 0.0
    %v10641 = vmax.f32 %v10577, 0.0
    %v10642 = vmax.f32 %v10578, 0.0
    %v10643 = vmax.f32 %v10579, 0.0
    %v10644 = vmax.f32 %v10580, 0.0
    %v10645 = vmax.f32 %v10581, 0.0
    %v10646 = vmax.f32 %v10582, 0.0
    %v10647 = vmax.f32 %v10583, 0.0
    %v10648 = vmax.f32 %v10584, 0.0
    %v10649 = vmax.f32 %v10585, 0.0
    %v10650 = vmax.f32 %v10586, 0.0
    %v10651 = vmax.f32 %v10587, 0.0
    %v10652 = vmax.f32 %v10588, 0.0
    %v10653 = vmax.f32 %v10589, 0.0
    %v10654 = vmax.f32 %v10590, 0.0
    %v10655 = vadd.f32 %v10591, %v10592
    %v10656 = vadd.f32 %v10655, %v10593
    %v10657 = vadd.f32 %v10656, %v10594
    %v10658 = vadd.f32 %v10657, %v10595
    %v10659 = vadd.f32 %v10658, %v10596
    %v10660 = vadd.f32 %v10659, %v10597
    %v10661 = vadd.f32 %v10660, %v10598
    %v10662 = vadd.f32 %v10661, %v10599
    %v10663 = vadd.f32 %v10662, %v10600
    %v10664 = vadd.f32 %v10663, %v10601
    %v10665 = vadd.f32 %v10664, %v10602
    %v10666 = vadd.f32 %v10665, %v10603
    %v10667 = vadd.f32 %v10666, %v10604
    %v10668 = vadd.f32 %v10667, %v10605
    %v10669 = vadd.f32 %v10668, %v10606
    %v10670 = vadd.f32 %v10669, %v10607
    %v10671 = vadd.f32 %v10670, %v10608
    %v10672 = vadd.f32 %v10671, %v10609
    %v10673 = vadd.f32 %v10672, %v10610
    %v10674 = vadd.f32 %v10673, %v10611
    %v10675 = vadd.f32 %v10674, %v10612
    %v10676 = vadd.f32 %v10675, %v10613
    %v10677 = vadd.f32 %v10676, %v10614
    %v10678 = vadd.f32 %v10677, %v10615
    %v10679 = vadd.f32 %v10678, %v10616
    %v10680 = vadd.f32 %v10679, %v10617
    %v10681 = vadd.f32 %v10680, %v10618
    %v10682 = vadd.f32 %v10681, %v10619
    %v10683 = vadd.f32 %v10682, %v10620
    %v10684 = vadd.f32 %v10683, %v10621
    %v10685 = vadd.f32 %v10684, %v10622
    %v10686 = vrot.slane %v10685, 4
    %v10687 = vadd.f32 %v10685, %v10686
    %v10688 = vrot.slane %v10687, 2
    %v10689 = vadd.f32 %v10687, %v10688
    %v10690 = vrot.slane %v10689, 1
    %v10691 = vadd.f32 %v10689, %v10690
    %v10692 = vadd.f32 %v10623, %v10624
    %v10693 = vadd.f32 %v10692, %v10625
    %v10694 = vadd.f32 %v10693, %v10626
    %v10695 = vadd.f32 %v10694, %v10627
    %v10696 = vadd.f32 %v10695, %v10628
    %v10697 = vadd.f32 %v10696, %v10629
    %v10698 = vadd.f32 %v10697, %v10630
    %v10699 = vadd.f32 %v10698, %v10631
    %v10700 = vadd.f32 %v10699, %v10632
    %v10701 = vadd.f32 %v10700, %v10633
    %v10702 = vadd.f32 %v10701, %v10634
    %v10703 = vadd.f32 %v10702, %v10635
    %v10704 = vadd.f32 %v10703, %v10636
    %v10705 = vadd.f32 %v10704, %v10637
    %v10706 = vadd.f32 %v10705, %v10638
    %v10707 = vadd.f32 %v10706, %v10639
    %v10708 = vadd.f32 %v10707, %v10640
    %v10709 = vadd.f32 %v10708, %v10641
    %v10710 = vadd.f32 %v10709, %v10642
    %v10711 = vadd.f32 %v10710, %v10643
    %v10712 = vadd.f32 %v10711, %v10644
    %v10713 = vadd.f32 %v10712, %v10645
    %v10714 = vadd.f32 %v10713, %v10646
    %v10715 = vadd.f32 %v10714, %v10647
    %v10716 = vadd.f32 %v10715, %v10648
    %v10717 = vadd.f32 %v10716, %v10649
    %v10718 = vadd.f32 %v10717, %v10650
    %v10719 = vadd.f32 %v10718, %v10651
    %v10720 = vadd.f32 %v10719, %v10652
    %v10721 = vadd.f32 %v10720, %v10653
    %v10722 = vadd.f32 %v10721, %v10654
    %v10723 = vrot.slane %v10722, 4
    %v10724 = vadd.f32 %v10722, %v10723
    %v10725 = vrot.slane %v10724, 2
    %v10726 = vadd.f32 %v10724, %v10725
    %v10727 = vrot.slane %v10726, 1
    %v10728 = vadd.f32 %v10726, %v10727
    %v10729 = vmul.f32 %v10691, 0.00390625
    %v10730 = vmul.f32 %v10728, 0.00390625
    %v10731 = vld [vmem:[%s1] sm:$0x3]
    %v10733 = vrot.slane %v10731, 1
    %v10736 = vadd.f32 %v10729, %v10731
    %v10737 = vadd.f32 %v10730, %v10733
    %v10738 = vpack.c.bf16 %v10736, %v10736
    %v10739 = vpack.c.bf16 %v10737, %v10737
    %v10740 = vld [vmem:[%s10] sm:$0xf]
    %v10741 = vld [vmem:[%s10 + $0x4] sm:$0xf]
    %v10742 = vld [vmem:[%s10 + $0x8] sm:$0xf]
    %v10743 = vld [vmem:[%s10 + $0xc] sm:$0xf]
    %v10744 = vld [vmem:[%s10 + $0x10] sm:$0xf]
    %v10745 = vld [vmem:[%s10 + $0x14] sm:$0xf]
    %v10746 = vld [vmem:[%s10 + $0x18] sm:$0xf]
    %v10747 = vld [vmem:[%s10 + $0x1c] sm:$0xf]
    %v10748 = vld [vmem:[%s10 + $0x20] sm:$0xf]
    %v10749 = vld [vmem:[%s10 + $0x24] sm:$0xf]
    %v10750 = vld [vmem:[%s10 + $0x28] sm:$0xf]
    %v10751 = vld [vmem:[%s10 + $0x2c] sm:$0xf]
    %v10752 = vld [vmem:[%s10 + $0x30] sm:$0xf]
    %v10753 = vld [vmem:[%s10 + $0x34] sm:$0xf]
    %v10754 = vld [vmem:[%s10 + $0x38] sm:$0xf]
    %v10755 = vld [vmem:[%s10 + $0x3c] sm:$0xf]
    %v10756 = vld [vmem:[%s11] sm:$0x1]
    %v10758 = vlaneseq
    %v10759 = vshrl.u32 %v10758, 7
    %v10760 = vsub.s32 0, %v10759
    %v10761 = vrot.slane %v10756, %v10760
    %v10765 = vunpack.c.l.b16 %v10738
    %v10766 = vunpack.c.l.b16 %v10739
    %v10767 = vrot.slane %v10766, 7
    %vm10768 = vcmask 1041409
    %v10769 = vsel %vm10768, %v10767, %v10765
    %v10770 = vpack.c.b16 %v10769, %v10769
    %v10788 = vunpack.c.l.b16 %v10740
    %v10789 = vunpack.c.l.b16 %v10741
    %v10790 = vunpack.c.l.b16 %v10742
    %v10791 = vunpack.c.l.b16 %v10743
    %v10792 = vunpack.c.l.b16 %v10744
    %v10793 = vunpack.c.l.b16 %v10745
    %v10794 = vunpack.c.l.b16 %v10746
    %v10795 = vunpack.c.l.b16 %v10747
    %v10796 = vunpack.c.l.b16 %v10748
    %v10797 = vunpack.c.l.b16 %v10749
    %v10798 = vunpack.c.l.b16 %v10750
    %v10799 = vunpack.c.l.b16 %v10751
    %v10800 = vunpack.c.l.b16 %v10752
    %v10801 = vunpack.c.l.b16 %v10753
    %v10802 = vunpack.c.l.b16 %v10754
    %v10803 = vunpack.c.l.b16 %v10755
    %v10804 = vpack.c.b16 %v10789, %v10788
    %v10805 = vpack.c.b16 %v10791, %v10790
    %v10806 = vpack.c.b16 %v10793, %v10792
    %v10807 = vpack.c.b16 %v10795, %v10794
    %v10808 = vpack.c.b16 %v10797, %v10796
    %v10809 = vpack.c.b16 %v10799, %v10798
    %v10810 = vpack.c.b16 %v10801, %v10800
    %v10811 = vpack.c.b16 %v10803, %v10802
    %10820 = vmatprep.subr.bf16.mxu0 0
    %10821 = vmatpush1.bf16.msra.mxu0 %v10811
    %10822 = vmatprep.subr.bf16.mxu0 0
    %10823 = vmatpush1.bf16.msra.mxu0 %v10810
    %10824 = vmatprep.subr.bf16.mxu0 0
    %10825 = vmatpush1.bf16.msra.mxu0 %v10809
    %10826 = vmatprep.subr.bf16.mxu0 0
    %10827 = vmatpush1.bf16.msra.mxu0 %v10808
    %10828 = vmatprep.subr.bf16.mxu0 0
    %10829 = vmatpush1.bf16.msra.mxu0 %v10807
    %10830 = vmatprep.subr.bf16.mxu0 0
    %10831 = vmatpush1.bf16.msra.mxu0 %v10806
    %10832 = vmatprep.subr.bf16.mxu0 0
    %10833 = vmatpush1.bf16.msra.mxu0 %v10805
    %10834 = vmatprep.subr.bf16.mxu0 0
    %10835 = vmatpush1.bf16.msra.mxu0 %v10804
    %10836 = vmatprep.subr.bf16.mxu0 0
    %10837 = vmatpush2.bf16.msra.mxu0 0
    %10838 = vmatprep.subr.bf16.mxu0 0
    %10839 = vmatpush2.bf16.msra.mxu0 0
    %10840 = vmatprep.subr.bf16.mxu0 0
    %10841 = vmatpush2.bf16.msra.mxu0 0
    %10842 = vmatprep.subr.bf16.mxu0 0
    %10843 = vmatpush2.bf16.msra.mxu0 0
    %10844 = vmatprep.subr.bf16.mxu0 0
    %10845 = vmatpush2.bf16.msra.mxu0 0
    %10846 = vmatprep.subr.bf16.mxu0 0
    %10847 = vmatpush2.bf16.msra.mxu0 0
    %10848 = vmatprep.subr.bf16.mxu0 0
    %10849 = vmatpush2.bf16.msra.mxu0 0
    %10850 = vmatprep.subr.bf16.mxu0 0
    %10851 = vmatpush2.bf16.msra.mxu0 0
    %10852 = vmatprep.mubr.bf16.mxu0 0
    %10853 = vmatmul.mubr.bf16.gmra.mxu0 %v10770
    %v10854 = vpop.f32.mrf.mxu0
    %v10855 = vadd.f32 %v10761, %v10854
    %v10856 = vpop.f32.mrf.mxu0
    %v10857 = vpop.f32.mrf.mxu0
    %v10858 = vpop.f32.mrf.mxu0
    %10859 = vdwg.mxu0
    %10860 = vst [vmem:[#allocation4] sm:$0x3] %v10855
    // Predicated region
    $region54: #{forward.1} parent=1 // pred_check
      _
    $region55: #{forward.1} parent=1 // pred_check_branch
      %10862 = sbr.rel (0) target = $region57
    $region56: #{forward.1} parent=1 // pred_region
      %s10864 = ssub.s32 32, 32
      %10865 = vsyncadd [#allocation5], %s10864
      %s10867 = sshll.u32 [#allocation4], 4
      %s10868 = int_to_ptr.vmem [resolvable:$true] %s10867
      %10870 = dma.vmem_to_hbm [thread:$0]  %s10868, 32, %s12, [#allocation5]
    $region57: #{forward.1} parent=1 // pred_fallthru
      _
    // Predicated region
    $region58: #{forward.1} parent=1 // pred_check
      _
    $region59: #{forward.1} parent=1 // pred_check_branch
      %10872 = sbr.rel (0) target = $region61
    $region60: #{forward.1} parent=1 // pred_region
      %10873 = dma.done [#allocation5], 32
    $region61: #{forward.1} parent=1 // pred_fallthru
      _
    %10874 = vsyncpa [#allocation5], 1

</llo_original>
